<compile_context>
chip_gen: v7x
topology: tpu7x:2x2x1
jax: 0.10.0
libtpu: 0.0.40
codegen_flags: <defaults>
</compile_context>

<pallas_src>
import functools

import jax
import jax.numpy as jnp
from jax.experimental import pallas as pl
from jax.experimental.pallas import tpu as pltpu

BN_EPS = 1e-5                 # PyTorch BatchNorm2d default
VMEM_LIMIT = 32 << 20         # valid on v5e/v6e (128 MiB) and v7x (64 MiB physical)


def _round_up(x, m):
    return (x + m - 1) // m * m


def _choose_tm(m, max_tm=1024, sub=16):
    """Pick an M-tile: multiple of `sub` (bf16 sublane tile), prefer one that
    divides M exactly (no pad copy) and gives >= 2 grid steps (v7x megacore)."""
    if m <= 2 * sub:
        return m, m                       # single full block (full-dim block is legal)
    t = min(max_tm, m // 2)
    t -= t % sub
    while t >= sub:
        if m % t == 0:
            return t, m                   # divides exactly: no jnp.pad copy
        t -= sub
    tm = max(sub, _round_up(pl.cdiv(m, 2), sub))
    return tm, _round_up(m, tm)           # tiny pad fallback (B=1 conv2/conv3)


# ----------------------------------------------------------------------------
# Pallas kernel 1: matmul + folded bias (+ReLU), bf16 in / bf16 out, f32 acc
# ----------------------------------------------------------------------------
def _matmul_bias_kernel(a_ref, w_ref, bias_ref, o_ref, *, apply_relu):
    acc = jnp.dot(a_ref[...], w_ref[...], preferred_element_type=jnp.float32)
    out = acc + bias_ref[...]
    if apply_relu:
        out = jnp.maximum(out, 0.0)
    o_ref[...] = out.astype(o_ref.dtype)


def matmul_bias(a, w, bias, *, apply_relu, out_dtype=jnp.bfloat16, max_tm=1024):
    """a: (M, K) bf16, w: (K, N) bf16 (BN scale pre-folded), bias: (1, N) f32.
    Tiled over M ('parallel' grid axis, double-buffered A-tile DMA)."""
    m, k = a.shape
    k2, n = w.shape
    assert k == k2
    tm, m_pad = _choose_tm(m, max_tm)
    if m_pad != m:
        a = jnp.pad(a, ((0, m_pad - m), (0, 0)))

    out = pl.pallas_call(
        functools.partial(_matmul_bias_kernel, apply_relu=apply_relu),
        out_shape=jax.ShapeDtypeStruct((m_pad, n), out_dtype),
        grid_spec=pltpu.PrefetchScalarGridSpec(
            num_scalar_prefetch=0,
            grid=(m_pad // tm,),
            in_specs=[
                pl.BlockSpec((tm, k), lambda i: (i, 0)),   # A tile (streams)
                pl.BlockSpec((k, n), lambda i: (0, 0)),    # W (resident)
                pl.BlockSpec((1, n), lambda i: (0, 0)),    # folded bias
            ],
            out_specs=pl.BlockSpec((tm, n), lambda i: (i, 0)),
        ),
        compiler_params=pltpu.CompilerParams(
            dimension_semantics=("parallel",),
            vmem_limit_bytes=VMEM_LIMIT,
        ),
    )(a, w, bias)
    return out[:m] if m_pad != m else out


# ----------------------------------------------------------------------------
# Pallas kernel 2: fused dueling head (one FC1 matmul, one block-diag FC2 matmul,
#                  dueling combine with lane masks, lane-dense 128-wide store)
# ----------------------------------------------------------------------------
def _fused_head_kernel(feat_ref, w1_ref, b1_ref, w2_ref, b2_ref, q_ref, *, n_actions):
    # h = relu(feat @ [wv1||wa1] + [bv1||ba1])                       (B, 1024)
    h = jnp.dot(feat_ref[...], w1_ref[...], preferred_element_type=jnp.float32)
    h = jnp.maximum(h + b1_ref[...], 0.0).astype(jnp.bfloat16)
    # y = h @ blockdiag(wv2, wa2) + b2 ; lane 127 = V, lanes 0..A-1 = A   (B, 128)
    y = jnp.dot(h, w2_ref[...], preferred_element_type=jnp.float32) + b2_ref[...]
    lane = jax.lax.broadcasted_iota(jnp.int32, y.shape, 1)
    adv = jnp.where(lane < n_actions, y, 0.0)
    mean_a = jnp.sum(adv) * (1.0 / (y.shape[0] * n_actions))   # mean over ALL of A
    val = jnp.sum(jnp.where(lane == 127, y, 0.0), axis=1, keepdims=True)
    q_ref[...] = (adv + (val - mean_a)).astype(q_ref.dtype)    # Q = V + (A - A.mean())


def fused_dueling_head(feat, w1, b1, w2, b2, n_actions):
    bsz = feat.shape[0]
    q_pad = pl.pallas_call(
        functools.partial(_fused_head_kernel, n_actions=n_actions),
        out_shape=jax.ShapeDtypeStruct((bsz, 128), jnp.float32),
        compiler_params=pltpu.CompilerParams(vmem_limit_bytes=VMEM_LIMIT),
    )(feat, w1, b1, w2, b2)
    return q_pad[:, :n_actions]


# ----------------------------------------------------------------------------
# Plain-JAX glue: im2col, BN/255 folding, parameter init / prep
# ----------------------------------------------------------------------------
def im2col(x_nhwc, kh, kw, stride):
    """x: (B, H, W, C) -> ((B*OH*OW, KH*KW*C), OH, OW). Stays in x's dtype (bf16)."""
    b, h, w, c = x_nhwc.shape
    oh = (h - kh) // stride + 1
    ow = (w - kw) // stride + 1
    cols = []
    for i in range(kh):
        for j in range(kw):
            cols.append(x_nhwc[:, i:i + stride * oh:stride, j:j + stride * ow:stride, :])
    patches = jnp.stack(cols, axis=3)                 # (B, OH, OW, KH*KW, C)
    return patches.reshape(b * oh * ow, kh * kw * c), oh, ow


def fold_conv_bn(w_hwio, conv_bias, bn, extra_scale=1.0):
    """Eval-mode BN (and optional input scale, e.g. 1/255) folded into the conv:
    BN(conv(x*extra_scale, w) + b) == conv(x, w*scale*extra_scale) + bias."""
    kh, kw, ci, co = w_hwio.shape
    scale = bn["gamma"] / jnp.sqrt(bn["var"] + BN_EPS)
    w = w_hwio.reshape(kh * kw * ci, co) * scale[None, :] * extra_scale
    bias = (conv_bias - bn["mean"]) * scale + bn["beta"]
    return w.astype(jnp.bfloat16), bias.reshape(1, co).astype(jnp.float32)


def init_params(key, outputs):
    ks = iter(jax.random.split(key, 32))

    def rnd(shape, s=0.05):
        return jax.random.normal(next(ks), shape, jnp.float32) * s

    def bn(c):
        return dict(gamma=1.0 + rnd((c,), 0.01), beta=rnd((c,), 0.01),
                    mean=rnd((c,), 0.01), var=1.0 + jnp.abs(rnd((c,), 0.01)))

    return {
        # conv weights stored HWIO: (KH, KW, Cin, Cout) -- matches im2col order
        "w1": rnd((8, 8, 4, 32)), "b1": rnd((32,)), "bn1": bn(32),
        "w2": rnd((4, 4, 32, 64)), "b2": rnd((64,)), "bn2": bn(64),
        "w3": rnd((3, 3, 64, 64)), "b3": rnd((64,)), "bn3": bn(64),
        # value stream (rows in PyTorch CHW-flatten order)
        "wv1": rnd((3136, 512), 0.02), "bv1": rnd((512,)),
        "wv2": rnd((512, 1), 0.02), "bv2": rnd((1,)),
        # advantage stream
        "wa1": rnd((3136, 512), 0.02), "ba1": rnd((512,)),
        "wa2": rnd((512, outputs), 0.02), "ba2": rnd((outputs,)),
    }


def prepare_inference_params(p):
    """One-time folds: BN + 1/255 into conv weights (bf16), head FC1 concat +
    row permutation (CHW -> HWC flatten), block-diagonal 128-lane FC2."""
    outputs = p["wa2"].shape[1]
    assert outputs < 128
    cw1, cb1 = fold_conv_bn(p["w1"], p["b1"], p["bn1"], extra_scale=1.0 / 255.0)
    cw2, cb2 = fold_conv_bn(p["w2"], p["b2"], p["bn2"])
    cw3, cb3 = fold_conv_bn(p["w3"], p["b3"], p["bn3"])

    # Permute FC1 rows from PyTorch's CHW-flatten index (c*49 + h*7 + w) to the
    # natural HWC-flatten index (h*448 + w*64 + c) -> no transpose in the forward.
    hh, ww, cc = jnp.meshgrid(jnp.arange(7), jnp.arange(7), jnp.arange(64), indexing="ij")
    perm = (cc * 49 + hh * 7 + ww).reshape(-1)                      # (3136,)
    hw1 = jnp.concatenate([p["wv1"], p["wa1"]], axis=1)[perm]       # (3136, 1024)
    hb1 = jnp.concatenate([p["bv1"], p["ba1"]]).reshape(1, 1024)

    # Block-diagonal second layer padded to 128 lanes: value -> lane 127,
    # advantages -> lanes 0..outputs-1.
    w2 = jnp.zeros((1024, 128), jnp.float32)
    w2 = w2.at[:512, 127].set(p["wv2"][:, 0])
    w2 = w2.at[512:, :outputs].set(p["wa2"])
    b2 = jnp.zeros((1, 128), jnp.float32)
    b2 = b2.at[0, 127].set(p["bv2"][0])
    b2 = b2.at[0, :outputs].set(p["ba2"])

    return {
        "cw1": cw1, "cb1": cb1,
        "cw2": cw2, "cb2": cb2,
        "cw3": cw3, "cb3": cb3,
        "hw1": hw1.astype(jnp.bfloat16), "hb1": hb1.astype(jnp.float32),
        "hw2": w2.astype(jnp.bfloat16), "hb2": b2.astype(jnp.float32),
    }


# ----------------------------------------------------------------------------
# Forward pass (mirrors Model3Layer.forward, eval-mode BN)
# ----------------------------------------------------------------------------
def model3layer_forward(prep, x_nchw, n_actions):
    assert x_nchw.shape[1:] == (4, 84, 84)
    b = x_nchw.shape[0]

    # uint8 -> bf16 directly (0..255 exact in bf16); 1/255 is folded into cw1.
    x = jnp.transpose(x_nchw.astype(jnp.bfloat16), (0, 2, 3, 1))    # NCHW -> NHWC

    # conv1: 4->32, k=8, s=4  (84 -> 20)
    a, oh, ow = im2col(x, 8, 8, 4)
    x = matmul_bias(a, prep["cw1"], prep["cb1"], apply_relu=True).reshape(b, oh, ow, 32)

    # conv2: 32->64, k=4, s=2  (20 -> 9)
    a, oh, ow = im2col(x, 4, 4, 2)
    x = matmul_bias(a, prep["cw2"], prep["cb2"], apply_relu=True).reshape(b, oh, ow, 64)

    # conv3: 64->64, k=3, s=1  (9 -> 7)
    a, oh, ow = im2col(x, 3, 3, 1)
    x = matmul_bias(a, prep["cw3"], prep["cb3"], apply_relu=True).reshape(b, oh, ow, 64)

    # natural HWC flatten (free reshape; hw1 rows were permuted at prep time)
    feat = x.reshape(b, 7 * 7 * 64)

    # fused value + advantage streams + dueling combine (single Pallas kernel)
    return fused_dueling_head(feat, prep["hw1"], prep["hb1"],
                              prep["hw2"], prep["hb2"], n_actions)


# ----------------------------------------------------------------------------
if __name__ == "__main__":
    OUTPUTS = 6  # number of Atari actions

    key = jax.random.PRNGKey(0)
    k_param, k_data = jax.random.split(key)

    params = init_params(k_param, OUTPUTS)
    prep = prepare_inference_params(params)

    # "4 stacked 84x84 int8 grayscale frames", batch of 1 (allowed by the assert)
    x = jax.random.randint(k_data, (1, 4, 84, 84), 0, 256, dtype=jnp.int32).astype(jnp.uint8)

    fwd = jax.jit(model3layer_forward, static_argnames=("n_actions",))
    q = jax.block_until_ready(fwd(prep, x, n_actions=OUTPUTS))

    assert q.shape == (1, OUTPUTS), q.shape
    assert bool(jnp.all(jnp.isfinite(q))), "non-finite output"
    print("KERNEL_OK")
</pallas_src>

<mosaic_0001>
module attributes {stable_mosaic.version = 11 : i64} {
  func.func @_matmul_bias_kernel(%arg0: i32, %arg1: memref<80x256xbf16, #tpu.memory_space<vmem>>, %arg2: memref<256x32xbf16, #tpu.memory_space<vmem>>, %arg3: memref<1x32xf32, #tpu.memory_space<vmem>>, %arg4: memref<80x32xbf16, #tpu.memory_space<vmem>>) attributes {dimension_semantics = [#tpu.dimension_semantics<parallel>], iteration_bounds = array<i64: 5>, scalar_prefetch = 0 : i64, scratch_operands = 0 : i64, tpu.core_type = #tpu.core_type<tc>, window_params = [{transform_indices = @transform_0, window_bounds = array<i64: 80, 256>}, {pipeline_mode = #tpu.pipeline_mode<synchronous>, transform_indices = @transform_1, window_bounds = array<i64: 256, 32>}, {pipeline_mode = #tpu.pipeline_mode<synchronous>, transform_indices = @transform_2, window_bounds = array<i64: 1, 32>}, {transform_indices = @transform_3, window_bounds = array<i64: 80, 32>}]} {
    %c0 = arith.constant 0 : index
    %c0_0 = arith.constant 0 : index
    %0 = vector.load %arg1[%c0, %c0_0] : memref<80x256xbf16, #tpu.memory_space<vmem>>, vector<80x256xbf16>
    %c0_1 = arith.constant 0 : index
    %c0_2 = arith.constant 0 : index
    %1 = vector.load %arg2[%c0_1, %c0_2] : memref<256x32xbf16, #tpu.memory_space<vmem>>, vector<256x32xbf16>
    %cst = arith.constant dense<0.000000e+00> : vector<80x32xf32>
    %2 = tpu.matmul %0, %1, %cst {dimension_numbers = #tpu.dot_dimension_numbers<[1], [0], [0], [1], [0, 0, 1, 1], [], []>} : vector<80x256xbf16>, vector<256x32xbf16>, vector<80x32xf32> -> vector<80x32xf32>
    %c0_3 = arith.constant 0 : index
    %c0_4 = arith.constant 0 : index
    %3 = vector.load %arg3[%c0_3, %c0_4] : memref<1x32xf32, #tpu.memory_space<vmem>>, vector<1x32xf32>
    %4 = vector.broadcast %3 : vector<1x32xf32> to vector<80x32xf32>
    %5 = arith.addf %2, %4 : vector<80x32xf32>
    %cst_5 = arith.constant 0.000000e+00 : f32
    %6 = vector.broadcast %cst_5 : f32 to vector<80x32xf32>
    %7 = arith.maximumf %5, %6 : vector<80x32xf32>
    %8 = arith.truncf %7 : vector<80x32xf32> to vector<80x32xbf16>
    %c0_6 = arith.constant 0 : index
    %c0_7 = arith.constant 0 : index
    %9 = vector.load %arg4[%c0_6, %c0_7] : memref<80x32xbf16, #tpu.memory_space<vmem>>, vector<80x32xbf16>
    tpu.vector_store %arg4[%c0_6, %c0_7], %8 {strides = array<i32>} : memref<80x32xbf16, #tpu.memory_space<vmem>>, vector<80x32xbf16>,
    return
  }
  func.func @transform_0(%arg0: i32) -> (i32, i32) {
    %c0_i32 = arith.constant 0 : i32
    %c0_i32_0 = arith.constant 0 : i32
    return %arg0, %c0_i32 : i32, i32
  }
  func.func @transform_1(%arg0: i32) -> (i32, i32) {
    %c0_i32 = arith.constant 0 : i32
    %c0_i32_0 = arith.constant 0 : i32
    %c0_i32_1 = arith.constant 0 : i32
    return %c0_i32, %c0_i32_0 : i32, i32
  }
  func.func @transform_2(%arg0: i32) -> (i32, i32) {
    %c0_i32 = arith.constant 0 : i32
    %c0_i32_0 = arith.constant 0 : i32
    %c0_i32_1 = arith.constant 0 : i32
    return %c0_i32, %c0_i32_0 : i32, i32
  }
  func.func @transform_3(%arg0: i32) -> (i32, i32) {
    %c0_i32 = arith.constant 0 : i32
    %c0_i32_0 = arith.constant 0 : i32
    return %arg0, %c0_i32 : i32, i32
  }
}

module attributes {stable_mosaic.version = 11 : i64} {
  func.func @_matmul_bias_kernel(%arg0: i32, %arg1: memref<48x512xbf16, #tpu.memory_space<vmem>>, %arg2: memref<512x64xbf16, #tpu.memory_space<vmem>>, %arg3: memref<1x64xf32, #tpu.memory_space<vmem>>, %arg4: memref<48x64xbf16, #tpu.memory_space<vmem>>) attributes {dimension_semantics = [#tpu.dimension_semantics<parallel>], iteration_bounds = array<i64: 2>, scalar_prefetch = 0 : i64, scratch_operands = 0 : i64, tpu.core_type = #tpu.core_type<tc>, window_params = [{transform_indices = @transform_0, window_bounds = array<i64: 48, 512>}, {pipeline_mode = #tpu.pipeline_mode<synchronous>, transform_indices = @transform_1, window_bounds = array<i64: 512, 64>}, {pipeline_mode = #tpu.pipeline_mode<synchronous>, transform_indices = @transform_2, window_bounds = array<i64: 1, 64>}, {transform_indices = @transform_3, window_bounds = array<i64: 48, 64>}]} {
    %c0 = arith.constant 0 : index
    %c0_0 = arith.constant 0 : index
    %0 = vector.load %arg1[%c0, %c0_0] : memref<48x512xbf16, #tpu.memory_space<vmem>>, vector<48x512xbf16>
    %c0_1 = arith.constant 0 : index
    %c0_2 = arith.constant 0 : index
    %1 = vector.load %arg2[%c0_1, %c0_2] : memref<512x64xbf16, #tpu.memory_space<vmem>>, vector<512x64xbf16>
    %cst = arith.constant dense<0.000000e+00> : vector<48x64xf32>
    %2 = tpu.matmul %0, %1, %cst {dimension_numbers = #tpu.dot_dimension_numbers<[1], [0], [0], [1], [0, 0, 1, 1], [], []>} : vector<48x512xbf16>, vector<512x64xbf16>, vector<48x64xf32> -> vector<48x64xf32>
    %c0_3 = arith.constant 0 : index
    %c0_4 = arith.constant 0 : index
    %3 = vector.load %arg3[%c0_3, %c0_4] : memref<1x64xf32, #tpu.memory_space<vmem>>, vector<1x64xf32>
    %4 = vector.broadcast %3 : vector<1x64xf32> to vector<48x64xf32>
    %5 = arith.addf %2, %4 : vector<48x64xf32>
    %cst_5 = arith.constant 0.000000e+00 : f32
    %6 = vector.broadcast %cst_5 : f32 to vector<48x64xf32>
    %7 = arith.maximumf %5, %6 : vector<48x64xf32>
    %8 = arith.truncf %7 : vector<48x64xf32> to vector<48x64xbf16>
    %c0_6 = arith.constant 0 : index
    %c0_7 = arith.constant 0 : index
    %9 = vector.load %arg4[%c0_6, %c0_7] : memref<48x64xbf16, #tpu.memory_space<vmem>>, vector<48x64xbf16>
    tpu.vector_store %arg4[%c0_6, %c0_7], %8 {strides = array<i32>} : memref<48x64xbf16, #tpu.memory_space<vmem>>, vector<48x64xbf16>,
    return
  }
  func.func @transform_0(%arg0: i32) -> (i32, i32) {
    %c0_i32 = arith.constant 0 : i32
    %c0_i32_0 = arith.constant 0 : i32
    return %arg0, %c0_i32 : i32, i32
  }
  func.func @transform_1(%arg0: i32) -> (i32, i32) {
    %c0_i32 = arith.constant 0 : i32
    %c0_i32_0 = arith.constant 0 : i32
    %c0_i32_1 = arith.constant 0 : i32
    return %c0_i32, %c0_i32_0 : i32, i32
  }
  func.func @transform_2(%arg0: i32) -> (i32, i32) {
    %c0_i32 = arith.constant 0 : i32
    %c0_i32_0 = arith.constant 0 : i32
    %c0_i32_1 = arith.constant 0 : i32
    return %c0_i32, %c0_i32_0 : i32, i32
  }
  func.func @transform_3(%arg0: i32) -> (i32, i32) {
    %c0_i32 = arith.constant 0 : i32
    %c0_i32_0 = arith.constant 0 : i32
    return %arg0, %c0_i32 : i32, i32
  }
}

module attributes {stable_mosaic.version = 11 : i64} {
  func.func @_matmul_bias_kernel(%arg0: i32, %arg1: memref<32x576xbf16, #tpu.memory_space<vmem>>, %arg2: memref<576x64xbf16, #tpu.memory_space<vmem>>, %arg3: memref<1x64xf32, #tpu.memory_space<vmem>>, %arg4: memref<32x64xbf16, #tpu.memory_space<vmem>>) attributes {dimension_semantics = [#tpu.dimension_semantics<parallel>], iteration_bounds = array<i64: 2>, scalar_prefetch = 0 : i64, scratch_operands = 0 : i64, tpu.core_type = #tpu.core_type<tc>, window_params = [{transform_indices = @transform_0, window_bounds = array<i64: 32, 576>}, {pipeline_mode = #tpu.pipeline_mode<synchronous>, transform_indices = @transform_1, window_bounds = array<i64: 576, 64>}, {pipeline_mode = #tpu.pipeline_mode<synchronous>, transform_indices = @transform_2, window_bounds = array<i64: 1, 64>}, {transform_indices = @transform_3, window_bounds = array<i64: 32, 64>}]} {
    %c0 = arith.constant 0 : index
    %c0_0 = arith.constant 0 : index
    %0 = vector.load %arg1[%c0, %c0_0] : memref<32x576xbf16, #tpu.memory_space<vmem>>, vector<32x576xbf16>
    %c0_1 = arith.constant 0 : index
    %c0_2 = arith.constant 0 : index
    %1 = vector.load %arg2[%c0_1, %c0_2] : memref<576x64xbf16, #tpu.memory_space<vmem>>, vector<576x64xbf16>
    %cst = arith.constant dense<0.000000e+00> : vector<32x64xf32>
    %2 = tpu.matmul %0, %1, %cst {dimension_numbers = #tpu.dot_dimension_numbers<[1], [0], [0], [1], [0, 0, 1, 1], [], []>} : vector<32x576xbf16>, vector<576x64xbf16>, vector<32x64xf32> -> vector<32x64xf32>
    %c0_3 = arith.constant 0 : index
    %c0_4 = arith.constant 0 : index
    %3 = vector.load %arg3[%c0_3, %c0_4] : memref<1x64xf32, #tpu.memory_space<vmem>>, vector<1x64xf32>
    %4 = vector.broadcast %3 : vector<1x64xf32> to vector<32x64xf32>
    %5 = arith.addf %2, %4 : vector<32x64xf32>
    %cst_5 = arith.constant 0.000000e+00 : f32
    %6 = vector.broadcast %cst_5 : f32 to vector<32x64xf32>
    %7 = arith.maximumf %5, %6 : vector<32x64xf32>
    %8 = arith.truncf %7 : vector<32x64xf32> to vector<32x64xbf16>
    %c0_6 = arith.constant 0 : index
    %c0_7 = arith.constant 0 : index
    %9 = vector.load %arg4[%c0_6, %c0_7] : memref<32x64xbf16, #tpu.memory_space<vmem>>, vector<32x64xbf16>
    tpu.vector_store %arg4[%c0_6, %c0_7], %8 {strides = array<i32>} : memref<32x64xbf16, #tpu.memory_space<vmem>>, vector<32x64xbf16>,
    return
  }
  func.func @transform_0(%arg0: i32) -> (i32, i32) {
    %c0_i32 = arith.constant 0 : i32
    %c0_i32_0 = arith.constant 0 : i32
    return %arg0, %c0_i32 : i32, i32
  }
  func.func @transform_1(%arg0: i32) -> (i32, i32) {
    %c0_i32 = arith.constant 0 : i32
    %c0_i32_0 = arith.constant 0 : i32
    %c0_i32_1 = arith.constant 0 : i32
    return %c0_i32, %c0_i32_0 : i32, i32
  }
  func.func @transform_2(%arg0: i32) -> (i32, i32) {
    %c0_i32 = arith.constant 0 : i32
    %c0_i32_0 = arith.constant 0 : i32
    %c0_i32_1 = arith.constant 0 : i32
    return %c0_i32, %c0_i32_0 : i32, i32
  }
  func.func @transform_3(%arg0: i32) -> (i32, i32) {
    %c0_i32 = arith.constant 0 : i32
    %c0_i32_0 = arith.constant 0 : i32
    return %arg0, %c0_i32 : i32, i32
  }
}

module attributes {stable_mosaic.version = 11 : i64} {
  func.func @_fused_head_kernel(%arg0: memref<1x3136xbf16, #tpu.memory_space<vmem>>, %arg1: memref<3136x1024xbf16, #tpu.memory_space<vmem>>, %arg2: memref<1x1024xf32, #tpu.memory_space<vmem>>, %arg3: memref<1024x128xbf16, #tpu.memory_space<vmem>>, %arg4: memref<1x128xf32, #tpu.memory_space<vmem>>, %arg5: memref<1x128xf32, #tpu.memory_space<vmem>>) attributes {dimension_semantics = [], scalar_prefetch = 0 : i64, scratch_operands = 0 : i64, tpu.core_type = #tpu.core_type<tc>} {
    %c0 = arith.constant 0 : index
    %c0_0 = arith.constant 0 : index
    %0 = vector.load %arg0[%c0, %c0_0] : memref<1x3136xbf16, #tpu.memory_space<vmem>>, vector<1x3136xbf16>
    %c0_1 = arith.constant 0 : index
    %c0_2 = arith.constant 0 : index
    %1 = vector.load %arg1[%c0_1, %c0_2] : memref<3136x1024xbf16, #tpu.memory_space<vmem>>, vector<3136x1024xbf16>
    %cst = arith.constant dense<0.000000e+00> : vector<1x1024xf32>
    %2 = tpu.matmul %0, %1, %cst {dimension_numbers = #tpu.dot_dimension_numbers<[1], [0], [0], [1], [0, 0, 1, 1], [], []>} : vector<1x3136xbf16>, vector<3136x1024xbf16>, vector<1x1024xf32> -> vector<1x1024xf32>
    %c0_3 = arith.constant 0 : index
    %c0_4 = arith.constant 0 : index
    %3 = vector.load %arg2[%c0_3, %c0_4] : memref<1x1024xf32, #tpu.memory_space<vmem>>, vector<1x1024xf32>
    %4 = arith.addf %2, %3 : vector<1x1024xf32>
    %cst_5 = arith.constant 0.000000e+00 : f32
    %5 = vector.broadcast %cst_5 : f32 to vector<1x1024xf32>
    %6 = arith.maximumf %4, %5 : vector<1x1024xf32>
    %7 = arith.truncf %6 : vector<1x1024xf32> to vector<1x1024xbf16>
    %c0_6 = arith.constant 0 : index
    %c0_7 = arith.constant 0 : index
    %8 = vector.load %arg3[%c0_6, %c0_7] : memref<1024x128xbf16, #tpu.memory_space<vmem>>, vector<1024x128xbf16>
    %cst_8 = arith.constant dense<0.000000e+00> : vector<1x128xf32>
    %9 = tpu.matmul %7, %8, %cst_8 {dimension_numbers = #tpu.dot_dimension_numbers<[1], [0], [0], [1], [0, 0, 1, 1], [], []>} : vector<1x1024xbf16>, vector<1024x128xbf16>, vector<1x128xf32> -> vector<1x128xf32>
    %c0_9 = arith.constant 0 : index
    %c0_10 = arith.constant 0 : index
    %10 = vector.load %arg4[%c0_9, %c0_10] : memref<1x128xf32, #tpu.memory_space<vmem>>, vector<1x128xf32>
    %11 = arith.addf %9, %10 : vector<1x128xf32>
    %12 = tpu.iota {dimensions = array<i32: 1>} : vector<1x128xi32>
    %c6_i32 = arith.constant 6 : i32
    %13 = vector.broadcast %c6_i32 : i32 to vector<1x128xi32>
    %14 = arith.cmpi slt, %12, %13 : vector<1x128xi32>
    %cst_11 = arith.constant 0.000000e+00 : f32
    %15 = vector.broadcast %cst_11 : f32 to vector<1x128xf32>
    %16 = arith.select %14, %11, %15 : vector<1x128xi1>, vector<1x128xf32>
    %17 = vector.shape_cast %16 : vector<1x128xf32> to vector<1x1x128xf32>
    %cst_12 = arith.constant dense<0.000000e+00> : vector<1xf32>
    %18 = vector.multi_reduction <add>, %17, %cst_12 [1, 2] : vector<1x1x128xf32> to vector<1xf32>
    %19 = vector.shape_cast %18 : vector<1xf32> to vector<1x1x1xf32>
    %20 = vector.extract %19[0, 0, 0] : f32 from vector<1x1x1xf32>
    %cst_13 = arith.constant 0.166666672 : f32
    %21 = arith.mulf %20, %cst_13 : f32
    %c127_i32 = arith.constant 127 : i32
    %22 = vector.broadcast %c127_i32 : i32 to vector<1x128xi32>
    %23 = arith.cmpi eq, %12, %22 : vector<1x128xi32>
    %cst_14 = arith.constant 0.000000e+00 : f32
    %24 = vector.broadcast %cst_14 : f32 to vector<1x128xf32>
    %25 = arith.select %23, %11, %24 : vector<1x128xi1>, vector<1x128xf32>
    %cst_15 = arith.constant dense<0.000000e+00> : vector<1xf32>
    %26 = vector.multi_reduction <add>, %25, %cst_15 [1] : vector<1x128xf32> to vector<1xf32>
    %27 = vector.shape_cast %26 : vector<1xf32> to vector<1x1xf32>
    %28 = vector.broadcast %21 : f32 to vector<1x1xf32>
    %29 = arith.subf %27, %28 : vector<1x1xf32>
    %30 = vector.broadcast %29 : vector<1x1xf32> to vector<1x128xf32>
    %31 = arith.addf %16, %30 : vector<1x128xf32>
    %c0_16 = arith.constant 0 : index
    %c0_17 = arith.constant 0 : index
    %32 = vector.load %arg5[%c0_16, %c0_17] : memref<1x128xf32, #tpu.memory_space<vmem>>, vector<1x128xf32>
    tpu.vector_store %arg5[%c0_16, %c0_17], %31 {strides = array<i32>} : memref<1x128xf32, #tpu.memory_space<vmem>>, vector<1x128xf32>,
    return
  }
}

</mosaic_0001>

<llo_original>
// kernel: model3layer_forward.4
$region0: #{model3layer_forward.4}
  #allocation0 [shape = 'u32[]', space=smem, size = 0x4, offset = 0x4, fixed_abs, tag = 'smem constant byte address 0x4 - core index']
  #allocation1 [shape = 'u32[144,128]{1,0:T(1,128)}', space=vmem, size = 0x12000, scoped, tag = 'internal scratch']
  %s0 = inlined_call_operand.vmem [shape: bf16[400,256], index: 0, kind: input, shape index: {}]
  %s1 = inlined_call_operand.vmem [shape: bf16[256,32], index: 1, kind: input, shape index: {}]
  %s2 = inlined_call_operand.vmem [shape: f32[1,32], index: 2, kind: input, shape index: {}]
  %s3 = inlined_call_operand.vmem [shape: bf16[400,32], index: 3, kind: output, shape index: {}]
  %s4 = sld [smem:[#allocation0]]
  $region45: #{model3layer_forward.4} parent=0
    _
  %s6 = ssub.s32 1, %s4
  %s7 = scalar_select 0, %s6, %s4
  loop: start=0, step=1, limit=7
  $region2: #{model3layer_forward.4} parent=0 // loop_pre_header
    _
  $region3: #{model3layer_forward.4} parent=0 // loop_header
    %s9 = sphi 0, %s13
    %p10 = scmp.ge.s32.totalorder %s9, 7
    %s19 = sphi 0, %s21
    %s22 = sphi 0, %s19
    %s23 = sphi 0, %s22
    %s39 = sphi 0, %s23
    %s43 = sphi 0, %s43
    %s45 = sphi 0, %s43
    %s46 = sphi 0, %s45
    %s60 = sphi 0, %s46
    %s64 = sphi 0, %s64
    %s66 = sphi 0, %s64
    %s67 = sphi 0, %s66
    %s81 = sphi 0, %s67
    %s87 = sphi 0, %s89
    %s90 = sphi 0, %s87
    %s91 = sphi 0, %s90
    %s107 = sphi 0, %s91
  $region4: #{model3layer_forward.4} parent=0 // loop_header_branch
    %12 = sbr.rel (%p10) target = $region8
  $region5: #{model3layer_forward.4} parent=0 // loop_body
    %s14 = ssub.s32 %s9, 1
    %s15 = ssub.s32 %s9, 2
    %s16 = sadd.s32 %s9, 1
    %s17 = ssub.s32 %s9, %s16
    %p18 = scmp.eq.s32.totalorder %s17, 0
    %s20 = sadd.s32 %s19, 1
    %s21 = scalar_select %p18, %s19, %s20
    %p24 = pneg %p18
    %p25 = scmp.eq.s32.totalorder %s9, 4
    %p26 = por %p24, %p25
    %p27 = scmp.ne.s32.totalorder %s19, %s22
    %p28 = scmp.eq.s32.totalorder %s9, 0
    %p29 = por %p27, %p28
    %p30 = scmp.ne.s32.totalorder %s19, %s22
    %p31 = scmp.eq.s32.totalorder %s14, 4
    %p32 = por %p30, %p31
    %p33 = scmp.ne.s32.totalorder %s22, %s23
    %p34 = scmp.eq.s32.totalorder %s14, 0
    %p35 = por %p33, %p34
    %p36 = scmp.ne.s32.totalorder %s22, %s23
    %p37 = scmp.eq.s32.totalorder %s15, 4
    %p38 = por %p36, %p37
    %p40 = scmp.ne.s32.totalorder %s23, %s39
    %p41 = scmp.eq.s32.totalorder %s15, 0
    %p42 = por %p40, %p41
    %s44 = sadd.s32 %s43, 1
    %p47 = scmp.eq.s32.totalorder %s9, 4
    %p48 = scmp.ne.s32.totalorder %s43, %s45
    %p49 = scmp.eq.s32.totalorder %s9, 0
    %p50 = por %p48, %p49
    %p51 = scmp.ne.s32.totalorder %s43, %s45
    %p52 = scmp.eq.s32.totalorder %s14, 4
    %p53 = por %p51, %p52
    %p54 = scmp.ne.s32.totalorder %s45, %s46
    %p55 = scmp.eq.s32.totalorder %s14, 0
    %p56 = por %p54, %p55
    %p57 = scmp.ne.s32.totalorder %s45, %s46
    %p58 = scmp.eq.s32.totalorder %s15, 4
    %p59 = por %p57, %p58
    %p61 = scmp.ne.s32.totalorder %s46, %s60
    %p62 = scmp.eq.s32.totalorder %s15, 0
    %p63 = por %p61, %p62
    %s65 = sadd.s32 %s64, 1
    %p68 = scmp.eq.s32.totalorder %s9, 4
    %p69 = scmp.ne.s32.totalorder %s64, %s66
    %p70 = scmp.eq.s32.totalorder %s9, 0
    %p71 = por %p69, %p70
    %p72 = scmp.ne.s32.totalorder %s64, %s66
    %p73 = scmp.eq.s32.totalorder %s14, 4
    %p74 = por %p72, %p73
    %p75 = scmp.ne.s32.totalorder %s66, %s67
    %p76 = scmp.eq.s32.totalorder %s14, 0
    %p77 = por %p75, %p76
    %p78 = scmp.ne.s32.totalorder %s66, %s67
    %p79 = scmp.eq.s32.totalorder %s15, 4
    %p80 = por %p78, %p79
    %p82 = scmp.ne.s32.totalorder %s67, %s81
    %p83 = scmp.eq.s32.totalorder %s15, 0
    %p84 = por %p82, %p83
    %s85 = ssub.s32 %s9, %s16
    %p86 = scmp.eq.s32.totalorder %s85, 0
    %s88 = sadd.s32 %s87, 1
    %s89 = scalar_select %p86, %s87, %s88
    %p92 = pneg %p86
    %p93 = scmp.eq.s32.totalorder %s9, 4
    %p94 = por %p92, %p93
    %p95 = scmp.ne.s32.totalorder %s87, %s90
    %p96 = scmp.eq.s32.totalorder %s9, 0
    %p97 = por %p95, %p96
    %p98 = scmp.ne.s32.totalorder %s87, %s90
    %p99 = scmp.eq.s32.totalorder %s14, 4
    %p100 = por %p98, %p99
    %p101 = scmp.ne.s32.totalorder %s90, %s91
    %p102 = scmp.eq.s32.totalorder %s14, 0
    %p103 = por %p101, %p102
    %p104 = scmp.ne.s32.totalorder %s90, %s91
    %p105 = scmp.eq.s32.totalorder %s15, 4
    %p106 = por %p104, %p105
    %p108 = scmp.ne.s32.totalorder %s91, %s107
    %p109 = scmp.eq.s32.totalorder %s15, 0
    %p110 = por %p108, %p109
    %p111 = scmp.le.s32.totalorder 1, %s9
    %p112 = scmp.lt.s32.totalorder %s9, 6
    %p113 = pnand %p111, %p112
    %p114 = pneg %p113
    // Predicated region
    $region9: #{model3layer_forward.4} parent=5 // pred_check
      _
    $region10: #{model3layer_forward.4} parent=5 // pred_check_branch
      %116 = sbr.rel (%p113) target = $region12
    $region11: #{model3layer_forward.4} parent=5 // pred_region
      %s117 = ssub.s32 %s9, 1
      // Predicated region
      $region13: #{model3layer_forward.4} parent=11 // pred_check
        %p118 = pneg %p56
      $region14: #{model3layer_forward.4} parent=11 // pred_check_branch
        %120 = sbr.rel (%p118) target = $region16
      $region15: #{model3layer_forward.4} parent=11 // pred_region
        _
      $region16: #{model3layer_forward.4} parent=11 // pred_fallthru
        _
      // Predicated region
      $region17: #{model3layer_forward.4} parent=11 // pred_check
        %p121 = pneg %p77
      $region18: #{model3layer_forward.4} parent=11 // pred_check_branch
        %123 = sbr.rel (%p121) target = $region20
      $region19: #{model3layer_forward.4} parent=11 // pred_region
        _
      $region20: #{model3layer_forward.4} parent=11 // pred_fallthru
        _
    $region12: #{model3layer_forward.4} parent=5 // pred_fallthru
      _
    %p124 = scmp.lt.s32.totalorder %s9, 5
    // Predicated region
    $region21: #{model3layer_forward.4} parent=5 // pred_check
      %p125 = pneg %p124
    $region22: #{model3layer_forward.4} parent=5 // pred_check_branch
      %127 = sbr.rel (%p125) target = $region24
    $region23: #{model3layer_forward.4} parent=5 // pred_region
      // Predicated region
      $region25: #{model3layer_forward.4} parent=23 // pred_check
        %p128 = pneg %p29
      $region26: #{model3layer_forward.4} parent=23 // pred_check_branch
        %130 = sbr.rel (%p128) target = $region28
      $region27: #{model3layer_forward.4} parent=23 // pred_region
        %s131 = smul.u32 10, %s9
        %p132 = scmp.lt.s32.totalorder %s131, 49
        %s133 = scalar_select %p132, %s131, 49
        %s134 = smul.addr %s133, 2
        %s135 = smul.addr %s134, 4
        %s136 = scalar_lea.vmem %s0, %s135
        %s137 = smul.u32 10, %s9
      $region28: #{model3layer_forward.4} parent=23 // pred_fallthru
        _
    $region24: #{model3layer_forward.4} parent=5 // pred_fallthru
      _
    %p138 = scmp.le.s32.totalorder 1, %s9
    %p139 = scmp.lt.s32.totalorder %s9, 6
    %p140 = pnand %p138, %p139
    %p141 = pneg %p140
    // Predicated region
    $region29: #{model3layer_forward.4} parent=5 // pred_check
      _
    $region30: #{model3layer_forward.4} parent=5 // pred_check_branch
      %143 = sbr.rel (%p140) target = $region32
    $region31: #{model3layer_forward.4} parent=5 // pred_region
      %s144 = ssub.s32 %s9, 1
      %s145 = smul.u32 10, %s14
      %p146 = scmp.lt.s32.totalorder %s145, 49
      %s147 = scalar_select %p146, %s145, 49
      %s148 = smul.addr %s147, 2
      %s149 = smul.addr %s148, 4
      %s150 = scalar_lea.vmem %s0, %s149
      %p151 = pneg %p35
      %p152 = pneg %p32
      %p153 = pneg %p56
      %p154 = pneg %p53
      %p155 = pneg %p77
      %p156 = pneg %p74
      %p157 = pneg %p103
      %p158 = pneg %p100
      %s159 = smul.u32 10, %s14
      %p160 = scmp.lt.s32.totalorder %s159, 49
      %s161 = scalar_select %p160, %s159, 49
      %s162 = smul.addr %s161, 4
      %s163 = scalar_lea.vmem %s3, %s162
      %s164 = smul.u32 10, %s14
      %p165 = scmp.lt.s32.totalorder %s164, 49
      %s166 = scalar_select %p165, %s164, 49
      %s167 = smul.addr %s166, 2
      %s168 = smul.addr %s167, 4
      %s169 = scalar_lea.vmem %s0, %s168
      %s170 = smul.u32 10, %s14
      %s171 = smul.u32 10, %s14
      %p172 = scmp.lt.s32.totalorder %s171, 49
      %s173 = scalar_select %p172, %s171, 49
      %s174 = smul.addr %s173, 4
      %s175 = scalar_lea.vmem %s3, %s174
      %s176 = smul.u32 10, %s14
      %v178 = vld [vmem:[%s169] sm:$0xff]
      %v179 = vld [vmem:[%s169 + $0x8] sm:$0xff]
      %v180 = vld [vmem:[%s169 + $0x10] sm:$0xff]
      %v181 = vld [vmem:[%s169 + $0x18] sm:$0xff]
      %v182 = vld [vmem:[%s169 + $0x20] sm:$0xff]
      %v183 = vld [vmem:[%s169 + $0x28] sm:$0xff]
      %v184 = vld [vmem:[%s169 + $0x30] sm:$0xff]
      %v185 = vld [vmem:[%s169 + $0x38] sm:$0xff]
      %v186 = vld [vmem:[%s169 + $0x40] sm:$0xff]
      %v187 = vld [vmem:[%s169 + $0x48] sm:$0xff]
      %v188 = vld [vmem:[%s1] sm:$0xf]
      %v189 = vld [vmem:[%s1 + $0x4] sm:$0xf]
      %v190 = vld [vmem:[%s1 + $0x8] sm:$0xf]
      %v191 = vld [vmem:[%s1 + $0xc] sm:$0xf]
      %v192 = vld [vmem:[%s1 + $0x10] sm:$0xf]
      %v193 = vld [vmem:[%s1 + $0x14] sm:$0xf]
      %v194 = vld [vmem:[%s1 + $0x18] sm:$0xf]
      %v195 = vld [vmem:[%s1 + $0x1c] sm:$0xf]
      %v196 = vld [vmem:[%s1 + $0x20] sm:$0xf]
      %v197 = vld [vmem:[%s1 + $0x24] sm:$0xf]
      %v198 = vld [vmem:[%s1 + $0x28] sm:$0xf]
      %v199 = vld [vmem:[%s1 + $0x2c] sm:$0xf]
      %v200 = vld [vmem:[%s1 + $0x30] sm:$0xf]
      %v201 = vld [vmem:[%s1 + $0x34] sm:$0xf]
      %v202 = vld [vmem:[%s1 + $0x38] sm:$0xf]
      %v203 = vld [vmem:[%s1 + $0x3c] sm:$0xf]
      %v204 = vld [vmem:[%s1 + $0x40] sm:$0xf]
      %v205 = vld [vmem:[%s1 + $0x44] sm:$0xf]
      %v206 = vld [vmem:[%s1 + $0x48] sm:$0xf]
      %v207 = vld [vmem:[%s1 + $0x4c] sm:$0xf]
      %v208 = vld [vmem:[%s1 + $0x50] sm:$0xf]
      %v209 = vld [vmem:[%s1 + $0x54] sm:$0xf]
      %v210 = vld [vmem:[%s1 + $0x58] sm:$0xf]
      %v211 = vld [vmem:[%s1 + $0x5c] sm:$0xf]
      %v212 = vld [vmem:[%s1 + $0x60] sm:$0xf]
      %v213 = vld [vmem:[%s1 + $0x64] sm:$0xf]
      %v214 = vld [vmem:[%s1 + $0x68] sm:$0xf]
      %v215 = vld [vmem:[%s1 + $0x6c] sm:$0xf]
      %v216 = vld [vmem:[%s1 + $0x70] sm:$0xf]
      %v217 = vld [vmem:[%s1 + $0x74] sm:$0xf]
      %v218 = vld [vmem:[%s1 + $0x78] sm:$0xf]
      %v219 = vld [vmem:[%s1 + $0x7c] sm:$0xf]
      %v220 = vld [vmem:[%s2] sm:$0x1]
      %v222 = vlaneseq
      %v223 = vshrl.u32 %v222, 7
      %v224 = vsub.s32 0, %v223
      %v225 = vrot.slane %v220, %v224
      %v237 = vunpack.c.l.b16 %v178
      %v238 = vunpack.c.h.b16 %v178
      %v239 = vunpack.c.l.b16 %v179
      %v240 = vunpack.c.h.b16 %v179
      %v241 = vunpack.c.l.b16 %v180
      %v242 = vunpack.c.h.b16 %v180
      %v243 = vunpack.c.l.b16 %v181
      %v244 = vunpack.c.h.b16 %v181
      %v245 = vunpack.c.l.b16 %v182
      %v246 = vunpack.c.h.b16 %v182
      %v247 = vunpack.c.l.b16 %v183
      %v248 = vunpack.c.h.b16 %v183
      %v249 = vunpack.c.l.b16 %v184
      %v250 = vunpack.c.h.b16 %v184
      %v251 = vunpack.c.l.b16 %v185
      %v252 = vunpack.c.h.b16 %v185
      %v253 = vunpack.c.l.b16 %v186
      %v254 = vunpack.c.h.b16 %v186
      %v255 = vunpack.c.l.b16 %v187
      %v256 = vunpack.c.h.b16 %v187
      %v257 = vpack.c.b16 %v239, %v237
      %v258 = vpack.c.b16 %v240, %v238
      %v259 = vpack.c.b16 %v243, %v241
      %v260 = vpack.c.b16 %v244, %v242
      %v261 = vpack.c.b16 %v247, %v245
      %v262 = vpack.c.b16 %v248, %v246
      %v263 = vpack.c.b16 %v251, %v249
      %v264 = vpack.c.b16 %v252, %v250
      %v265 = vpack.c.b16 %v255, %v253
      %v266 = vpack.c.b16 %v256, %v254
      %v309 = vunpack.c.l.b16 %v188
      %v310 = vunpack.c.l.b16 %v189
      %v311 = vunpack.c.l.b16 %v190
      %v312 = vunpack.c.l.b16 %v191
      %v313 = vunpack.c.l.b16 %v192
      %v314 = vunpack.c.l.b16 %v193
      %v315 = vunpack.c.l.b16 %v194
      %v316 = vunpack.c.l.b16 %v195
      %v317 = vunpack.c.l.b16 %v196
      %v318 = vunpack.c.l.b16 %v197
      %v319 = vunpack.c.l.b16 %v198
      %v320 = vunpack.c.l.b16 %v199
      %v321 = vunpack.c.l.b16 %v200
      %v322 = vunpack.c.l.b16 %v201
      %v323 = vunpack.c.l.b16 %v202
      %v324 = vunpack.c.l.b16 %v203
      %v325 = vunpack.c.l.b16 %v204
      %v326 = vunpack.c.l.b16 %v205
      %v327 = vunpack.c.l.b16 %v206
      %v328 = vunpack.c.l.b16 %v207
      %v329 = vunpack.c.l.b16 %v208
      %v330 = vunpack.c.l.b16 %v209
      %v331 = vunpack.c.l.b16 %v210
      %v332 = vunpack.c.l.b16 %v211
      %v333 = vunpack.c.l.b16 %v212
      %v334 = vunpack.c.l.b16 %v213
      %v335 = vunpack.c.l.b16 %v214
      %v336 = vunpack.c.l.b16 %v215
      %v337 = vunpack.c.l.b16 %v216
      %v338 = vunpack.c.l.b16 %v217
      %v339 = vunpack.c.l.b16 %v218
      %v340 = vunpack.c.l.b16 %v219
      %v341 = vpack.c.b16 %v310, %v309
      %v342 = vpack.c.b16 %v312, %v311
      %v343 = vpack.c.b16 %v314, %v313
      %v344 = vpack.c.b16 %v316, %v315
      %v345 = vpack.c.b16 %v318, %v317
      %v346 = vpack.c.b16 %v320, %v319
      %v347 = vpack.c.b16 %v322, %v321
      %v348 = vpack.c.b16 %v324, %v323
      %v349 = vpack.c.b16 %v326, %v325
      %v350 = vpack.c.b16 %v328, %v327
      %v351 = vpack.c.b16 %v330, %v329
      %v352 = vpack.c.b16 %v332, %v331
      %v353 = vpack.c.b16 %v334, %v333
      %v354 = vpack.c.b16 %v336, %v335
      %v355 = vpack.c.b16 %v338, %v337
      %v356 = vpack.c.b16 %v340, %v339
      %373 = vmatprep.subr.bf16.mxu0 0
      %374 = vmatpush1.bf16.msra.mxu0 %v341
      %375 = vmatprep.subr.bf16.mxu0 0
      %376 = vmatpush1.bf16.msra.mxu0 %v342
      %377 = vmatprep.subr.bf16.mxu0 0
      %378 = vmatpush1.bf16.msra.mxu0 %v343
      %379 = vmatprep.subr.bf16.mxu0 0
      %380 = vmatpush1.bf16.msra.mxu0 %v344
      %381 = vmatprep.subr.bf16.mxu0 0
      %382 = vmatpush1.bf16.msra.mxu0 %v345
      %383 = vmatprep.subr.bf16.mxu0 0
      %384 = vmatpush1.bf16.msra.mxu0 %v346
      %385 = vmatprep.subr.bf16.mxu0 0
      %386 = vmatpush1.bf16.msra.mxu0 %v347
      %387 = vmatprep.subr.bf16.mxu0 0
      %388 = vmatpush1.bf16.msra.mxu0 %v348
      %389 = vmatprep.subr.bf16.mxu0 0
      %390 = vmatpush1.bf16.msra.mxu0 %v349
      %391 = vmatprep.subr.bf16.mxu0 0
      %392 = vmatpush1.bf16.msra.mxu0 %v350
      %393 = vmatprep.subr.bf16.mxu0 0
      %394 = vmatpush1.bf16.msra.mxu0 %v351
      %395 = vmatprep.subr.bf16.mxu0 0
      %396 = vmatpush1.bf16.msra.mxu0 %v352
      %397 = vmatprep.subr.bf16.mxu0 0
      %398 = vmatpush1.bf16.msra.mxu0 %v353
      %399 = vmatprep.subr.bf16.mxu0 0
      %400 = vmatpush1.bf16.msra.mxu0 %v354
      %401 = vmatprep.subr.bf16.mxu0 0
      %402 = vmatpush1.bf16.msra.mxu0 %v355
      %403 = vmatprep.subr.bf16.mxu0 0
      %404 = vmatpush1.bf16.msra.mxu0 %v356
      %405 = vmatprep.mubr.bf16.mxu0 %v258
      %406 = vmatmul.mubr.bf16.gmra.mrb[0].mxu0 %v257
      %v407 = vpop.f32.mrb[0].mxu0
      %v408 = vadd.f32 %v225, %v407
      %v409 = vpop.f32.mrb[0].mxu0
      %v410 = vpop.f32.mrb[0].mxu0
      %v411 = vadd.f32 %v225, %v410
      %v412 = vpop.f32.mrb[0].mxu0
      %413 = vmatprep.mubr.bf16.mxu0 %v260
      %414 = vmatmul.mubr.bf16.gmra.mrb[0].mxu0 %v259
      %v415 = vpop.f32.mrb[0].mxu0
      %v416 = vadd.f32 %v225, %v415
      %v417 = vpop.f32.mrb[0].mxu0
      %v418 = vpop.f32.mrb[0].mxu0
      %v419 = vadd.f32 %v225, %v418
      %v420 = vpop.f32.mrb[0].mxu0
      %421 = vmatprep.mubr.bf16.mxu0 %v262
      %422 = vmatmul.mubr.bf16.gmra.mrb[0].mxu0 %v261
      %v423 = vpop.f32.mrb[0].mxu0
      %v424 = vadd.f32 %v225, %v423
      %v425 = vpop.f32.mrb[0].mxu0
      %v426 = vpop.f32.mrb[0].mxu0
      %v427 = vadd.f32 %v225, %v426
      %v428 = vpop.f32.mrb[0].mxu0
      %429 = vmatprep.mubr.bf16.mxu0 %v264
      %430 = vmatmul.mubr.bf16.gmra.mrb[0].mxu0 %v263
      %v431 = vpop.f32.mrb[0].mxu0
      %v432 = vadd.f32 %v225, %v431
      %v433 = vpop.f32.mrb[0].mxu0
      %v434 = vpop.f32.mrb[0].mxu0
      %v435 = vadd.f32 %v225, %v434
      %v436 = vpop.f32.mrb[0].mxu0
      %437 = vmatprep.mubr.bf16.mxu0 %v266
      %438 = vmatmul.mubr.bf16.gmra.mrb[0].mxu0 %v265
      %v439 = vpop.f32.mrb[0].mxu0
      %v440 = vadd.f32 %v225, %v439
      %v441 = vpop.f32.mrb[0].mxu0
      %v442 = vpop.f32.mrb[0].mxu0
      %v443 = vadd.f32 %v225, %v442
      %v444 = vpop.f32.mrb[0].mxu0
      %445 = vdwg.mxu0
      %v446 = vmax.f32 %v408, 0.0
      %v447 = vmax.f32 %v411, 0.0
      %v448 = vmax.f32 %v416, 0.0
      %v449 = vmax.f32 %v419, 0.0
      %v450 = vmax.f32 %v424, 0.0
      %v451 = vmax.f32 %v427, 0.0
      %v452 = vmax.f32 %v432, 0.0
      %v453 = vmax.f32 %v435, 0.0
      %v454 = vmax.f32 %v440, 0.0
      %v455 = vmax.f32 %v443, 0.0
      %v456 = vpack.c.bf16 %v447, %v446
      %v457 = vpack.c.bf16 %v449, %v448
      %v458 = vpack.c.bf16 %v451, %v450
      %v459 = vpack.c.bf16 %v453, %v452
      %v460 = vpack.c.bf16 %v455, %v454
      %v466 = vunpack.c.l.b16 %v456
      %v467 = vunpack.c.h.b16 %v456
      %v468 = vunpack.c.l.b16 %v457
      %v469 = vunpack.c.h.b16 %v457
      %v470 = vunpack.c.l.b16 %v458
      %v471 = vunpack.c.h.b16 %v458
      %v472 = vunpack.c.l.b16 %v459
      %v473 = vunpack.c.h.b16 %v459
      %v474 = vunpack.c.l.b16 %v460
      %v475 = vunpack.c.h.b16 %v460
      %v476 = vpack.c.b16 %v466, %v466
      %v477 = vpack.c.b16 %v467, %v467
      %v478 = vpack.c.b16 %v468, %v468
      %v479 = vpack.c.b16 %v469, %v469
      %v480 = vpack.c.b16 %v470, %v470
      %v481 = vpack.c.b16 %v471, %v471
      %v482 = vpack.c.b16 %v472, %v472
      %v483 = vpack.c.b16 %v473, %v473
      %v484 = vpack.c.b16 %v474, %v474
      %v485 = vpack.c.b16 %v475, %v475
      %vm496 = vcmask 257024
      %497 = vst.msk [vmem:[%s175] sm:$0xf] %vm496, %v476
      %498 = vst.msk [vmem:[%s175 + $0x4] sm:$0xf] %vm496, %v477
      %499 = vst.msk [vmem:[%s175 + $0x8] sm:$0xf] %vm496, %v478
      %500 = vst.msk [vmem:[%s175 + $0xc] sm:$0xf] %vm496, %v479
      %501 = vst.msk [vmem:[%s175 + $0x10] sm:$0xf] %vm496, %v480
      %502 = vst.msk [vmem:[%s175 + $0x14] sm:$0xf] %vm496, %v481
      %503 = vst.msk [vmem:[%s175 + $0x18] sm:$0xf] %vm496, %v482
      %504 = vst.msk [vmem:[%s175 + $0x1c] sm:$0xf] %vm496, %v483
      %505 = vst.msk [vmem:[%s175 + $0x20] sm:$0xf] %vm496, %v484
      %506 = vst.msk [vmem:[%s175 + $0x24] sm:$0xf] %vm496, %v485
      %s507 = smul.u32 10, %s14
      %p508 = scmp.lt.s32.totalorder %s507, 49
      %s509 = scalar_select %p508, %s507, 49
      %s510 = smul.addr %s509, 4
      %s511 = scalar_lea.vmem %s3, %s510
      // Predicated region
      $region33: #{model3layer_forward.4} parent=31 // pred_check
        %p512 = pneg %p100
      $region34: #{model3layer_forward.4} parent=31 // pred_check_branch
        %514 = sbr.rel (%p512) target = $region36
      $region35: #{model3layer_forward.4} parent=31 // pred_region
        %s515 = smul.u32 10, %s14
      $region36: #{model3layer_forward.4} parent=31 // pred_fallthru
        _
    $region32: #{model3layer_forward.4} parent=5 // pred_fallthru
      _
    %p516 = scmp.le.s32.totalorder 2, %s9
    // Predicated region
    $region37: #{model3layer_forward.4} parent=5 // pred_check
      %p517 = pneg %p516
    $region38: #{model3layer_forward.4} parent=5 // pred_check_branch
      %519 = sbr.rel (%p517) target = $region40
    $region39: #{model3layer_forward.4} parent=5 // pred_region
      %s520 = ssub.s32 %s9, 2
      // Predicated region
      $region41: #{model3layer_forward.4} parent=39 // pred_check
        %p521 = pneg %p106
      $region42: #{model3layer_forward.4} parent=39 // pred_check_branch
        %523 = sbr.rel (%p521) target = $region44
      $region43: #{model3layer_forward.4} parent=39 // pred_region
        %s524 = smul.u32 10, %s15
        %p525 = scmp.lt.s32.totalorder %s524, 49
        %s526 = scalar_select %p525, %s524, 49
        %s527 = smul.addr %s526, 4
        %s528 = scalar_lea.vmem %s3, %s527
      $region44: #{model3layer_forward.4} parent=39 // pred_fallthru
        _
    $region40: #{model3layer_forward.4} parent=5 // pred_fallthru
      _
  $region6: #{model3layer_forward.4} parent=0 // loop_footer
    %s13 = sadd.s32 1, %s9
  $region7: #{model3layer_forward.4} parent=0 // loop_footer_branch
    %8 = sbr.rel target = $region3
  $region8: #{model3layer_forward.4} parent=0 // loop_exit
    _

// kernel: model3layer_forward.5
$region0: #{model3layer_forward.5}
  #allocation0 [shape = 'u32[]', space=smem, size = 0x4, offset = 0x4, fixed_abs, tag = 'smem constant byte address 0x4 - core index']
  #allocation1 [shape = 'u32[144,128]{1,0:T(1,128)}', space=vmem, size = 0x12000, scoped, tag = 'internal scratch']
  %s0 = inlined_call_operand.vmem [shape: bf16[96,512], index: 0, kind: input, shape index: {}]
  %s1 = inlined_call_operand.vmem [shape: bf16[512,64], index: 1, kind: input, shape index: {}]
  %s2 = inlined_call_operand.vmem [shape: f32[1,64], index: 2, kind: input, shape index: {}]
  %s3 = inlined_call_operand.vmem [shape: bf16[96,64], index: 3, kind: output, shape index: {}]
  %s4 = sld [smem:[#allocation0]]
  $region45: #{model3layer_forward.5} parent=0
    _
  %s6 = ssub.s32 1, %s4
  %s7 = scalar_select 0, %s6, %s4
  loop: start=0, step=1, limit=4
  $region2: #{model3layer_forward.5} parent=0 // loop_pre_header
    _
  $region3: #{model3layer_forward.5} parent=0 // loop_header
    %s9 = sphi 0, %s13
    %p10 = scmp.ge.s32.totalorder %s9, 4
    %s19 = sphi 0, %s21
    %s22 = sphi 0, %s19
    %s23 = sphi 0, %s22
    %s39 = sphi 0, %s23
    %s43 = sphi 0, %s43
    %s45 = sphi 0, %s43
    %s46 = sphi 0, %s45
    %s60 = sphi 0, %s46
    %s64 = sphi 0, %s64
    %s66 = sphi 0, %s64
    %s67 = sphi 0, %s66
    %s81 = sphi 0, %s67
    %s87 = sphi 0, %s89
    %s90 = sphi 0, %s87
    %s91 = sphi 0, %s90
    %s107 = sphi 0, %s91
  $region4: #{model3layer_forward.5} parent=0 // loop_header_branch
    %12 = sbr.rel (%p10) target = $region8
  $region5: #{model3layer_forward.5} parent=0 // loop_body
    %s14 = ssub.s32 %s9, 1
    %s15 = ssub.s32 %s9, 2
    %s16 = sadd.s32 %s9, 1
    %s17 = ssub.s32 %s9, %s16
    %p18 = scmp.eq.s32.totalorder %s17, 0
    %s20 = sadd.s32 %s19, 1
    %s21 = scalar_select %p18, %s19, %s20
    %p24 = pneg %p18
    %p25 = scmp.eq.s32.totalorder %s9, 1
    %p26 = por %p24, %p25
    %p27 = scmp.ne.s32.totalorder %s19, %s22
    %p28 = scmp.eq.s32.totalorder %s9, 0
    %p29 = por %p27, %p28
    %p30 = scmp.ne.s32.totalorder %s19, %s22
    %p31 = scmp.eq.s32.totalorder %s14, 1
    %p32 = por %p30, %p31
    %p33 = scmp.ne.s32.totalorder %s22, %s23
    %p34 = scmp.eq.s32.totalorder %s14, 0
    %p35 = por %p33, %p34
    %p36 = scmp.ne.s32.totalorder %s22, %s23
    %p37 = scmp.eq.s32.totalorder %s15, 1
    %p38 = por %p36, %p37
    %p40 = scmp.ne.s32.totalorder %s23, %s39
    %p41 = scmp.eq.s32.totalorder %s15, 0
    %p42 = por %p40, %p41
    %s44 = sadd.s32 %s43, 1
    %p47 = scmp.eq.s32.totalorder %s9, 1
    %p48 = scmp.ne.s32.totalorder %s43, %s45
    %p49 = scmp.eq.s32.totalorder %s9, 0
    %p50 = por %p48, %p49
    %p51 = scmp.ne.s32.totalorder %s43, %s45
    %p52 = scmp.eq.s32.totalorder %s14, 1
    %p53 = por %p51, %p52
    %p54 = scmp.ne.s32.totalorder %s45, %s46
    %p55 = scmp.eq.s32.totalorder %s14, 0
    %p56 = por %p54, %p55
    %p57 = scmp.ne.s32.totalorder %s45, %s46
    %p58 = scmp.eq.s32.totalorder %s15, 1
    %p59 = por %p57, %p58
    %p61 = scmp.ne.s32.totalorder %s46, %s60
    %p62 = scmp.eq.s32.totalorder %s15, 0
    %p63 = por %p61, %p62
    %s65 = sadd.s32 %s64, 1
    %p68 = scmp.eq.s32.totalorder %s9, 1
    %p69 = scmp.ne.s32.totalorder %s64, %s66
    %p70 = scmp.eq.s32.totalorder %s9, 0
    %p71 = por %p69, %p70
    %p72 = scmp.ne.s32.totalorder %s64, %s66
    %p73 = scmp.eq.s32.totalorder %s14, 1
    %p74 = por %p72, %p73
    %p75 = scmp.ne.s32.totalorder %s66, %s67
    %p76 = scmp.eq.s32.totalorder %s14, 0
    %p77 = por %p75, %p76
    %p78 = scmp.ne.s32.totalorder %s66, %s67
    %p79 = scmp.eq.s32.totalorder %s15, 1
    %p80 = por %p78, %p79
    %p82 = scmp.ne.s32.totalorder %s67, %s81
    %p83 = scmp.eq.s32.totalorder %s15, 0
    %p84 = por %p82, %p83
    %s85 = ssub.s32 %s9, %s16
    %p86 = scmp.eq.s32.totalorder %s85, 0
    %s88 = sadd.s32 %s87, 1
    %s89 = scalar_select %p86, %s87, %s88
    %p92 = pneg %p86
    %p93 = scmp.eq.s32.totalorder %s9, 1
    %p94 = por %p92, %p93
    %p95 = scmp.ne.s32.totalorder %s87, %s90
    %p96 = scmp.eq.s32.totalorder %s9, 0
    %p97 = por %p95, %p96
    %p98 = scmp.ne.s32.totalorder %s87, %s90
    %p99 = scmp.eq.s32.totalorder %s14, 1
    %p100 = por %p98, %p99
    %p101 = scmp.ne.s32.totalorder %s90, %s91
    %p102 = scmp.eq.s32.totalorder %s14, 0
    %p103 = por %p101, %p102
    %p104 = scmp.ne.s32.totalorder %s90, %s91
    %p105 = scmp.eq.s32.totalorder %s15, 1
    %p106 = por %p104, %p105
    %p108 = scmp.ne.s32.totalorder %s91, %s107
    %p109 = scmp.eq.s32.totalorder %s15, 0
    %p110 = por %p108, %p109
    %p111 = scmp.le.s32.totalorder 1, %s9
    %p112 = scmp.lt.s32.totalorder %s9, 3
    %p113 = pnand %p111, %p112
    %p114 = pneg %p113
    // Predicated region
    $region9: #{model3layer_forward.5} parent=5 // pred_check
      _
    $region10: #{model3layer_forward.5} parent=5 // pred_check_branch
      %116 = sbr.rel (%p113) target = $region12
    $region11: #{model3layer_forward.5} parent=5 // pred_region
      %s117 = ssub.s32 %s9, 1
      // Predicated region
      $region13: #{model3layer_forward.5} parent=11 // pred_check
        %p118 = pneg %p56
      $region14: #{model3layer_forward.5} parent=11 // pred_check_branch
        %120 = sbr.rel (%p118) target = $region16
      $region15: #{model3layer_forward.5} parent=11 // pred_region
        _
      $region16: #{model3layer_forward.5} parent=11 // pred_fallthru
        _
      // Predicated region
      $region17: #{model3layer_forward.5} parent=11 // pred_check
        %p121 = pneg %p77
      $region18: #{model3layer_forward.5} parent=11 // pred_check_branch
        %123 = sbr.rel (%p121) target = $region20
      $region19: #{model3layer_forward.5} parent=11 // pred_region
        _
      $region20: #{model3layer_forward.5} parent=11 // pred_fallthru
        _
    $region12: #{model3layer_forward.5} parent=5 // pred_fallthru
      _
    %p124 = scmp.lt.s32.totalorder %s9, 2
    // Predicated region
    $region21: #{model3layer_forward.5} parent=5 // pred_check
      %p125 = pneg %p124
    $region22: #{model3layer_forward.5} parent=5 // pred_check_branch
      %127 = sbr.rel (%p125) target = $region24
    $region23: #{model3layer_forward.5} parent=5 // pred_region
      // Predicated region
      $region25: #{model3layer_forward.5} parent=23 // pred_check
        %p128 = pneg %p29
      $region26: #{model3layer_forward.5} parent=23 // pred_check_branch
        %130 = sbr.rel (%p128) target = $region28
      $region27: #{model3layer_forward.5} parent=23 // pred_region
        %s131 = smul.u32 6, %s9
        %p132 = scmp.lt.s32.totalorder %s131, 11
        %s133 = scalar_select %p132, %s131, 11
        %s134 = smul.addr %s133, 4
        %s135 = smul.addr %s134, 4
        %s136 = scalar_lea.vmem %s0, %s135
        %s137 = smul.u32 6, %s9
      $region28: #{model3layer_forward.5} parent=23 // pred_fallthru
        _
    $region24: #{model3layer_forward.5} parent=5 // pred_fallthru
      _
    %p138 = scmp.le.s32.totalorder 1, %s9
    %p139 = scmp.lt.s32.totalorder %s9, 3
    %p140 = pnand %p138, %p139
    %p141 = pneg %p140
    // Predicated region
    $region29: #{model3layer_forward.5} parent=5 // pred_check
      _
    $region30: #{model3layer_forward.5} parent=5 // pred_check_branch
      %143 = sbr.rel (%p140) target = $region32
    $region31: #{model3layer_forward.5} parent=5 // pred_region
      %s144 = ssub.s32 %s9, 1
      %s145 = smul.u32 6, %s14
      %p146 = scmp.lt.s32.totalorder %s145, 11
      %s147 = scalar_select %p146, %s145, 11
      %s148 = smul.addr %s147, 4
      %s149 = smul.addr %s148, 4
      %s150 = scalar_lea.vmem %s0, %s149
      %p151 = pneg %p35
      %p152 = pneg %p32
      %p153 = pneg %p56
      %p154 = pneg %p53
      %p155 = pneg %p77
      %p156 = pneg %p74
      %p157 = pneg %p103
      %p158 = pneg %p100
      %s159 = smul.u32 6, %s14
      %p160 = scmp.lt.s32.totalorder %s159, 11
      %s161 = scalar_select %p160, %s159, 11
      %s162 = smul.addr %s161, 4
      %s163 = scalar_lea.vmem %s3, %s162
      %s164 = smul.u32 6, %s14
      %p165 = scmp.lt.s32.totalorder %s164, 11
      %s166 = scalar_select %p165, %s164, 11
      %s167 = smul.addr %s166, 4
      %s168 = smul.addr %s167, 4
      %s169 = scalar_lea.vmem %s0, %s168
      %s170 = smul.u32 6, %s14
      %s171 = smul.u32 6, %s14
      %p172 = scmp.lt.s32.totalorder %s171, 11
      %s173 = scalar_select %p172, %s171, 11
      %s174 = smul.addr %s173, 4
      %s175 = scalar_lea.vmem %s3, %s174
      %s176 = smul.u32 6, %s14
      %v178 = vld [vmem:[%s169] sm:$0xff]
      %v179 = vld [vmem:[%s169 + $0x8] sm:$0xff]
      %v180 = vld [vmem:[%s169 + $0x10] sm:$0xff]
      %v181 = vld [vmem:[%s169 + $0x18] sm:$0xff]
      %v182 = vld [vmem:[%s169 + $0x20] sm:$0xff]
      %v183 = vld [vmem:[%s169 + $0x28] sm:$0xff]
      %v184 = vld [vmem:[%s169 + $0x30] sm:$0xff]
      %v185 = vld [vmem:[%s169 + $0x38] sm:$0xff]
      %v186 = vld [vmem:[%s169 + $0x40] sm:$0xff]
      %v187 = vld [vmem:[%s169 + $0x48] sm:$0xff]
      %v188 = vld [vmem:[%s169 + $0x50] sm:$0xff]
      %v189 = vld [vmem:[%s169 + $0x58] sm:$0xff]
      %v190 = vld [vmem:[%s1] sm:$0xf]
      %v191 = vld [vmem:[%s1 + $0x4] sm:$0xf]
      %v192 = vld [vmem:[%s1 + $0x8] sm:$0xf]
      %v193 = vld [vmem:[%s1 + $0xc] sm:$0xf]
      %v194 = vld [vmem:[%s1 + $0x10] sm:$0xf]
      %v195 = vld [vmem:[%s1 + $0x14] sm:$0xf]
      %v196 = vld [vmem:[%s1 + $0x18] sm:$0xf]
      %v197 = vld [vmem:[%s1 + $0x1c] sm:$0xf]
      %v198 = vld [vmem:[%s1 + $0x20] sm:$0xf]
      %v199 = vld [vmem:[%s1 + $0x24] sm:$0xf]
      %v200 = vld [vmem:[%s1 + $0x28] sm:$0xf]
      %v201 = vld [vmem:[%s1 + $0x2c] sm:$0xf]
      %v202 = vld [vmem:[%s1 + $0x30] sm:$0xf]
      %v203 = vld [vmem:[%s1 + $0x34] sm:$0xf]
      %v204 = vld [vmem:[%s1 + $0x38] sm:$0xf]
      %v205 = vld [vmem:[%s1 + $0x3c] sm:$0xf]
      %v206 = vld [vmem:[%s1 + $0x40] sm:$0xf]
      %v207 = vld [vmem:[%s1 + $0x44] sm:$0xf]
      %v208 = vld [vmem:[%s1 + $0x48] sm:$0xf]
      %v209 = vld [vmem:[%s1 + $0x4c] sm:$0xf]
      %v210 = vld [vmem:[%s1 + $0x50] sm:$0xf]
      %v211 = vld [vmem:[%s1 + $0x54] sm:$0xf]
      %v212 = vld [vmem:[%s1 + $0x58] sm:$0xf]
      %v213 = vld [vmem:[%s1 + $0x5c] sm:$0xf]
      %v214 = vld [vmem:[%s1 + $0x60] sm:$0xf]
      %v215 = vld [vmem:[%s1 + $0x64] sm:$0xf]
      %v216 = vld [vmem:[%s1 + $0x68] sm:$0xf]
      %v217 = vld [vmem:[%s1 + $0x6c] sm:$0xf]
      %v218 = vld [vmem:[%s1 + $0x70] sm:$0xf]
      %v219 = vld [vmem:[%s1 + $0x74] sm:$0xf]
      %v220 = vld [vmem:[%s1 + $0x78] sm:$0xf]
      %v221 = vld [vmem:[%s1 + $0x7c] sm:$0xf]
      %v222 = vld [vmem:[%s1 + $0x80] sm:$0xf]
      %v223 = vld [vmem:[%s1 + $0x84] sm:$0xf]
      %v224 = vld [vmem:[%s1 + $0x88] sm:$0xf]
      %v225 = vld [vmem:[%s1 + $0x8c] sm:$0xf]
      %v226 = vld [vmem:[%s1 + $0x90] sm:$0xf]
      %v227 = vld [vmem:[%s1 + $0x94] sm:$0xf]
      %v228 = vld [vmem:[%s1 + $0x98] sm:$0xf]
      %v229 = vld [vmem:[%s1 + $0x9c] sm:$0xf]
      %v230 = vld [vmem:[%s1 + $0xa0] sm:$0xf]
      %v231 = vld [vmem:[%s1 + $0xa4] sm:$0xf]
      %v232 = vld [vmem:[%s1 + $0xa8] sm:$0xf]
      %v233 = vld [vmem:[%s1 + $0xac] sm:$0xf]
      %v234 = vld [vmem:[%s1 + $0xb0] sm:$0xf]
      %v235 = vld [vmem:[%s1 + $0xb4] sm:$0xf]
      %v236 = vld [vmem:[%s1 + $0xb8] sm:$0xf]
      %v237 = vld [vmem:[%s1 + $0xbc] sm:$0xf]
      %v238 = vld [vmem:[%s1 + $0xc0] sm:$0xf]
      %v239 = vld [vmem:[%s1 + $0xc4] sm:$0xf]
      %v240 = vld [vmem:[%s1 + $0xc8] sm:$0xf]
      %v241 = vld [vmem:[%s1 + $0xcc] sm:$0xf]
      %v242 = vld [vmem:[%s1 + $0xd0] sm:$0xf]
      %v243 = vld [vmem:[%s1 + $0xd4] sm:$0xf]
      %v244 = vld [vmem:[%s1 + $0xd8] sm:$0xf]
      %v245 = vld [vmem:[%s1 + $0xdc] sm:$0xf]
      %v246 = vld [vmem:[%s1 + $0xe0] sm:$0xf]
      %v247 = vld [vmem:[%s1 + $0xe4] sm:$0xf]
      %v248 = vld [vmem:[%s1 + $0xe8] sm:$0xf]
      %v249 = vld [vmem:[%s1 + $0xec] sm:$0xf]
      %v250 = vld [vmem:[%s1 + $0xf0] sm:$0xf]
      %v251 = vld [vmem:[%s1 + $0xf4] sm:$0xf]
      %v252 = vld [vmem:[%s1 + $0xf8] sm:$0xf]
      %v253 = vld [vmem:[%s1 + $0xfc] sm:$0xf]
      %v254 = vld [vmem:[%s2] sm:$0x1]
      %v256 = vlaneseq
      %v257 = vshrl.u32 %v256, 7
      %v258 = vsub.s32 0, %v257
      %v259 = vrot.slane %v254, %v258
      %v273 = vunpack.c.l.b16 %v178
      %v274 = vunpack.c.h.b16 %v178
      %v275 = vunpack.c.l.b16 %v179
      %v276 = vunpack.c.h.b16 %v179
      %v277 = vunpack.c.l.b16 %v180
      %v278 = vunpack.c.h.b16 %v180
      %v279 = vunpack.c.l.b16 %v181
      %v280 = vunpack.c.h.b16 %v181
      %v281 = vunpack.c.l.b16 %v182
      %v282 = vunpack.c.h.b16 %v182
      %v283 = vunpack.c.l.b16 %v183
      %v284 = vunpack.c.h.b16 %v183
      %v285 = vunpack.c.l.b16 %v184
      %v286 = vunpack.c.h.b16 %v184
      %v287 = vunpack.c.l.b16 %v185
      %v288 = vunpack.c.h.b16 %v185
      %v289 = vunpack.c.l.b16 %v186
      %v290 = vunpack.c.h.b16 %v186
      %v291 = vunpack.c.l.b16 %v187
      %v292 = vunpack.c.h.b16 %v187
      %v293 = vunpack.c.l.b16 %v188
      %v294 = vunpack.c.h.b16 %v188
      %v295 = vunpack.c.l.b16 %v189
      %v296 = vunpack.c.h.b16 %v189
      %v297 = vpack.c.b16 %v277, %v273
      %v298 = vpack.c.b16 %v278, %v274
      %v299 = vpack.c.b16 %v279, %v275
      %v300 = vpack.c.b16 %v280, %v276
      %v301 = vpack.c.b16 %v285, %v281
      %v302 = vpack.c.b16 %v286, %v282
      %v303 = vpack.c.b16 %v287, %v283
      %v304 = vpack.c.b16 %v288, %v284
      %v305 = vpack.c.b16 %v293, %v289
      %v306 = vpack.c.b16 %v294, %v290
      %v307 = vpack.c.b16 %v295, %v291
      %v308 = vpack.c.b16 %v296, %v292
      %v385 = vunpack.c.l.b16 %v190
      %v386 = vunpack.c.l.b16 %v191
      %v387 = vunpack.c.l.b16 %v192
      %v388 = vunpack.c.l.b16 %v193
      %v389 = vunpack.c.l.b16 %v194
      %v390 = vunpack.c.l.b16 %v195
      %v391 = vunpack.c.l.b16 %v196
      %v392 = vunpack.c.l.b16 %v197
      %v393 = vunpack.c.l.b16 %v198
      %v394 = vunpack.c.l.b16 %v199
      %v395 = vunpack.c.l.b16 %v200
      %v396 = vunpack.c.l.b16 %v201
      %v397 = vunpack.c.l.b16 %v202
      %v398 = vunpack.c.l.b16 %v203
      %v399 = vunpack.c.l.b16 %v204
      %v400 = vunpack.c.l.b16 %v205
      %v401 = vunpack.c.l.b16 %v206
      %v402 = vunpack.c.l.b16 %v207
      %v403 = vunpack.c.l.b16 %v208
      %v404 = vunpack.c.l.b16 %v209
      %v405 = vunpack.c.l.b16 %v210
      %v406 = vunpack.c.l.b16 %v211
      %v407 = vunpack.c.l.b16 %v212
      %v408 = vunpack.c.l.b16 %v213
      %v409 = vunpack.c.l.b16 %v214
      %v410 = vunpack.c.l.b16 %v215
      %v411 = vunpack.c.l.b16 %v216
      %v412 = vunpack.c.l.b16 %v217
      %v413 = vunpack.c.l.b16 %v218
      %v414 = vunpack.c.l.b16 %v219
      %v415 = vunpack.c.l.b16 %v220
      %v416 = vunpack.c.l.b16 %v221
      %v417 = vunpack.c.l.b16 %v222
      %v418 = vunpack.c.l.b16 %v223
      %v419 = vunpack.c.l.b16 %v224
      %v420 = vunpack.c.l.b16 %v225
      %v421 = vunpack.c.l.b16 %v226
      %v422 = vunpack.c.l.b16 %v227
      %v423 = vunpack.c.l.b16 %v228
      %v424 = vunpack.c.l.b16 %v229
      %v425 = vunpack.c.l.b16 %v230
      %v426 = vunpack.c.l.b16 %v231
      %v427 = vunpack.c.l.b16 %v232
      %v428 = vunpack.c.l.b16 %v233
      %v429 = vunpack.c.l.b16 %v234
      %v430 = vunpack.c.l.b16 %v235
      %v431 = vunpack.c.l.b16 %v236
      %v432 = vunpack.c.l.b16 %v237
      %v433 = vunpack.c.l.b16 %v238
      %v434 = vunpack.c.l.b16 %v239
      %v435 = vunpack.c.l.b16 %v240
      %v436 = vunpack.c.l.b16 %v241
      %v437 = vunpack.c.l.b16 %v242
      %v438 = vunpack.c.l.b16 %v243
      %v439 = vunpack.c.l.b16 %v244
      %v440 = vunpack.c.l.b16 %v245
      %v441 = vunpack.c.l.b16 %v246
      %v442 = vunpack.c.l.b16 %v247
      %v443 = vunpack.c.l.b16 %v248
      %v444 = vunpack.c.l.b16 %v249
      %v445 = vunpack.c.l.b16 %v250
      %v446 = vunpack.c.l.b16 %v251
      %v447 = vunpack.c.l.b16 %v252
      %v448 = vunpack.c.l.b16 %v253
      %v449 = vpack.c.b16 %v386, %v385
      %v450 = vpack.c.b16 %v388, %v387
      %v451 = vpack.c.b16 %v390, %v389
      %v452 = vpack.c.b16 %v392, %v391
      %v453 = vpack.c.b16 %v394, %v393
      %v454 = vpack.c.b16 %v396, %v395
      %v455 = vpack.c.b16 %v398, %v397
      %v456 = vpack.c.b16 %v400, %v399
      %v457 = vpack.c.b16 %v402, %v401
      %v458 = vpack.c.b16 %v404, %v403
      %v459 = vpack.c.b16 %v406, %v405
      %v460 = vpack.c.b16 %v408, %v407
      %v461 = vpack.c.b16 %v410, %v409
      %v462 = vpack.c.b16 %v412, %v411
      %v463 = vpack.c.b16 %v414, %v413
      %v464 = vpack.c.b16 %v416, %v415
      %v465 = vpack.c.b16 %v418, %v417
      %v466 = vpack.c.b16 %v420, %v419
      %v467 = vpack.c.b16 %v422, %v421
      %v468 = vpack.c.b16 %v424, %v423
      %v469 = vpack.c.b16 %v426, %v425
      %v470 = vpack.c.b16 %v428, %v427
      %v471 = vpack.c.b16 %v430, %v429
      %v472 = vpack.c.b16 %v432, %v431
      %v473 = vpack.c.b16 %v434, %v433
      %v474 = vpack.c.b16 %v436, %v435
      %v475 = vpack.c.b16 %v438, %v437
      %v476 = vpack.c.b16 %v440, %v439
      %v477 = vpack.c.b16 %v442, %v441
      %v478 = vpack.c.b16 %v444, %v443
      %v479 = vpack.c.b16 %v446, %v445
      %v480 = vpack.c.b16 %v448, %v447
      %513 = vmatprep.subr.bf16.mxu0 0
      %514 = vmatpush1.bf16.msra.mxu0 %v449
      %515 = vmatprep.subr.bf16.mxu0 0
      %516 = vmatpush1.bf16.msra.mxu0 %v450
      %517 = vmatprep.subr.bf16.mxu0 0
      %518 = vmatpush1.bf16.msra.mxu0 %v451
      %519 = vmatprep.subr.bf16.mxu0 0
      %520 = vmatpush1.bf16.msra.mxu0 %v452
      %521 = vmatprep.subr.bf16.mxu0 0
      %522 = vmatpush1.bf16.msra.mxu0 %v453
      %523 = vmatprep.subr.bf16.mxu0 0
      %524 = vmatpush1.bf16.msra.mxu0 %v454
      %525 = vmatprep.subr.bf16.mxu0 0
      %526 = vmatpush1.bf16.msra.mxu0 %v455
      %527 = vmatprep.subr.bf16.mxu0 0
      %528 = vmatpush1.bf16.msra.mxu0 %v456
      %529 = vmatprep.subr.bf16.mxu0 0
      %530 = vmatpush1.bf16.msra.mxu0 %v457
      %531 = vmatprep.subr.bf16.mxu0 0
      %532 = vmatpush1.bf16.msra.mxu0 %v458
      %533 = vmatprep.subr.bf16.mxu0 0
      %534 = vmatpush1.bf16.msra.mxu0 %v459
      %535 = vmatprep.subr.bf16.mxu0 0
      %536 = vmatpush1.bf16.msra.mxu0 %v460
      %537 = vmatprep.subr.bf16.mxu0 0
      %538 = vmatpush1.bf16.msra.mxu0 %v461
      %539 = vmatprep.subr.bf16.mxu0 0
      %540 = vmatpush1.bf16.msra.mxu0 %v462
      %541 = vmatprep.subr.bf16.mxu0 0
      %542 = vmatpush1.bf16.msra.mxu0 %v463
      %543 = vmatprep.subr.bf16.mxu0 0
      %544 = vmatpush1.bf16.msra.mxu0 %v464
      %545 = vmatprep.mubr.bf16.mxu0 %v298
      %546 = vmatmul.mubr.bf16.gmra.mrb[0].mxu0 %v297
      %v547 = vpop.f32.mrb[0].mxu0
      %v548 = vadd.f32 %v259, %v547
      %v549 = vpop.f32.mrb[0].mxu0
      %v550 = vpop.f32.mrb[0].mxu0
      %v551 = vadd.f32 %v259, %v550
      %v552 = vpop.f32.mrb[0].mxu0
      %553 = vmatprep.mubr.bf16.mxu0 %v302
      %554 = vmatmul.mubr.bf16.gmra.mrb[0].mxu0 %v301
      %v555 = vpop.f32.mrb[0].mxu0
      %v556 = vadd.f32 %v259, %v555
      %v557 = vpop.f32.mrb[0].mxu0
      %v558 = vpop.f32.mrb[0].mxu0
      %v559 = vadd.f32 %v259, %v558
      %v560 = vpop.f32.mrb[0].mxu0
      %561 = vmatprep.mubr.bf16.mxu0 %v306
      %562 = vmatmul.mubr.bf16.gmra.mrb[0].mxu0 %v305
      %v563 = vpop.f32.mrb[0].mxu0
      %v564 = vadd.f32 %v259, %v563
      %v565 = vpop.f32.mrb[0].mxu0
      %v566 = vpop.f32.mrb[0].mxu0
      %v567 = vadd.f32 %v259, %v566
      %v568 = vpop.f32.mrb[0].mxu0
      %569 = vdwg.mxu0
      %570 = vmatprep.subr.bf16.mxu0 0
      %571 = vmatpush1.bf16.msra.mxu0 %v465
      %572 = vmatprep.subr.bf16.mxu0 0
      %573 = vmatpush1.bf16.msra.mxu0 %v466
      %574 = vmatprep.subr.bf16.mxu0 0
      %575 = vmatpush1.bf16.msra.mxu0 %v467
      %576 = vmatprep.subr.bf16.mxu0 0
      %577 = vmatpush1.bf16.msra.mxu0 %v468
      %578 = vmatprep.subr.bf16.mxu0 0
      %579 = vmatpush1.bf16.msra.mxu0 %v469
      %580 = vmatprep.subr.bf16.mxu0 0
      %581 = vmatpush1.bf16.msra.mxu0 %v470
      %582 = vmatprep.subr.bf16.mxu0 0
      %583 = vmatpush1.bf16.msra.mxu0 %v471
      %584 = vmatprep.subr.bf16.mxu0 0
      %585 = vmatpush1.bf16.msra.mxu0 %v472
      %586 = vmatprep.subr.bf16.mxu0 0
      %587 = vmatpush1.bf16.msra.mxu0 %v473
      %588 = vmatprep.subr.bf16.mxu0 0
      %589 = vmatpush1.bf16.msra.mxu0 %v474
      %590 = vmatprep.subr.bf16.mxu0 0
      %591 = vmatpush1.bf16.msra.mxu0 %v475
      %592 = vmatprep.subr.bf16.mxu0 0
      %593 = vmatpush1.bf16.msra.mxu0 %v476
      %594 = vmatprep.subr.bf16.mxu0 0
      %595 = vmatpush1.bf16.msra.mxu0 %v477
      %596 = vmatprep.subr.bf16.mxu0 0
      %597 = vmatpush1.bf16.msra.mxu0 %v478
      %598 = vmatprep.subr.bf16.mxu0 0
      %599 = vmatpush1.bf16.msra.mxu0 %v479
      %600 = vmatprep.subr.bf16.mxu0 0
      %601 = vmatpush1.bf16.msra.mxu0 %v480
      %602 = vmatprep.mubr.bf16.mxu0 %v300
      %603 = vmatmul.mubr.bf16.gmra.mrb[0].mxu0 %v299
      %v604 = vpop.f32.mrb[0].mxu0
      %v605 = vadd.f32 %v548, %v604
      %v606 = vpop.f32.mrb[0].mxu0
      %v607 = vpop.f32.mrb[0].mxu0
      %v608 = vadd.f32 %v551, %v607
      %v609 = vpop.f32.mrb[0].mxu0
      %610 = vmatprep.mubr.bf16.mxu0 %v304
      %611 = vmatmul.mubr.bf16.gmra.mrb[0].mxu0 %v303
      %v612 = vpop.f32.mrb[0].mxu0
      %v613 = vadd.f32 %v556, %v612
      %v614 = vpop.f32.mrb[0].mxu0
      %v615 = vpop.f32.mrb[0].mxu0
      %v616 = vadd.f32 %v559, %v615
      %v617 = vpop.f32.mrb[0].mxu0
      %618 = vmatprep.mubr.bf16.mxu0 %v308
      %619 = vmatmul.mubr.bf16.gmra.mrb[0].mxu0 %v307
      %v620 = vpop.f32.mrb[0].mxu0
      %v621 = vadd.f32 %v564, %v620
      %v622 = vpop.f32.mrb[0].mxu0
      %v623 = vpop.f32.mrb[0].mxu0
      %v624 = vadd.f32 %v567, %v623
      %v625 = vpop.f32.mrb[0].mxu0
      %626 = vdwg.mxu0
      %v627 = vmax.f32 %v605, 0.0
      %v628 = vmax.f32 %v608, 0.0
      %v629 = vmax.f32 %v613, 0.0
      %v630 = vmax.f32 %v616, 0.0
      %v631 = vmax.f32 %v621, 0.0
      %v632 = vmax.f32 %v624, 0.0
      %v633 = vpack.c.bf16 %v628, %v627
      %v634 = vpack.c.bf16 %v630, %v629
      %v635 = vpack.c.bf16 %v632, %v631
      %v639 = vunpack.c.l.b16 %v633
      %v640 = vunpack.c.h.b16 %v633
      %v641 = vunpack.c.l.b16 %v634
      %v642 = vunpack.c.h.b16 %v634
      %v643 = vunpack.c.l.b16 %v635
      %v644 = vunpack.c.h.b16 %v635
      %v645 = vpack.c.b16 %v639, %v639
      %v646 = vpack.c.b16 %v640, %v640
      %v647 = vpack.c.b16 %v641, %v641
      %v648 = vpack.c.b16 %v642, %v642
      %v649 = vpack.c.b16 %v643, %v643
      %v650 = vpack.c.b16 %v644, %v644
      %vm657 = vcmask 519168
      %658 = vst.msk [vmem:[%s175] sm:$0xf] %vm657, %v645
      %659 = vst.msk [vmem:[%s175 + $0x4] sm:$0xf] %vm657, %v646
      %660 = vst.msk [vmem:[%s175 + $0x8] sm:$0xf] %vm657, %v647
      %661 = vst.msk [vmem:[%s175 + $0xc] sm:$0xf] %vm657, %v648
      %662 = vst.msk [vmem:[%s175 + $0x10] sm:$0xf] %vm657, %v649
      %663 = vst.msk [vmem:[%s175 + $0x14] sm:$0xf] %vm657, %v650
      %s664 = smul.u32 6, %s14
      %p665 = scmp.lt.s32.totalorder %s664, 11
      %s666 = scalar_select %p665, %s664, 11
      %s667 = smul.addr %s666, 4
      %s668 = scalar_lea.vmem %s3, %s667
      // Predicated region
      $region33: #{model3layer_forward.5} parent=31 // pred_check
        %p669 = pneg %p100
      $region34: #{model3layer_forward.5} parent=31 // pred_check_branch
        %671 = sbr.rel (%p669) target = $region36
      $region35: #{model3layer_forward.5} parent=31 // pred_region
        %s672 = smul.u32 6, %s14
      $region36: #{model3layer_forward.5} parent=31 // pred_fallthru
        _
    $region32: #{model3layer_forward.5} parent=5 // pred_fallthru
      _
    %p673 = scmp.le.s32.totalorder 2, %s9
    // Predicated region
    $region37: #{model3layer_forward.5} parent=5 // pred_check
      %p674 = pneg %p673
    $region38: #{model3layer_forward.5} parent=5 // pred_check_branch
      %676 = sbr.rel (%p674) target = $region40
    $region39: #{model3layer_forward.5} parent=5 // pred_region
      %s677 = ssub.s32 %s9, 2
      // Predicated region
      $region41: #{model3layer_forward.5} parent=39 // pred_check
        %p678 = pneg %p106
      $region42: #{model3layer_forward.5} parent=39 // pred_check_branch
        %680 = sbr.rel (%p678) target = $region44
      $region43: #{model3layer_forward.5} parent=39 // pred_region
        %s681 = smul.u32 6, %s15
        %p682 = scmp.lt.s32.totalorder %s681, 11
        %s683 = scalar_select %p682, %s681, 11
        %s684 = smul.addr %s683, 4
        %s685 = scalar_lea.vmem %s3, %s684
      $region44: #{model3layer_forward.5} parent=39 // pred_fallthru
        _
    $region40: #{model3layer_forward.5} parent=5 // pred_fallthru
      _
  $region6: #{model3layer_forward.5} parent=0 // loop_footer
    %s13 = sadd.s32 1, %s9
  $region7: #{model3layer_forward.5} parent=0 // loop_footer_branch
    %8 = sbr.rel target = $region3
  $region8: #{model3layer_forward.5} parent=0 // loop_exit
    _

// kernel: model3layer_forward.6
$region0: #{model3layer_forward.6}
  #allocation0 [shape = 'u32[]', space=smem, size = 0x4, offset = 0x4, fixed_abs, tag = 'smem constant byte address 0x4 - core index']
  #allocation1 [shape = 'u32[144,128]{1,0:T(1,128)}', space=vmem, size = 0x12000, scoped, tag = 'internal scratch']
  %s0 = inlined_call_operand.vmem [shape: bf16[64,576], index: 0, kind: input, shape index: {}]
  %s1 = inlined_call_operand.vmem [shape: bf16[576,64], index: 1, kind: input, shape index: {}]
  %s2 = inlined_call_operand.vmem [shape: f32[1,64], index: 2, kind: input, shape index: {}]
  %s3 = inlined_call_operand.vmem [shape: bf16[64,64], index: 3, kind: output, shape index: {}]
  %s4 = sld [smem:[#allocation0]]
  $region45: #{model3layer_forward.6} parent=0
    _
  %s6 = ssub.s32 1, %s4
  %s7 = scalar_select 0, %s6, %s4
  loop: start=0, step=1, limit=4
  $region2: #{model3layer_forward.6} parent=0 // loop_pre_header
    _
  $region3: #{model3layer_forward.6} parent=0 // loop_header
    %s9 = sphi 0, %s13
    %p10 = scmp.ge.s32.totalorder %s9, 4
    %s19 = sphi 0, %s21
    %s22 = sphi 0, %s19
    %s23 = sphi 0, %s22
    %s39 = sphi 0, %s23
    %s43 = sphi 0, %s43
    %s45 = sphi 0, %s43
    %s46 = sphi 0, %s45
    %s60 = sphi 0, %s46
    %s64 = sphi 0, %s64
    %s66 = sphi 0, %s64
    %s67 = sphi 0, %s66
    %s81 = sphi 0, %s67
    %s87 = sphi 0, %s89
    %s90 = sphi 0, %s87
    %s91 = sphi 0, %s90
    %s107 = sphi 0, %s91
  $region4: #{model3layer_forward.6} parent=0 // loop_header_branch
    %12 = sbr.rel (%p10) target = $region8
  $region5: #{model3layer_forward.6} parent=0 // loop_body
    %s14 = ssub.s32 %s9, 1
    %s15 = ssub.s32 %s9, 2
    %s16 = sadd.s32 %s9, 1
    %s17 = ssub.s32 %s9, %s16
    %p18 = scmp.eq.s32.totalorder %s17, 0
    %s20 = sadd.s32 %s19, 1
    %s21 = scalar_select %p18, %s19, %s20
    %p24 = pneg %p18
    %p25 = scmp.eq.s32.totalorder %s9, 1
    %p26 = por %p24, %p25
    %p27 = scmp.ne.s32.totalorder %s19, %s22
    %p28 = scmp.eq.s32.totalorder %s9, 0
    %p29 = por %p27, %p28
    %p30 = scmp.ne.s32.totalorder %s19, %s22
    %p31 = scmp.eq.s32.totalorder %s14, 1
    %p32 = por %p30, %p31
    %p33 = scmp.ne.s32.totalorder %s22, %s23
    %p34 = scmp.eq.s32.totalorder %s14, 0
    %p35 = por %p33, %p34
    %p36 = scmp.ne.s32.totalorder %s22, %s23
    %p37 = scmp.eq.s32.totalorder %s15, 1
    %p38 = por %p36, %p37
    %p40 = scmp.ne.s32.totalorder %s23, %s39
    %p41 = scmp.eq.s32.totalorder %s15, 0
    %p42 = por %p40, %p41
    %s44 = sadd.s32 %s43, 1
    %p47 = scmp.eq.s32.totalorder %s9, 1
    %p48 = scmp.ne.s32.totalorder %s43, %s45
    %p49 = scmp.eq.s32.totalorder %s9, 0
    %p50 = por %p48, %p49
    %p51 = scmp.ne.s32.totalorder %s43, %s45
    %p52 = scmp.eq.s32.totalorder %s14, 1
    %p53 = por %p51, %p52
    %p54 = scmp.ne.s32.totalorder %s45, %s46
    %p55 = scmp.eq.s32.totalorder %s14, 0
    %p56 = por %p54, %p55
    %p57 = scmp.ne.s32.totalorder %s45, %s46
    %p58 = scmp.eq.s32.totalorder %s15, 1
    %p59 = por %p57, %p58
    %p61 = scmp.ne.s32.totalorder %s46, %s60
    %p62 = scmp.eq.s32.totalorder %s15, 0
    %p63 = por %p61, %p62
    %s65 = sadd.s32 %s64, 1
    %p68 = scmp.eq.s32.totalorder %s9, 1
    %p69 = scmp.ne.s32.totalorder %s64, %s66
    %p70 = scmp.eq.s32.totalorder %s9, 0
    %p71 = por %p69, %p70
    %p72 = scmp.ne.s32.totalorder %s64, %s66
    %p73 = scmp.eq.s32.totalorder %s14, 1
    %p74 = por %p72, %p73
    %p75 = scmp.ne.s32.totalorder %s66, %s67
    %p76 = scmp.eq.s32.totalorder %s14, 0
    %p77 = por %p75, %p76
    %p78 = scmp.ne.s32.totalorder %s66, %s67
    %p79 = scmp.eq.s32.totalorder %s15, 1
    %p80 = por %p78, %p79
    %p82 = scmp.ne.s32.totalorder %s67, %s81
    %p83 = scmp.eq.s32.totalorder %s15, 0
    %p84 = por %p82, %p83
    %s85 = ssub.s32 %s9, %s16
    %p86 = scmp.eq.s32.totalorder %s85, 0
    %s88 = sadd.s32 %s87, 1
    %s89 = scalar_select %p86, %s87, %s88
    %p92 = pneg %p86
    %p93 = scmp.eq.s32.totalorder %s9, 1
    %p94 = por %p92, %p93
    %p95 = scmp.ne.s32.totalorder %s87, %s90
    %p96 = scmp.eq.s32.totalorder %s9, 0
    %p97 = por %p95, %p96
    %p98 = scmp.ne.s32.totalorder %s87, %s90
    %p99 = scmp.eq.s32.totalorder %s14, 1
    %p100 = por %p98, %p99
    %p101 = scmp.ne.s32.totalorder %s90, %s91
    %p102 = scmp.eq.s32.totalorder %s14, 0
    %p103 = por %p101, %p102
    %p104 = scmp.ne.s32.totalorder %s90, %s91
    %p105 = scmp.eq.s32.totalorder %s15, 1
    %p106 = por %p104, %p105
    %p108 = scmp.ne.s32.totalorder %s91, %s107
    %p109 = scmp.eq.s32.totalorder %s15, 0
    %p110 = por %p108, %p109
    %p111 = scmp.le.s32.totalorder 1, %s9
    %p112 = scmp.lt.s32.totalorder %s9, 3
    %p113 = pnand %p111, %p112
    %p114 = pneg %p113
    // Predicated region
    $region9: #{model3layer_forward.6} parent=5 // pred_check
      _
    $region10: #{model3layer_forward.6} parent=5 // pred_check_branch
      %116 = sbr.rel (%p113) target = $region12
    $region11: #{model3layer_forward.6} parent=5 // pred_region
      %s117 = ssub.s32 %s9, 1
      // Predicated region
      $region13: #{model3layer_forward.6} parent=11 // pred_check
        %p118 = pneg %p56
      $region14: #{model3layer_forward.6} parent=11 // pred_check_branch
        %120 = sbr.rel (%p118) target = $region16
      $region15: #{model3layer_forward.6} parent=11 // pred_region
        _
      $region16: #{model3layer_forward.6} parent=11 // pred_fallthru
        _
      // Predicated region
      $region17: #{model3layer_forward.6} parent=11 // pred_check
        %p121 = pneg %p77
      $region18: #{model3layer_forward.6} parent=11 // pred_check_branch
        %123 = sbr.rel (%p121) target = $region20
      $region19: #{model3layer_forward.6} parent=11 // pred_region
        _
      $region20: #{model3layer_forward.6} parent=11 // pred_fallthru
        _
    $region12: #{model3layer_forward.6} parent=5 // pred_fallthru
      _
    %p124 = scmp.lt.s32.totalorder %s9, 2
    // Predicated region
    $region21: #{model3layer_forward.6} parent=5 // pred_check
      %p125 = pneg %p124
    $region22: #{model3layer_forward.6} parent=5 // pred_check_branch
      %127 = sbr.rel (%p125) target = $region24
    $region23: #{model3layer_forward.6} parent=5 // pred_region
      // Predicated region
      $region25: #{model3layer_forward.6} parent=23 // pred_check
        %p128 = pneg %p29
      $region26: #{model3layer_forward.6} parent=23 // pred_check_branch
        %130 = sbr.rel (%p128) target = $region28
      $region27: #{model3layer_forward.6} parent=23 // pred_region
        %s131 = smul.u32 4, %s9
        %p132 = scmp.lt.s32.totalorder %s131, 7
        %s133 = scalar_select %p132, %s131, 7
        %s134 = smul.addr %s133, 5
        %s135 = smul.addr %s134, 4
        %s136 = scalar_lea.vmem %s0, %s135
        %s137 = smul.u32 4, %s9
      $region28: #{model3layer_forward.6} parent=23 // pred_fallthru
        _
    $region24: #{model3layer_forward.6} parent=5 // pred_fallthru
      _
    %p138 = scmp.le.s32.totalorder 1, %s9
    %p139 = scmp.lt.s32.totalorder %s9, 3
    %p140 = pnand %p138, %p139
    %p141 = pneg %p140
    // Predicated region
    $region29: #{model3layer_forward.6} parent=5 // pred_check
      _
    $region30: #{model3layer_forward.6} parent=5 // pred_check_branch
      %143 = sbr.rel (%p140) target = $region32
    $region31: #{model3layer_forward.6} parent=5 // pred_region
      %s144 = ssub.s32 %s9, 1
      %s145 = smul.u32 4, %s14
      %p146 = scmp.lt.s32.totalorder %s145, 7
      %s147 = scalar_select %p146, %s145, 7
      %s148 = smul.addr %s147, 5
      %s149 = smul.addr %s148, 4
      %s150 = scalar_lea.vmem %s0, %s149
      %p151 = pneg %p35
      %p152 = pneg %p32
      %p153 = pneg %p56
      %p154 = pneg %p53
      %p155 = pneg %p77
      %p156 = pneg %p74
      %p157 = pneg %p103
      %p158 = pneg %p100
      %s159 = smul.u32 4, %s14
      %p160 = scmp.lt.s32.totalorder %s159, 7
      %s161 = scalar_select %p160, %s159, 7
      %s162 = smul.addr %s161, 4
      %s163 = scalar_lea.vmem %s3, %s162
      %s164 = smul.u32 4, %s14
      %p165 = scmp.lt.s32.totalorder %s164, 7
      %s166 = scalar_select %p165, %s164, 7
      %s167 = smul.addr %s166, 5
      %s168 = smul.addr %s167, 4
      %s169 = scalar_lea.vmem %s0, %s168
      %s170 = smul.u32 4, %s14
      %s171 = smul.u32 4, %s14
      %p172 = scmp.lt.s32.totalorder %s171, 7
      %s173 = scalar_select %p172, %s171, 7
      %s174 = smul.addr %s173, 4
      %s175 = scalar_lea.vmem %s3, %s174
      %s176 = smul.u32 4, %s14
      %v178 = vld [vmem:[%s169] sm:$0xff]
      %v179 = vld [vmem:[%s169 + $0x8] sm:$0xff]
      %v180 = vld [vmem:[%s169 + $0x10] sm:$0xf]
      %v181 = vld [vmem:[%s169 + $0x14] sm:$0xff]
      %v182 = vld [vmem:[%s169 + $0x1c] sm:$0xff]
      %v183 = vld [vmem:[%s169 + $0x24] sm:$0xf]
      %v184 = vld [vmem:[%s169 + $0x28] sm:$0xff]
      %v185 = vld [vmem:[%s169 + $0x30] sm:$0xff]
      %v186 = vld [vmem:[%s169 + $0x38] sm:$0xf]
      %v187 = vld [vmem:[%s169 + $0x3c] sm:$0xff]
      %v188 = vld [vmem:[%s169 + $0x44] sm:$0xff]
      %v189 = vld [vmem:[%s169 + $0x4c] sm:$0xf]
      %v190 = vld [vmem:[%s1] sm:$0xf]
      %v191 = vld [vmem:[%s1 + $0x4] sm:$0xf]
      %v192 = vld [vmem:[%s1 + $0x8] sm:$0xf]
      %v193 = vld [vmem:[%s1 + $0xc] sm:$0xf]
      %v194 = vld [vmem:[%s1 + $0x10] sm:$0xf]
      %v195 = vld [vmem:[%s1 + $0x14] sm:$0xf]
      %v196 = vld [vmem:[%s1 + $0x18] sm:$0xf]
      %v197 = vld [vmem:[%s1 + $0x1c] sm:$0xf]
      %v198 = vld [vmem:[%s1 + $0x20] sm:$0xf]
      %v199 = vld [vmem:[%s1 + $0x24] sm:$0xf]
      %v200 = vld [vmem:[%s1 + $0x28] sm:$0xf]
      %v201 = vld [vmem:[%s1 + $0x2c] sm:$0xf]
      %v202 = vld [vmem:[%s1 + $0x30] sm:$0xf]
      %v203 = vld [vmem:[%s1 + $0x34] sm:$0xf]
      %v204 = vld [vmem:[%s1 + $0x38] sm:$0xf]
      %v205 = vld [vmem:[%s1 + $0x3c] sm:$0xf]
      %v206 = vld [vmem:[%s1 + $0x40] sm:$0xf]
      %v207 = vld [vmem:[%s1 + $0x44] sm:$0xf]
      %v208 = vld [vmem:[%s1 + $0x48] sm:$0xf]
      %v209 = vld [vmem:[%s1 + $0x4c] sm:$0xf]
      %v210 = vld [vmem:[%s1 + $0x50] sm:$0xf]
      %v211 = vld [vmem:[%s1 + $0x54] sm:$0xf]
      %v212 = vld [vmem:[%s1 + $0x58] sm:$0xf]
      %v213 = vld [vmem:[%s1 + $0x5c] sm:$0xf]
      %v214 = vld [vmem:[%s1 + $0x60] sm:$0xf]
      %v215 = vld [vmem:[%s1 + $0x64] sm:$0xf]
      %v216 = vld [vmem:[%s1 + $0x68] sm:$0xf]
      %v217 = vld [vmem:[%s1 + $0x6c] sm:$0xf]
      %v218 = vld [vmem:[%s1 + $0x70] sm:$0xf]
      %v219 = vld [vmem:[%s1 + $0x74] sm:$0xf]
      %v220 = vld [vmem:[%s1 + $0x78] sm:$0xf]
      %v221 = vld [vmem:[%s1 + $0x7c] sm:$0xf]
      %v222 = vld [vmem:[%s1 + $0x80] sm:$0xf]
      %v223 = vld [vmem:[%s1 + $0x84] sm:$0xf]
      %v224 = vld [vmem:[%s1 + $0x88] sm:$0xf]
      %v225 = vld [vmem:[%s1 + $0x8c] sm:$0xf]
      %v226 = vld [vmem:[%s1 + $0x90] sm:$0xf]
      %v227 = vld [vmem:[%s1 + $0x94] sm:$0xf]
      %v228 = vld [vmem:[%s1 + $0x98] sm:$0xf]
      %v229 = vld [vmem:[%s1 + $0x9c] sm:$0xf]
      %v230 = vld [vmem:[%s1 + $0xa0] sm:$0xf]
      %v231 = vld [vmem:[%s1 + $0xa4] sm:$0xf]
      %v232 = vld [vmem:[%s1 + $0xa8] sm:$0xf]
      %v233 = vld [vmem:[%s1 + $0xac] sm:$0xf]
      %v234 = vld [vmem:[%s1 + $0xb0] sm:$0xf]
      %v235 = vld [vmem:[%s1 + $0xb4] sm:$0xf]
      %v236 = vld [vmem:[%s1 + $0xb8] sm:$0xf]
      %v237 = vld [vmem:[%s1 + $0xbc] sm:$0xf]
      %v238 = vld [vmem:[%s1 + $0xc0] sm:$0xf]
      %v239 = vld [vmem:[%s1 + $0xc4] sm:$0xf]
      %v240 = vld [vmem:[%s1 + $0xc8] sm:$0xf]
      %v241 = vld [vmem:[%s1 + $0xcc] sm:$0xf]
      %v242 = vld [vmem:[%s1 + $0xd0] sm:$0xf]
      %v243 = vld [vmem:[%s1 + $0xd4] sm:$0xf]
      %v244 = vld [vmem:[%s1 + $0xd8] sm:$0xf]
      %v245 = vld [vmem:[%s1 + $0xdc] sm:$0xf]
      %v246 = vld [vmem:[%s1 + $0xe0] sm:$0xf]
      %v247 = vld [vmem:[%s1 + $0xe4] sm:$0xf]
      %v248 = vld [vmem:[%s1 + $0xe8] sm:$0xf]
      %v249 = vld [vmem:[%s1 + $0xec] sm:$0xf]
      %v250 = vld [vmem:[%s1 + $0xf0] sm:$0xf]
      %v251 = vld [vmem:[%s1 + $0xf4] sm:$0xf]
      %v252 = vld [vmem:[%s1 + $0xf8] sm:$0xf]
      %v253 = vld [vmem:[%s1 + $0xfc] sm:$0xf]
      %v254 = vld [vmem:[%s1 + $0x100] sm:$0xf]
      %v255 = vld [vmem:[%s1 + $0x104] sm:$0xf]
      %v256 = vld [vmem:[%s1 + $0x108] sm:$0xf]
      %v257 = vld [vmem:[%s1 + $0x10c] sm:$0xf]
      %v258 = vld [vmem:[%s1 + $0x110] sm:$0xf]
      %v259 = vld [vmem:[%s1 + $0x114] sm:$0xf]
      %v260 = vld [vmem:[%s1 + $0x118] sm:$0xf]
      %v261 = vld [vmem:[%s1 + $0x11c] sm:$0xf]
      %v262 = vld [vmem:[%s2] sm:$0x1]
      %v264 = vlaneseq
      %v265 = vshrl.u32 %v264, 7
      %v266 = vsub.s32 0, %v265
      %v267 = vrot.slane %v262, %v266
      %v281 = vunpack.c.l.b16 %v178
      %v282 = vunpack.c.h.b16 %v178
      %v283 = vunpack.c.l.b16 %v179
      %v284 = vunpack.c.h.b16 %v179
      %v285 = vunpack.c.l.b16 %v180
      %v286 = vunpack.c.l.b16 %v181
      %v287 = vunpack.c.h.b16 %v181
      %v288 = vunpack.c.l.b16 %v182
      %v289 = vunpack.c.h.b16 %v182
      %v290 = vunpack.c.l.b16 %v183
      %v291 = vunpack.c.l.b16 %v184
      %v292 = vunpack.c.h.b16 %v184
      %v293 = vunpack.c.l.b16 %v185
      %v294 = vunpack.c.h.b16 %v185
      %v295 = vunpack.c.l.b16 %v186
      %v296 = vunpack.c.l.b16 %v187
      %v297 = vunpack.c.h.b16 %v187
      %v298 = vunpack.c.l.b16 %v188
      %v299 = vunpack.c.h.b16 %v188
      %v300 = vunpack.c.l.b16 %v189
      %v301 = vpack.c.b16 %v286, %v281
      %v302 = vpack.c.b16 %v287, %v282
      %v303 = vpack.c.b16 %v288, %v283
      %v304 = vpack.c.b16 %v289, %v284
      %v305 = vpack.c.b16 %v290, %v285
      %v306 = vpack.c.b16 %v296, %v291
      %v307 = vpack.c.b16 %v297, %v292
      %v308 = vpack.c.b16 %v298, %v293
      %v309 = vpack.c.b16 %v299, %v294
      %v310 = vpack.c.b16 %v300, %v295
      %v391 = vunpack.c.l.b16 %v190
      %v392 = vunpack.c.l.b16 %v191
      %v393 = vunpack.c.l.b16 %v192
      %v394 = vunpack.c.l.b16 %v193
      %v395 = vunpack.c.l.b16 %v194
      %v396 = vunpack.c.l.b16 %v195
      %v397 = vunpack.c.l.b16 %v196
      %v398 = vunpack.c.l.b16 %v197
      %v399 = vunpack.c.l.b16 %v198
      %v400 = vunpack.c.l.b16 %v199
      %v401 = vunpack.c.l.b16 %v200
      %v402 = vunpack.c.l.b16 %v201
      %v403 = vunpack.c.l.b16 %v202
      %v404 = vunpack.c.l.b16 %v203
      %v405 = vunpack.c.l.b16 %v204
      %v406 = vunpack.c.l.b16 %v205
      %v407 = vunpack.c.l.b16 %v206
      %v408 = vunpack.c.l.b16 %v207
      %v409 = vunpack.c.l.b16 %v208
      %v410 = vunpack.c.l.b16 %v209
      %v411 = vunpack.c.l.b16 %v210
      %v412 = vunpack.c.l.b16 %v211
      %v413 = vunpack.c.l.b16 %v212
      %v414 = vunpack.c.l.b16 %v213
      %v415 = vunpack.c.l.b16 %v214
      %v416 = vunpack.c.l.b16 %v215
      %v417 = vunpack.c.l.b16 %v216
      %v418 = vunpack.c.l.b16 %v217
      %v419 = vunpack.c.l.b16 %v218
      %v420 = vunpack.c.l.b16 %v219
      %v421 = vunpack.c.l.b16 %v220
      %v422 = vunpack.c.l.b16 %v221
      %v423 = vunpack.c.l.b16 %v222
      %v424 = vunpack.c.l.b16 %v223
      %v425 = vunpack.c.l.b16 %v224
      %v426 = vunpack.c.l.b16 %v225
      %v427 = vunpack.c.l.b16 %v226
      %v428 = vunpack.c.l.b16 %v227
      %v429 = vunpack.c.l.b16 %v228
      %v430 = vunpack.c.l.b16 %v229
      %v431 = vunpack.c.l.b16 %v230
      %v432 = vunpack.c.l.b16 %v231
      %v433 = vunpack.c.l.b16 %v232
      %v434 = vunpack.c.l.b16 %v233
      %v435 = vunpack.c.l.b16 %v234
      %v436 = vunpack.c.l.b16 %v235
      %v437 = vunpack.c.l.b16 %v236
      %v438 = vunpack.c.l.b16 %v237
      %v439 = vunpack.c.l.b16 %v238
      %v440 = vunpack.c.l.b16 %v239
      %v441 = vunpack.c.l.b16 %v240
      %v442 = vunpack.c.l.b16 %v241
      %v443 = vunpack.c.l.b16 %v242
      %v444 = vunpack.c.l.b16 %v243
      %v445 = vunpack.c.l.b16 %v244
      %v446 = vunpack.c.l.b16 %v245
      %v447 = vunpack.c.l.b16 %v246
      %v448 = vunpack.c.l.b16 %v247
      %v449 = vunpack.c.l.b16 %v248
      %v450 = vunpack.c.l.b16 %v249
      %v451 = vunpack.c.l.b16 %v250
      %v452 = vunpack.c.l.b16 %v251
      %v453 = vunpack.c.l.b16 %v252
      %v454 = vunpack.c.l.b16 %v253
      %v455 = vunpack.c.l.b16 %v254
      %v456 = vunpack.c.l.b16 %v255
      %v457 = vunpack.c.l.b16 %v256
      %v458 = vunpack.c.l.b16 %v257
      %v459 = vunpack.c.l.b16 %v258
      %v460 = vunpack.c.l.b16 %v259
      %v461 = vunpack.c.l.b16 %v260
      %v462 = vunpack.c.l.b16 %v261
      %v463 = vpack.c.b16 %v392, %v391
      %v464 = vpack.c.b16 %v394, %v393
      %v465 = vpack.c.b16 %v396, %v395
      %v466 = vpack.c.b16 %v398, %v397
      %v467 = vpack.c.b16 %v400, %v399
      %v468 = vpack.c.b16 %v402, %v401
      %v469 = vpack.c.b16 %v404, %v403
      %v470 = vpack.c.b16 %v406, %v405
      %v471 = vpack.c.b16 %v408, %v407
      %v472 = vpack.c.b16 %v410, %v409
      %v473 = vpack.c.b16 %v412, %v411
      %v474 = vpack.c.b16 %v414, %v413
      %v475 = vpack.c.b16 %v416, %v415
      %v476 = vpack.c.b16 %v418, %v417
      %v477 = vpack.c.b16 %v420, %v419
      %v478 = vpack.c.b16 %v422, %v421
      %v479 = vpack.c.b16 %v424, %v423
      %v480 = vpack.c.b16 %v426, %v425
      %v481 = vpack.c.b16 %v428, %v427
      %v482 = vpack.c.b16 %v430, %v429
      %v483 = vpack.c.b16 %v432, %v431
      %v484 = vpack.c.b16 %v434, %v433
      %v485 = vpack.c.b16 %v436, %v435
      %v486 = vpack.c.b16 %v438, %v437
      %v487 = vpack.c.b16 %v440, %v439
      %v488 = vpack.c.b16 %v442, %v441
      %v489 = vpack.c.b16 %v444, %v443
      %v490 = vpack.c.b16 %v446, %v445
      %v491 = vpack.c.b16 %v448, %v447
      %v492 = vpack.c.b16 %v450, %v449
      %v493 = vpack.c.b16 %v452, %v451
      %v494 = vpack.c.b16 %v454, %v453
      %v495 = vpack.c.b16 %v456, %v455
      %v496 = vpack.c.b16 %v458, %v457
      %v497 = vpack.c.b16 %v460, %v459
      %v498 = vpack.c.b16 %v462, %v461
      %vm535 = vcmask 523264
      %v537 = vsel %vm535, %v305, 0
      %v540 = vsel %vm535, %v310, 0
      %542 = vmatprep.subr.bf16.mxu0 0
      %543 = vmatpush1.bf16.msra.mxu0 %v463
      %544 = vmatprep.subr.bf16.mxu0 0
      %545 = vmatpush1.bf16.msra.mxu0 %v464
      %546 = vmatprep.subr.bf16.mxu0 0
      %547 = vmatpush1.bf16.msra.mxu0 %v465
      %548 = vmatprep.subr.bf16.mxu0 0
      %549 = vmatpush1.bf16.msra.mxu0 %v466
      %550 = vmatprep.subr.bf16.mxu0 0
      %551 = vmatpush1.bf16.msra.mxu0 %v467
      %552 = vmatprep.subr.bf16.mxu0 0
      %553 = vmatpush1.bf16.msra.mxu0 %v468
      %554 = vmatprep.subr.bf16.mxu0 0
      %555 = vmatpush1.bf16.msra.mxu0 %v469
      %556 = vmatprep.subr.bf16.mxu0 0
      %557 = vmatpush1.bf16.msra.mxu0 %v470
      %558 = vmatprep.subr.bf16.mxu0 0
      %559 = vmatpush1.bf16.msra.mxu0 %v471
      %560 = vmatprep.subr.bf16.mxu0 0
      %561 = vmatpush1.bf16.msra.mxu0 %v472
      %562 = vmatprep.subr.bf16.mxu0 0
      %563 = vmatpush1.bf16.msra.mxu0 %v473
      %564 = vmatprep.subr.bf16.mxu0 0
      %565 = vmatpush1.bf16.msra.mxu0 %v474
      %566 = vmatprep.subr.bf16.mxu0 0
      %567 = vmatpush1.bf16.msra.mxu0 %v475
      %568 = vmatprep.subr.bf16.mxu0 0
      %569 = vmatpush1.bf16.msra.mxu0 %v476
      %570 = vmatprep.subr.bf16.mxu0 0
      %571 = vmatpush1.bf16.msra.mxu0 %v477
      %572 = vmatprep.subr.bf16.mxu0 0
      %573 = vmatpush1.bf16.msra.mxu0 %v478
      %574 = vmatprep.mubr.bf16.mxu0 %v302
      %575 = vmatmul.mubr.bf16.gmra.mrb[0].mxu0 %v301
      %v576 = vpop.f32.mrb[0].mxu0
      %v577 = vadd.f32 %v267, %v576
      %v578 = vpop.f32.mrb[0].mxu0
      %v579 = vpop.f32.mrb[0].mxu0
      %v580 = vadd.f32 %v267, %v579
      %v581 = vpop.f32.mrb[0].mxu0
      %582 = vmatprep.mubr.bf16.mxu0 %v307
      %583 = vmatmul.mubr.bf16.gmra.mrb[0].mxu0 %v306
      %v584 = vpop.f32.mrb[0].mxu0
      %v585 = vadd.f32 %v267, %v584
      %v586 = vpop.f32.mrb[0].mxu0
      %v587 = vpop.f32.mrb[0].mxu0
      %v588 = vadd.f32 %v267, %v587
      %v589 = vpop.f32.mrb[0].mxu0
      %590 = vdwg.mxu0
      %591 = vmatprep.subr.bf16.mxu0 0
      %592 = vmatpush1.bf16.msra.mxu0 %v479
      %593 = vmatprep.subr.bf16.mxu0 0
      %594 = vmatpush1.bf16.msra.mxu0 %v480
      %595 = vmatprep.subr.bf16.mxu0 0
      %596 = vmatpush1.bf16.msra.mxu0 %v481
      %597 = vmatprep.subr.bf16.mxu0 0
      %598 = vmatpush1.bf16.msra.mxu0 %v482
      %599 = vmatprep.subr.bf16.mxu0 0
      %600 = vmatpush1.bf16.msra.mxu0 %v483
      %601 = vmatprep.subr.bf16.mxu0 0
      %602 = vmatpush1.bf16.msra.mxu0 %v484
      %603 = vmatprep.subr.bf16.mxu0 0
      %604 = vmatpush1.bf16.msra.mxu0 %v485
      %605 = vmatprep.subr.bf16.mxu0 0
      %606 = vmatpush1.bf16.msra.mxu0 %v486
      %607 = vmatprep.subr.bf16.mxu0 0
      %608 = vmatpush1.bf16.msra.mxu0 %v487
      %609 = vmatprep.subr.bf16.mxu0 0
      %610 = vmatpush1.bf16.msra.mxu0 %v488
      %611 = vmatprep.subr.bf16.mxu0 0
      %612 = vmatpush1.bf16.msra.mxu0 %v489
      %613 = vmatprep.subr.bf16.mxu0 0
      %614 = vmatpush1.bf16.msra.mxu0 %v490
      %615 = vmatprep.subr.bf16.mxu0 0
      %616 = vmatpush1.bf16.msra.mxu0 %v491
      %617 = vmatprep.subr.bf16.mxu0 0
      %618 = vmatpush1.bf16.msra.mxu0 %v492
      %619 = vmatprep.subr.bf16.mxu0 0
      %620 = vmatpush1.bf16.msra.mxu0 %v493
      %621 = vmatprep.subr.bf16.mxu0 0
      %622 = vmatpush1.bf16.msra.mxu0 %v494
      %623 = vmatprep.mubr.bf16.mxu0 %v304
      %624 = vmatmul.mubr.bf16.gmra.mrb[0].mxu0 %v303
      %v625 = vpop.f32.mrb[0].mxu0
      %v626 = vadd.f32 %v577, %v625
      %v627 = vpop.f32.mrb[0].mxu0
      %v628 = vpop.f32.mrb[0].mxu0
      %v629 = vadd.f32 %v580, %v628
      %v630 = vpop.f32.mrb[0].mxu0
      %631 = vmatprep.mubr.bf16.mxu0 %v309
      %632 = vmatmul.mubr.bf16.gmra.mrb[0].mxu0 %v308
      %v633 = vpop.f32.mrb[0].mxu0
      %v634 = vadd.f32 %v585, %v633
      %v635 = vpop.f32.mrb[0].mxu0
      %v636 = vpop.f32.mrb[0].mxu0
      %v637 = vadd.f32 %v588, %v636
      %v638 = vpop.f32.mrb[0].mxu0
      %639 = vdwg.mxu0
      %640 = vmatprep.subr.bf16.mxu0 0
      %641 = vmatpush1.bf16.msra.mxu0 %v495
      %642 = vmatprep.subr.bf16.mxu0 0
      %643 = vmatpush1.bf16.msra.mxu0 %v496
      %644 = vmatprep.subr.bf16.mxu0 0
      %645 = vmatpush1.bf16.msra.mxu0 %v497
      %646 = vmatprep.subr.bf16.mxu0 0
      %647 = vmatpush1.bf16.msra.mxu0 %v498
      %648 = vmatprep.subr.bf16.mxu0 0
      %649 = vmatpush1.bf16.msra.mxu0 0
      %650 = vmatprep.subr.bf16.mxu0 0
      %651 = vmatpush1.bf16.msra.mxu0 0
      %652 = vmatprep.subr.bf16.mxu0 0
      %653 = vmatpush1.bf16.msra.mxu0 0
      %654 = vmatprep.subr.bf16.mxu0 0
      %655 = vmatpush1.bf16.msra.mxu0 0
      %656 = vmatprep.subr.bf16.mxu0 0
      %657 = vmatpush1.bf16.msra.mxu0 0
      %658 = vmatprep.subr.bf16.mxu0 0
      %659 = vmatpush1.bf16.msra.mxu0 0
      %660 = vmatprep.subr.bf16.mxu0 0
      %661 = vmatpush1.bf16.msra.mxu0 0
      %662 = vmatprep.subr.bf16.mxu0 0
      %663 = vmatpush1.bf16.msra.mxu0 0
      %664 = vmatprep.subr.bf16.mxu0 0
      %665 = vmatpush1.bf16.msra.mxu0 0
      %666 = vmatprep.subr.bf16.mxu0 0
      %667 = vmatpush1.bf16.msra.mxu0 0
      %668 = vmatprep.subr.bf16.mxu0 0
      %669 = vmatpush1.bf16.msra.mxu0 0
      %670 = vmatprep.subr.bf16.mxu0 0
      %671 = vmatpush1.bf16.msra.mxu0 0
      %672 = vmatprep.mubr.bf16.mxu0 0
      %673 = vmatmul.mubr.bf16.gmra.mrb[0].mxu0 %v537
      %v674 = vpop.f32.mrb[0].mxu0
      %v675 = vadd.f32 %v626, %v674
      %v676 = vpop.f32.mrb[0].mxu0
      %v677 = vpop.f32.mrb[0].mxu0
      %v678 = vadd.f32 %v629, %v677
      %v679 = vpop.f32.mrb[0].mxu0
      %680 = vmatprep.mubr.bf16.mxu0 0
      %681 = vmatmul.mubr.bf16.gmra.mrb[0].mxu0 %v540
      %v682 = vpop.f32.mrb[0].mxu0
      %v683 = vadd.f32 %v634, %v682
      %v684 = vpop.f32.mrb[0].mxu0
      %v685 = vpop.f32.mrb[0].mxu0
      %v686 = vadd.f32 %v637, %v685
      %v687 = vpop.f32.mrb[0].mxu0
      %688 = vdwg.mxu0
      %v689 = vmax.f32 %v675, 0.0
      %v690 = vmax.f32 %v678, 0.0
      %v691 = vmax.f32 %v683, 0.0
      %v692 = vmax.f32 %v686, 0.0
      %v693 = vpack.c.bf16 %v690, %v689
      %v694 = vpack.c.bf16 %v692, %v691
      %v697 = vunpack.c.l.b16 %v693
      %v698 = vunpack.c.h.b16 %v693
      %v699 = vunpack.c.l.b16 %v694
      %v700 = vunpack.c.h.b16 %v694
      %v701 = vpack.c.b16 %v697, %v697
      %v702 = vpack.c.b16 %v698, %v698
      %v703 = vpack.c.b16 %v699, %v699
      %v704 = vpack.c.b16 %v700, %v700
      %vm709 = vcmask 519168
      %710 = vst.msk [vmem:[%s175] sm:$0xf] %vm709, %v701
      %711 = vst.msk [vmem:[%s175 + $0x4] sm:$0xf] %vm709, %v702
      %712 = vst.msk [vmem:[%s175 + $0x8] sm:$0xf] %vm709, %v703
      %713 = vst.msk [vmem:[%s175 + $0xc] sm:$0xf] %vm709, %v704
      %s714 = smul.u32 4, %s14
      %p715 = scmp.lt.s32.totalorder %s714, 7
      %s716 = scalar_select %p715, %s714, 7
      %s717 = smul.addr %s716, 4
      %s718 = scalar_lea.vmem %s3, %s717
      // Predicated region
      $region33: #{model3layer_forward.6} parent=31 // pred_check
        %p719 = pneg %p100
      $region34: #{model3layer_forward.6} parent=31 // pred_check_branch
        %721 = sbr.rel (%p719) target = $region36
      $region35: #{model3layer_forward.6} parent=31 // pred_region
        %s722 = smul.u32 4, %s14
      $region36: #{model3layer_forward.6} parent=31 // pred_fallthru
        _
    $region32: #{model3layer_forward.6} parent=5 // pred_fallthru
      _
    %p723 = scmp.le.s32.totalorder 2, %s9
    // Predicated region
    $region37: #{model3layer_forward.6} parent=5 // pred_check
      %p724 = pneg %p723
    $region38: #{model3layer_forward.6} parent=5 // pred_check_branch
      %726 = sbr.rel (%p724) target = $region40
    $region39: #{model3layer_forward.6} parent=5 // pred_region
      %s727 = ssub.s32 %s9, 2
      // Predicated region
      $region41: #{model3layer_forward.6} parent=39 // pred_check
        %p728 = pneg %p106
      $region42: #{model3layer_forward.6} parent=39 // pred_check_branch
        %730 = sbr.rel (%p728) target = $region44
      $region43: #{model3layer_forward.6} parent=39 // pred_region
        %s731 = smul.u32 4, %s15
        %p732 = scmp.lt.s32.totalorder %s731, 7
        %s733 = scalar_select %p732, %s731, 7
        %s734 = smul.addr %s733, 4
        %s735 = scalar_lea.vmem %s3, %s734
      $region44: #{model3layer_forward.6} parent=39 // pred_fallthru
        _
    $region40: #{model3layer_forward.6} parent=5 // pred_fallthru
      _
  $region6: #{model3layer_forward.6} parent=0 // loop_footer
    %s13 = sadd.s32 1, %s9
  $region7: #{model3layer_forward.6} parent=0 // loop_footer_branch
    %8 = sbr.rel target = $region3
  $region8: #{model3layer_forward.6} parent=0 // loop_exit
    _

// kernel: model3layer_forward.7
$region0: #{model3layer_forward.7}
  #allocation0 [shape = 'u32[]', space=smem, size = 0x4, offset = 0x4, fixed_abs, tag = 'smem constant byte address 0x4 - core index']
  #allocation1 [shape = 'u32[144,128]{1,0:T(1,128)}', space=vmem, size = 0x12000, scoped, tag = 'internal scratch']
  %s0 = inlined_call_operand.vmem [shape: bf16[1,3136], index: 0, kind: input, shape index: {}]
  %s1 = inlined_call_operand.vmem [shape: bf16[3136,1024], index: 1, kind: input, shape index: {}]
  %s2 = inlined_call_operand.vmem [shape: f32[1,1024], index: 2, kind: input, shape index: {}]
  %s3 = inlined_call_operand.vmem [shape: bf16[1024,128], index: 3, kind: input, shape index: {}]
  %s4 = inlined_call_operand.vmem [shape: f32[1,128], index: 4, kind: input, shape index: {}]
  %s5 = inlined_call_operand.hbm [shape: f32[1,128], index: 5, kind: output, shape index: {}]
  %s6 = sld [smem:[#allocation0]]
  $region30: #{model3layer_forward.7} parent=0
    _
  %s8 = ssub.s32 1, %s6
  %s9 = scalar_select 0, %s8, %s6
  $region1: #{model3layer_forward.7} parent=0
    #allocation2 [shape = 'u8[512]{0}', space=vmem, size = 0x400, scoped, tag = 'output window, operand 0, single buffered']
    #allocation3 [shape = 's32[1]{0}', space=sflag, size = 0x4, scoped, tag = 'scoped memory for model3layer_forward.7']
    %10 = vsyncpa [#allocation3], 0
    // Predicated region
    $region2: #{model3layer_forward.7} parent=1 // pred_check
      _
    $region3: #{model3layer_forward.7} parent=1 // pred_check_branch
      %12 = sbr.rel (0) target = $region5
    $region4: #{model3layer_forward.7} parent=1 // pred_region
      _
    $region5: #{model3layer_forward.7} parent=1 // pred_fallthru
      _
    // Predicated region
    $region6: #{model3layer_forward.7} parent=1 // pred_check
      _
    $region7: #{model3layer_forward.7} parent=1 // pred_check_branch
      %14 = sbr.rel (0) target = $region9
    $region8: #{model3layer_forward.7} parent=1 // pred_region
      _
    $region9: #{model3layer_forward.7} parent=1 // pred_fallthru
      _
    // Predicated region
    $region10: #{model3layer_forward.7} parent=1 // pred_check
      _
    $region11: #{model3layer_forward.7} parent=1 // pred_check_branch
      %16 = sbr.rel (0) target = $region13
    $region12: #{model3layer_forward.7} parent=1 // pred_region
      _
    $region13: #{model3layer_forward.7} parent=1 // pred_fallthru
      _
    // Predicated region
    $region14: #{model3layer_forward.7} parent=1 // pred_check
      _
    $region15: #{model3layer_forward.7} parent=1 // pred_check_branch
      %18 = sbr.rel (0) target = $region17
    $region16: #{model3layer_forward.7} parent=1 // pred_region
      _
    $region17: #{model3layer_forward.7} parent=1 // pred_fallthru
      _
    // Predicated region
    $region18: #{model3layer_forward.7} parent=1 // pred_check
      _
    $region19: #{model3layer_forward.7} parent=1 // pred_check_branch
      %20 = sbr.rel (0) target = $region21
    $region20: #{model3layer_forward.7} parent=1 // pred_region
      _
    $region21: #{model3layer_forward.7} parent=1 // pred_fallthru
      _
    %v22 = vld [vmem:[%s0] sm:$0xff]
    %v23 = vld [vmem:[%s0 + $0x8] sm:$0xff]
    %v24 = vld [vmem:[%s0 + $0x10] sm:$0xff]
    %v25 = vld [vmem:[%s0 + $0x18] sm:$0x1]
    %v26 = vld [vmem:[%s1] sm:$0xff]
    %v27 = vld [vmem:[%s1 + $0x8] sm:$0xff]
    %v28 = vld [vmem:[%s1 + $0x10] sm:$0xff]
    %v29 = vld [vmem:[%s1 + $0x18] sm:$0xff]
    %v30 = vld [vmem:[%s1 + $0x20] sm:$0xff]
    %v31 = vld [vmem:[%s1 + $0x28] sm:$0xff]
    %v32 = vld [vmem:[%s1 + $0x30] sm:$0xff]
    %v33 = vld [vmem:[%s1 + $0x38] sm:$0xff]
    %v34 = vld [vmem:[%s1 + $0x40] sm:$0xff]
    %v35 = vld [vmem:[%s1 + $0x48] sm:$0xff]
    %v36 = vld [vmem:[%s1 + $0x50] sm:$0xff]
    %v37 = vld [vmem:[%s1 + $0x58] sm:$0xff]
    %v38 = vld [vmem:[%s1 + $0x60] sm:$0xff]
    %v39 = vld [vmem:[%s1 + $0x68] sm:$0xff]
    %v40 = vld [vmem:[%s1 + $0x70] sm:$0xff]
    %v41 = vld [vmem:[%s1 + $0x78] sm:$0xff]
    %v42 = vld [vmem:[%s1 + $0x80] sm:$0xff]
    %v43 = vld [vmem:[%s1 + $0x88] sm:$0xff]
    %v44 = vld [vmem:[%s1 + $0x90] sm:$0xff]
    %v45 = vld [vmem:[%s1 + $0x98] sm:$0xff]
    %v46 = vld [vmem:[%s1 + $0xa0] sm:$0xff]
    %v47 = vld [vmem:[%s1 + $0xa8] sm:$0xff]
    %v48 = vld [vmem:[%s1 + $0xb0] sm:$0xff]
    %v49 = vld [vmem:[%s1 + $0xb8] sm:$0xff]
    %v50 = vld [vmem:[%s1 + $0xc0] sm:$0xff]
    %v51 = vld [vmem:[%s1 + $0xc8] sm:$0xff]
    %v52 = vld [vmem:[%s1 + $0xd0] sm:$0xff]
    %v53 = vld [vmem:[%s1 + $0xd8] sm:$0xff]
    %v54 = vld [vmem:[%s1 + $0xe0] sm:$0xff]
    %v55 = vld [vmem:[%s1 + $0xe8] sm:$0xff]
    %v56 = vld [vmem:[%s1 + $0xf0] sm:$0xff]
    %v57 = vld [vmem:[%s1 + $0xf8] sm:$0xff]
    %v58 = vld [vmem:[%s1 + $0x100] sm:$0xff]
    %v59 = vld [vmem:[%s1 + $0x108] sm:$0xff]
    %v60 = vld [vmem:[%s1 + $0x110] sm:$0xff]
    %v61 = vld [vmem:[%s1 + $0x118] sm:$0xff]
    %v62 = vld [vmem:[%s1 + $0x120] sm:$0xff]
    %v63 = vld [vmem:[%s1 + $0x128] sm:$0xff]
    %v64 = vld [vmem:[%s1 + $0x130] sm:$0xff]
    %v65 = vld [vmem:[%s1 + $0x138] sm:$0xff]
    %v66 = vld [vmem:[%s1 + $0x140] sm:$0xff]
    %v67 = vld [vmem:[%s1 + $0x148] sm:$0xff]
    %v68 = vld [vmem:[%s1 + $0x150] sm:$0xff]
    %v69 = vld [vmem:[%s1 + $0x158] sm:$0xff]
    %v70 = vld [vmem:[%s1 + $0x160] sm:$0xff]
    %v71 = vld [vmem:[%s1 + $0x168] sm:$0xff]
    %v72 = vld [vmem:[%s1 + $0x170] sm:$0xff]
    %v73 = vld [vmem:[%s1 + $0x178] sm:$0xff]
    %v74 = vld [vmem:[%s1 + $0x180] sm:$0xff]
    %v75 = vld [vmem:[%s1 + $0x188] sm:$0xff]
    %v76 = vld [vmem:[%s1 + $0x190] sm:$0xff]
    %v77 = vld [vmem:[%s1 + $0x198] sm:$0xff]
    %v78 = vld [vmem:[%s1 + $0x1a0] sm:$0xff]
    %v79 = vld [vmem:[%s1 + $0x1a8] sm:$0xff]
    %v80 = vld [vmem:[%s1 + $0x1b0] sm:$0xff]
    %v81 = vld [vmem:[%s1 + $0x1b8] sm:$0xff]
    %v82 = vld [vmem:[%s1 + $0x1c0] sm:$0xff]
    %v83 = vld [vmem:[%s1 + $0x1c8] sm:$0xff]
    %v84 = vld [vmem:[%s1 + $0x1d0] sm:$0xff]
    %v85 = vld [vmem:[%s1 + $0x1d8] sm:$0xff]
    %v86 = vld [vmem:[%s1 + $0x1e0] sm:$0xff]
    %v87 = vld [vmem:[%s1 + $0x1e8] sm:$0xff]
    %v88 = vld [vmem:[%s1 + $0x1f0] sm:$0xff]
    %v89 = vld [vmem:[%s1 + $0x1f8] sm:$0xff]
    %v90 = vld [vmem:[%s1 + $0x200] sm:$0xff]
    %v91 = vld [vmem:[%s1 + $0x208] sm:$0xff]
    %v92 = vld [vmem:[%s1 + $0x210] sm:$0xff]
    %v93 = vld [vmem:[%s1 + $0x218] sm:$0xff]
    %v94 = vld [vmem:[%s1 + $0x220] sm:$0xff]
    %v95 = vld [vmem:[%s1 + $0x228] sm:$0xff]
    %v96 = vld [vmem:[%s1 + $0x230] sm:$0xff]
    %v97 = vld [vmem:[%s1 + $0x238] sm:$0xff]
    %v98 = vld [vmem:[%s1 + $0x240] sm:$0xff]
    %v99 = vld [vmem:[%s1 + $0x248] sm:$0xff]
    %v100 = vld [vmem:[%s1 + $0x250] sm:$0xff]
    %v101 = vld [vmem:[%s1 + $0x258] sm:$0xff]
    %v102 = vld [vmem:[%s1 + $0x260] sm:$0xff]
    %v103 = vld [vmem:[%s1 + $0x268] sm:$0xff]
    %v104 = vld [vmem:[%s1 + $0x270] sm:$0xff]
    %v105 = vld [vmem:[%s1 + $0x278] sm:$0xff]
    %v106 = vld [vmem:[%s1 + $0x280] sm:$0xff]
    %v107 = vld [vmem:[%s1 + $0x288] sm:$0xff]
    %v108 = vld [vmem:[%s1 + $0x290] sm:$0xff]
    %v109 = vld [vmem:[%s1 + $0x298] sm:$0xff]
    %v110 = vld [vmem:[%s1 + $0x2a0] sm:$0xff]
    %v111 = vld [vmem:[%s1 + $0x2a8] sm:$0xff]
    %v112 = vld [vmem:[%s1 + $0x2b0] sm:$0xff]
    %v113 = vld [vmem:[%s1 + $0x2b8] sm:$0xff]
    %v114 = vld [vmem:[%s1 + $0x2c0] sm:$0xff]
    %v115 = vld [vmem:[%s1 + $0x2c8] sm:$0xff]
    %v116 = vld [vmem:[%s1 + $0x2d0] sm:$0xff]
    %v117 = vld [vmem:[%s1 + $0x2d8] sm:$0xff]
    %v118 = vld [vmem:[%s1 + $0x2e0] sm:$0xff]
    %v119 = vld [vmem:[%s1 + $0x2e8] sm:$0xff]
    %v120 = vld [vmem:[%s1 + $0x2f0] sm:$0xff]
    %v121 = vld [vmem:[%s1 + $0x2f8] sm:$0xff]
    %v122 = vld [vmem:[%s1 + $0x300] sm:$0xff]
    %v123 = vld [vmem:[%s1 + $0x308] sm:$0xff]
    %v124 = vld [vmem:[%s1 + $0x310] sm:$0xff]
    %v125 = vld [vmem:[%s1 + $0x318] sm:$0xff]
    %v126 = vld [vmem:[%s1 + $0x320] sm:$0xff]
    %v127 = vld [vmem:[%s1 + $0x328] sm:$0xff]
    %v128 = vld [vmem:[%s1 + $0x330] sm:$0xff]
    %v129 = vld [vmem:[%s1 + $0x338] sm:$0xff]
    %v130 = vld [vmem:[%s1 + $0x340] sm:$0xff]
    %v131 = vld [vmem:[%s1 + $0x348] sm:$0xff]
    %v132 = vld [vmem:[%s1 + $0x350] sm:$0xff]
    %v133 = vld [vmem:[%s1 + $0x358] sm:$0xff]
    %v134 = vld [vmem:[%s1 + $0x360] sm:$0xff]
    %v135 = vld [vmem:[%s1 + $0x368] sm:$0xff]
    %v136 = vld [vmem:[%s1 + $0x370] sm:$0xff]
    %v137 = vld [vmem:[%s1 + $0x378] sm:$0xff]
    %v138 = vld [vmem:[%s1 + $0x380] sm:$0xff]
    %v139 = vld [vmem:[%s1 + $0x388] sm:$0xff]
    %v140 = vld [vmem:[%s1 + $0x390] sm:$0xff]
    %v141 = vld [vmem:[%s1 + $0x398] sm:$0xff]
    %v142 = vld [vmem:[%s1 + $0x3a0] sm:$0xff]
    %v143 = vld [vmem:[%s1 + $0x3a8] sm:$0xff]
    %v144 = vld [vmem:[%s1 + $0x3b0] sm:$0xff]
    %v145 = vld [vmem:[%s1 + $0x3b8] sm:$0xff]
    %v146 = vld [vmem:[%s1 + $0x3c0] sm:$0xff]
    %v147 = vld [vmem:[%s1 + $0x3c8] sm:$0xff]
    %v148 = vld [vmem:[%s1 + $0x3d0] sm:$0xff]
    %v149 = vld [vmem:[%s1 + $0x3d8] sm:$0xff]
    %v150 = vld [vmem:[%s1 + $0x3e0] sm:$0xff]
    %v151 = vld [vmem:[%s1 + $0x3e8] sm:$0xff]
    %v152 = vld [vmem:[%s1 + $0x3f0] sm:$0xff]
    %v153 = vld [vmem:[%s1 + $0x3f8] sm:$0xff]
    %v154 = vld [vmem:[%s1 + $0x400] sm:$0xff]
    %v155 = vld [vmem:[%s1 + $0x408] sm:$0xff]
    %v156 = vld [vmem:[%s1 + $0x410] sm:$0xff]
    %v157 = vld [vmem:[%s1 + $0x418] sm:$0xff]
    %v158 = vld [vmem:[%s1 + $0x420] sm:$0xff]
    %v159 = vld [vmem:[%s1 + $0x428] sm:$0xff]
    %v160 = vld [vmem:[%s1 + $0x430] sm:$0xff]
    %v161 = vld [vmem:[%s1 + $0x438] sm:$0xff]
    %v162 = vld [vmem:[%s1 + $0x440] sm:$0xff]
    %v163 = vld [vmem:[%s1 + $0x448] sm:$0xff]
    %v164 = vld [vmem:[%s1 + $0x450] sm:$0xff]
    %v165 = vld [vmem:[%s1 + $0x458] sm:$0xff]
    %v166 = vld [vmem:[%s1 + $0x460] sm:$0xff]
    %v167 = vld [vmem:[%s1 + $0x468] sm:$0xff]
    %v168 = vld [vmem:[%s1 + $0x470] sm:$0xff]
    %v169 = vld [vmem:[%s1 + $0x478] sm:$0xff]
    %v170 = vld [vmem:[%s1 + $0x480] sm:$0xff]
    %v171 = vld [vmem:[%s1 + $0x488] sm:$0xff]
    %v172 = vld [vmem:[%s1 + $0x490] sm:$0xff]
    %v173 = vld [vmem:[%s1 + $0x498] sm:$0xff]
    %v174 = vld [vmem:[%s1 + $0x4a0] sm:$0xff]
    %v175 = vld [vmem:[%s1 + $0x4a8] sm:$0xff]
    %v176 = vld [vmem:[%s1 + $0x4b0] sm:$0xff]
    %v177 = vld [vmem:[%s1 + $0x4b8] sm:$0xff]
    %v178 = vld [vmem:[%s1 + $0x4c0] sm:$0xff]
    %v179 = vld [vmem:[%s1 + $0x4c8] sm:$0xff]
    %v180 = vld [vmem:[%s1 + $0x4d0] sm:$0xff]
    %v181 = vld [vmem:[%s1 + $0x4d8] sm:$0xff]
    %v182 = vld [vmem:[%s1 + $0x4e0] sm:$0xff]
    %v183 = vld [vmem:[%s1 + $0x4e8] sm:$0xff]
    %v184 = vld [vmem:[%s1 + $0x4f0] sm:$0xff]
    %v185 = vld [vmem:[%s1 + $0x4f8] sm:$0xff]
    %v186 = vld [vmem:[%s1 + $0x500] sm:$0xff]
    %v187 = vld [vmem:[%s1 + $0x508] sm:$0xff]
    %v188 = vld [vmem:[%s1 + $0x510] sm:$0xff]
    %v189 = vld [vmem:[%s1 + $0x518] sm:$0xff]
    %v190 = vld [vmem:[%s1 + $0x520] sm:$0xff]
    %v191 = vld [vmem:[%s1 + $0x528] sm:$0xff]
    %v192 = vld [vmem:[%s1 + $0x530] sm:$0xff]
    %v193 = vld [vmem:[%s1 + $0x538] sm:$0xff]
    %v194 = vld [vmem:[%s1 + $0x540] sm:$0xff]
    %v195 = vld [vmem:[%s1 + $0x548] sm:$0xff]
    %v196 = vld [vmem:[%s1 + $0x550] sm:$0xff]
    %v197 = vld [vmem:[%s1 + $0x558] sm:$0xff]
    %v198 = vld [vmem:[%s1 + $0x560] sm:$0xff]
    %v199 = vld [vmem:[%s1 + $0x568] sm:$0xff]
    %v200 = vld [vmem:[%s1 + $0x570] sm:$0xff]
    %v201 = vld [vmem:[%s1 + $0x578] sm:$0xff]
    %v202 = vld [vmem:[%s1 + $0x580] sm:$0xff]
    %v203 = vld [vmem:[%s1 + $0x588] sm:$0xff]
    %v204 = vld [vmem:[%s1 + $0x590] sm:$0xff]
    %v205 = vld [vmem:[%s1 + $0x598] sm:$0xff]
    %v206 = vld [vmem:[%s1 + $0x5a0] sm:$0xff]
    %v207 = vld [vmem:[%s1 + $0x5a8] sm:$0xff]
    %v208 = vld [vmem:[%s1 + $0x5b0] sm:$0xff]
    %v209 = vld [vmem:[%s1 + $0x5b8] sm:$0xff]
    %v210 = vld [vmem:[%s1 + $0x5c0] sm:$0xff]
    %v211 = vld [vmem:[%s1 + $0x5c8] sm:$0xff]
    %v212 = vld [vmem:[%s1 + $0x5d0] sm:$0xff]
    %v213 = vld [vmem:[%s1 + $0x5d8] sm:$0xff]
    %v214 = vld [vmem:[%s1 + $0x5e0] sm:$0xff]
    %v215 = vld [vmem:[%s1 + $0x5e8] sm:$0xff]
    %v216 = vld [vmem:[%s1 + $0x5f0] sm:$0xff]
    %v217 = vld [vmem:[%s1 + $0x5f8] sm:$0xff]
    %v218 = vld [vmem:[%s1 + $0x600] sm:$0xff]
    %v219 = vld [vmem:[%s1 + $0x608] sm:$0xff]
    %v220 = vld [vmem:[%s1 + $0x610] sm:$0xff]
    %v221 = vld [vmem:[%s1 + $0x618] sm:$0xff]
    %v222 = vld [vmem:[%s1 + $0x620] sm:$0xff]
    %v223 = vld [vmem:[%s1 + $0x628] sm:$0xff]
    %v224 = vld [vmem:[%s1 + $0x630] sm:$0xff]
    %v225 = vld [vmem:[%s1 + $0x638] sm:$0xff]
    %v226 = vld [vmem:[%s1 + $0x640] sm:$0xff]
    %v227 = vld [vmem:[%s1 + $0x648] sm:$0xff]
    %v228 = vld [vmem:[%s1 + $0x650] sm:$0xff]
    %v229 = vld [vmem:[%s1 + $0x658] sm:$0xff]
    %v230 = vld [vmem:[%s1 + $0x660] sm:$0xff]
    %v231 = vld [vmem:[%s1 + $0x668] sm:$0xff]
    %v232 = vld [vmem:[%s1 + $0x670] sm:$0xff]
    %v233 = vld [vmem:[%s1 + $0x678] sm:$0xff]
    %v234 = vld [vmem:[%s1 + $0x680] sm:$0xff]
    %v235 = vld [vmem:[%s1 + $0x688] sm:$0xff]
    %v236 = vld [vmem:[%s1 + $0x690] sm:$0xff]
    %v237 = vld [vmem:[%s1 + $0x698] sm:$0xff]
    %v238 = vld [vmem:[%s1 + $0x6a0] sm:$0xff]
    %v239 = vld [vmem:[%s1 + $0x6a8] sm:$0xff]
    %v240 = vld [vmem:[%s1 + $0x6b0] sm:$0xff]
    %v241 = vld [vmem:[%s1 + $0x6b8] sm:$0xff]
    %v242 = vld [vmem:[%s1 + $0x6c0] sm:$0xff]
    %v243 = vld [vmem:[%s1 + $0x6c8] sm:$0xff]
    %v244 = vld [vmem:[%s1 + $0x6d0] sm:$0xff]
    %v245 = vld [vmem:[%s1 + $0x6d8] sm:$0xff]
    %v246 = vld [vmem:[%s1 + $0x6e0] sm:$0xff]
    %v247 = vld [vmem:[%s1 + $0x6e8] sm:$0xff]
    %v248 = vld [vmem:[%s1 + $0x6f0] sm:$0xff]
    %v249 = vld [vmem:[%s1 + $0x6f8] sm:$0xff]
    %v250 = vld [vmem:[%s1 + $0x700] sm:$0xff]
    %v251 = vld [vmem:[%s1 + $0x708] sm:$0xff]
    %v252 = vld [vmem:[%s1 + $0x710] sm:$0xff]
    %v253 = vld [vmem:[%s1 + $0x718] sm:$0xff]
    %v254 = vld [vmem:[%s1 + $0x720] sm:$0xff]
    %v255 = vld [vmem:[%s1 + $0x728] sm:$0xff]
    %v256 = vld [vmem:[%s1 + $0x730] sm:$0xff]
    %v257 = vld [vmem:[%s1 + $0x738] sm:$0xff]
    %v258 = vld [vmem:[%s1 + $0x740] sm:$0xff]
    %v259 = vld [vmem:[%s1 + $0x748] sm:$0xff]
    %v260 = vld [vmem:[%s1 + $0x750] sm:$0xff]
    %v261 = vld [vmem:[%s1 + $0x758] sm:$0xff]
    %v262 = vld [vmem:[%s1 + $0x760] sm:$0xff]
    %v263 = vld [vmem:[%s1 + $0x768] sm:$0xff]
    %v264 = vld [vmem:[%s1 + $0x770] sm:$0xff]
    %v265 = vld [vmem:[%s1 + $0x778] sm:$0xff]
    %v266 = vld [vmem:[%s1 + $0x780] sm:$0xff]
    %v267 = vld [vmem:[%s1 + $0x788] sm:$0xff]
    %v268 = vld [vmem:[%s1 + $0x790] sm:$0xff]
    %v269 = vld [vmem:[%s1 + $0x798] sm:$0xff]
    %v270 = vld [vmem:[%s1 + $0x7a0] sm:$0xff]
    %v271 = vld [vmem:[%s1 + $0x7a8] sm:$0xff]
    %v272 = vld [vmem:[%s1 + $0x7b0] sm:$0xff]
    %v273 = vld [vmem:[%s1 + $0x7b8] sm:$0xff]
    %v274 = vld [vmem:[%s1 + $0x7c0] sm:$0xff]
    %v275 = vld [vmem:[%s1 + $0x7c8] sm:$0xff]
    %v276 = vld [vmem:[%s1 + $0x7d0] sm:$0xff]
    %v277 = vld [vmem:[%s1 + $0x7d8] sm:$0xff]
    %v278 = vld [vmem:[%s1 + $0x7e0] sm:$0xff]
    %v279 = vld [vmem:[%s1 + $0x7e8] sm:$0xff]
    %v280 = vld [vmem:[%s1 + $0x7f0] sm:$0xff]
    %v281 = vld [vmem:[%s1 + $0x7f8] sm:$0xff]
    %v282 = vld [vmem:[%s1 + $0x800] sm:$0xff]
    %v283 = vld [vmem:[%s1 + $0x808] sm:$0xff]
    %v284 = vld [vmem:[%s1 + $0x810] sm:$0xff]
    %v285 = vld [vmem:[%s1 + $0x818] sm:$0xff]
    %v286 = vld [vmem:[%s1 + $0x820] sm:$0xff]
    %v287 = vld [vmem:[%s1 + $0x828] sm:$0xff]
    %v288 = vld [vmem:[%s1 + $0x830] sm:$0xff]
    %v289 = vld [vmem:[%s1 + $0x838] sm:$0xff]
    %v290 = vld [vmem:[%s1 + $0x840] sm:$0xff]
    %v291 = vld [vmem:[%s1 + $0x848] sm:$0xff]
    %v292 = vld [vmem:[%s1 + $0x850] sm:$0xff]
    %v293 = vld [vmem:[%s1 + $0x858] sm:$0xff]
    %v294 = vld [vmem:[%s1 + $0x860] sm:$0xff]
    %v295 = vld [vmem:[%s1 + $0x868] sm:$0xff]
    %v296 = vld [vmem:[%s1 + $0x870] sm:$0xff]
    %v297 = vld [vmem:[%s1 + $0x878] sm:$0xff]
    %v298 = vld [vmem:[%s1 + $0x880] sm:$0xff]
    %v299 = vld [vmem:[%s1 + $0x888] sm:$0xff]
    %v300 = vld [vmem:[%s1 + $0x890] sm:$0xff]
    %v301 = vld [vmem:[%s1 + $0x898] sm:$0xff]
    %v302 = vld [vmem:[%s1 + $0x8a0] sm:$0xff]
    %v303 = vld [vmem:[%s1 + $0x8a8] sm:$0xff]
    %v304 = vld [vmem:[%s1 + $0x8b0] sm:$0xff]
    %v305 = vld [vmem:[%s1 + $0x8b8] sm:$0xff]
    %v306 = vld [vmem:[%s1 + $0x8c0] sm:$0xff]
    %v307 = vld [vmem:[%s1 + $0x8c8] sm:$0xff]
    %v308 = vld [vmem:[%s1 + $0x8d0] sm:$0xff]
    %v309 = vld [vmem:[%s1 + $0x8d8] sm:$0xff]
    %v310 = vld [vmem:[%s1 + $0x8e0] sm:$0xff]
    %v311 = vld [vmem:[%s1 + $0x8e8] sm:$0xff]
    %v312 = vld [vmem:[%s1 + $0x8f0] sm:$0xff]
    %v313 = vld [vmem:[%s1 + $0x8f8] sm:$0xff]
    %v314 = vld [vmem:[%s1 + $0x900] sm:$0xff]
    %v315 = vld [vmem:[%s1 + $0x908] sm:$0xff]
    %v316 = vld [vmem:[%s1 + $0x910] sm:$0xff]
    %v317 = vld [vmem:[%s1 + $0x918] sm:$0xff]
    %v318 = vld [vmem:[%s1 + $0x920] sm:$0xff]
    %v319 = vld [vmem:[%s1 + $0x928] sm:$0xff]
    %v320 = vld [vmem:[%s1 + $0x930] sm:$0xff]
    %v321 = vld [vmem:[%s1 + $0x938] sm:$0xff]
    %v322 = vld [vmem:[%s1 + $0x940] sm:$0xff]
    %v323 = vld [vmem:[%s1 + $0x948] sm:$0xff]
    %v324 = vld [vmem:[%s1 + $0x950] sm:$0xff]
    %v325 = vld [vmem:[%s1 + $0x958] sm:$0xff]
    %v326 = vld [vmem:[%s1 + $0x960] sm:$0xff]
    %v327 = vld [vmem:[%s1 + $0x968] sm:$0xff]
    %v328 = vld [vmem:[%s1 + $0x970] sm:$0xff]
    %v329 = vld [vmem:[%s1 + $0x978] sm:$0xff]
    %v330 = vld [vmem:[%s1 + $0x980] sm:$0xff]
    %v331 = vld [vmem:[%s1 + $0x988] sm:$0xff]
    %v332 = vld [vmem:[%s1 + $0x990] sm:$0xff]
    %v333 = vld [vmem:[%s1 + $0x998] sm:$0xff]
    %v334 = vld [vmem:[%s1 + $0x9a0] sm:$0xff]
    %v335 = vld [vmem:[%s1 + $0x9a8] sm:$0xff]
    %v336 = vld [vmem:[%s1 + $0x9b0] sm:$0xff]
    %v337 = vld [vmem:[%s1 + $0x9b8] sm:$0xff]
    %v338 = vld [vmem:[%s1 + $0x9c0] sm:$0xff]
    %v339 = vld [vmem:[%s1 + $0x9c8] sm:$0xff]
    %v340 = vld [vmem:[%s1 + $0x9d0] sm:$0xff]
    %v341 = vld [vmem:[%s1 + $0x9d8] sm:$0xff]
    %v342 = vld [vmem:[%s1 + $0x9e0] sm:$0xff]
    %v343 = vld [vmem:[%s1 + $0x9e8] sm:$0xff]
    %v344 = vld [vmem:[%s1 + $0x9f0] sm:$0xff]
    %v345 = vld [vmem:[%s1 + $0x9f8] sm:$0xff]
    %v346 = vld [vmem:[%s1 + $0xa00] sm:$0xff]
    %v347 = vld [vmem:[%s1 + $0xa08] sm:$0xff]
    %v348 = vld [vmem:[%s1 + $0xa10] sm:$0xff]
    %v349 = vld [vmem:[%s1 + $0xa18] sm:$0xff]
    %v350 = vld [vmem:[%s1 + $0xa20] sm:$0xff]
    %v351 = vld [vmem:[%s1 + $0xa28] sm:$0xff]
    %v352 = vld [vmem:[%s1 + $0xa30] sm:$0xff]
    %v353 = vld [vmem:[%s1 + $0xa38] sm:$0xff]
    %v354 = vld [vmem:[%s1 + $0xa40] sm:$0xff]
    %v355 = vld [vmem:[%s1 + $0xa48] sm:$0xff]
    %v356 = vld [vmem:[%s1 + $0xa50] sm:$0xff]
    %v357 = vld [vmem:[%s1 + $0xa58] sm:$0xff]
    %v358 = vld [vmem:[%s1 + $0xa60] sm:$0xff]
    %v359 = vld [vmem:[%s1 + $0xa68] sm:$0xff]
    %v360 = vld [vmem:[%s1 + $0xa70] sm:$0xff]
    %v361 = vld [vmem:[%s1 + $0xa78] sm:$0xff]
    %v362 = vld [vmem:[%s1 + $0xa80] sm:$0xff]
    %v363 = vld [vmem:[%s1 + $0xa88] sm:$0xff]
    %v364 = vld [vmem:[%s1 + $0xa90] sm:$0xff]
    %v365 = vld [vmem:[%s1 + $0xa98] sm:$0xff]
    %v366 = vld [vmem:[%s1 + $0xaa0] sm:$0xff]
    %v367 = vld [vmem:[%s1 + $0xaa8] sm:$0xff]
    %v368 = vld [vmem:[%s1 + $0xab0] sm:$0xff]
    %v369 = vld [vmem:[%s1 + $0xab8] sm:$0xff]
    %v370 = vld [vmem:[%s1 + $0xac0] sm:$0xff]
    %v371 = vld [vmem:[%s1 + $0xac8] sm:$0xff]
    %v372 = vld [vmem:[%s1 + $0xad0] sm:$0xff]
    %v373 = vld [vmem:[%s1 + $0xad8] sm:$0xff]
    %v374 = vld [vmem:[%s1 + $0xae0] sm:$0xff]
    %v375 = vld [vmem:[%s1 + $0xae8] sm:$0xff]
    %v376 = vld [vmem:[%s1 + $0xaf0] sm:$0xff]
    %v377 = vld [vmem:[%s1 + $0xaf8] sm:$0xff]
    %v378 = vld [vmem:[%s1 + $0xb00] sm:$0xff]
    %v379 = vld [vmem:[%s1 + $0xb08] sm:$0xff]
    %v380 = vld [vmem:[%s1 + $0xb10] sm:$0xff]
    %v381 = vld [vmem:[%s1 + $0xb18] sm:$0xff]
    %v382 = vld [vmem:[%s1 + $0xb20] sm:$0xff]
    %v383 = vld [vmem:[%s1 + $0xb28] sm:$0xff]
    %v384 = vld [vmem:[%s1 + $0xb30] sm:$0xff]
    %v385 = vld [vmem:[%s1 + $0xb38] sm:$0xff]
    %v386 = vld [vmem:[%s1 + $0xb40] sm:$0xff]
    %v387 = vld [vmem:[%s1 + $0xb48] sm:$0xff]
    %v388 = vld [vmem:[%s1 + $0xb50] sm:$0xff]
    %v389 = vld [vmem:[%s1 + $0xb58] sm:$0xff]
    %v390 = vld [vmem:[%s1 + $0xb60] sm:$0xff]
    %v391 = vld [vmem:[%s1 + $0xb68] sm:$0xff]
    %v392 = vld [vmem:[%s1 + $0xb70] sm:$0xff]
    %v393 = vld [vmem:[%s1 + $0xb78] sm:$0xff]
    %v394 = vld [vmem:[%s1 + $0xb80] sm:$0xff]
    %v395 = vld [vmem:[%s1 + $0xb88] sm:$0xff]
    %v396 = vld [vmem:[%s1 + $0xb90] sm:$0xff]
    %v397 = vld [vmem:[%s1 + $0xb98] sm:$0xff]
    %v398 = vld [vmem:[%s1 + $0xba0] sm:$0xff]
    %v399 = vld [vmem:[%s1 + $0xba8] sm:$0xff]
    %v400 = vld [vmem:[%s1 + $0xbb0] sm:$0xff]
    %v401 = vld [vmem:[%s1 + $0xbb8] sm:$0xff]
    %v402 = vld [vmem:[%s1 + $0xbc0] sm:$0xff]
    %v403 = vld [vmem:[%s1 + $0xbc8] sm:$0xff]
    %v404 = vld [vmem:[%s1 + $0xbd0] sm:$0xff]
    %v405 = vld [vmem:[%s1 + $0xbd8] sm:$0xff]
    %v406 = vld [vmem:[%s1 + $0xbe0] sm:$0xff]
    %v407 = vld [vmem:[%s1 + $0xbe8] sm:$0xff]
    %v408 = vld [vmem:[%s1 + $0xbf0] sm:$0xff]
    %v409 = vld [vmem:[%s1 + $0xbf8] sm:$0xff]
    %v410 = vld [vmem:[%s1 + $0xc00] sm:$0xff]
    %v411 = vld [vmem:[%s1 + $0xc08] sm:$0xff]
    %v412 = vld [vmem:[%s1 + $0xc10] sm:$0xff]
    %v413 = vld [vmem:[%s1 + $0xc18] sm:$0xff]
    %v414 = vld [vmem:[%s1 + $0xc20] sm:$0xff]
    %v415 = vld [vmem:[%s1 + $0xc28] sm:$0xff]
    %v416 = vld [vmem:[%s1 + $0xc30] sm:$0xff]
    %v417 = vld [vmem:[%s1 + $0xc38] sm:$0xff]
    %v418 = vld [vmem:[%s1 + $0xc40] sm:$0xff]
    %v419 = vld [vmem:[%s1 + $0xc48] sm:$0xff]
    %v420 = vld [vmem:[%s1 + $0xc50] sm:$0xff]
    %v421 = vld [vmem:[%s1 + $0xc58] sm:$0xff]
    %v422 = vld [vmem:[%s1 + $0xc60] sm:$0xff]
    %v423 = vld [vmem:[%s1 + $0xc68] sm:$0xff]
    %v424 = vld [vmem:[%s1 + $0xc70] sm:$0xff]
    %v425 = vld [vmem:[%s1 + $0xc78] sm:$0xff]
    %v426 = vld [vmem:[%s1 + $0xc80] sm:$0xff]
    %v427 = vld [vmem:[%s1 + $0xc88] sm:$0xff]
    %v428 = vld [vmem:[%s1 + $0xc90] sm:$0xff]
    %v429 = vld [vmem:[%s1 + $0xc98] sm:$0xff]
    %v430 = vld [vmem:[%s1 + $0xca0] sm:$0xff]
    %v431 = vld [vmem:[%s1 + $0xca8] sm:$0xff]
    %v432 = vld [vmem:[%s1 + $0xcb0] sm:$0xff]
    %v433 = vld [vmem:[%s1 + $0xcb8] sm:$0xff]
    %v434 = vld [vmem:[%s1 + $0xcc0] sm:$0xff]
    %v435 = vld [vmem:[%s1 + $0xcc8] sm:$0xff]
    %v436 = vld [vmem:[%s1 + $0xcd0] sm:$0xff]
    %v437 = vld [vmem:[%s1 + $0xcd8] sm:$0xff]
    %v438 = vld [vmem:[%s1 + $0xce0] sm:$0xff]
    %v439 = vld [vmem:[%s1 + $0xce8] sm:$0xff]
    %v440 = vld [vmem:[%s1 + $0xcf0] sm:$0xff]
    %v441 = vld [vmem:[%s1 + $0xcf8] sm:$0xff]
    %v442 = vld [vmem:[%s1 + $0xd00] sm:$0xff]
    %v443 = vld [vmem:[%s1 + $0xd08] sm:$0xff]
    %v444 = vld [vmem:[%s1 + $0xd10] sm:$0xff]
    %v445 = vld [vmem:[%s1 + $0xd18] sm:$0xff]
    %v446 = vld [vmem:[%s1 + $0xd20] sm:$0xff]
    %v447 = vld [vmem:[%s1 + $0xd28] sm:$0xff]
    %v448 = vld [vmem:[%s1 + $0xd30] sm:$0xff]
    %v449 = vld [vmem:[%s1 + $0xd38] sm:$0xff]
    %v450 = vld [vmem:[%s1 + $0xd40] sm:$0xff]
    %v451 = vld [vmem:[%s1 + $0xd48] sm:$0xff]
    %v452 = vld [vmem:[%s1 + $0xd50] sm:$0xff]
    %v453 = vld [vmem:[%s1 + $0xd58] sm:$0xff]
    %v454 = vld [vmem:[%s1 + $0xd60] sm:$0xff]
    %v455 = vld [vmem:[%s1 + $0xd68] sm:$0xff]
    %v456 = vld [vmem:[%s1 + $0xd70] sm:$0xff]
    %v457 = vld [vmem:[%s1 + $0xd78] sm:$0xff]
    %v458 = vld [vmem:[%s1 + $0xd80] sm:$0xff]
    %v459 = vld [vmem:[%s1 + $0xd88] sm:$0xff]
    %v460 = vld [vmem:[%s1 + $0xd90] sm:$0xff]
    %v461 = vld [vmem:[%s1 + $0xd98] sm:$0xff]
    %v462 = vld [vmem:[%s1 + $0xda0] sm:$0xff]
    %v463 = vld [vmem:[%s1 + $0xda8] sm:$0xff]
    %v464 = vld [vmem:[%s1 + $0xdb0] sm:$0xff]
    %v465 = vld [vmem:[%s1 + $0xdb8] sm:$0xff]
    %v466 = vld [vmem:[%s1 + $0xdc0] sm:$0xff]
    %v467 = vld [vmem:[%s1 + $0xdc8] sm:$0xff]
    %v468 = vld [vmem:[%s1 + $0xdd0] sm:$0xff]
    %v469 = vld [vmem:[%s1 + $0xdd8] sm:$0xff]
    %v470 = vld [vmem:[%s1 + $0xde0] sm:$0xff]
    %v471 = vld [vmem:[%s1 + $0xde8] sm:$0xff]
    %v472 = vld [vmem:[%s1 + $0xdf0] sm:$0xff]
    %v473 = vld [vmem:[%s1 + $0xdf8] sm:$0xff]
    %v474 = vld [vmem:[%s1 + $0xe00] sm:$0xff]
    %v475 = vld [vmem:[%s1 + $0xe08] sm:$0xff]
    %v476 = vld [vmem:[%s1 + $0xe10] sm:$0xff]
    %v477 = vld [vmem:[%s1 + $0xe18] sm:$0xff]
    %v478 = vld [vmem:[%s1 + $0xe20] sm:$0xff]
    %v479 = vld [vmem:[%s1 + $0xe28] sm:$0xff]
    %v480 = vld [vmem:[%s1 + $0xe30] sm:$0xff]
    %v481 = vld [vmem:[%s1 + $0xe38] sm:$0xff]
    %v482 = vld [vmem:[%s1 + $0xe40] sm:$0xff]
    %v483 = vld [vmem:[%s1 + $0xe48] sm:$0xff]
    %v484 = vld [vmem:[%s1 + $0xe50] sm:$0xff]
    %v485 = vld [vmem:[%s1 + $0xe58] sm:$0xff]
    %v486 = vld [vmem:[%s1 + $0xe60] sm:$0xff]
    %v487 = vld [vmem:[%s1 + $0xe68] sm:$0xff]
    %v488 = vld [vmem:[%s1 + $0xe70] sm:$0xff]
    %v489 = vld [vmem:[%s1 + $0xe78] sm:$0xff]
    %v490 = vld [vmem:[%s1 + $0xe80] sm:$0xff]
    %v491 = vld [vmem:[%s1 + $0xe88] sm:$0xff]
    %v492 = vld [vmem:[%s1 + $0xe90] sm:$0xff]
    %v493 = vld [vmem:[%s1 + $0xe98] sm:$0xff]
    %v494 = vld [vmem:[%s1 + $0xea0] sm:$0xff]
    %v495 = vld [vmem:[%s1 + $0xea8] sm:$0xff]
    %v496 = vld [vmem:[%s1 + $0xeb0] sm:$0xff]
    %v497 = vld [vmem:[%s1 + $0xeb8] sm:$0xff]
    %v498 = vld [vmem:[%s1 + $0xec0] sm:$0xff]
    %v499 = vld [vmem:[%s1 + $0xec8] sm:$0xff]
    %v500 = vld [vmem:[%s1 + $0xed0] sm:$0xff]
    %v501 = vld [vmem:[%s1 + $0xed8] sm:$0xff]
    %v502 = vld [vmem:[%s1 + $0xee0] sm:$0xff]
    %v503 = vld [vmem:[%s1 + $0xee8] sm:$0xff]
    %v504 = vld [vmem:[%s1 + $0xef0] sm:$0xff]
    %v505 = vld [vmem:[%s1 + $0xef8] sm:$0xff]
    %v506 = vld [vmem:[%s1 + $0xf00] sm:$0xff]
    %v507 = vld [vmem:[%s1 + $0xf08] sm:$0xff]
    %v508 = vld [vmem:[%s1 + $0xf10] sm:$0xff]
    %v509 = vld [vmem:[%s1 + $0xf18] sm:$0xff]
    %v510 = vld [vmem:[%s1 + $0xf20] sm:$0xff]
    %v511 = vld [vmem:[%s1 + $0xf28] sm:$0xff]
    %v512 = vld [vmem:[%s1 + $0xf30] sm:$0xff]
    %v513 = vld [vmem:[%s1 + $0xf38] sm:$0xff]
    %v514 = vld [vmem:[%s1 + $0xf40] sm:$0xff]
    %v515 = vld [vmem:[%s1 + $0xf48] sm:$0xff]
    %v516 = vld [vmem:[%s1 + $0xf50] sm:$0xff]
    %v517 = vld [vmem:[%s1 + $0xf58] sm:$0xff]
    %v518 = vld [vmem:[%s1 + $0xf60] sm:$0xff]
    %v519 = vld [vmem:[%s1 + $0xf68] sm:$0xff]
    %v520 = vld [vmem:[%s1 + $0xf70] sm:$0xff]
    %v521 = vld [vmem:[%s1 + $0xf78] sm:$0xff]
    %v522 = vld [vmem:[%s1 + $0xf80] sm:$0xff]
    %v523 = vld [vmem:[%s1 + $0xf88] sm:$0xff]
    %v524 = vld [vmem:[%s1 + $0xf90] sm:$0xff]
    %v525 = vld [vmem:[%s1 + $0xf98] sm:$0xff]
    %v526 = vld [vmem:[%s1 + $0xfa0] sm:$0xff]
    %v527 = vld [vmem:[%s1 + $0xfa8] sm:$0xff]
    %v528 = vld [vmem:[%s1 + $0xfb0] sm:$0xff]
    %v529 = vld [vmem:[%s1 + $0xfb8] sm:$0xff]
    %v530 = vld [vmem:[%s1 + $0xfc0] sm:$0xff]
    %v531 = vld [vmem:[%s1 + $0xfc8] sm:$0xff]
    %v532 = vld [vmem:[%s1 + $0xfd0] sm:$0xff]
    %v533 = vld [vmem:[%s1 + $0xfd8] sm:$0xff]
    %v534 = vld [vmem:[%s1 + $0xfe0] sm:$0xff]
    %v535 = vld [vmem:[%s1 + $0xfe8] sm:$0xff]
    %v536 = vld [vmem:[%s1 + $0xff0] sm:$0xff]
    %v537 = vld [vmem:[%s1 + $0xff8] sm:$0xff]
    %v538 = vld [vmem:[%s1 + $0x1000] sm:$0xff]
    %v539 = vld [vmem:[%s1 + $0x1008] sm:$0xff]
    %v540 = vld [vmem:[%s1 + $0x1010] sm:$0xff]
    %v541 = vld [vmem:[%s1 + $0x1018] sm:$0xff]
    %v542 = vld [vmem:[%s1 + $0x1020] sm:$0xff]
    %v543 = vld [vmem:[%s1 + $0x1028] sm:$0xff]
    %v544 = vld [vmem:[%s1 + $0x1030] sm:$0xff]
    %v545 = vld [vmem:[%s1 + $0x1038] sm:$0xff]
    %v546 = vld [vmem:[%s1 + $0x1040] sm:$0xff]
    %v547 = vld [vmem:[%s1 + $0x1048] sm:$0xff]
    %v548 = vld [vmem:[%s1 + $0x1050] sm:$0xff]
    %v549 = vld [vmem:[%s1 + $0x1058] sm:$0xff]
    %v550 = vld [vmem:[%s1 + $0x1060] sm:$0xff]
    %v551 = vld [vmem:[%s1 + $0x1068] sm:$0xff]
    %v552 = vld [vmem:[%s1 + $0x1070] sm:$0xff]
    %v553 = vld [vmem:[%s1 + $0x1078] sm:$0xff]
    %v554 = vld [vmem:[%s1 + $0x1080] sm:$0xff]
    %v555 = vld [vmem:[%s1 + $0x1088] sm:$0xff]
    %v556 = vld [vmem:[%s1 + $0x1090] sm:$0xff]
    %v557 = vld [vmem:[%s1 + $0x1098] sm:$0xff]
    %v558 = vld [vmem:[%s1 + $0x10a0] sm:$0xff]
    %v559 = vld [vmem:[%s1 + $0x10a8] sm:$0xff]
    %v560 = vld [vmem:[%s1 + $0x10b0] sm:$0xff]
    %v561 = vld [vmem:[%s1 + $0x10b8] sm:$0xff]
    %v562 = vld [vmem:[%s1 + $0x10c0] sm:$0xff]
    %v563 = vld [vmem:[%s1 + $0x10c8] sm:$0xff]
    %v564 = vld [vmem:[%s1 + $0x10d0] sm:$0xff]
    %v565 = vld [vmem:[%s1 + $0x10d8] sm:$0xff]
    %v566 = vld [vmem:[%s1 + $0x10e0] sm:$0xff]
    %v567 = vld [vmem:[%s1 + $0x10e8] sm:$0xff]
    %v568 = vld [vmem:[%s1 + $0x10f0] sm:$0xff]
    %v569 = vld [vmem:[%s1 + $0x10f8] sm:$0xff]
    %v570 = vld [vmem:[%s1 + $0x1100] sm:$0xff]
    %v571 = vld [vmem:[%s1 + $0x1108] sm:$0xff]
    %v572 = vld [vmem:[%s1 + $0x1110] sm:$0xff]
    %v573 = vld [vmem:[%s1 + $0x1118] sm:$0xff]
    %v574 = vld [vmem:[%s1 + $0x1120] sm:$0xff]
    %v575 = vld [vmem:[%s1 + $0x1128] sm:$0xff]
    %v576 = vld [vmem:[%s1 + $0x1130] sm:$0xff]
    %v577 = vld [vmem:[%s1 + $0x1138] sm:$0xff]
    %v578 = vld [vmem:[%s1 + $0x1140] sm:$0xff]
    %v579 = vld [vmem:[%s1 + $0x1148] sm:$0xff]
    %v580 = vld [vmem:[%s1 + $0x1150] sm:$0xff]
    %v581 = vld [vmem:[%s1 + $0x1158] sm:$0xff]
    %v582 = vld [vmem:[%s1 + $0x1160] sm:$0xff]
    %v583 = vld [vmem:[%s1 + $0x1168] sm:$0xff]
    %v584 = vld [vmem:[%s1 + $0x1170] sm:$0xff]
    %v585 = vld [vmem:[%s1 + $0x1178] sm:$0xff]
    %v586 = vld [vmem:[%s1 + $0x1180] sm:$0xff]
    %v587 = vld [vmem:[%s1 + $0x1188] sm:$0xff]
    %v588 = vld [vmem:[%s1 + $0x1190] sm:$0xff]
    %v589 = vld [vmem:[%s1 + $0x1198] sm:$0xff]
    %v590 = vld [vmem:[%s1 + $0x11a0] sm:$0xff]
    %v591 = vld [vmem:[%s1 + $0x11a8] sm:$0xff]
    %v592 = vld [vmem:[%s1 + $0x11b0] sm:$0xff]
    %v593 = vld [vmem:[%s1 + $0x11b8] sm:$0xff]
    %v594 = vld [vmem:[%s1 + $0x11c0] sm:$0xff]
    %v595 = vld [vmem:[%s1 + $0x11c8] sm:$0xff]
    %v596 = vld [vmem:[%s1 + $0x11d0] sm:$0xff]
    %v597 = vld [vmem:[%s1 + $0x11d8] sm:$0xff]
    %v598 = vld [vmem:[%s1 + $0x11e0] sm:$0xff]
    %v599 = vld [vmem:[%s1 + $0x11e8] sm:$0xff]
    %v600 = vld [vmem:[%s1 + $0x11f0] sm:$0xff]
    %v601 = vld [vmem:[%s1 + $0x11f8] sm:$0xff]
    %v602 = vld [vmem:[%s1 + $0x1200] sm:$0xff]
    %v603 = vld [vmem:[%s1 + $0x1208] sm:$0xff]
    %v604 = vld [vmem:[%s1 + $0x1210] sm:$0xff]
    %v605 = vld [vmem:[%s1 + $0x1218] sm:$0xff]
    %v606 = vld [vmem:[%s1 + $0x1220] sm:$0xff]
    %v607 = vld [vmem:[%s1 + $0x1228] sm:$0xff]
    %v608 = vld [vmem:[%s1 + $0x1230] sm:$0xff]
    %v609 = vld [vmem:[%s1 + $0x1238] sm:$0xff]
    %v610 = vld [vmem:[%s1 + $0x1240] sm:$0xff]
    %v611 = vld [vmem:[%s1 + $0x1248] sm:$0xff]
    %v612 = vld [vmem:[%s1 + $0x1250] sm:$0xff]
    %v613 = vld [vmem:[%s1 + $0x1258] sm:$0xff]
    %v614 = vld [vmem:[%s1 + $0x1260] sm:$0xff]
    %v615 = vld [vmem:[%s1 + $0x1268] sm:$0xff]
    %v616 = vld [vmem:[%s1 + $0x1270] sm:$0xff]
    %v617 = vld [vmem:[%s1 + $0x1278] sm:$0xff]
    %v618 = vld [vmem:[%s1 + $0x1280] sm:$0xff]
    %v619 = vld [vmem:[%s1 + $0x1288] sm:$0xff]
    %v620 = vld [vmem:[%s1 + $0x1290] sm:$0xff]
    %v621 = vld [vmem:[%s1 + $0x1298] sm:$0xff]
    %v622 = vld [vmem:[%s1 + $0x12a0] sm:$0xff]
    %v623 = vld [vmem:[%s1 + $0x12a8] sm:$0xff]
    %v624 = vld [vmem:[%s1 + $0x12b0] sm:$0xff]
    %v625 = vld [vmem:[%s1 + $0x12b8] sm:$0xff]
    %v626 = vld [vmem:[%s1 + $0x12c0] sm:$0xff]
    %v627 = vld [vmem:[%s1 + $0x12c8] sm:$0xff]
    %v628 = vld [vmem:[%s1 + $0x12d0] sm:$0xff]
    %v629 = vld [vmem:[%s1 + $0x12d8] sm:$0xff]
    %v630 = vld [vmem:[%s1 + $0x12e0] sm:$0xff]
    %v631 = vld [vmem:[%s1 + $0x12e8] sm:$0xff]
    %v632 = vld [vmem:[%s1 + $0x12f0] sm:$0xff]
    %v633 = vld [vmem:[%s1 + $0x12f8] sm:$0xff]
    %v634 = vld [vmem:[%s1 + $0x1300] sm:$0xff]
    %v635 = vld [vmem:[%s1 + $0x1308] sm:$0xff]
    %v636 = vld [vmem:[%s1 + $0x1310] sm:$0xff]
    %v637 = vld [vmem:[%s1 + $0x1318] sm:$0xff]
    %v638 = vld [vmem:[%s1 + $0x1320] sm:$0xff]
    %v639 = vld [vmem:[%s1 + $0x1328] sm:$0xff]
    %v640 = vld [vmem:[%s1 + $0x1330] sm:$0xff]
    %v641 = vld [vmem:[%s1 + $0x1338] sm:$0xff]
    %v642 = vld [vmem:[%s1 + $0x1340] sm:$0xff]
    %v643 = vld [vmem:[%s1 + $0x1348] sm:$0xff]
    %v644 = vld [vmem:[%s1 + $0x1350] sm:$0xff]
    %v645 = vld [vmem:[%s1 + $0x1358] sm:$0xff]
    %v646 = vld [vmem:[%s1 + $0x1360] sm:$0xff]
    %v647 = vld [vmem:[%s1 + $0x1368] sm:$0xff]
    %v648 = vld [vmem:[%s1 + $0x1370] sm:$0xff]
    %v649 = vld [vmem:[%s1 + $0x1378] sm:$0xff]
    %v650 = vld [vmem:[%s1 + $0x1380] sm:$0xff]
    %v651 = vld [vmem:[%s1 + $0x1388] sm:$0xff]
    %v652 = vld [vmem:[%s1 + $0x1390] sm:$0xff]
    %v653 = vld [vmem:[%s1 + $0x1398] sm:$0xff]
    %v654 = vld [vmem:[%s1 + $0x13a0] sm:$0xff]
    %v655 = vld [vmem:[%s1 + $0x13a8] sm:$0xff]
    %v656 = vld [vmem:[%s1 + $0x13b0] sm:$0xff]
    %v657 = vld [vmem:[%s1 + $0x13b8] sm:$0xff]
    %v658 = vld [vmem:[%s1 + $0x13c0] sm:$0xff]
    %v659 = vld [vmem:[%s1 + $0x13c8] sm:$0xff]
    %v660 = vld [vmem:[%s1 + $0x13d0] sm:$0xff]
    %v661 = vld [vmem:[%s1 + $0x13d8] sm:$0xff]
    %v662 = vld [vmem:[%s1 + $0x13e0] sm:$0xff]
    %v663 = vld [vmem:[%s1 + $0x13e8] sm:$0xff]
    %v664 = vld [vmem:[%s1 + $0x13f0] sm:$0xff]
    %v665 = vld [vmem:[%s1 + $0x13f8] sm:$0xff]
    %v666 = vld [vmem:[%s1 + $0x1400] sm:$0xff]
    %v667 = vld [vmem:[%s1 + $0x1408] sm:$0xff]
    %v668 = vld [vmem:[%s1 + $0x1410] sm:$0xff]
    %v669 = vld [vmem:[%s1 + $0x1418] sm:$0xff]
    %v670 = vld [vmem:[%s1 + $0x1420] sm:$0xff]
    %v671 = vld [vmem:[%s1 + $0x1428] sm:$0xff]
    %v672 = vld [vmem:[%s1 + $0x1430] sm:$0xff]
    %v673 = vld [vmem:[%s1 + $0x1438] sm:$0xff]
    %v674 = vld [vmem:[%s1 + $0x1440] sm:$0xff]
    %v675 = vld [vmem:[%s1 + $0x1448] sm:$0xff]
    %v676 = vld [vmem:[%s1 + $0x1450] sm:$0xff]
    %v677 = vld [vmem:[%s1 + $0x1458] sm:$0xff]
    %v678 = vld [vmem:[%s1 + $0x1460] sm:$0xff]
    %v679 = vld [vmem:[%s1 + $0x1468] sm:$0xff]
    %v680 = vld [vmem:[%s1 + $0x1470] sm:$0xff]
    %v681 = vld [vmem:[%s1 + $0x1478] sm:$0xff]
    %v682 = vld [vmem:[%s1 + $0x1480] sm:$0xff]
    %v683 = vld [vmem:[%s1 + $0x1488] sm:$0xff]
    %v684 = vld [vmem:[%s1 + $0x1490] sm:$0xff]
    %v685 = vld [vmem:[%s1 + $0x1498] sm:$0xff]
    %v686 = vld [vmem:[%s1 + $0x14a0] sm:$0xff]
    %v687 = vld [vmem:[%s1 + $0x14a8] sm:$0xff]
    %v688 = vld [vmem:[%s1 + $0x14b0] sm:$0xff]
    %v689 = vld [vmem:[%s1 + $0x14b8] sm:$0xff]
    %v690 = vld [vmem:[%s1 + $0x14c0] sm:$0xff]
    %v691 = vld [vmem:[%s1 + $0x14c8] sm:$0xff]
    %v692 = vld [vmem:[%s1 + $0x14d0] sm:$0xff]
    %v693 = vld [vmem:[%s1 + $0x14d8] sm:$0xff]
    %v694 = vld [vmem:[%s1 + $0x14e0] sm:$0xff]
    %v695 = vld [vmem:[%s1 + $0x14e8] sm:$0xff]
    %v696 = vld [vmem:[%s1 + $0x14f0] sm:$0xff]
    %v697 = vld [vmem:[%s1 + $0x14f8] sm:$0xff]
    %v698 = vld [vmem:[%s1 + $0x1500] sm:$0xff]
    %v699 = vld [vmem:[%s1 + $0x1508] sm:$0xff]
    %v700 = vld [vmem:[%s1 + $0x1510] sm:$0xff]
    %v701 = vld [vmem:[%s1 + $0x1518] sm:$0xff]
    %v702 = vld [vmem:[%s1 + $0x1520] sm:$0xff]
    %v703 = vld [vmem:[%s1 + $0x1528] sm:$0xff]
    %v704 = vld [vmem:[%s1 + $0x1530] sm:$0xff]
    %v705 = vld [vmem:[%s1 + $0x1538] sm:$0xff]
    %v706 = vld [vmem:[%s1 + $0x1540] sm:$0xff]
    %v707 = vld [vmem:[%s1 + $0x1548] sm:$0xff]
    %v708 = vld [vmem:[%s1 + $0x1550] sm:$0xff]
    %v709 = vld [vmem:[%s1 + $0x1558] sm:$0xff]
    %v710 = vld [vmem:[%s1 + $0x1560] sm:$0xff]
    %v711 = vld [vmem:[%s1 + $0x1568] sm:$0xff]
    %v712 = vld [vmem:[%s1 + $0x1570] sm:$0xff]
    %v713 = vld [vmem:[%s1 + $0x1578] sm:$0xff]
    %v714 = vld [vmem:[%s1 + $0x1580] sm:$0xff]
    %v715 = vld [vmem:[%s1 + $0x1588] sm:$0xff]
    %v716 = vld [vmem:[%s1 + $0x1590] sm:$0xff]
    %v717 = vld [vmem:[%s1 + $0x1598] sm:$0xff]
    %v718 = vld [vmem:[%s1 + $0x15a0] sm:$0xff]
    %v719 = vld [vmem:[%s1 + $0x15a8] sm:$0xff]
    %v720 = vld [vmem:[%s1 + $0x15b0] sm:$0xff]
    %v721 = vld [vmem:[%s1 + $0x15b8] sm:$0xff]
    %v722 = vld [vmem:[%s1 + $0x15c0] sm:$0xff]
    %v723 = vld [vmem:[%s1 + $0x15c8] sm:$0xff]
    %v724 = vld [vmem:[%s1 + $0x15d0] sm:$0xff]
    %v725 = vld [vmem:[%s1 + $0x15d8] sm:$0xff]
    %v726 = vld [vmem:[%s1 + $0x15e0] sm:$0xff]
    %v727 = vld [vmem:[%s1 + $0x15e8] sm:$0xff]
    %v728 = vld [vmem:[%s1 + $0x15f0] sm:$0xff]
    %v729 = vld [vmem:[%s1 + $0x15f8] sm:$0xff]
    %v730 = vld [vmem:[%s1 + $0x1600] sm:$0xff]
    %v731 = vld [vmem:[%s1 + $0x1608] sm:$0xff]
    %v732 = vld [vmem:[%s1 + $0x1610] sm:$0xff]
    %v733 = vld [vmem:[%s1 + $0x1618] sm:$0xff]
    %v734 = vld [vmem:[%s1 + $0x1620] sm:$0xff]
    %v735 = vld [vmem:[%s1 + $0x1628] sm:$0xff]
    %v736 = vld [vmem:[%s1 + $0x1630] sm:$0xff]
    %v737 = vld [vmem:[%s1 + $0x1638] sm:$0xff]
    %v738 = vld [vmem:[%s1 + $0x1640] sm:$0xff]
    %v739 = vld [vmem:[%s1 + $0x1648] sm:$0xff]
    %v740 = vld [vmem:[%s1 + $0x1650] sm:$0xff]
    %v741 = vld [vmem:[%s1 + $0x1658] sm:$0xff]
    %v742 = vld [vmem:[%s1 + $0x1660] sm:$0xff]
    %v743 = vld [vmem:[%s1 + $0x1668] sm:$0xff]
    %v744 = vld [vmem:[%s1 + $0x1670] sm:$0xff]
    %v745 = vld [vmem:[%s1 + $0x1678] sm:$0xff]
    %v746 = vld [vmem:[%s1 + $0x1680] sm:$0xff]
    %v747 = vld [vmem:[%s1 + $0x1688] sm:$0xff]
    %v748 = vld [vmem:[%s1 + $0x1690] sm:$0xff]
    %v749 = vld [vmem:[%s1 + $0x1698] sm:$0xff]
    %v750 = vld [vmem:[%s1 + $0x16a0] sm:$0xff]
    %v751 = vld [vmem:[%s1 + $0x16a8] sm:$0xff]
    %v752 = vld [vmem:[%s1 + $0x16b0] sm:$0xff]
    %v753 = vld [vmem:[%s1 + $0x16b8] sm:$0xff]
    %v754 = vld [vmem:[%s1 + $0x16c0] sm:$0xff]
    %v755 = vld [vmem:[%s1 + $0x16c8] sm:$0xff]
    %v756 = vld [vmem:[%s1 + $0x16d0] sm:$0xff]
    %v757 = vld [vmem:[%s1 + $0x16d8] sm:$0xff]
    %v758 = vld [vmem:[%s1 + $0x16e0] sm:$0xff]
    %v759 = vld [vmem:[%s1 + $0x16e8] sm:$0xff]
    %v760 = vld [vmem:[%s1 + $0x16f0] sm:$0xff]
    %v761 = vld [vmem:[%s1 + $0x16f8] sm:$0xff]
    %v762 = vld [vmem:[%s1 + $0x1700] sm:$0xff]
    %v763 = vld [vmem:[%s1 + $0x1708] sm:$0xff]
    %v764 = vld [vmem:[%s1 + $0x1710] sm:$0xff]
    %v765 = vld [vmem:[%s1 + $0x1718] sm:$0xff]
    %v766 = vld [vmem:[%s1 + $0x1720] sm:$0xff]
    %v767 = vld [vmem:[%s1 + $0x1728] sm:$0xff]
    %v768 = vld [vmem:[%s1 + $0x1730] sm:$0xff]
    %v769 = vld [vmem:[%s1 + $0x1738] sm:$0xff]
    %v770 = vld [vmem:[%s1 + $0x1740] sm:$0xff]
    %v771 = vld [vmem:[%s1 + $0x1748] sm:$0xff]
    %v772 = vld [vmem:[%s1 + $0x1750] sm:$0xff]
    %v773 = vld [vmem:[%s1 + $0x1758] sm:$0xff]
    %v774 = vld [vmem:[%s1 + $0x1760] sm:$0xff]
    %v775 = vld [vmem:[%s1 + $0x1768] sm:$0xff]
    %v776 = vld [vmem:[%s1 + $0x1770] sm:$0xff]
    %v777 = vld [vmem:[%s1 + $0x1778] sm:$0xff]
    %v778 = vld [vmem:[%s1 + $0x1780] sm:$0xff]
    %v779 = vld [vmem:[%s1 + $0x1788] sm:$0xff]
    %v780 = vld [vmem:[%s1 + $0x1790] sm:$0xff]
    %v781 = vld [vmem:[%s1 + $0x1798] sm:$0xff]
    %v782 = vld [vmem:[%s1 + $0x17a0] sm:$0xff]
    %v783 = vld [vmem:[%s1 + $0x17a8] sm:$0xff]
    %v784 = vld [vmem:[%s1 + $0x17b0] sm:$0xff]
    %v785 = vld [vmem:[%s1 + $0x17b8] sm:$0xff]
    %v786 = vld [vmem:[%s1 + $0x17c0] sm:$0xff]
    %v787 = vld [vmem:[%s1 + $0x17c8] sm:$0xff]
    %v788 = vld [vmem:[%s1 + $0x17d0] sm:$0xff]
    %v789 = vld [vmem:[%s1 + $0x17d8] sm:$0xff]
    %v790 = vld [vmem:[%s1 + $0x17e0] sm:$0xff]
    %v791 = vld [vmem:[%s1 + $0x17e8] sm:$0xff]
    %v792 = vld [vmem:[%s1 + $0x17f0] sm:$0xff]
    %v793 = vld [vmem:[%s1 + $0x17f8] sm:$0xff]
    %v794 = vld [vmem:[%s1 + $0x1800] sm:$0xff]
    %v795 = vld [vmem:[%s1 + $0x1808] sm:$0xff]
    %v796 = vld [vmem:[%s1 + $0x1810] sm:$0xff]
    %v797 = vld [vmem:[%s1 + $0x1818] sm:$0xff]
    %v798 = vld [vmem:[%s1 + $0x1820] sm:$0xff]
    %v799 = vld [vmem:[%s1 + $0x1828] sm:$0xff]
    %v800 = vld [vmem:[%s1 + $0x1830] sm:$0xff]
    %v801 = vld [vmem:[%s1 + $0x1838] sm:$0xff]
    %v802 = vld [vmem:[%s1 + $0x1840] sm:$0xff]
    %v803 = vld [vmem:[%s1 + $0x1848] sm:$0xff]
    %v804 = vld [vmem:[%s1 + $0x1850] sm:$0xff]
    %v805 = vld [vmem:[%s1 + $0x1858] sm:$0xff]
    %v806 = vld [vmem:[%s1 + $0x1860] sm:$0xff]
    %v807 = vld [vmem:[%s1 + $0x1868] sm:$0xff]
    %v808 = vld [vmem:[%s1 + $0x1870] sm:$0xff]
    %v809 = vld [vmem:[%s1 + $0x1878] sm:$0xff]
    %v810 = vld [vmem:[%s1 + $0x1880] sm:$0xff]
    %v811 = vld [vmem:[%s1 + $0x1888] sm:$0xff]
    %v812 = vld [vmem:[%s1 + $0x1890] sm:$0xff]
    %v813 = vld [vmem:[%s1 + $0x1898] sm:$0xff]
    %v814 = vld [vmem:[%s1 + $0x18a0] sm:$0xff]
    %v815 = vld [vmem:[%s1 + $0x18a8] sm:$0xff]
    %v816 = vld [vmem:[%s1 + $0x18b0] sm:$0xff]
    %v817 = vld [vmem:[%s1 + $0x18b8] sm:$0xff]
    %v818 = vld [vmem:[%s1 + $0x18c0] sm:$0xff]
    %v819 = vld [vmem:[%s1 + $0x18c8] sm:$0xff]
    %v820 = vld [vmem:[%s1 + $0x18d0] sm:$0xff]
    %v821 = vld [vmem:[%s1 + $0x18d8] sm:$0xff]
    %v822 = vld [vmem:[%s1 + $0x18e0] sm:$0xff]
    %v823 = vld [vmem:[%s1 + $0x18e8] sm:$0xff]
    %v824 = vld [vmem:[%s1 + $0x18f0] sm:$0xff]
    %v825 = vld [vmem:[%s1 + $0x18f8] sm:$0xff]
    %v826 = vld [vmem:[%s1 + $0x1900] sm:$0xff]
    %v827 = vld [vmem:[%s1 + $0x1908] sm:$0xff]
    %v828 = vld [vmem:[%s1 + $0x1910] sm:$0xff]
    %v829 = vld [vmem:[%s1 + $0x1918] sm:$0xff]
    %v830 = vld [vmem:[%s1 + $0x1920] sm:$0xff]
    %v831 = vld [vmem:[%s1 + $0x1928] sm:$0xff]
    %v832 = vld [vmem:[%s1 + $0x1930] sm:$0xff]
    %v833 = vld [vmem:[%s1 + $0x1938] sm:$0xff]
    %v834 = vld [vmem:[%s1 + $0x1940] sm:$0xff]
    %v835 = vld [vmem:[%s1 + $0x1948] sm:$0xff]
    %v836 = vld [vmem:[%s1 + $0x1950] sm:$0xff]
    %v837 = vld [vmem:[%s1 + $0x1958] sm:$0xff]
    %v838 = vld [vmem:[%s1 + $0x1960] sm:$0xff]
    %v839 = vld [vmem:[%s1 + $0x1968] sm:$0xff]
    %v840 = vld [vmem:[%s1 + $0x1970] sm:$0xff]
    %v841 = vld [vmem:[%s1 + $0x1978] sm:$0xff]
    %v842 = vld [vmem:[%s1 + $0x1980] sm:$0xff]
    %v843 = vld [vmem:[%s1 + $0x1988] sm:$0xff]
    %v844 = vld [vmem:[%s1 + $0x1990] sm:$0xff]
    %v845 = vld [vmem:[%s1 + $0x1998] sm:$0xff]
    %v846 = vld [vmem:[%s1 + $0x19a0] sm:$0xff]
    %v847 = vld [vmem:[%s1 + $0x19a8] sm:$0xff]
    %v848 = vld [vmem:[%s1 + $0x19b0] sm:$0xff]
    %v849 = vld [vmem:[%s1 + $0x19b8] sm:$0xff]
    %v850 = vld [vmem:[%s1 + $0x19c0] sm:$0xff]
    %v851 = vld [vmem:[%s1 + $0x19c8] sm:$0xff]
    %v852 = vld [vmem:[%s1 + $0x19d0] sm:$0xff]
    %v853 = vld [vmem:[%s1 + $0x19d8] sm:$0xff]
    %v854 = vld [vmem:[%s1 + $0x19e0] sm:$0xff]
    %v855 = vld [vmem:[%s1 + $0x19e8] sm:$0xff]
    %v856 = vld [vmem:[%s1 + $0x19f0] sm:$0xff]
    %v857 = vld [vmem:[%s1 + $0x19f8] sm:$0xff]
    %v858 = vld [vmem:[%s1 + $0x1a00] sm:$0xff]
    %v859 = vld [vmem:[%s1 + $0x1a08] sm:$0xff]
    %v860 = vld [vmem:[%s1 + $0x1a10] sm:$0xff]
    %v861 = vld [vmem:[%s1 + $0x1a18] sm:$0xff]
    %v862 = vld [vmem:[%s1 + $0x1a20] sm:$0xff]
    %v863 = vld [vmem:[%s1 + $0x1a28] sm:$0xff]
    %v864 = vld [vmem:[%s1 + $0x1a30] sm:$0xff]
    %v865 = vld [vmem:[%s1 + $0x1a38] sm:$0xff]
    %v866 = vld [vmem:[%s1 + $0x1a40] sm:$0xff]
    %v867 = vld [vmem:[%s1 + $0x1a48] sm:$0xff]
    %v868 = vld [vmem:[%s1 + $0x1a50] sm:$0xff]
    %v869 = vld [vmem:[%s1 + $0x1a58] sm:$0xff]
    %v870 = vld [vmem:[%s1 + $0x1a60] sm:$0xff]
    %v871 = vld [vmem:[%s1 + $0x1a68] sm:$0xff]
    %v872 = vld [vmem:[%s1 + $0x1a70] sm:$0xff]
    %v873 = vld [vmem:[%s1 + $0x1a78] sm:$0xff]
    %v874 = vld [vmem:[%s1 + $0x1a80] sm:$0xff]
    %v875 = vld [vmem:[%s1 + $0x1a88] sm:$0xff]
    %v876 = vld [vmem:[%s1 + $0x1a90] sm:$0xff]
    %v877 = vld [vmem:[%s1 + $0x1a98] sm:$0xff]
    %v878 = vld [vmem:[%s1 + $0x1aa0] sm:$0xff]
    %v879 = vld [vmem:[%s1 + $0x1aa8] sm:$0xff]
    %v880 = vld [vmem:[%s1 + $0x1ab0] sm:$0xff]
    %v881 = vld [vmem:[%s1 + $0x1ab8] sm:$0xff]
    %v882 = vld [vmem:[%s1 + $0x1ac0] sm:$0xff]
    %v883 = vld [vmem:[%s1 + $0x1ac8] sm:$0xff]
    %v884 = vld [vmem:[%s1 + $0x1ad0] sm:$0xff]
    %v885 = vld [vmem:[%s1 + $0x1ad8] sm:$0xff]
    %v886 = vld [vmem:[%s1 + $0x1ae0] sm:$0xff]
    %v887 = vld [vmem:[%s1 + $0x1ae8] sm:$0xff]
    %v888 = vld [vmem:[%s1 + $0x1af0] sm:$0xff]
    %v889 = vld [vmem:[%s1 + $0x1af8] sm:$0xff]
    %v890 = vld [vmem:[%s1 + $0x1b00] sm:$0xff]
    %v891 = vld [vmem:[%s1 + $0x1b08] sm:$0xff]
    %v892 = vld [vmem:[%s1 + $0x1b10] sm:$0xff]
    %v893 = vld [vmem:[%s1 + $0x1b18] sm:$0xff]
    %v894 = vld [vmem:[%s1 + $0x1b20] sm:$0xff]
    %v895 = vld [vmem:[%s1 + $0x1b28] sm:$0xff]
    %v896 = vld [vmem:[%s1 + $0x1b30] sm:$0xff]
    %v897 = vld [vmem:[%s1 + $0x1b38] sm:$0xff]
    %v898 = vld [vmem:[%s1 + $0x1b40] sm:$0xff]
    %v899 = vld [vmem:[%s1 + $0x1b48] sm:$0xff]
    %v900 = vld [vmem:[%s1 + $0x1b50] sm:$0xff]
    %v901 = vld [vmem:[%s1 + $0x1b58] sm:$0xff]
    %v902 = vld [vmem:[%s1 + $0x1b60] sm:$0xff]
    %v903 = vld [vmem:[%s1 + $0x1b68] sm:$0xff]
    %v904 = vld [vmem:[%s1 + $0x1b70] sm:$0xff]
    %v905 = vld [vmem:[%s1 + $0x1b78] sm:$0xff]
    %v906 = vld [vmem:[%s1 + $0x1b80] sm:$0xff]
    %v907 = vld [vmem:[%s1 + $0x1b88] sm:$0xff]
    %v908 = vld [vmem:[%s1 + $0x1b90] sm:$0xff]
    %v909 = vld [vmem:[%s1 + $0x1b98] sm:$0xff]
    %v910 = vld [vmem:[%s1 + $0x1ba0] sm:$0xff]
    %v911 = vld [vmem:[%s1 + $0x1ba8] sm:$0xff]
    %v912 = vld [vmem:[%s1 + $0x1bb0] sm:$0xff]
    %v913 = vld [vmem:[%s1 + $0x1bb8] sm:$0xff]
    %v914 = vld [vmem:[%s1 + $0x1bc0] sm:$0xff]
    %v915 = vld [vmem:[%s1 + $0x1bc8] sm:$0xff]
    %v916 = vld [vmem:[%s1 + $0x1bd0] sm:$0xff]
    %v917 = vld [vmem:[%s1 + $0x1bd8] sm:$0xff]
    %v918 = vld [vmem:[%s1 + $0x1be0] sm:$0xff]
    %v919 = vld [vmem:[%s1 + $0x1be8] sm:$0xff]
    %v920 = vld [vmem:[%s1 + $0x1bf0] sm:$0xff]
    %v921 = vld [vmem:[%s1 + $0x1bf8] sm:$0xff]
    %v922 = vld [vmem:[%s1 + $0x1c00] sm:$0xff]
    %v923 = vld [vmem:[%s1 + $0x1c08] sm:$0xff]
    %v924 = vld [vmem:[%s1 + $0x1c10] sm:$0xff]
    %v925 = vld [vmem:[%s1 + $0x1c18] sm:$0xff]
    %v926 = vld [vmem:[%s1 + $0x1c20] sm:$0xff]
    %v927 = vld [vmem:[%s1 + $0x1c28] sm:$0xff]
    %v928 = vld [vmem:[%s1 + $0x1c30] sm:$0xff]
    %v929 = vld [vmem:[%s1 + $0x1c38] sm:$0xff]
    %v930 = vld [vmem:[%s1 + $0x1c40] sm:$0xff]
    %v931 = vld [vmem:[%s1 + $0x1c48] sm:$0xff]
    %v932 = vld [vmem:[%s1 + $0x1c50] sm:$0xff]
    %v933 = vld [vmem:[%s1 + $0x1c58] sm:$0xff]
    %v934 = vld [vmem:[%s1 + $0x1c60] sm:$0xff]
    %v935 = vld [vmem:[%s1 + $0x1c68] sm:$0xff]
    %v936 = vld [vmem:[%s1 + $0x1c70] sm:$0xff]
    %v937 = vld [vmem:[%s1 + $0x1c78] sm:$0xff]
    %v938 = vld [vmem:[%s1 + $0x1c80] sm:$0xff]
    %v939 = vld [vmem:[%s1 + $0x1c88] sm:$0xff]
    %v940 = vld [vmem:[%s1 + $0x1c90] sm:$0xff]
    %v941 = vld [vmem:[%s1 + $0x1c98] sm:$0xff]
    %v942 = vld [vmem:[%s1 + $0x1ca0] sm:$0xff]
    %v943 = vld [vmem:[%s1 + $0x1ca8] sm:$0xff]
    %v944 = vld [vmem:[%s1 + $0x1cb0] sm:$0xff]
    %v945 = vld [vmem:[%s1 + $0x1cb8] sm:$0xff]
    %v946 = vld [vmem:[%s1 + $0x1cc0] sm:$0xff]
    %v947 = vld [vmem:[%s1 + $0x1cc8] sm:$0xff]
    %v948 = vld [vmem:[%s1 + $0x1cd0] sm:$0xff]
    %v949 = vld [vmem:[%s1 + $0x1cd8] sm:$0xff]
    %v950 = vld [vmem:[%s1 + $0x1ce0] sm:$0xff]
    %v951 = vld [vmem:[%s1 + $0x1ce8] sm:$0xff]
    %v952 = vld [vmem:[%s1 + $0x1cf0] sm:$0xff]
    %v953 = vld [vmem:[%s1 + $0x1cf8] sm:$0xff]
    %v954 = vld [vmem:[%s1 + $0x1d00] sm:$0xff]
    %v955 = vld [vmem:[%s1 + $0x1d08] sm:$0xff]
    %v956 = vld [vmem:[%s1 + $0x1d10] sm:$0xff]
    %v957 = vld [vmem:[%s1 + $0x1d18] sm:$0xff]
    %v958 = vld [vmem:[%s1 + $0x1d20] sm:$0xff]
    %v959 = vld [vmem:[%s1 + $0x1d28] sm:$0xff]
    %v960 = vld [vmem:[%s1 + $0x1d30] sm:$0xff]
    %v961 = vld [vmem:[%s1 + $0x1d38] sm:$0xff]
    %v962 = vld [vmem:[%s1 + $0x1d40] sm:$0xff]
    %v963 = vld [vmem:[%s1 + $0x1d48] sm:$0xff]
    %v964 = vld [vmem:[%s1 + $0x1d50] sm:$0xff]
    %v965 = vld [vmem:[%s1 + $0x1d58] sm:$0xff]
    %v966 = vld [vmem:[%s1 + $0x1d60] sm:$0xff]
    %v967 = vld [vmem:[%s1 + $0x1d68] sm:$0xff]
    %v968 = vld [vmem:[%s1 + $0x1d70] sm:$0xff]
    %v969 = vld [vmem:[%s1 + $0x1d78] sm:$0xff]
    %v970 = vld [vmem:[%s1 + $0x1d80] sm:$0xff]
    %v971 = vld [vmem:[%s1 + $0x1d88] sm:$0xff]
    %v972 = vld [vmem:[%s1 + $0x1d90] sm:$0xff]
    %v973 = vld [vmem:[%s1 + $0x1d98] sm:$0xff]
    %v974 = vld [vmem:[%s1 + $0x1da0] sm:$0xff]
    %v975 = vld [vmem:[%s1 + $0x1da8] sm:$0xff]
    %v976 = vld [vmem:[%s1 + $0x1db0] sm:$0xff]
    %v977 = vld [vmem:[%s1 + $0x1db8] sm:$0xff]
    %v978 = vld [vmem:[%s1 + $0x1dc0] sm:$0xff]
    %v979 = vld [vmem:[%s1 + $0x1dc8] sm:$0xff]
    %v980 = vld [vmem:[%s1 + $0x1dd0] sm:$0xff]
    %v981 = vld [vmem:[%s1 + $0x1dd8] sm:$0xff]
    %v982 = vld [vmem:[%s1 + $0x1de0] sm:$0xff]
    %v983 = vld [vmem:[%s1 + $0x1de8] sm:$0xff]
    %v984 = vld [vmem:[%s1 + $0x1df0] sm:$0xff]
    %v985 = vld [vmem:[%s1 + $0x1df8] sm:$0xff]
    %v986 = vld [vmem:[%s1 + $0x1e00] sm:$0xff]
    %v987 = vld [vmem:[%s1 + $0x1e08] sm:$0xff]
    %v988 = vld [vmem:[%s1 + $0x1e10] sm:$0xff]
    %v989 = vld [vmem:[%s1 + $0x1e18] sm:$0xff]
    %v990 = vld [vmem:[%s1 + $0x1e20] sm:$0xff]
    %v991 = vld [vmem:[%s1 + $0x1e28] sm:$0xff]
    %v992 = vld [vmem:[%s1 + $0x1e30] sm:$0xff]
    %v993 = vld [vmem:[%s1 + $0x1e38] sm:$0xff]
    %v994 = vld [vmem:[%s1 + $0x1e40] sm:$0xff]
    %v995 = vld [vmem:[%s1 + $0x1e48] sm:$0xff]
    %v996 = vld [vmem:[%s1 + $0x1e50] sm:$0xff]
    %v997 = vld [vmem:[%s1 + $0x1e58] sm:$0xff]
    %v998 = vld [vmem:[%s1 + $0x1e60] sm:$0xff]
    %v999 = vld [vmem:[%s1 + $0x1e68] sm:$0xff]
    %v1000 = vld [vmem:[%s1 + $0x1e70] sm:$0xff]
    %v1001 = vld [vmem:[%s1 + $0x1e78] sm:$0xff]
    %v1002 = vld [vmem:[%s1 + $0x1e80] sm:$0xff]
    %v1003 = vld [vmem:[%s1 + $0x1e88] sm:$0xff]
    %v1004 = vld [vmem:[%s1 + $0x1e90] sm:$0xff]
    %v1005 = vld [vmem:[%s1 + $0x1e98] sm:$0xff]
    %v1006 = vld [vmem:[%s1 + $0x1ea0] sm:$0xff]
    %v1007 = vld [vmem:[%s1 + $0x1ea8] sm:$0xff]
    %v1008 = vld [vmem:[%s1 + $0x1eb0] sm:$0xff]
    %v1009 = vld [vmem:[%s1 + $0x1eb8] sm:$0xff]
    %v1010 = vld [vmem:[%s1 + $0x1ec0] sm:$0xff]
    %v1011 = vld [vmem:[%s1 + $0x1ec8] sm:$0xff]
    %v1012 = vld [vmem:[%s1 + $0x1ed0] sm:$0xff]
    %v1013 = vld [vmem:[%s1 + $0x1ed8] sm:$0xff]
    %v1014 = vld [vmem:[%s1 + $0x1ee0] sm:$0xff]
    %v1015 = vld [vmem:[%s1 + $0x1ee8] sm:$0xff]
    %v1016 = vld [vmem:[%s1 + $0x1ef0] sm:$0xff]
    %v1017 = vld [vmem:[%s1 + $0x1ef8] sm:$0xff]
    %v1018 = vld [vmem:[%s1 + $0x1f00] sm:$0xff]
    %v1019 = vld [vmem:[%s1 + $0x1f08] sm:$0xff]
    %v1020 = vld [vmem:[%s1 + $0x1f10] sm:$0xff]
    %v1021 = vld [vmem:[%s1 + $0x1f18] sm:$0xff]
    %v1022 = vld [vmem:[%s1 + $0x1f20] sm:$0xff]
    %v1023 = vld [vmem:[%s1 + $0x1f28] sm:$0xff]
    %v1024 = vld [vmem:[%s1 + $0x1f30] sm:$0xff]
    %v1025 = vld [vmem:[%s1 + $0x1f38] sm:$0xff]
    %v1026 = vld [vmem:[%s1 + $0x1f40] sm:$0xff]
    %v1027 = vld [vmem:[%s1 + $0x1f48] sm:$0xff]
    %v1028 = vld [vmem:[%s1 + $0x1f50] sm:$0xff]
    %v1029 = vld [vmem:[%s1 + $0x1f58] sm:$0xff]
    %v1030 = vld [vmem:[%s1 + $0x1f60] sm:$0xff]
    %v1031 = vld [vmem:[%s1 + $0x1f68] sm:$0xff]
    %v1032 = vld [vmem:[%s1 + $0x1f70] sm:$0xff]
    %v1033 = vld [vmem:[%s1 + $0x1f78] sm:$0xff]
    %v1034 = vld [vmem:[%s1 + $0x1f80] sm:$0xff]
    %v1035 = vld [vmem:[%s1 + $0x1f88] sm:$0xff]
    %v1036 = vld [vmem:[%s1 + $0x1f90] sm:$0xff]
    %v1037 = vld [vmem:[%s1 + $0x1f98] sm:$0xff]
    %v1038 = vld [vmem:[%s1 + $0x1fa0] sm:$0xff]
    %v1039 = vld [vmem:[%s1 + $0x1fa8] sm:$0xff]
    %v1040 = vld [vmem:[%s1 + $0x1fb0] sm:$0xff]
    %v1041 = vld [vmem:[%s1 + $0x1fb8] sm:$0xff]
    %v1042 = vld [vmem:[%s1 + $0x1fc0] sm:$0xff]
    %v1043 = vld [vmem:[%s1 + $0x1fc8] sm:$0xff]
    %v1044 = vld [vmem:[%s1 + $0x1fd0] sm:$0xff]
    %v1045 = vld [vmem:[%s1 + $0x1fd8] sm:$0xff]
    %v1046 = vld [vmem:[%s1 + $0x1fe0] sm:$0xff]
    %v1047 = vld [vmem:[%s1 + $0x1fe8] sm:$0xff]
    %v1048 = vld [vmem:[%s1 + $0x1ff0] sm:$0xff]
    %v1049 = vld [vmem:[%s1 + $0x1ff8] sm:$0xff]
    %v1050 = vld [vmem:[%s1 + $0x2000] sm:$0xff]
    %v1051 = vld [vmem:[%s1 + $0x2008] sm:$0xff]
    %v1052 = vld [vmem:[%s1 + $0x2010] sm:$0xff]
    %v1053 = vld [vmem:[%s1 + $0x2018] sm:$0xff]
    %v1054 = vld [vmem:[%s1 + $0x2020] sm:$0xff]
    %v1055 = vld [vmem:[%s1 + $0x2028] sm:$0xff]
    %v1056 = vld [vmem:[%s1 + $0x2030] sm:$0xff]
    %v1057 = vld [vmem:[%s1 + $0x2038] sm:$0xff]
    %v1058 = vld [vmem:[%s1 + $0x2040] sm:$0xff]
    %v1059 = vld [vmem:[%s1 + $0x2048] sm:$0xff]
    %v1060 = vld [vmem:[%s1 + $0x2050] sm:$0xff]
    %v1061 = vld [vmem:[%s1 + $0x2058] sm:$0xff]
    %v1062 = vld [vmem:[%s1 + $0x2060] sm:$0xff]
    %v1063 = vld [vmem:[%s1 + $0x2068] sm:$0xff]
    %v1064 = vld [vmem:[%s1 + $0x2070] sm:$0xff]
    %v1065 = vld [vmem:[%s1 + $0x2078] sm:$0xff]
    %v1066 = vld [vmem:[%s1 + $0x2080] sm:$0xff]
    %v1067 = vld [vmem:[%s1 + $0x2088] sm:$0xff]
    %v1068 = vld [vmem:[%s1 + $0x2090] sm:$0xff]
    %v1069 = vld [vmem:[%s1 + $0x2098] sm:$0xff]
    %v1070 = vld [vmem:[%s1 + $0x20a0] sm:$0xff]
    %v1071 = vld [vmem:[%s1 + $0x20a8] sm:$0xff]
    %v1072 = vld [vmem:[%s1 + $0x20b0] sm:$0xff]
    %v1073 = vld [vmem:[%s1 + $0x20b8] sm:$0xff]
    %v1074 = vld [vmem:[%s1 + $0x20c0] sm:$0xff]
    %v1075 = vld [vmem:[%s1 + $0x20c8] sm:$0xff]
    %v1076 = vld [vmem:[%s1 + $0x20d0] sm:$0xff]
    %v1077 = vld [vmem:[%s1 + $0x20d8] sm:$0xff]
    %v1078 = vld [vmem:[%s1 + $0x20e0] sm:$0xff]
    %v1079 = vld [vmem:[%s1 + $0x20e8] sm:$0xff]
    %v1080 = vld [vmem:[%s1 + $0x20f0] sm:$0xff]
    %v1081 = vld [vmem:[%s1 + $0x20f8] sm:$0xff]
    %v1082 = vld [vmem:[%s1 + $0x2100] sm:$0xff]
    %v1083 = vld [vmem:[%s1 + $0x2108] sm:$0xff]
    %v1084 = vld [vmem:[%s1 + $0x2110] sm:$0xff]
    %v1085 = vld [vmem:[%s1 + $0x2118] sm:$0xff]
    %v1086 = vld [vmem:[%s1 + $0x2120] sm:$0xff]
    %v1087 = vld [vmem:[%s1 + $0x2128] sm:$0xff]
    %v1088 = vld [vmem:[%s1 + $0x2130] sm:$0xff]
    %v1089 = vld [vmem:[%s1 + $0x2138] sm:$0xff]
    %v1090 = vld [vmem:[%s1 + $0x2140] sm:$0xff]
    %v1091 = vld [vmem:[%s1 + $0x2148] sm:$0xff]
    %v1092 = vld [vmem:[%s1 + $0x2150] sm:$0xff]
    %v1093 = vld [vmem:[%s1 + $0x2158] sm:$0xff]
    %v1094 = vld [vmem:[%s1 + $0x2160] sm:$0xff]
    %v1095 = vld [vmem:[%s1 + $0x2168] sm:$0xff]
    %v1096 = vld [vmem:[%s1 + $0x2170] sm:$0xff]
    %v1097 = vld [vmem:[%s1 + $0x2178] sm:$0xff]
    %v1098 = vld [vmem:[%s1 + $0x2180] sm:$0xff]
    %v1099 = vld [vmem:[%s1 + $0x2188] sm:$0xff]
    %v1100 = vld [vmem:[%s1 + $0x2190] sm:$0xff]
    %v1101 = vld [vmem:[%s1 + $0x2198] sm:$0xff]
    %v1102 = vld [vmem:[%s1 + $0x21a0] sm:$0xff]
    %v1103 = vld [vmem:[%s1 + $0x21a8] sm:$0xff]
    %v1104 = vld [vmem:[%s1 + $0x21b0] sm:$0xff]
    %v1105 = vld [vmem:[%s1 + $0x21b8] sm:$0xff]
    %v1106 = vld [vmem:[%s1 + $0x21c0] sm:$0xff]
    %v1107 = vld [vmem:[%s1 + $0x21c8] sm:$0xff]
    %v1108 = vld [vmem:[%s1 + $0x21d0] sm:$0xff]
    %v1109 = vld [vmem:[%s1 + $0x21d8] sm:$0xff]
    %v1110 = vld [vmem:[%s1 + $0x21e0] sm:$0xff]
    %v1111 = vld [vmem:[%s1 + $0x21e8] sm:$0xff]
    %v1112 = vld [vmem:[%s1 + $0x21f0] sm:$0xff]
    %v1113 = vld [vmem:[%s1 + $0x21f8] sm:$0xff]
    %v1114 = vld [vmem:[%s1 + $0x2200] sm:$0xff]
    %v1115 = vld [vmem:[%s1 + $0x2208] sm:$0xff]
    %v1116 = vld [vmem:[%s1 + $0x2210] sm:$0xff]
    %v1117 = vld [vmem:[%s1 + $0x2218] sm:$0xff]
    %v1118 = vld [vmem:[%s1 + $0x2220] sm:$0xff]
    %v1119 = vld [vmem:[%s1 + $0x2228] sm:$0xff]
    %v1120 = vld [vmem:[%s1 + $0x2230] sm:$0xff]
    %v1121 = vld [vmem:[%s1 + $0x2238] sm:$0xff]
    %v1122 = vld [vmem:[%s1 + $0x2240] sm:$0xff]
    %v1123 = vld [vmem:[%s1 + $0x2248] sm:$0xff]
    %v1124 = vld [vmem:[%s1 + $0x2250] sm:$0xff]
    %v1125 = vld [vmem:[%s1 + $0x2258] sm:$0xff]
    %v1126 = vld [vmem:[%s1 + $0x2260] sm:$0xff]
    %v1127 = vld [vmem:[%s1 + $0x2268] sm:$0xff]
    %v1128 = vld [vmem:[%s1 + $0x2270] sm:$0xff]
    %v1129 = vld [vmem:[%s1 + $0x2278] sm:$0xff]
    %v1130 = vld [vmem:[%s1 + $0x2280] sm:$0xff]
    %v1131 = vld [vmem:[%s1 + $0x2288] sm:$0xff]
    %v1132 = vld [vmem:[%s1 + $0x2290] sm:$0xff]
    %v1133 = vld [vmem:[%s1 + $0x2298] sm:$0xff]
    %v1134 = vld [vmem:[%s1 + $0x22a0] sm:$0xff]
    %v1135 = vld [vmem:[%s1 + $0x22a8] sm:$0xff]
    %v1136 = vld [vmem:[%s1 + $0x22b0] sm:$0xff]
    %v1137 = vld [vmem:[%s1 + $0x22b8] sm:$0xff]
    %v1138 = vld [vmem:[%s1 + $0x22c0] sm:$0xff]
    %v1139 = vld [vmem:[%s1 + $0x22c8] sm:$0xff]
    %v1140 = vld [vmem:[%s1 + $0x22d0] sm:$0xff]
    %v1141 = vld [vmem:[%s1 + $0x22d8] sm:$0xff]
    %v1142 = vld [vmem:[%s1 + $0x22e0] sm:$0xff]
    %v1143 = vld [vmem:[%s1 + $0x22e8] sm:$0xff]
    %v1144 = vld [vmem:[%s1 + $0x22f0] sm:$0xff]
    %v1145 = vld [vmem:[%s1 + $0x22f8] sm:$0xff]
    %v1146 = vld [vmem:[%s1 + $0x2300] sm:$0xff]
    %v1147 = vld [vmem:[%s1 + $0x2308] sm:$0xff]
    %v1148 = vld [vmem:[%s1 + $0x2310] sm:$0xff]
    %v1149 = vld [vmem:[%s1 + $0x2318] sm:$0xff]
    %v1150 = vld [vmem:[%s1 + $0x2320] sm:$0xff]
    %v1151 = vld [vmem:[%s1 + $0x2328] sm:$0xff]
    %v1152 = vld [vmem:[%s1 + $0x2330] sm:$0xff]
    %v1153 = vld [vmem:[%s1 + $0x2338] sm:$0xff]
    %v1154 = vld [vmem:[%s1 + $0x2340] sm:$0xff]
    %v1155 = vld [vmem:[%s1 + $0x2348] sm:$0xff]
    %v1156 = vld [vmem:[%s1 + $0x2350] sm:$0xff]
    %v1157 = vld [vmem:[%s1 + $0x2358] sm:$0xff]
    %v1158 = vld [vmem:[%s1 + $0x2360] sm:$0xff]
    %v1159 = vld [vmem:[%s1 + $0x2368] sm:$0xff]
    %v1160 = vld [vmem:[%s1 + $0x2370] sm:$0xff]
    %v1161 = vld [vmem:[%s1 + $0x2378] sm:$0xff]
    %v1162 = vld [vmem:[%s1 + $0x2380] sm:$0xff]
    %v1163 = vld [vmem:[%s1 + $0x2388] sm:$0xff]
    %v1164 = vld [vmem:[%s1 + $0x2390] sm:$0xff]
    %v1165 = vld [vmem:[%s1 + $0x2398] sm:$0xff]
    %v1166 = vld [vmem:[%s1 + $0x23a0] sm:$0xff]
    %v1167 = vld [vmem:[%s1 + $0x23a8] sm:$0xff]
    %v1168 = vld [vmem:[%s1 + $0x23b0] sm:$0xff]
    %v1169 = vld [vmem:[%s1 + $0x23b8] sm:$0xff]
    %v1170 = vld [vmem:[%s1 + $0x23c0] sm:$0xff]
    %v1171 = vld [vmem:[%s1 + $0x23c8] sm:$0xff]
    %v1172 = vld [vmem:[%s1 + $0x23d0] sm:$0xff]
    %v1173 = vld [vmem:[%s1 + $0x23d8] sm:$0xff]
    %v1174 = vld [vmem:[%s1 + $0x23e0] sm:$0xff]
    %v1175 = vld [vmem:[%s1 + $0x23e8] sm:$0xff]
    %v1176 = vld [vmem:[%s1 + $0x23f0] sm:$0xff]
    %v1177 = vld [vmem:[%s1 + $0x23f8] sm:$0xff]
    %v1178 = vld [vmem:[%s1 + $0x2400] sm:$0xff]
    %v1179 = vld [vmem:[%s1 + $0x2408] sm:$0xff]
    %v1180 = vld [vmem:[%s1 + $0x2410] sm:$0xff]
    %v1181 = vld [vmem:[%s1 + $0x2418] sm:$0xff]
    %v1182 = vld [vmem:[%s1 + $0x2420] sm:$0xff]
    %v1183 = vld [vmem:[%s1 + $0x2428] sm:$0xff]
    %v1184 = vld [vmem:[%s1 + $0x2430] sm:$0xff]
    %v1185 = vld [vmem:[%s1 + $0x2438] sm:$0xff]
    %v1186 = vld [vmem:[%s1 + $0x2440] sm:$0xff]
    %v1187 = vld [vmem:[%s1 + $0x2448] sm:$0xff]
    %v1188 = vld [vmem:[%s1 + $0x2450] sm:$0xff]
    %v1189 = vld [vmem:[%s1 + $0x2458] sm:$0xff]
    %v1190 = vld [vmem:[%s1 + $0x2460] sm:$0xff]
    %v1191 = vld [vmem:[%s1 + $0x2468] sm:$0xff]
    %v1192 = vld [vmem:[%s1 + $0x2470] sm:$0xff]
    %v1193 = vld [vmem:[%s1 + $0x2478] sm:$0xff]
    %v1194 = vld [vmem:[%s1 + $0x2480] sm:$0xff]
    %v1195 = vld [vmem:[%s1 + $0x2488] sm:$0xff]
    %v1196 = vld [vmem:[%s1 + $0x2490] sm:$0xff]
    %v1197 = vld [vmem:[%s1 + $0x2498] sm:$0xff]
    %v1198 = vld [vmem:[%s1 + $0x24a0] sm:$0xff]
    %v1199 = vld [vmem:[%s1 + $0x24a8] sm:$0xff]
    %v1200 = vld [vmem:[%s1 + $0x24b0] sm:$0xff]
    %v1201 = vld [vmem:[%s1 + $0x24b8] sm:$0xff]
    %v1202 = vld [vmem:[%s1 + $0x24c0] sm:$0xff]
    %v1203 = vld [vmem:[%s1 + $0x24c8] sm:$0xff]
    %v1204 = vld [vmem:[%s1 + $0x24d0] sm:$0xff]
    %v1205 = vld [vmem:[%s1 + $0x24d8] sm:$0xff]
    %v1206 = vld [vmem:[%s1 + $0x24e0] sm:$0xff]
    %v1207 = vld [vmem:[%s1 + $0x24e8] sm:$0xff]
    %v1208 = vld [vmem:[%s1 + $0x24f0] sm:$0xff]
    %v1209 = vld [vmem:[%s1 + $0x24f8] sm:$0xff]
    %v1210 = vld [vmem:[%s1 + $0x2500] sm:$0xff]
    %v1211 = vld [vmem:[%s1 + $0x2508] sm:$0xff]
    %v1212 = vld [vmem:[%s1 + $0x2510] sm:$0xff]
    %v1213 = vld [vmem:[%s1 + $0x2518] sm:$0xff]
    %v1214 = vld [vmem:[%s1 + $0x2520] sm:$0xff]
    %v1215 = vld [vmem:[%s1 + $0x2528] sm:$0xff]
    %v1216 = vld [vmem:[%s1 + $0x2530] sm:$0xff]
    %v1217 = vld [vmem:[%s1 + $0x2538] sm:$0xff]
    %v1218 = vld [vmem:[%s1 + $0x2540] sm:$0xff]
    %v1219 = vld [vmem:[%s1 + $0x2548] sm:$0xff]
    %v1220 = vld [vmem:[%s1 + $0x2550] sm:$0xff]
    %v1221 = vld [vmem:[%s1 + $0x2558] sm:$0xff]
    %v1222 = vld [vmem:[%s1 + $0x2560] sm:$0xff]
    %v1223 = vld [vmem:[%s1 + $0x2568] sm:$0xff]
    %v1224 = vld [vmem:[%s1 + $0x2570] sm:$0xff]
    %v1225 = vld [vmem:[%s1 + $0x2578] sm:$0xff]
    %v1226 = vld [vmem:[%s1 + $0x2580] sm:$0xff]
    %v1227 = vld [vmem:[%s1 + $0x2588] sm:$0xff]
    %v1228 = vld [vmem:[%s1 + $0x2590] sm:$0xff]
    %v1229 = vld [vmem:[%s1 + $0x2598] sm:$0xff]
    %v1230 = vld [vmem:[%s1 + $0x25a0] sm:$0xff]
    %v1231 = vld [vmem:[%s1 + $0x25a8] sm:$0xff]
    %v1232 = vld [vmem:[%s1 + $0x25b0] sm:$0xff]
    %v1233 = vld [vmem:[%s1 + $0x25b8] sm:$0xff]
    %v1234 = vld [vmem:[%s1 + $0x25c0] sm:$0xff]
    %v1235 = vld [vmem:[%s1 + $0x25c8] sm:$0xff]
    %v1236 = vld [vmem:[%s1 + $0x25d0] sm:$0xff]
    %v1237 = vld [vmem:[%s1 + $0x25d8] sm:$0xff]
    %v1238 = vld [vmem:[%s1 + $0x25e0] sm:$0xff]
    %v1239 = vld [vmem:[%s1 + $0x25e8] sm:$0xff]
    %v1240 = vld [vmem:[%s1 + $0x25f0] sm:$0xff]
    %v1241 = vld [vmem:[%s1 + $0x25f8] sm:$0xff]
    %v1242 = vld [vmem:[%s1 + $0x2600] sm:$0xff]
    %v1243 = vld [vmem:[%s1 + $0x2608] sm:$0xff]
    %v1244 = vld [vmem:[%s1 + $0x2610] sm:$0xff]
    %v1245 = vld [vmem:[%s1 + $0x2618] sm:$0xff]
    %v1246 = vld [vmem:[%s1 + $0x2620] sm:$0xff]
    %v1247 = vld [vmem:[%s1 + $0x2628] sm:$0xff]
    %v1248 = vld [vmem:[%s1 + $0x2630] sm:$0xff]
    %v1249 = vld [vmem:[%s1 + $0x2638] sm:$0xff]
    %v1250 = vld [vmem:[%s1 + $0x2640] sm:$0xff]
    %v1251 = vld [vmem:[%s1 + $0x2648] sm:$0xff]
    %v1252 = vld [vmem:[%s1 + $0x2650] sm:$0xff]
    %v1253 = vld [vmem:[%s1 + $0x2658] sm:$0xff]
    %v1254 = vld [vmem:[%s1 + $0x2660] sm:$0xff]
    %v1255 = vld [vmem:[%s1 + $0x2668] sm:$0xff]
    %v1256 = vld [vmem:[%s1 + $0x2670] sm:$0xff]
    %v1257 = vld [vmem:[%s1 + $0x2678] sm:$0xff]
    %v1258 = vld [vmem:[%s1 + $0x2680] sm:$0xff]
    %v1259 = vld [vmem:[%s1 + $0x2688] sm:$0xff]
    %v1260 = vld [vmem:[%s1 + $0x2690] sm:$0xff]
    %v1261 = vld [vmem:[%s1 + $0x2698] sm:$0xff]
    %v1262 = vld [vmem:[%s1 + $0x26a0] sm:$0xff]
    %v1263 = vld [vmem:[%s1 + $0x26a8] sm:$0xff]
    %v1264 = vld [vmem:[%s1 + $0x26b0] sm:$0xff]
    %v1265 = vld [vmem:[%s1 + $0x26b8] sm:$0xff]
    %v1266 = vld [vmem:[%s1 + $0x26c0] sm:$0xff]
    %v1267 = vld [vmem:[%s1 + $0x26c8] sm:$0xff]
    %v1268 = vld [vmem:[%s1 + $0x26d0] sm:$0xff]
    %v1269 = vld [vmem:[%s1 + $0x26d8] sm:$0xff]
    %v1270 = vld [vmem:[%s1 + $0x26e0] sm:$0xff]
    %v1271 = vld [vmem:[%s1 + $0x26e8] sm:$0xff]
    %v1272 = vld [vmem:[%s1 + $0x26f0] sm:$0xff]
    %v1273 = vld [vmem:[%s1 + $0x26f8] sm:$0xff]
    %v1274 = vld [vmem:[%s1 + $0x2700] sm:$0xff]
    %v1275 = vld [vmem:[%s1 + $0x2708] sm:$0xff]
    %v1276 = vld [vmem:[%s1 + $0x2710] sm:$0xff]
    %v1277 = vld [vmem:[%s1 + $0x2718] sm:$0xff]
    %v1278 = vld [vmem:[%s1 + $0x2720] sm:$0xff]
    %v1279 = vld [vmem:[%s1 + $0x2728] sm:$0xff]
    %v1280 = vld [vmem:[%s1 + $0x2730] sm:$0xff]
    %v1281 = vld [vmem:[%s1 + $0x2738] sm:$0xff]
    %v1282 = vld [vmem:[%s1 + $0x2740] sm:$0xff]
    %v1283 = vld [vmem:[%s1 + $0x2748] sm:$0xff]
    %v1284 = vld [vmem:[%s1 + $0x2750] sm:$0xff]
    %v1285 = vld [vmem:[%s1 + $0x2758] sm:$0xff]
    %v1286 = vld [vmem:[%s1 + $0x2760] sm:$0xff]
    %v1287 = vld [vmem:[%s1 + $0x2768] sm:$0xff]
    %v1288 = vld [vmem:[%s1 + $0x2770] sm:$0xff]
    %v1289 = vld [vmem:[%s1 + $0x2778] sm:$0xff]
    %v1290 = vld [vmem:[%s1 + $0x2780] sm:$0xff]
    %v1291 = vld [vmem:[%s1 + $0x2788] sm:$0xff]
    %v1292 = vld [vmem:[%s1 + $0x2790] sm:$0xff]
    %v1293 = vld [vmem:[%s1 + $0x2798] sm:$0xff]
    %v1294 = vld [vmem:[%s1 + $0x27a0] sm:$0xff]
    %v1295 = vld [vmem:[%s1 + $0x27a8] sm:$0xff]
    %v1296 = vld [vmem:[%s1 + $0x27b0] sm:$0xff]
    %v1297 = vld [vmem:[%s1 + $0x27b8] sm:$0xff]
    %v1298 = vld [vmem:[%s1 + $0x27c0] sm:$0xff]
    %v1299 = vld [vmem:[%s1 + $0x27c8] sm:$0xff]
    %v1300 = vld [vmem:[%s1 + $0x27d0] sm:$0xff]
    %v1301 = vld [vmem:[%s1 + $0x27d8] sm:$0xff]
    %v1302 = vld [vmem:[%s1 + $0x27e0] sm:$0xff]
    %v1303 = vld [vmem:[%s1 + $0x27e8] sm:$0xff]
    %v1304 = vld [vmem:[%s1 + $0x27f0] sm:$0xff]
    %v1305 = vld [vmem:[%s1 + $0x27f8] sm:$0xff]
    %v1306 = vld [vmem:[%s1 + $0x2800] sm:$0xff]
    %v1307 = vld [vmem:[%s1 + $0x2808] sm:$0xff]
    %v1308 = vld [vmem:[%s1 + $0x2810] sm:$0xff]
    %v1309 = vld [vmem:[%s1 + $0x2818] sm:$0xff]
    %v1310 = vld [vmem:[%s1 + $0x2820] sm:$0xff]
    %v1311 = vld [vmem:[%s1 + $0x2828] sm:$0xff]
    %v1312 = vld [vmem:[%s1 + $0x2830] sm:$0xff]
    %v1313 = vld [vmem:[%s1 + $0x2838] sm:$0xff]
    %v1314 = vld [vmem:[%s1 + $0x2840] sm:$0xff]
    %v1315 = vld [vmem:[%s1 + $0x2848] sm:$0xff]
    %v1316 = vld [vmem:[%s1 + $0x2850] sm:$0xff]
    %v1317 = vld [vmem:[%s1 + $0x2858] sm:$0xff]
    %v1318 = vld [vmem:[%s1 + $0x2860] sm:$0xff]
    %v1319 = vld [vmem:[%s1 + $0x2868] sm:$0xff]
    %v1320 = vld [vmem:[%s1 + $0x2870] sm:$0xff]
    %v1321 = vld [vmem:[%s1 + $0x2878] sm:$0xff]
    %v1322 = vld [vmem:[%s1 + $0x2880] sm:$0xff]
    %v1323 = vld [vmem:[%s1 + $0x2888] sm:$0xff]
    %v1324 = vld [vmem:[%s1 + $0x2890] sm:$0xff]
    %v1325 = vld [vmem:[%s1 + $0x2898] sm:$0xff]
    %v1326 = vld [vmem:[%s1 + $0x28a0] sm:$0xff]
    %v1327 = vld [vmem:[%s1 + $0x28a8] sm:$0xff]
    %v1328 = vld [vmem:[%s1 + $0x28b0] sm:$0xff]
    %v1329 = vld [vmem:[%s1 + $0x28b8] sm:$0xff]
    %v1330 = vld [vmem:[%s1 + $0x28c0] sm:$0xff]
    %v1331 = vld [vmem:[%s1 + $0x28c8] sm:$0xff]
    %v1332 = vld [vmem:[%s1 + $0x28d0] sm:$0xff]
    %v1333 = vld [vmem:[%s1 + $0x28d8] sm:$0xff]
    %v1334 = vld [vmem:[%s1 + $0x28e0] sm:$0xff]
    %v1335 = vld [vmem:[%s1 + $0x28e8] sm:$0xff]
    %v1336 = vld [vmem:[%s1 + $0x28f0] sm:$0xff]
    %v1337 = vld [vmem:[%s1 + $0x28f8] sm:$0xff]
    %v1338 = vld [vmem:[%s1 + $0x2900] sm:$0xff]
    %v1339 = vld [vmem:[%s1 + $0x2908] sm:$0xff]
    %v1340 = vld [vmem:[%s1 + $0x2910] sm:$0xff]
    %v1341 = vld [vmem:[%s1 + $0x2918] sm:$0xff]
    %v1342 = vld [vmem:[%s1 + $0x2920] sm:$0xff]
    %v1343 = vld [vmem:[%s1 + $0x2928] sm:$0xff]
    %v1344 = vld [vmem:[%s1 + $0x2930] sm:$0xff]
    %v1345 = vld [vmem:[%s1 + $0x2938] sm:$0xff]
    %v1346 = vld [vmem:[%s1 + $0x2940] sm:$0xff]
    %v1347 = vld [vmem:[%s1 + $0x2948] sm:$0xff]
    %v1348 = vld [vmem:[%s1 + $0x2950] sm:$0xff]
    %v1349 = vld [vmem:[%s1 + $0x2958] sm:$0xff]
    %v1350 = vld [vmem:[%s1 + $0x2960] sm:$0xff]
    %v1351 = vld [vmem:[%s1 + $0x2968] sm:$0xff]
    %v1352 = vld [vmem:[%s1 + $0x2970] sm:$0xff]
    %v1353 = vld [vmem:[%s1 + $0x2978] sm:$0xff]
    %v1354 = vld [vmem:[%s1 + $0x2980] sm:$0xff]
    %v1355 = vld [vmem:[%s1 + $0x2988] sm:$0xff]
    %v1356 = vld [vmem:[%s1 + $0x2990] sm:$0xff]
    %v1357 = vld [vmem:[%s1 + $0x2998] sm:$0xff]
    %v1358 = vld [vmem:[%s1 + $0x29a0] sm:$0xff]
    %v1359 = vld [vmem:[%s1 + $0x29a8] sm:$0xff]
    %v1360 = vld [vmem:[%s1 + $0x29b0] sm:$0xff]
    %v1361 = vld [vmem:[%s1 + $0x29b8] sm:$0xff]
    %v1362 = vld [vmem:[%s1 + $0x29c0] sm:$0xff]
    %v1363 = vld [vmem:[%s1 + $0x29c8] sm:$0xff]
    %v1364 = vld [vmem:[%s1 + $0x29d0] sm:$0xff]
    %v1365 = vld [vmem:[%s1 + $0x29d8] sm:$0xff]
    %v1366 = vld [vmem:[%s1 + $0x29e0] sm:$0xff]
    %v1367 = vld [vmem:[%s1 + $0x29e8] sm:$0xff]
    %v1368 = vld [vmem:[%s1 + $0x29f0] sm:$0xff]
    %v1369 = vld [vmem:[%s1 + $0x29f8] sm:$0xff]
    %v1370 = vld [vmem:[%s1 + $0x2a00] sm:$0xff]
    %v1371 = vld [vmem:[%s1 + $0x2a08] sm:$0xff]
    %v1372 = vld [vmem:[%s1 + $0x2a10] sm:$0xff]
    %v1373 = vld [vmem:[%s1 + $0x2a18] sm:$0xff]
    %v1374 = vld [vmem:[%s1 + $0x2a20] sm:$0xff]
    %v1375 = vld [vmem:[%s1 + $0x2a28] sm:$0xff]
    %v1376 = vld [vmem:[%s1 + $0x2a30] sm:$0xff]
    %v1377 = vld [vmem:[%s1 + $0x2a38] sm:$0xff]
    %v1378 = vld [vmem:[%s1 + $0x2a40] sm:$0xff]
    %v1379 = vld [vmem:[%s1 + $0x2a48] sm:$0xff]
    %v1380 = vld [vmem:[%s1 + $0x2a50] sm:$0xff]
    %v1381 = vld [vmem:[%s1 + $0x2a58] sm:$0xff]
    %v1382 = vld [vmem:[%s1 + $0x2a60] sm:$0xff]
    %v1383 = vld [vmem:[%s1 + $0x2a68] sm:$0xff]
    %v1384 = vld [vmem:[%s1 + $0x2a70] sm:$0xff]
    %v1385 = vld [vmem:[%s1 + $0x2a78] sm:$0xff]
    %v1386 = vld [vmem:[%s1 + $0x2a80] sm:$0xff]
    %v1387 = vld [vmem:[%s1 + $0x2a88] sm:$0xff]
    %v1388 = vld [vmem:[%s1 + $0x2a90] sm:$0xff]
    %v1389 = vld [vmem:[%s1 + $0x2a98] sm:$0xff]
    %v1390 = vld [vmem:[%s1 + $0x2aa0] sm:$0xff]
    %v1391 = vld [vmem:[%s1 + $0x2aa8] sm:$0xff]
    %v1392 = vld [vmem:[%s1 + $0x2ab0] sm:$0xff]
    %v1393 = vld [vmem:[%s1 + $0x2ab8] sm:$0xff]
    %v1394 = vld [vmem:[%s1 + $0x2ac0] sm:$0xff]
    %v1395 = vld [vmem:[%s1 + $0x2ac8] sm:$0xff]
    %v1396 = vld [vmem:[%s1 + $0x2ad0] sm:$0xff]
    %v1397 = vld [vmem:[%s1 + $0x2ad8] sm:$0xff]
    %v1398 = vld [vmem:[%s1 + $0x2ae0] sm:$0xff]
    %v1399 = vld [vmem:[%s1 + $0x2ae8] sm:$0xff]
    %v1400 = vld [vmem:[%s1 + $0x2af0] sm:$0xff]
    %v1401 = vld [vmem:[%s1 + $0x2af8] sm:$0xff]
    %v1402 = vld [vmem:[%s1 + $0x2b00] sm:$0xff]
    %v1403 = vld [vmem:[%s1 + $0x2b08] sm:$0xff]
    %v1404 = vld [vmem:[%s1 + $0x2b10] sm:$0xff]
    %v1405 = vld [vmem:[%s1 + $0x2b18] sm:$0xff]
    %v1406 = vld [vmem:[%s1 + $0x2b20] sm:$0xff]
    %v1407 = vld [vmem:[%s1 + $0x2b28] sm:$0xff]
    %v1408 = vld [vmem:[%s1 + $0x2b30] sm:$0xff]
    %v1409 = vld [vmem:[%s1 + $0x2b38] sm:$0xff]
    %v1410 = vld [vmem:[%s1 + $0x2b40] sm:$0xff]
    %v1411 = vld [vmem:[%s1 + $0x2b48] sm:$0xff]
    %v1412 = vld [vmem:[%s1 + $0x2b50] sm:$0xff]
    %v1413 = vld [vmem:[%s1 + $0x2b58] sm:$0xff]
    %v1414 = vld [vmem:[%s1 + $0x2b60] sm:$0xff]
    %v1415 = vld [vmem:[%s1 + $0x2b68] sm:$0xff]
    %v1416 = vld [vmem:[%s1 + $0x2b70] sm:$0xff]
    %v1417 = vld [vmem:[%s1 + $0x2b78] sm:$0xff]
    %v1418 = vld [vmem:[%s1 + $0x2b80] sm:$0xff]
    %v1419 = vld [vmem:[%s1 + $0x2b88] sm:$0xff]
    %v1420 = vld [vmem:[%s1 + $0x2b90] sm:$0xff]
    %v1421 = vld [vmem:[%s1 + $0x2b98] sm:$0xff]
    %v1422 = vld [vmem:[%s1 + $0x2ba0] sm:$0xff]
    %v1423 = vld [vmem:[%s1 + $0x2ba8] sm:$0xff]
    %v1424 = vld [vmem:[%s1 + $0x2bb0] sm:$0xff]
    %v1425 = vld [vmem:[%s1 + $0x2bb8] sm:$0xff]
    %v1426 = vld [vmem:[%s1 + $0x2bc0] sm:$0xff]
    %v1427 = vld [vmem:[%s1 + $0x2bc8] sm:$0xff]
    %v1428 = vld [vmem:[%s1 + $0x2bd0] sm:$0xff]
    %v1429 = vld [vmem:[%s1 + $0x2bd8] sm:$0xff]
    %v1430 = vld [vmem:[%s1 + $0x2be0] sm:$0xff]
    %v1431 = vld [vmem:[%s1 + $0x2be8] sm:$0xff]
    %v1432 = vld [vmem:[%s1 + $0x2bf0] sm:$0xff]
    %v1433 = vld [vmem:[%s1 + $0x2bf8] sm:$0xff]
    %v1434 = vld [vmem:[%s1 + $0x2c00] sm:$0xff]
    %v1435 = vld [vmem:[%s1 + $0x2c08] sm:$0xff]
    %v1436 = vld [vmem:[%s1 + $0x2c10] sm:$0xff]
    %v1437 = vld [vmem:[%s1 + $0x2c18] sm:$0xff]
    %v1438 = vld [vmem:[%s1 + $0x2c20] sm:$0xff]
    %v1439 = vld [vmem:[%s1 + $0x2c28] sm:$0xff]
    %v1440 = vld [vmem:[%s1 + $0x2c30] sm:$0xff]
    %v1441 = vld [vmem:[%s1 + $0x2c38] sm:$0xff]
    %v1442 = vld [vmem:[%s1 + $0x2c40] sm:$0xff]
    %v1443 = vld [vmem:[%s1 + $0x2c48] sm:$0xff]
    %v1444 = vld [vmem:[%s1 + $0x2c50] sm:$0xff]
    %v1445 = vld [vmem:[%s1 + $0x2c58] sm:$0xff]
    %v1446 = vld [vmem:[%s1 + $0x2c60] sm:$0xff]
    %v1447 = vld [vmem:[%s1 + $0x2c68] sm:$0xff]
    %v1448 = vld [vmem:[%s1 + $0x2c70] sm:$0xff]
    %v1449 = vld [vmem:[%s1 + $0x2c78] sm:$0xff]
    %v1450 = vld [vmem:[%s1 + $0x2c80] sm:$0xff]
    %v1451 = vld [vmem:[%s1 + $0x2c88] sm:$0xff]
    %v1452 = vld [vmem:[%s1 + $0x2c90] sm:$0xff]
    %v1453 = vld [vmem:[%s1 + $0x2c98] sm:$0xff]
    %v1454 = vld [vmem:[%s1 + $0x2ca0] sm:$0xff]
    %v1455 = vld [vmem:[%s1 + $0x2ca8] sm:$0xff]
    %v1456 = vld [vmem:[%s1 + $0x2cb0] sm:$0xff]
    %v1457 = vld [vmem:[%s1 + $0x2cb8] sm:$0xff]
    %v1458 = vld [vmem:[%s1 + $0x2cc0] sm:$0xff]
    %v1459 = vld [vmem:[%s1 + $0x2cc8] sm:$0xff]
    %v1460 = vld [vmem:[%s1 + $0x2cd0] sm:$0xff]
    %v1461 = vld [vmem:[%s1 + $0x2cd8] sm:$0xff]
    %v1462 = vld [vmem:[%s1 + $0x2ce0] sm:$0xff]
    %v1463 = vld [vmem:[%s1 + $0x2ce8] sm:$0xff]
    %v1464 = vld [vmem:[%s1 + $0x2cf0] sm:$0xff]
    %v1465 = vld [vmem:[%s1 + $0x2cf8] sm:$0xff]
    %v1466 = vld [vmem:[%s1 + $0x2d00] sm:$0xff]
    %v1467 = vld [vmem:[%s1 + $0x2d08] sm:$0xff]
    %v1468 = vld [vmem:[%s1 + $0x2d10] sm:$0xff]
    %v1469 = vld [vmem:[%s1 + $0x2d18] sm:$0xff]
    %v1470 = vld [vmem:[%s1 + $0x2d20] sm:$0xff]
    %v1471 = vld [vmem:[%s1 + $0x2d28] sm:$0xff]
    %v1472 = vld [vmem:[%s1 + $0x2d30] sm:$0xff]
    %v1473 = vld [vmem:[%s1 + $0x2d38] sm:$0xff]
    %v1474 = vld [vmem:[%s1 + $0x2d40] sm:$0xff]
    %v1475 = vld [vmem:[%s1 + $0x2d48] sm:$0xff]
    %v1476 = vld [vmem:[%s1 + $0x2d50] sm:$0xff]
    %v1477 = vld [vmem:[%s1 + $0x2d58] sm:$0xff]
    %v1478 = vld [vmem:[%s1 + $0x2d60] sm:$0xff]
    %v1479 = vld [vmem:[%s1 + $0x2d68] sm:$0xff]
    %v1480 = vld [vmem:[%s1 + $0x2d70] sm:$0xff]
    %v1481 = vld [vmem:[%s1 + $0x2d78] sm:$0xff]
    %v1482 = vld [vmem:[%s1 + $0x2d80] sm:$0xff]
    %v1483 = vld [vmem:[%s1 + $0x2d88] sm:$0xff]
    %v1484 = vld [vmem:[%s1 + $0x2d90] sm:$0xff]
    %v1485 = vld [vmem:[%s1 + $0x2d98] sm:$0xff]
    %v1486 = vld [vmem:[%s1 + $0x2da0] sm:$0xff]
    %v1487 = vld [vmem:[%s1 + $0x2da8] sm:$0xff]
    %v1488 = vld [vmem:[%s1 + $0x2db0] sm:$0xff]
    %v1489 = vld [vmem:[%s1 + $0x2db8] sm:$0xff]
    %v1490 = vld [vmem:[%s1 + $0x2dc0] sm:$0xff]
    %v1491 = vld [vmem:[%s1 + $0x2dc8] sm:$0xff]
    %v1492 = vld [vmem:[%s1 + $0x2dd0] sm:$0xff]
    %v1493 = vld [vmem:[%s1 + $0x2dd8] sm:$0xff]
    %v1494 = vld [vmem:[%s1 + $0x2de0] sm:$0xff]
    %v1495 = vld [vmem:[%s1 + $0x2de8] sm:$0xff]
    %v1496 = vld [vmem:[%s1 + $0x2df0] sm:$0xff]
    %v1497 = vld [vmem:[%s1 + $0x2df8] sm:$0xff]
    %v1498 = vld [vmem:[%s1 + $0x2e00] sm:$0xff]
    %v1499 = vld [vmem:[%s1 + $0x2e08] sm:$0xff]
    %v1500 = vld [vmem:[%s1 + $0x2e10] sm:$0xff]
    %v1501 = vld [vmem:[%s1 + $0x2e18] sm:$0xff]
    %v1502 = vld [vmem:[%s1 + $0x2e20] sm:$0xff]
    %v1503 = vld [vmem:[%s1 + $0x2e28] sm:$0xff]
    %v1504 = vld [vmem:[%s1 + $0x2e30] sm:$0xff]
    %v1505 = vld [vmem:[%s1 + $0x2e38] sm:$0xff]
    %v1506 = vld [vmem:[%s1 + $0x2e40] sm:$0xff]
    %v1507 = vld [vmem:[%s1 + $0x2e48] sm:$0xff]
    %v1508 = vld [vmem:[%s1 + $0x2e50] sm:$0xff]
    %v1509 = vld [vmem:[%s1 + $0x2e58] sm:$0xff]
    %v1510 = vld [vmem:[%s1 + $0x2e60] sm:$0xff]
    %v1511 = vld [vmem:[%s1 + $0x2e68] sm:$0xff]
    %v1512 = vld [vmem:[%s1 + $0x2e70] sm:$0xff]
    %v1513 = vld [vmem:[%s1 + $0x2e78] sm:$0xff]
    %v1514 = vld [vmem:[%s1 + $0x2e80] sm:$0xff]
    %v1515 = vld [vmem:[%s1 + $0x2e88] sm:$0xff]
    %v1516 = vld [vmem:[%s1 + $0x2e90] sm:$0xff]
    %v1517 = vld [vmem:[%s1 + $0x2e98] sm:$0xff]
    %v1518 = vld [vmem:[%s1 + $0x2ea0] sm:$0xff]
    %v1519 = vld [vmem:[%s1 + $0x2ea8] sm:$0xff]
    %v1520 = vld [vmem:[%s1 + $0x2eb0] sm:$0xff]
    %v1521 = vld [vmem:[%s1 + $0x2eb8] sm:$0xff]
    %v1522 = vld [vmem:[%s1 + $0x2ec0] sm:$0xff]
    %v1523 = vld [vmem:[%s1 + $0x2ec8] sm:$0xff]
    %v1524 = vld [vmem:[%s1 + $0x2ed0] sm:$0xff]
    %v1525 = vld [vmem:[%s1 + $0x2ed8] sm:$0xff]
    %v1526 = vld [vmem:[%s1 + $0x2ee0] sm:$0xff]
    %v1527 = vld [vmem:[%s1 + $0x2ee8] sm:$0xff]
    %v1528 = vld [vmem:[%s1 + $0x2ef0] sm:$0xff]
    %v1529 = vld [vmem:[%s1 + $0x2ef8] sm:$0xff]
    %v1530 = vld [vmem:[%s1 + $0x2f00] sm:$0xff]
    %v1531 = vld [vmem:[%s1 + $0x2f08] sm:$0xff]
    %v1532 = vld [vmem:[%s1 + $0x2f10] sm:$0xff]
    %v1533 = vld [vmem:[%s1 + $0x2f18] sm:$0xff]
    %v1534 = vld [vmem:[%s1 + $0x2f20] sm:$0xff]
    %v1535 = vld [vmem:[%s1 + $0x2f28] sm:$0xff]
    %v1536 = vld [vmem:[%s1 + $0x2f30] sm:$0xff]
    %v1537 = vld [vmem:[%s1 + $0x2f38] sm:$0xff]
    %v1538 = vld [vmem:[%s1 + $0x2f40] sm:$0xff]
    %v1539 = vld [vmem:[%s1 + $0x2f48] sm:$0xff]
    %v1540 = vld [vmem:[%s1 + $0x2f50] sm:$0xff]
    %v1541 = vld [vmem:[%s1 + $0x2f58] sm:$0xff]
    %v1542 = vld [vmem:[%s1 + $0x2f60] sm:$0xff]
    %v1543 = vld [vmem:[%s1 + $0x2f68] sm:$0xff]
    %v1544 = vld [vmem:[%s1 + $0x2f70] sm:$0xff]
    %v1545 = vld [vmem:[%s1 + $0x2f78] sm:$0xff]
    %v1546 = vld [vmem:[%s1 + $0x2f80] sm:$0xff]
    %v1547 = vld [vmem:[%s1 + $0x2f88] sm:$0xff]
    %v1548 = vld [vmem:[%s1 + $0x2f90] sm:$0xff]
    %v1549 = vld [vmem:[%s1 + $0x2f98] sm:$0xff]
    %v1550 = vld [vmem:[%s1 + $0x2fa0] sm:$0xff]
    %v1551 = vld [vmem:[%s1 + $0x2fa8] sm:$0xff]
    %v1552 = vld [vmem:[%s1 + $0x2fb0] sm:$0xff]
    %v1553 = vld [vmem:[%s1 + $0x2fb8] sm:$0xff]
    %v1554 = vld [vmem:[%s1 + $0x2fc0] sm:$0xff]
    %v1555 = vld [vmem:[%s1 + $0x2fc8] sm:$0xff]
    %v1556 = vld [vmem:[%s1 + $0x2fd0] sm:$0xff]
    %v1557 = vld [vmem:[%s1 + $0x2fd8] sm:$0xff]
    %v1558 = vld [vmem:[%s1 + $0x2fe0] sm:$0xff]
    %v1559 = vld [vmem:[%s1 + $0x2fe8] sm:$0xff]
    %v1560 = vld [vmem:[%s1 + $0x2ff0] sm:$0xff]
    %v1561 = vld [vmem:[%s1 + $0x2ff8] sm:$0xff]
    %v1562 = vld [vmem:[%s1 + $0x3000] sm:$0xff]
    %v1563 = vld [vmem:[%s1 + $0x3008] sm:$0xff]
    %v1564 = vld [vmem:[%s1 + $0x3010] sm:$0xff]
    %v1565 = vld [vmem:[%s1 + $0x3018] sm:$0xff]
    %v1566 = vld [vmem:[%s1 + $0x3020] sm:$0xff]
    %v1567 = vld [vmem:[%s1 + $0x3028] sm:$0xff]
    %v1568 = vld [vmem:[%s1 + $0x3030] sm:$0xff]
    %v1569 = vld [vmem:[%s1 + $0x3038] sm:$0xff]
    %v1570 = vld [vmem:[%s1 + $0x3040] sm:$0xff]
    %v1571 = vld [vmem:[%s1 + $0x3048] sm:$0xff]
    %v1572 = vld [vmem:[%s1 + $0x3050] sm:$0xff]
    %v1573 = vld [vmem:[%s1 + $0x3058] sm:$0xff]
    %v1574 = vld [vmem:[%s1 + $0x3060] sm:$0xff]
    %v1575 = vld [vmem:[%s1 + $0x3068] sm:$0xff]
    %v1576 = vld [vmem:[%s1 + $0x3070] sm:$0xff]
    %v1577 = vld [vmem:[%s1 + $0x3078] sm:$0xff]
    %v1578 = vld [vmem:[%s1 + $0x3080] sm:$0xff]
    %v1579 = vld [vmem:[%s1 + $0x3088] sm:$0xff]
    %v1580 = vld [vmem:[%s1 + $0x3090] sm:$0xff]
    %v1581 = vld [vmem:[%s1 + $0x3098] sm:$0xff]
    %v1582 = vld [vmem:[%s1 + $0x30a0] sm:$0xff]
    %v1583 = vld [vmem:[%s1 + $0x30a8] sm:$0xff]
    %v1584 = vld [vmem:[%s1 + $0x30b0] sm:$0xff]
    %v1585 = vld [vmem:[%s1 + $0x30b8] sm:$0xff]
    %v1586 = vld [vmem:[%s1 + $0x30c0] sm:$0xff]
    %v1587 = vld [vmem:[%s1 + $0x30c8] sm:$0xff]
    %v1588 = vld [vmem:[%s1 + $0x30d0] sm:$0xff]
    %v1589 = vld [vmem:[%s1 + $0x30d8] sm:$0xff]
    %v1590 = vld [vmem:[%s1 + $0x30e0] sm:$0xff]
    %v1591 = vld [vmem:[%s1 + $0x30e8] sm:$0xff]
    %v1592 = vld [vmem:[%s1 + $0x30f0] sm:$0xff]
    %v1593 = vld [vmem:[%s1 + $0x30f8] sm:$0xff]
    %v1594 = vld [vmem:[%s2] sm:$0xff]
    %v1599 = vcombine.high %v22, %v22
    %v1601 = vunpack.c.l.s4 1966171168
    %v1602 = vunpack.c.0.s8 %v1601
    %v1603 = vlaneseq
    %v1604 = vshrl.u32 %v1603, 7
    %v1605 = vsub.s32 %v1602, %v1604
    %v1606 = vrot.slane %v22, %v1605
    %v1608 = vunpack.c.l.s4 1966171168
    %v1609 = vunpack.c.0.s8 %v1608
    %v1610 = vlaneseq
    %v1611 = vshrl.u32 %v1610, 7
    %v1612 = vsub.s32 %v1609, %v1611
    %v1613 = vrot.slane %v1599, %v1612
    %v1614 = vcombine.high %v1606, %v1606
    %v1615 = vcombine.high %v1613, %v1613
    %v1617 = vunpack.c.l.s4 1966171168
    %v1618 = vunpack.c.0.s8 %v1617
    %v1619 = vlaneseq
    %v1620 = vshrl.u32 %v1619, 7
    %v1621 = vsub.s32 %v1618, %v1620
    %v1622 = vrot.slane %v1606, %v1621
    %v1624 = vunpack.c.l.s4 1966171168
    %v1625 = vunpack.c.0.s8 %v1624
    %v1626 = vlaneseq
    %v1627 = vshrl.u32 %v1626, 7
    %v1628 = vsub.s32 %v1625, %v1627
    %v1629 = vrot.slane %v1613, %v1628
    %v1631 = vunpack.c.l.s4 1966171168
    %v1632 = vunpack.c.0.s8 %v1631
    %v1633 = vlaneseq
    %v1634 = vshrl.u32 %v1633, 7
    %v1635 = vsub.s32 %v1632, %v1634
    %v1636 = vrot.slane %v1614, %v1635
    %v1638 = vunpack.c.l.s4 1966171168
    %v1639 = vunpack.c.0.s8 %v1638
    %v1640 = vlaneseq
    %v1641 = vshrl.u32 %v1640, 7
    %v1642 = vsub.s32 %v1639, %v1641
    %v1643 = vrot.slane %v1615, %v1642
    %v1644 = vcombine.high %v1622, %v1622
    %v1645 = vcombine.high %v1629, %v1629
    %v1646 = vcombine.high %v1636, %v1636
    %v1647 = vcombine.high %v1643, %v1643
    %v1648 = vcombine.high %v23, %v23
    %v1650 = vunpack.c.l.s4 1966171168
    %v1651 = vunpack.c.0.s8 %v1650
    %v1652 = vlaneseq
    %v1653 = vshrl.u32 %v1652, 7
    %v1654 = vsub.s32 %v1651, %v1653
    %v1655 = vrot.slane %v23, %v1654
    %v1657 = vunpack.c.l.s4 1966171168
    %v1658 = vunpack.c.0.s8 %v1657
    %v1659 = vlaneseq
    %v1660 = vshrl.u32 %v1659, 7
    %v1661 = vsub.s32 %v1658, %v1660
    %v1662 = vrot.slane %v1648, %v1661
    %v1663 = vcombine.high %v1655, %v1655
    %v1664 = vcombine.high %v1662, %v1662
    %v1666 = vunpack.c.l.s4 1966171168
    %v1667 = vunpack.c.0.s8 %v1666
    %v1668 = vlaneseq
    %v1669 = vshrl.u32 %v1668, 7
    %v1670 = vsub.s32 %v1667, %v1669
    %v1671 = vrot.slane %v1655, %v1670
    %v1673 = vunpack.c.l.s4 1966171168
    %v1674 = vunpack.c.0.s8 %v1673
    %v1675 = vlaneseq
    %v1676 = vshrl.u32 %v1675, 7
    %v1677 = vsub.s32 %v1674, %v1676
    %v1678 = vrot.slane %v1662, %v1677
    %v1680 = vunpack.c.l.s4 1966171168
    %v1681 = vunpack.c.0.s8 %v1680
    %v1682 = vlaneseq
    %v1683 = vshrl.u32 %v1682, 7
    %v1684 = vsub.s32 %v1681, %v1683
    %v1685 = vrot.slane %v1663, %v1684
    %v1687 = vunpack.c.l.s4 1966171168
    %v1688 = vunpack.c.0.s8 %v1687
    %v1689 = vlaneseq
    %v1690 = vshrl.u32 %v1689, 7
    %v1691 = vsub.s32 %v1688, %v1690
    %v1692 = vrot.slane %v1664, %v1691
    %v1693 = vcombine.high %v1671, %v1671
    %v1694 = vcombine.high %v1678, %v1678
    %v1695 = vcombine.high %v1685, %v1685
    %v1696 = vcombine.high %v1692, %v1692
    %v1697 = vcombine.high %v24, %v24
    %v1699 = vunpack.c.l.s4 1966171168
    %v1700 = vunpack.c.0.s8 %v1699
    %v1701 = vlaneseq
    %v1702 = vshrl.u32 %v1701, 7
    %v1703 = vsub.s32 %v1700, %v1702
    %v1704 = vrot.slane %v24, %v1703
    %v1706 = vunpack.c.l.s4 1966171168
    %v1707 = vunpack.c.0.s8 %v1706
    %v1708 = vlaneseq
    %v1709 = vshrl.u32 %v1708, 7
    %v1710 = vsub.s32 %v1707, %v1709
    %v1711 = vrot.slane %v1697, %v1710
    %v1712 = vcombine.high %v1704, %v1704
    %v1713 = vcombine.high %v1711, %v1711
    %v1715 = vunpack.c.l.s4 1966171168
    %v1716 = vunpack.c.0.s8 %v1715
    %v1717 = vlaneseq
    %v1718 = vshrl.u32 %v1717, 7
    %v1719 = vsub.s32 %v1716, %v1718
    %v1720 = vrot.slane %v1704, %v1719
    %v1722 = vunpack.c.l.s4 1966171168
    %v1723 = vunpack.c.0.s8 %v1722
    %v1724 = vlaneseq
    %v1725 = vshrl.u32 %v1724, 7
    %v1726 = vsub.s32 %v1723, %v1725
    %v1727 = vrot.slane %v1711, %v1726
    %v1729 = vunpack.c.l.s4 1966171168
    %v1730 = vunpack.c.0.s8 %v1729
    %v1731 = vlaneseq
    %v1732 = vshrl.u32 %v1731, 7
    %v1733 = vsub.s32 %v1730, %v1732
    %v1734 = vrot.slane %v1712, %v1733
    %v1736 = vunpack.c.l.s4 1966171168
    %v1737 = vunpack.c.0.s8 %v1736
    %v1738 = vlaneseq
    %v1739 = vshrl.u32 %v1738, 7
    %v1740 = vsub.s32 %v1737, %v1739
    %v1741 = vrot.slane %v1713, %v1740
    %v1742 = vcombine.high %v1720, %v1720
    %v1743 = vcombine.high %v1727, %v1727
    %v1744 = vcombine.high %v1734, %v1734
    %v1745 = vcombine.high %v1741, %v1741
    %v1747 = vunpack.c.l.s4 1966171168
    %v1748 = vunpack.c.0.s8 %v1747
    %v1749 = vlaneseq
    %v1750 = vshrl.u32 %v1749, 7
    %v1751 = vsub.s32 %v1748, %v1750
    %v1752 = vrot.slane %v25, %v1751
    %v1754 = vunpack.c.l.s4 1966171168
    %v1755 = vunpack.c.0.s8 %v1754
    %v1756 = vlaneseq
    %v1757 = vshrl.u32 %v1756, 7
    %v1758 = vsub.s32 %v1755, %v1757
    %v1759 = vrot.slane %v1752, %v1758
    %v3352 = vunpack.c.l.b16 %v26
    %v3353 = vunpack.c.h.b16 %v26
    %v3354 = vunpack.c.l.b16 %v27
    %v3355 = vunpack.c.h.b16 %v27
    %v3356 = vunpack.c.l.b16 %v28
    %v3357 = vunpack.c.h.b16 %v28
    %v3358 = vunpack.c.l.b16 %v29
    %v3359 = vunpack.c.h.b16 %v29
    %v3360 = vunpack.c.l.b16 %v30
    %v3361 = vunpack.c.h.b16 %v30
    %v3362 = vunpack.c.l.b16 %v31
    %v3363 = vunpack.c.h.b16 %v31
    %v3364 = vunpack.c.l.b16 %v32
    %v3365 = vunpack.c.h.b16 %v32
    %v3366 = vunpack.c.l.b16 %v33
    %v3367 = vunpack.c.h.b16 %v33
    %v3368 = vunpack.c.l.b16 %v34
    %v3369 = vunpack.c.h.b16 %v34
    %v3370 = vunpack.c.l.b16 %v35
    %v3371 = vunpack.c.h.b16 %v35
    %v3372 = vunpack.c.l.b16 %v36
    %v3373 = vunpack.c.h.b16 %v36
    %v3374 = vunpack.c.l.b16 %v37
    %v3375 = vunpack.c.h.b16 %v37
    %v3376 = vunpack.c.l.b16 %v38
    %v3377 = vunpack.c.h.b16 %v38
    %v3378 = vunpack.c.l.b16 %v39
    %v3379 = vunpack.c.h.b16 %v39
    %v3380 = vunpack.c.l.b16 %v40
    %v3381 = vunpack.c.h.b16 %v40
    %v3382 = vunpack.c.l.b16 %v41
    %v3383 = vunpack.c.h.b16 %v41
    %v3384 = vunpack.c.l.b16 %v42
    %v3385 = vunpack.c.h.b16 %v42
    %v3386 = vunpack.c.l.b16 %v43
    %v3387 = vunpack.c.h.b16 %v43
    %v3388 = vunpack.c.l.b16 %v44
    %v3389 = vunpack.c.h.b16 %v44
    %v3390 = vunpack.c.l.b16 %v45
    %v3391 = vunpack.c.h.b16 %v45
    %v3392 = vunpack.c.l.b16 %v46
    %v3393 = vunpack.c.h.b16 %v46
    %v3394 = vunpack.c.l.b16 %v47
    %v3395 = vunpack.c.h.b16 %v47
    %v3396 = vunpack.c.l.b16 %v48
    %v3397 = vunpack.c.h.b16 %v48
    %v3398 = vunpack.c.l.b16 %v49
    %v3399 = vunpack.c.h.b16 %v49
    %v3400 = vunpack.c.l.b16 %v50
    %v3401 = vunpack.c.h.b16 %v50
    %v3402 = vunpack.c.l.b16 %v51
    %v3403 = vunpack.c.h.b16 %v51
    %v3404 = vunpack.c.l.b16 %v52
    %v3405 = vunpack.c.h.b16 %v52
    %v3406 = vunpack.c.l.b16 %v53
    %v3407 = vunpack.c.h.b16 %v53
    %v3408 = vunpack.c.l.b16 %v54
    %v3409 = vunpack.c.h.b16 %v54
    %v3410 = vunpack.c.l.b16 %v55
    %v3411 = vunpack.c.h.b16 %v55
    %v3412 = vunpack.c.l.b16 %v56
    %v3413 = vunpack.c.h.b16 %v56
    %v3414 = vunpack.c.l.b16 %v57
    %v3415 = vunpack.c.h.b16 %v57
    %v3416 = vunpack.c.l.b16 %v58
    %v3417 = vunpack.c.h.b16 %v58
    %v3418 = vunpack.c.l.b16 %v59
    %v3419 = vunpack.c.h.b16 %v59
    %v3420 = vunpack.c.l.b16 %v60
    %v3421 = vunpack.c.h.b16 %v60
    %v3422 = vunpack.c.l.b16 %v61
    %v3423 = vunpack.c.h.b16 %v61
    %v3424 = vunpack.c.l.b16 %v62
    %v3425 = vunpack.c.h.b16 %v62
    %v3426 = vunpack.c.l.b16 %v63
    %v3427 = vunpack.c.h.b16 %v63
    %v3428 = vunpack.c.l.b16 %v64
    %v3429 = vunpack.c.h.b16 %v64
    %v3430 = vunpack.c.l.b16 %v65
    %v3431 = vunpack.c.h.b16 %v65
    %v3432 = vunpack.c.l.b16 %v66
    %v3433 = vunpack.c.h.b16 %v66
    %v3434 = vunpack.c.l.b16 %v67
    %v3435 = vunpack.c.h.b16 %v67
    %v3436 = vunpack.c.l.b16 %v68
    %v3437 = vunpack.c.h.b16 %v68
    %v3438 = vunpack.c.l.b16 %v69
    %v3439 = vunpack.c.h.b16 %v69
    %v3440 = vunpack.c.l.b16 %v70
    %v3441 = vunpack.c.h.b16 %v70
    %v3442 = vunpack.c.l.b16 %v71
    %v3443 = vunpack.c.h.b16 %v71
    %v3444 = vunpack.c.l.b16 %v72
    %v3445 = vunpack.c.h.b16 %v72
    %v3446 = vunpack.c.l.b16 %v73
    %v3447 = vunpack.c.h.b16 %v73
    %v3448 = vunpack.c.l.b16 %v74
    %v3449 = vunpack.c.h.b16 %v74
    %v3450 = vunpack.c.l.b16 %v75
    %v3451 = vunpack.c.h.b16 %v75
    %v3452 = vunpack.c.l.b16 %v76
    %v3453 = vunpack.c.h.b16 %v76
    %v3454 = vunpack.c.l.b16 %v77
    %v3455 = vunpack.c.h.b16 %v77
    %v3456 = vunpack.c.l.b16 %v78
    %v3457 = vunpack.c.h.b16 %v78
    %v3458 = vunpack.c.l.b16 %v79
    %v3459 = vunpack.c.h.b16 %v79
    %v3460 = vunpack.c.l.b16 %v80
    %v3461 = vunpack.c.h.b16 %v80
    %v3462 = vunpack.c.l.b16 %v81
    %v3463 = vunpack.c.h.b16 %v81
    %v3464 = vunpack.c.l.b16 %v82
    %v3465 = vunpack.c.h.b16 %v82
    %v3466 = vunpack.c.l.b16 %v83
    %v3467 = vunpack.c.h.b16 %v83
    %v3468 = vunpack.c.l.b16 %v84
    %v3469 = vunpack.c.h.b16 %v84
    %v3470 = vunpack.c.l.b16 %v85
    %v3471 = vunpack.c.h.b16 %v85
    %v3472 = vunpack.c.l.b16 %v86
    %v3473 = vunpack.c.h.b16 %v86
    %v3474 = vunpack.c.l.b16 %v87
    %v3475 = vunpack.c.h.b16 %v87
    %v3476 = vunpack.c.l.b16 %v88
    %v3477 = vunpack.c.h.b16 %v88
    %v3478 = vunpack.c.l.b16 %v89
    %v3479 = vunpack.c.h.b16 %v89
    %v3480 = vunpack.c.l.b16 %v90
    %v3481 = vunpack.c.h.b16 %v90
    %v3482 = vunpack.c.l.b16 %v91
    %v3483 = vunpack.c.h.b16 %v91
    %v3484 = vunpack.c.l.b16 %v92
    %v3485 = vunpack.c.h.b16 %v92
    %v3486 = vunpack.c.l.b16 %v93
    %v3487 = vunpack.c.h.b16 %v93
    %v3488 = vunpack.c.l.b16 %v94
    %v3489 = vunpack.c.h.b16 %v94
    %v3490 = vunpack.c.l.b16 %v95
    %v3491 = vunpack.c.h.b16 %v95
    %v3492 = vunpack.c.l.b16 %v96
    %v3493 = vunpack.c.h.b16 %v96
    %v3494 = vunpack.c.l.b16 %v97
    %v3495 = vunpack.c.h.b16 %v97
    %v3496 = vunpack.c.l.b16 %v98
    %v3497 = vunpack.c.h.b16 %v98
    %v3498 = vunpack.c.l.b16 %v99
    %v3499 = vunpack.c.h.b16 %v99
    %v3500 = vunpack.c.l.b16 %v100
    %v3501 = vunpack.c.h.b16 %v100
    %v3502 = vunpack.c.l.b16 %v101
    %v3503 = vunpack.c.h.b16 %v101
    %v3504 = vunpack.c.l.b16 %v102
    %v3505 = vunpack.c.h.b16 %v102
    %v3506 = vunpack.c.l.b16 %v103
    %v3507 = vunpack.c.h.b16 %v103
    %v3508 = vunpack.c.l.b16 %v104
    %v3509 = vunpack.c.h.b16 %v104
    %v3510 = vunpack.c.l.b16 %v105
    %v3511 = vunpack.c.h.b16 %v105
    %v3512 = vunpack.c.l.b16 %v106
    %v3513 = vunpack.c.h.b16 %v106
    %v3514 = vunpack.c.l.b16 %v107
    %v3515 = vunpack.c.h.b16 %v107
    %v3516 = vunpack.c.l.b16 %v108
    %v3517 = vunpack.c.h.b16 %v108
    %v3518 = vunpack.c.l.b16 %v109
    %v3519 = vunpack.c.h.b16 %v109
    %v3520 = vunpack.c.l.b16 %v110
    %v3521 = vunpack.c.h.b16 %v110
    %v3522 = vunpack.c.l.b16 %v111
    %v3523 = vunpack.c.h.b16 %v111
    %v3524 = vunpack.c.l.b16 %v112
    %v3525 = vunpack.c.h.b16 %v112
    %v3526 = vunpack.c.l.b16 %v113
    %v3527 = vunpack.c.h.b16 %v113
    %v3528 = vunpack.c.l.b16 %v114
    %v3529 = vunpack.c.h.b16 %v114
    %v3530 = vunpack.c.l.b16 %v115
    %v3531 = vunpack.c.h.b16 %v115
    %v3532 = vunpack.c.l.b16 %v116
    %v3533 = vunpack.c.h.b16 %v116
    %v3534 = vunpack.c.l.b16 %v117
    %v3535 = vunpack.c.h.b16 %v117
    %v3536 = vunpack.c.l.b16 %v118
    %v3537 = vunpack.c.h.b16 %v118
    %v3538 = vunpack.c.l.b16 %v119
    %v3539 = vunpack.c.h.b16 %v119
    %v3540 = vunpack.c.l.b16 %v120
    %v3541 = vunpack.c.h.b16 %v120
    %v3542 = vunpack.c.l.b16 %v121
    %v3543 = vunpack.c.h.b16 %v121
    %v3544 = vunpack.c.l.b16 %v122
    %v3545 = vunpack.c.h.b16 %v122
    %v3546 = vunpack.c.l.b16 %v123
    %v3547 = vunpack.c.h.b16 %v123
    %v3548 = vunpack.c.l.b16 %v124
    %v3549 = vunpack.c.h.b16 %v124
    %v3550 = vunpack.c.l.b16 %v125
    %v3551 = vunpack.c.h.b16 %v125
    %v3552 = vunpack.c.l.b16 %v126
    %v3553 = vunpack.c.h.b16 %v126
    %v3554 = vunpack.c.l.b16 %v127
    %v3555 = vunpack.c.h.b16 %v127
    %v3556 = vunpack.c.l.b16 %v128
    %v3557 = vunpack.c.h.b16 %v128
    %v3558 = vunpack.c.l.b16 %v129
    %v3559 = vunpack.c.h.b16 %v129
    %v3560 = vunpack.c.l.b16 %v130
    %v3561 = vunpack.c.h.b16 %v130
    %v3562 = vunpack.c.l.b16 %v131
    %v3563 = vunpack.c.h.b16 %v131
    %v3564 = vunpack.c.l.b16 %v132
    %v3565 = vunpack.c.h.b16 %v132
    %v3566 = vunpack.c.l.b16 %v133
    %v3567 = vunpack.c.h.b16 %v133
    %v3568 = vunpack.c.l.b16 %v134
    %v3569 = vunpack.c.h.b16 %v134
    %v3570 = vunpack.c.l.b16 %v135
    %v3571 = vunpack.c.h.b16 %v135
    %v3572 = vunpack.c.l.b16 %v136
    %v3573 = vunpack.c.h.b16 %v136
    %v3574 = vunpack.c.l.b16 %v137
    %v3575 = vunpack.c.h.b16 %v137
    %v3576 = vunpack.c.l.b16 %v138
    %v3577 = vunpack.c.h.b16 %v138
    %v3578 = vunpack.c.l.b16 %v139
    %v3579 = vunpack.c.h.b16 %v139
    %v3580 = vunpack.c.l.b16 %v140
    %v3581 = vunpack.c.h.b16 %v140
    %v3582 = vunpack.c.l.b16 %v141
    %v3583 = vunpack.c.h.b16 %v141
    %v3584 = vunpack.c.l.b16 %v142
    %v3585 = vunpack.c.h.b16 %v142
    %v3586 = vunpack.c.l.b16 %v143
    %v3587 = vunpack.c.h.b16 %v143
    %v3588 = vunpack.c.l.b16 %v144
    %v3589 = vunpack.c.h.b16 %v144
    %v3590 = vunpack.c.l.b16 %v145
    %v3591 = vunpack.c.h.b16 %v145
    %v3592 = vunpack.c.l.b16 %v146
    %v3593 = vunpack.c.h.b16 %v146
    %v3594 = vunpack.c.l.b16 %v147
    %v3595 = vunpack.c.h.b16 %v147
    %v3596 = vunpack.c.l.b16 %v148
    %v3597 = vunpack.c.h.b16 %v148
    %v3598 = vunpack.c.l.b16 %v149
    %v3599 = vunpack.c.h.b16 %v149
    %v3600 = vunpack.c.l.b16 %v150
    %v3601 = vunpack.c.h.b16 %v150
    %v3602 = vunpack.c.l.b16 %v151
    %v3603 = vunpack.c.h.b16 %v151
    %v3604 = vunpack.c.l.b16 %v152
    %v3605 = vunpack.c.h.b16 %v152
    %v3606 = vunpack.c.l.b16 %v153
    %v3607 = vunpack.c.h.b16 %v153
    %v3608 = vunpack.c.l.b16 %v154
    %v3609 = vunpack.c.h.b16 %v154
    %v3610 = vunpack.c.l.b16 %v155
    %v3611 = vunpack.c.h.b16 %v155
    %v3612 = vunpack.c.l.b16 %v156
    %v3613 = vunpack.c.h.b16 %v156
    %v3614 = vunpack.c.l.b16 %v157
    %v3615 = vunpack.c.h.b16 %v157
    %v3616 = vunpack.c.l.b16 %v158
    %v3617 = vunpack.c.h.b16 %v158
    %v3618 = vunpack.c.l.b16 %v159
    %v3619 = vunpack.c.h.b16 %v159
    %v3620 = vunpack.c.l.b16 %v160
    %v3621 = vunpack.c.h.b16 %v160
    %v3622 = vunpack.c.l.b16 %v161
    %v3623 = vunpack.c.h.b16 %v161
    %v3624 = vunpack.c.l.b16 %v162
    %v3625 = vunpack.c.h.b16 %v162
    %v3626 = vunpack.c.l.b16 %v163
    %v3627 = vunpack.c.h.b16 %v163
    %v3628 = vunpack.c.l.b16 %v164
    %v3629 = vunpack.c.h.b16 %v164
    %v3630 = vunpack.c.l.b16 %v165
    %v3631 = vunpack.c.h.b16 %v165
    %v3632 = vunpack.c.l.b16 %v166
    %v3633 = vunpack.c.h.b16 %v166
    %v3634 = vunpack.c.l.b16 %v167
    %v3635 = vunpack.c.h.b16 %v167
    %v3636 = vunpack.c.l.b16 %v168
    %v3637 = vunpack.c.h.b16 %v168
    %v3638 = vunpack.c.l.b16 %v169
    %v3639 = vunpack.c.h.b16 %v169
    %v3640 = vunpack.c.l.b16 %v170
    %v3641 = vunpack.c.h.b16 %v170
    %v3642 = vunpack.c.l.b16 %v171
    %v3643 = vunpack.c.h.b16 %v171
    %v3644 = vunpack.c.l.b16 %v172
    %v3645 = vunpack.c.h.b16 %v172
    %v3646 = vunpack.c.l.b16 %v173
    %v3647 = vunpack.c.h.b16 %v173
    %v3648 = vunpack.c.l.b16 %v174
    %v3649 = vunpack.c.h.b16 %v174
    %v3650 = vunpack.c.l.b16 %v175
    %v3651 = vunpack.c.h.b16 %v175
    %v3652 = vunpack.c.l.b16 %v176
    %v3653 = vunpack.c.h.b16 %v176
    %v3654 = vunpack.c.l.b16 %v177
    %v3655 = vunpack.c.h.b16 %v177
    %v3656 = vunpack.c.l.b16 %v178
    %v3657 = vunpack.c.h.b16 %v178
    %v3658 = vunpack.c.l.b16 %v179
    %v3659 = vunpack.c.h.b16 %v179
    %v3660 = vunpack.c.l.b16 %v180
    %v3661 = vunpack.c.h.b16 %v180
    %v3662 = vunpack.c.l.b16 %v181
    %v3663 = vunpack.c.h.b16 %v181
    %v3664 = vunpack.c.l.b16 %v182
    %v3665 = vunpack.c.h.b16 %v182
    %v3666 = vunpack.c.l.b16 %v183
    %v3667 = vunpack.c.h.b16 %v183
    %v3668 = vunpack.c.l.b16 %v184
    %v3669 = vunpack.c.h.b16 %v184
    %v3670 = vunpack.c.l.b16 %v185
    %v3671 = vunpack.c.h.b16 %v185
    %v3672 = vunpack.c.l.b16 %v186
    %v3673 = vunpack.c.h.b16 %v186
    %v3674 = vunpack.c.l.b16 %v187
    %v3675 = vunpack.c.h.b16 %v187
    %v3676 = vunpack.c.l.b16 %v188
    %v3677 = vunpack.c.h.b16 %v188
    %v3678 = vunpack.c.l.b16 %v189
    %v3679 = vunpack.c.h.b16 %v189
    %v3680 = vunpack.c.l.b16 %v190
    %v3681 = vunpack.c.h.b16 %v190
    %v3682 = vunpack.c.l.b16 %v191
    %v3683 = vunpack.c.h.b16 %v191
    %v3684 = vunpack.c.l.b16 %v192
    %v3685 = vunpack.c.h.b16 %v192
    %v3686 = vunpack.c.l.b16 %v193
    %v3687 = vunpack.c.h.b16 %v193
    %v3688 = vunpack.c.l.b16 %v194
    %v3689 = vunpack.c.h.b16 %v194
    %v3690 = vunpack.c.l.b16 %v195
    %v3691 = vunpack.c.h.b16 %v195
    %v3692 = vunpack.c.l.b16 %v196
    %v3693 = vunpack.c.h.b16 %v196
    %v3694 = vunpack.c.l.b16 %v197
    %v3695 = vunpack.c.h.b16 %v197
    %v3696 = vunpack.c.l.b16 %v198
    %v3697 = vunpack.c.h.b16 %v198
    %v3698 = vunpack.c.l.b16 %v199
    %v3699 = vunpack.c.h.b16 %v199
    %v3700 = vunpack.c.l.b16 %v200
    %v3701 = vunpack.c.h.b16 %v200
    %v3702 = vunpack.c.l.b16 %v201
    %v3703 = vunpack.c.h.b16 %v201
    %v3704 = vunpack.c.l.b16 %v202
    %v3705 = vunpack.c.h.b16 %v202
    %v3706 = vunpack.c.l.b16 %v203
    %v3707 = vunpack.c.h.b16 %v203
    %v3708 = vunpack.c.l.b16 %v204
    %v3709 = vunpack.c.h.b16 %v204
    %v3710 = vunpack.c.l.b16 %v205
    %v3711 = vunpack.c.h.b16 %v205
    %v3712 = vunpack.c.l.b16 %v206
    %v3713 = vunpack.c.h.b16 %v206
    %v3714 = vunpack.c.l.b16 %v207
    %v3715 = vunpack.c.h.b16 %v207
    %v3716 = vunpack.c.l.b16 %v208
    %v3717 = vunpack.c.h.b16 %v208
    %v3718 = vunpack.c.l.b16 %v209
    %v3719 = vunpack.c.h.b16 %v209
    %v3720 = vunpack.c.l.b16 %v210
    %v3721 = vunpack.c.h.b16 %v210
    %v3722 = vunpack.c.l.b16 %v211
    %v3723 = vunpack.c.h.b16 %v211
    %v3724 = vunpack.c.l.b16 %v212
    %v3725 = vunpack.c.h.b16 %v212
    %v3726 = vunpack.c.l.b16 %v213
    %v3727 = vunpack.c.h.b16 %v213
    %v3728 = vunpack.c.l.b16 %v214
    %v3729 = vunpack.c.h.b16 %v214
    %v3730 = vunpack.c.l.b16 %v215
    %v3731 = vunpack.c.h.b16 %v215
    %v3732 = vunpack.c.l.b16 %v216
    %v3733 = vunpack.c.h.b16 %v216
    %v3734 = vunpack.c.l.b16 %v217
    %v3735 = vunpack.c.h.b16 %v217
    %v3736 = vunpack.c.l.b16 %v218
    %v3737 = vunpack.c.h.b16 %v218
    %v3738 = vunpack.c.l.b16 %v219
    %v3739 = vunpack.c.h.b16 %v219
    %v3740 = vunpack.c.l.b16 %v220
    %v3741 = vunpack.c.h.b16 %v220
    %v3742 = vunpack.c.l.b16 %v221
    %v3743 = vunpack.c.h.b16 %v221
    %v3744 = vunpack.c.l.b16 %v222
    %v3745 = vunpack.c.h.b16 %v222
    %v3746 = vunpack.c.l.b16 %v223
    %v3747 = vunpack.c.h.b16 %v223
    %v3748 = vunpack.c.l.b16 %v224
    %v3749 = vunpack.c.h.b16 %v224
    %v3750 = vunpack.c.l.b16 %v225
    %v3751 = vunpack.c.h.b16 %v225
    %v3752 = vunpack.c.l.b16 %v226
    %v3753 = vunpack.c.h.b16 %v226
    %v3754 = vunpack.c.l.b16 %v227
    %v3755 = vunpack.c.h.b16 %v227
    %v3756 = vunpack.c.l.b16 %v228
    %v3757 = vunpack.c.h.b16 %v228
    %v3758 = vunpack.c.l.b16 %v229
    %v3759 = vunpack.c.h.b16 %v229
    %v3760 = vunpack.c.l.b16 %v230
    %v3761 = vunpack.c.h.b16 %v230
    %v3762 = vunpack.c.l.b16 %v231
    %v3763 = vunpack.c.h.b16 %v231
    %v3764 = vunpack.c.l.b16 %v232
    %v3765 = vunpack.c.h.b16 %v232
    %v3766 = vunpack.c.l.b16 %v233
    %v3767 = vunpack.c.h.b16 %v233
    %v3768 = vunpack.c.l.b16 %v234
    %v3769 = vunpack.c.h.b16 %v234
    %v3770 = vunpack.c.l.b16 %v235
    %v3771 = vunpack.c.h.b16 %v235
    %v3772 = vunpack.c.l.b16 %v236
    %v3773 = vunpack.c.h.b16 %v236
    %v3774 = vunpack.c.l.b16 %v237
    %v3775 = vunpack.c.h.b16 %v237
    %v3776 = vunpack.c.l.b16 %v238
    %v3777 = vunpack.c.h.b16 %v238
    %v3778 = vunpack.c.l.b16 %v239
    %v3779 = vunpack.c.h.b16 %v239
    %v3780 = vunpack.c.l.b16 %v240
    %v3781 = vunpack.c.h.b16 %v240
    %v3782 = vunpack.c.l.b16 %v241
    %v3783 = vunpack.c.h.b16 %v241
    %v3784 = vunpack.c.l.b16 %v242
    %v3785 = vunpack.c.h.b16 %v242
    %v3786 = vunpack.c.l.b16 %v243
    %v3787 = vunpack.c.h.b16 %v243
    %v3788 = vunpack.c.l.b16 %v244
    %v3789 = vunpack.c.h.b16 %v244
    %v3790 = vunpack.c.l.b16 %v245
    %v3791 = vunpack.c.h.b16 %v245
    %v3792 = vunpack.c.l.b16 %v246
    %v3793 = vunpack.c.h.b16 %v246
    %v3794 = vunpack.c.l.b16 %v247
    %v3795 = vunpack.c.h.b16 %v247
    %v3796 = vunpack.c.l.b16 %v248
    %v3797 = vunpack.c.h.b16 %v248
    %v3798 = vunpack.c.l.b16 %v249
    %v3799 = vunpack.c.h.b16 %v249
    %v3800 = vunpack.c.l.b16 %v250
    %v3801 = vunpack.c.h.b16 %v250
    %v3802 = vunpack.c.l.b16 %v251
    %v3803 = vunpack.c.h.b16 %v251
    %v3804 = vunpack.c.l.b16 %v252
    %v3805 = vunpack.c.h.b16 %v252
    %v3806 = vunpack.c.l.b16 %v253
    %v3807 = vunpack.c.h.b16 %v253
    %v3808 = vunpack.c.l.b16 %v254
    %v3809 = vunpack.c.h.b16 %v254
    %v3810 = vunpack.c.l.b16 %v255
    %v3811 = vunpack.c.h.b16 %v255
    %v3812 = vunpack.c.l.b16 %v256
    %v3813 = vunpack.c.h.b16 %v256
    %v3814 = vunpack.c.l.b16 %v257
    %v3815 = vunpack.c.h.b16 %v257
    %v3816 = vunpack.c.l.b16 %v258
    %v3817 = vunpack.c.h.b16 %v258
    %v3818 = vunpack.c.l.b16 %v259
    %v3819 = vunpack.c.h.b16 %v259
    %v3820 = vunpack.c.l.b16 %v260
    %v3821 = vunpack.c.h.b16 %v260
    %v3822 = vunpack.c.l.b16 %v261
    %v3823 = vunpack.c.h.b16 %v261
    %v3824 = vunpack.c.l.b16 %v262
    %v3825 = vunpack.c.h.b16 %v262
    %v3826 = vunpack.c.l.b16 %v263
    %v3827 = vunpack.c.h.b16 %v263
    %v3828 = vunpack.c.l.b16 %v264
    %v3829 = vunpack.c.h.b16 %v264
    %v3830 = vunpack.c.l.b16 %v265
    %v3831 = vunpack.c.h.b16 %v265
    %v3832 = vunpack.c.l.b16 %v266
    %v3833 = vunpack.c.h.b16 %v266
    %v3834 = vunpack.c.l.b16 %v267
    %v3835 = vunpack.c.h.b16 %v267
    %v3836 = vunpack.c.l.b16 %v268
    %v3837 = vunpack.c.h.b16 %v268
    %v3838 = vunpack.c.l.b16 %v269
    %v3839 = vunpack.c.h.b16 %v269
    %v3840 = vunpack.c.l.b16 %v270
    %v3841 = vunpack.c.h.b16 %v270
    %v3842 = vunpack.c.l.b16 %v271
    %v3843 = vunpack.c.h.b16 %v271
    %v3844 = vunpack.c.l.b16 %v272
    %v3845 = vunpack.c.h.b16 %v272
    %v3846 = vunpack.c.l.b16 %v273
    %v3847 = vunpack.c.h.b16 %v273
    %v3848 = vunpack.c.l.b16 %v274
    %v3849 = vunpack.c.h.b16 %v274
    %v3850 = vunpack.c.l.b16 %v275
    %v3851 = vunpack.c.h.b16 %v275
    %v3852 = vunpack.c.l.b16 %v276
    %v3853 = vunpack.c.h.b16 %v276
    %v3854 = vunpack.c.l.b16 %v277
    %v3855 = vunpack.c.h.b16 %v277
    %v3856 = vunpack.c.l.b16 %v278
    %v3857 = vunpack.c.h.b16 %v278
    %v3858 = vunpack.c.l.b16 %v279
    %v3859 = vunpack.c.h.b16 %v279
    %v3860 = vunpack.c.l.b16 %v280
    %v3861 = vunpack.c.h.b16 %v280
    %v3862 = vunpack.c.l.b16 %v281
    %v3863 = vunpack.c.h.b16 %v281
    %v3864 = vunpack.c.l.b16 %v282
    %v3865 = vunpack.c.h.b16 %v282
    %v3866 = vunpack.c.l.b16 %v283
    %v3867 = vunpack.c.h.b16 %v283
    %v3868 = vunpack.c.l.b16 %v284
    %v3869 = vunpack.c.h.b16 %v284
    %v3870 = vunpack.c.l.b16 %v285
    %v3871 = vunpack.c.h.b16 %v285
    %v3872 = vunpack.c.l.b16 %v286
    %v3873 = vunpack.c.h.b16 %v286
    %v3874 = vunpack.c.l.b16 %v287
    %v3875 = vunpack.c.h.b16 %v287
    %v3876 = vunpack.c.l.b16 %v288
    %v3877 = vunpack.c.h.b16 %v288
    %v3878 = vunpack.c.l.b16 %v289
    %v3879 = vunpack.c.h.b16 %v289
    %v3880 = vunpack.c.l.b16 %v290
    %v3881 = vunpack.c.h.b16 %v290
    %v3882 = vunpack.c.l.b16 %v291
    %v3883 = vunpack.c.h.b16 %v291
    %v3884 = vunpack.c.l.b16 %v292
    %v3885 = vunpack.c.h.b16 %v292
    %v3886 = vunpack.c.l.b16 %v293
    %v3887 = vunpack.c.h.b16 %v293
    %v3888 = vunpack.c.l.b16 %v294
    %v3889 = vunpack.c.h.b16 %v294
    %v3890 = vunpack.c.l.b16 %v295
    %v3891 = vunpack.c.h.b16 %v295
    %v3892 = vunpack.c.l.b16 %v296
    %v3893 = vunpack.c.h.b16 %v296
    %v3894 = vunpack.c.l.b16 %v297
    %v3895 = vunpack.c.h.b16 %v297
    %v3896 = vunpack.c.l.b16 %v298
    %v3897 = vunpack.c.h.b16 %v298
    %v3898 = vunpack.c.l.b16 %v299
    %v3899 = vunpack.c.h.b16 %v299
    %v3900 = vunpack.c.l.b16 %v300
    %v3901 = vunpack.c.h.b16 %v300
    %v3902 = vunpack.c.l.b16 %v301
    %v3903 = vunpack.c.h.b16 %v301
    %v3904 = vunpack.c.l.b16 %v302
    %v3905 = vunpack.c.h.b16 %v302
    %v3906 = vunpack.c.l.b16 %v303
    %v3907 = vunpack.c.h.b16 %v303
    %v3908 = vunpack.c.l.b16 %v304
    %v3909 = vunpack.c.h.b16 %v304
    %v3910 = vunpack.c.l.b16 %v305
    %v3911 = vunpack.c.h.b16 %v305
    %v3912 = vunpack.c.l.b16 %v306
    %v3913 = vunpack.c.h.b16 %v306
    %v3914 = vunpack.c.l.b16 %v307
    %v3915 = vunpack.c.h.b16 %v307
    %v3916 = vunpack.c.l.b16 %v308
    %v3917 = vunpack.c.h.b16 %v308
    %v3918 = vunpack.c.l.b16 %v309
    %v3919 = vunpack.c.h.b16 %v309
    %v3920 = vunpack.c.l.b16 %v310
    %v3921 = vunpack.c.h.b16 %v310
    %v3922 = vunpack.c.l.b16 %v311
    %v3923 = vunpack.c.h.b16 %v311
    %v3924 = vunpack.c.l.b16 %v312
    %v3925 = vunpack.c.h.b16 %v312
    %v3926 = vunpack.c.l.b16 %v313
    %v3927 = vunpack.c.h.b16 %v313
    %v3928 = vunpack.c.l.b16 %v314
    %v3929 = vunpack.c.h.b16 %v314
    %v3930 = vunpack.c.l.b16 %v315
    %v3931 = vunpack.c.h.b16 %v315
    %v3932 = vunpack.c.l.b16 %v316
    %v3933 = vunpack.c.h.b16 %v316
    %v3934 = vunpack.c.l.b16 %v317
    %v3935 = vunpack.c.h.b16 %v317
    %v3936 = vunpack.c.l.b16 %v318
    %v3937 = vunpack.c.h.b16 %v318
    %v3938 = vunpack.c.l.b16 %v319
    %v3939 = vunpack.c.h.b16 %v319
    %v3940 = vunpack.c.l.b16 %v320
    %v3941 = vunpack.c.h.b16 %v320
    %v3942 = vunpack.c.l.b16 %v321
    %v3943 = vunpack.c.h.b16 %v321
    %v3944 = vunpack.c.l.b16 %v322
    %v3945 = vunpack.c.h.b16 %v322
    %v3946 = vunpack.c.l.b16 %v323
    %v3947 = vunpack.c.h.b16 %v323
    %v3948 = vunpack.c.l.b16 %v324
    %v3949 = vunpack.c.h.b16 %v324
    %v3950 = vunpack.c.l.b16 %v325
    %v3951 = vunpack.c.h.b16 %v325
    %v3952 = vunpack.c.l.b16 %v326
    %v3953 = vunpack.c.h.b16 %v326
    %v3954 = vunpack.c.l.b16 %v327
    %v3955 = vunpack.c.h.b16 %v327
    %v3956 = vunpack.c.l.b16 %v328
    %v3957 = vunpack.c.h.b16 %v328
    %v3958 = vunpack.c.l.b16 %v329
    %v3959 = vunpack.c.h.b16 %v329
    %v3960 = vunpack.c.l.b16 %v330
    %v3961 = vunpack.c.h.b16 %v330
    %v3962 = vunpack.c.l.b16 %v331
    %v3963 = vunpack.c.h.b16 %v331
    %v3964 = vunpack.c.l.b16 %v332
    %v3965 = vunpack.c.h.b16 %v332
    %v3966 = vunpack.c.l.b16 %v333
    %v3967 = vunpack.c.h.b16 %v333
    %v3968 = vunpack.c.l.b16 %v334
    %v3969 = vunpack.c.h.b16 %v334
    %v3970 = vunpack.c.l.b16 %v335
    %v3971 = vunpack.c.h.b16 %v335
    %v3972 = vunpack.c.l.b16 %v336
    %v3973 = vunpack.c.h.b16 %v336
    %v3974 = vunpack.c.l.b16 %v337
    %v3975 = vunpack.c.h.b16 %v337
    %v3976 = vunpack.c.l.b16 %v338
    %v3977 = vunpack.c.h.b16 %v338
    %v3978 = vunpack.c.l.b16 %v339
    %v3979 = vunpack.c.h.b16 %v339
    %v3980 = vunpack.c.l.b16 %v340
    %v3981 = vunpack.c.h.b16 %v340
    %v3982 = vunpack.c.l.b16 %v341
    %v3983 = vunpack.c.h.b16 %v341
    %v3984 = vunpack.c.l.b16 %v342
    %v3985 = vunpack.c.h.b16 %v342
    %v3986 = vunpack.c.l.b16 %v343
    %v3987 = vunpack.c.h.b16 %v343
    %v3988 = vunpack.c.l.b16 %v344
    %v3989 = vunpack.c.h.b16 %v344
    %v3990 = vunpack.c.l.b16 %v345
    %v3991 = vunpack.c.h.b16 %v345
    %v3992 = vunpack.c.l.b16 %v346
    %v3993 = vunpack.c.h.b16 %v346
    %v3994 = vunpack.c.l.b16 %v347
    %v3995 = vunpack.c.h.b16 %v347
    %v3996 = vunpack.c.l.b16 %v348
    %v3997 = vunpack.c.h.b16 %v348
    %v3998 = vunpack.c.l.b16 %v349
    %v3999 = vunpack.c.h.b16 %v349
    %v4000 = vunpack.c.l.b16 %v350
    %v4001 = vunpack.c.h.b16 %v350
    %v4002 = vunpack.c.l.b16 %v351
    %v4003 = vunpack.c.h.b16 %v351
    %v4004 = vunpack.c.l.b16 %v352
    %v4005 = vunpack.c.h.b16 %v352
    %v4006 = vunpack.c.l.b16 %v353
    %v4007 = vunpack.c.h.b16 %v353
    %v4008 = vunpack.c.l.b16 %v354
    %v4009 = vunpack.c.h.b16 %v354
    %v4010 = vunpack.c.l.b16 %v355
    %v4011 = vunpack.c.h.b16 %v355
    %v4012 = vunpack.c.l.b16 %v356
    %v4013 = vunpack.c.h.b16 %v356
    %v4014 = vunpack.c.l.b16 %v357
    %v4015 = vunpack.c.h.b16 %v357
    %v4016 = vunpack.c.l.b16 %v358
    %v4017 = vunpack.c.h.b16 %v358
    %v4018 = vunpack.c.l.b16 %v359
    %v4019 = vunpack.c.h.b16 %v359
    %v4020 = vunpack.c.l.b16 %v360
    %v4021 = vunpack.c.h.b16 %v360
    %v4022 = vunpack.c.l.b16 %v361
    %v4023 = vunpack.c.h.b16 %v361
    %v4024 = vunpack.c.l.b16 %v362
    %v4025 = vunpack.c.h.b16 %v362
    %v4026 = vunpack.c.l.b16 %v363
    %v4027 = vunpack.c.h.b16 %v363
    %v4028 = vunpack.c.l.b16 %v364
    %v4029 = vunpack.c.h.b16 %v364
    %v4030 = vunpack.c.l.b16 %v365
    %v4031 = vunpack.c.h.b16 %v365
    %v4032 = vunpack.c.l.b16 %v366
    %v4033 = vunpack.c.h.b16 %v366
    %v4034 = vunpack.c.l.b16 %v367
    %v4035 = vunpack.c.h.b16 %v367
    %v4036 = vunpack.c.l.b16 %v368
    %v4037 = vunpack.c.h.b16 %v368
    %v4038 = vunpack.c.l.b16 %v369
    %v4039 = vunpack.c.h.b16 %v369
    %v4040 = vunpack.c.l.b16 %v370
    %v4041 = vunpack.c.h.b16 %v370
    %v4042 = vunpack.c.l.b16 %v371
    %v4043 = vunpack.c.h.b16 %v371
    %v4044 = vunpack.c.l.b16 %v372
    %v4045 = vunpack.c.h.b16 %v372
    %v4046 = vunpack.c.l.b16 %v373
    %v4047 = vunpack.c.h.b16 %v373
    %v4048 = vunpack.c.l.b16 %v374
    %v4049 = vunpack.c.h.b16 %v374
    %v4050 = vunpack.c.l.b16 %v375
    %v4051 = vunpack.c.h.b16 %v375
    %v4052 = vunpack.c.l.b16 %v376
    %v4053 = vunpack.c.h.b16 %v376
    %v4054 = vunpack.c.l.b16 %v377
    %v4055 = vunpack.c.h.b16 %v377
    %v4056 = vunpack.c.l.b16 %v378
    %v4057 = vunpack.c.h.b16 %v378
    %v4058 = vunpack.c.l.b16 %v379
    %v4059 = vunpack.c.h.b16 %v379
    %v4060 = vunpack.c.l.b16 %v380
    %v4061 = vunpack.c.h.b16 %v380
    %v4062 = vunpack.c.l.b16 %v381
    %v4063 = vunpack.c.h.b16 %v381
    %v4064 = vunpack.c.l.b16 %v382
    %v4065 = vunpack.c.h.b16 %v382
    %v4066 = vunpack.c.l.b16 %v383
    %v4067 = vunpack.c.h.b16 %v383
    %v4068 = vunpack.c.l.b16 %v384
    %v4069 = vunpack.c.h.b16 %v384
    %v4070 = vunpack.c.l.b16 %v385
    %v4071 = vunpack.c.h.b16 %v385
    %v4072 = vunpack.c.l.b16 %v386
    %v4073 = vunpack.c.h.b16 %v386
    %v4074 = vunpack.c.l.b16 %v387
    %v4075 = vunpack.c.h.b16 %v387
    %v4076 = vunpack.c.l.b16 %v388
    %v4077 = vunpack.c.h.b16 %v388
    %v4078 = vunpack.c.l.b16 %v389
    %v4079 = vunpack.c.h.b16 %v389
    %v4080 = vunpack.c.l.b16 %v390
    %v4081 = vunpack.c.h.b16 %v390
    %v4082 = vunpack.c.l.b16 %v391
    %v4083 = vunpack.c.h.b16 %v391
    %v4084 = vunpack.c.l.b16 %v392
    %v4085 = vunpack.c.h.b16 %v392
    %v4086 = vunpack.c.l.b16 %v393
    %v4087 = vunpack.c.h.b16 %v393
    %v4088 = vunpack.c.l.b16 %v394
    %v4089 = vunpack.c.h.b16 %v394
    %v4090 = vunpack.c.l.b16 %v395
    %v4091 = vunpack.c.h.b16 %v395
    %v4092 = vunpack.c.l.b16 %v396
    %v4093 = vunpack.c.h.b16 %v396
    %v4094 = vunpack.c.l.b16 %v397
    %v4095 = vunpack.c.h.b16 %v397
    %v4096 = vunpack.c.l.b16 %v398
    %v4097 = vunpack.c.h.b16 %v398
    %v4098 = vunpack.c.l.b16 %v399
    %v4099 = vunpack.c.h.b16 %v399
    %v4100 = vunpack.c.l.b16 %v400
    %v4101 = vunpack.c.h.b16 %v400
    %v4102 = vunpack.c.l.b16 %v401
    %v4103 = vunpack.c.h.b16 %v401
    %v4104 = vunpack.c.l.b16 %v402
    %v4105 = vunpack.c.h.b16 %v402
    %v4106 = vunpack.c.l.b16 %v403
    %v4107 = vunpack.c.h.b16 %v403
    %v4108 = vunpack.c.l.b16 %v404
    %v4109 = vunpack.c.h.b16 %v404
    %v4110 = vunpack.c.l.b16 %v405
    %v4111 = vunpack.c.h.b16 %v405
    %v4112 = vunpack.c.l.b16 %v406
    %v4113 = vunpack.c.h.b16 %v406
    %v4114 = vunpack.c.l.b16 %v407
    %v4115 = vunpack.c.h.b16 %v407
    %v4116 = vunpack.c.l.b16 %v408
    %v4117 = vunpack.c.h.b16 %v408
    %v4118 = vunpack.c.l.b16 %v409
    %v4119 = vunpack.c.h.b16 %v409
    %v4120 = vunpack.c.l.b16 %v410
    %v4121 = vunpack.c.h.b16 %v410
    %v4122 = vunpack.c.l.b16 %v411
    %v4123 = vunpack.c.h.b16 %v411
    %v4124 = vunpack.c.l.b16 %v412
    %v4125 = vunpack.c.h.b16 %v412
    %v4126 = vunpack.c.l.b16 %v413
    %v4127 = vunpack.c.h.b16 %v413
    %v4128 = vunpack.c.l.b16 %v414
    %v4129 = vunpack.c.h.b16 %v414
    %v4130 = vunpack.c.l.b16 %v415
    %v4131 = vunpack.c.h.b16 %v415
    %v4132 = vunpack.c.l.b16 %v416
    %v4133 = vunpack.c.h.b16 %v416
    %v4134 = vunpack.c.l.b16 %v417
    %v4135 = vunpack.c.h.b16 %v417
    %v4136 = vunpack.c.l.b16 %v418
    %v4137 = vunpack.c.h.b16 %v418
    %v4138 = vunpack.c.l.b16 %v419
    %v4139 = vunpack.c.h.b16 %v419
    %v4140 = vunpack.c.l.b16 %v420
    %v4141 = vunpack.c.h.b16 %v420
    %v4142 = vunpack.c.l.b16 %v421
    %v4143 = vunpack.c.h.b16 %v421
    %v4144 = vunpack.c.l.b16 %v422
    %v4145 = vunpack.c.h.b16 %v422
    %v4146 = vunpack.c.l.b16 %v423
    %v4147 = vunpack.c.h.b16 %v423
    %v4148 = vunpack.c.l.b16 %v424
    %v4149 = vunpack.c.h.b16 %v424
    %v4150 = vunpack.c.l.b16 %v425
    %v4151 = vunpack.c.h.b16 %v425
    %v4152 = vunpack.c.l.b16 %v426
    %v4153 = vunpack.c.h.b16 %v426
    %v4154 = vunpack.c.l.b16 %v427
    %v4155 = vunpack.c.h.b16 %v427
    %v4156 = vunpack.c.l.b16 %v428
    %v4157 = vunpack.c.h.b16 %v428
    %v4158 = vunpack.c.l.b16 %v429
    %v4159 = vunpack.c.h.b16 %v429
    %v4160 = vunpack.c.l.b16 %v430
    %v4161 = vunpack.c.h.b16 %v430
    %v4162 = vunpack.c.l.b16 %v431
    %v4163 = vunpack.c.h.b16 %v431
    %v4164 = vunpack.c.l.b16 %v432
    %v4165 = vunpack.c.h.b16 %v432
    %v4166 = vunpack.c.l.b16 %v433
    %v4167 = vunpack.c.h.b16 %v433
    %v4168 = vunpack.c.l.b16 %v434
    %v4169 = vunpack.c.h.b16 %v434
    %v4170 = vunpack.c.l.b16 %v435
    %v4171 = vunpack.c.h.b16 %v435
    %v4172 = vunpack.c.l.b16 %v436
    %v4173 = vunpack.c.h.b16 %v436
    %v4174 = vunpack.c.l.b16 %v437
    %v4175 = vunpack.c.h.b16 %v437
    %v4176 = vunpack.c.l.b16 %v438
    %v4177 = vunpack.c.h.b16 %v438
    %v4178 = vunpack.c.l.b16 %v439
    %v4179 = vunpack.c.h.b16 %v439
    %v4180 = vunpack.c.l.b16 %v440
    %v4181 = vunpack.c.h.b16 %v440
    %v4182 = vunpack.c.l.b16 %v441
    %v4183 = vunpack.c.h.b16 %v441
    %v4184 = vunpack.c.l.b16 %v442
    %v4185 = vunpack.c.h.b16 %v442
    %v4186 = vunpack.c.l.b16 %v443
    %v4187 = vunpack.c.h.b16 %v443
    %v4188 = vunpack.c.l.b16 %v444
    %v4189 = vunpack.c.h.b16 %v444
    %v4190 = vunpack.c.l.b16 %v445
    %v4191 = vunpack.c.h.b16 %v445
    %v4192 = vunpack.c.l.b16 %v446
    %v4193 = vunpack.c.h.b16 %v446
    %v4194 = vunpack.c.l.b16 %v447
    %v4195 = vunpack.c.h.b16 %v447
    %v4196 = vunpack.c.l.b16 %v448
    %v4197 = vunpack.c.h.b16 %v448
    %v4198 = vunpack.c.l.b16 %v449
    %v4199 = vunpack.c.h.b16 %v449
    %v4200 = vunpack.c.l.b16 %v450
    %v4201 = vunpack.c.h.b16 %v450
    %v4202 = vunpack.c.l.b16 %v451
    %v4203 = vunpack.c.h.b16 %v451
    %v4204 = vunpack.c.l.b16 %v452
    %v4205 = vunpack.c.h.b16 %v452
    %v4206 = vunpack.c.l.b16 %v453
    %v4207 = vunpack.c.h.b16 %v453
    %v4208 = vunpack.c.l.b16 %v454
    %v4209 = vunpack.c.h.b16 %v454
    %v4210 = vunpack.c.l.b16 %v455
    %v4211 = vunpack.c.h.b16 %v455
    %v4212 = vunpack.c.l.b16 %v456
    %v4213 = vunpack.c.h.b16 %v456
    %v4214 = vunpack.c.l.b16 %v457
    %v4215 = vunpack.c.h.b16 %v457
    %v4216 = vunpack.c.l.b16 %v458
    %v4217 = vunpack.c.h.b16 %v458
    %v4218 = vunpack.c.l.b16 %v459
    %v4219 = vunpack.c.h.b16 %v459
    %v4220 = vunpack.c.l.b16 %v460
    %v4221 = vunpack.c.h.b16 %v460
    %v4222 = vunpack.c.l.b16 %v461
    %v4223 = vunpack.c.h.b16 %v461
    %v4224 = vunpack.c.l.b16 %v462
    %v4225 = vunpack.c.h.b16 %v462
    %v4226 = vunpack.c.l.b16 %v463
    %v4227 = vunpack.c.h.b16 %v463
    %v4228 = vunpack.c.l.b16 %v464
    %v4229 = vunpack.c.h.b16 %v464
    %v4230 = vunpack.c.l.b16 %v465
    %v4231 = vunpack.c.h.b16 %v465
    %v4232 = vunpack.c.l.b16 %v466
    %v4233 = vunpack.c.h.b16 %v466
    %v4234 = vunpack.c.l.b16 %v467
    %v4235 = vunpack.c.h.b16 %v467
    %v4236 = vunpack.c.l.b16 %v468
    %v4237 = vunpack.c.h.b16 %v468
    %v4238 = vunpack.c.l.b16 %v469
    %v4239 = vunpack.c.h.b16 %v469
    %v4240 = vunpack.c.l.b16 %v470
    %v4241 = vunpack.c.h.b16 %v470
    %v4242 = vunpack.c.l.b16 %v471
    %v4243 = vunpack.c.h.b16 %v471
    %v4244 = vunpack.c.l.b16 %v472
    %v4245 = vunpack.c.h.b16 %v472
    %v4246 = vunpack.c.l.b16 %v473
    %v4247 = vunpack.c.h.b16 %v473
    %v4248 = vunpack.c.l.b16 %v474
    %v4249 = vunpack.c.h.b16 %v474
    %v4250 = vunpack.c.l.b16 %v475
    %v4251 = vunpack.c.h.b16 %v475
    %v4252 = vunpack.c.l.b16 %v476
    %v4253 = vunpack.c.h.b16 %v476
    %v4254 = vunpack.c.l.b16 %v477
    %v4255 = vunpack.c.h.b16 %v477
    %v4256 = vunpack.c.l.b16 %v478
    %v4257 = vunpack.c.h.b16 %v478
    %v4258 = vunpack.c.l.b16 %v479
    %v4259 = vunpack.c.h.b16 %v479
    %v4260 = vunpack.c.l.b16 %v480
    %v4261 = vunpack.c.h.b16 %v480
    %v4262 = vunpack.c.l.b16 %v481
    %v4263 = vunpack.c.h.b16 %v481
    %v4264 = vunpack.c.l.b16 %v482
    %v4265 = vunpack.c.h.b16 %v482
    %v4266 = vunpack.c.l.b16 %v483
    %v4267 = vunpack.c.h.b16 %v483
    %v4268 = vunpack.c.l.b16 %v484
    %v4269 = vunpack.c.h.b16 %v484
    %v4270 = vunpack.c.l.b16 %v485
    %v4271 = vunpack.c.h.b16 %v485
    %v4272 = vunpack.c.l.b16 %v486
    %v4273 = vunpack.c.h.b16 %v486
    %v4274 = vunpack.c.l.b16 %v487
    %v4275 = vunpack.c.h.b16 %v487
    %v4276 = vunpack.c.l.b16 %v488
    %v4277 = vunpack.c.h.b16 %v488
    %v4278 = vunpack.c.l.b16 %v489
    %v4279 = vunpack.c.h.b16 %v489
    %v4280 = vunpack.c.l.b16 %v490
    %v4281 = vunpack.c.h.b16 %v490
    %v4282 = vunpack.c.l.b16 %v491
    %v4283 = vunpack.c.h.b16 %v491
    %v4284 = vunpack.c.l.b16 %v492
    %v4285 = vunpack.c.h.b16 %v492
    %v4286 = vunpack.c.l.b16 %v493
    %v4287 = vunpack.c.h.b16 %v493
    %v4288 = vunpack.c.l.b16 %v494
    %v4289 = vunpack.c.h.b16 %v494
    %v4290 = vunpack.c.l.b16 %v495
    %v4291 = vunpack.c.h.b16 %v495
    %v4292 = vunpack.c.l.b16 %v496
    %v4293 = vunpack.c.h.b16 %v496
    %v4294 = vunpack.c.l.b16 %v497
    %v4295 = vunpack.c.h.b16 %v497
    %v4296 = vunpack.c.l.b16 %v498
    %v4297 = vunpack.c.h.b16 %v498
    %v4298 = vunpack.c.l.b16 %v499
    %v4299 = vunpack.c.h.b16 %v499
    %v4300 = vunpack.c.l.b16 %v500
    %v4301 = vunpack.c.h.b16 %v500
    %v4302 = vunpack.c.l.b16 %v501
    %v4303 = vunpack.c.h.b16 %v501
    %v4304 = vunpack.c.l.b16 %v502
    %v4305 = vunpack.c.h.b16 %v502
    %v4306 = vunpack.c.l.b16 %v503
    %v4307 = vunpack.c.h.b16 %v503
    %v4308 = vunpack.c.l.b16 %v504
    %v4309 = vunpack.c.h.b16 %v504
    %v4310 = vunpack.c.l.b16 %v505
    %v4311 = vunpack.c.h.b16 %v505
    %v4312 = vunpack.c.l.b16 %v506
    %v4313 = vunpack.c.h.b16 %v506
    %v4314 = vunpack.c.l.b16 %v507
    %v4315 = vunpack.c.h.b16 %v507
    %v4316 = vunpack.c.l.b16 %v508
    %v4317 = vunpack.c.h.b16 %v508
    %v4318 = vunpack.c.l.b16 %v509
    %v4319 = vunpack.c.h.b16 %v509
    %v4320 = vunpack.c.l.b16 %v510
    %v4321 = vunpack.c.h.b16 %v510
    %v4322 = vunpack.c.l.b16 %v511
    %v4323 = vunpack.c.h.b16 %v511
    %v4324 = vunpack.c.l.b16 %v512
    %v4325 = vunpack.c.h.b16 %v512
    %v4326 = vunpack.c.l.b16 %v513
    %v4327 = vunpack.c.h.b16 %v513
    %v4328 = vunpack.c.l.b16 %v514
    %v4329 = vunpack.c.h.b16 %v514
    %v4330 = vunpack.c.l.b16 %v515
    %v4331 = vunpack.c.h.b16 %v515
    %v4332 = vunpack.c.l.b16 %v516
    %v4333 = vunpack.c.h.b16 %v516
    %v4334 = vunpack.c.l.b16 %v517
    %v4335 = vunpack.c.h.b16 %v517
    %v4336 = vunpack.c.l.b16 %v518
    %v4337 = vunpack.c.h.b16 %v518
    %v4338 = vunpack.c.l.b16 %v519
    %v4339 = vunpack.c.h.b16 %v519
    %v4340 = vunpack.c.l.b16 %v520
    %v4341 = vunpack.c.h.b16 %v520
    %v4342 = vunpack.c.l.b16 %v521
    %v4343 = vunpack.c.h.b16 %v521
    %v4344 = vunpack.c.l.b16 %v522
    %v4345 = vunpack.c.h.b16 %v522
    %v4346 = vunpack.c.l.b16 %v523
    %v4347 = vunpack.c.h.b16 %v523
    %v4348 = vunpack.c.l.b16 %v524
    %v4349 = vunpack.c.h.b16 %v524
    %v4350 = vunpack.c.l.b16 %v525
    %v4351 = vunpack.c.h.b16 %v525
    %v4352 = vunpack.c.l.b16 %v526
    %v4353 = vunpack.c.h.b16 %v526
    %v4354 = vunpack.c.l.b16 %v527
    %v4355 = vunpack.c.h.b16 %v527
    %v4356 = vunpack.c.l.b16 %v528
    %v4357 = vunpack.c.h.b16 %v528
    %v4358 = vunpack.c.l.b16 %v529
    %v4359 = vunpack.c.h.b16 %v529
    %v4360 = vunpack.c.l.b16 %v530
    %v4361 = vunpack.c.h.b16 %v530
    %v4362 = vunpack.c.l.b16 %v531
    %v4363 = vunpack.c.h.b16 %v531
    %v4364 = vunpack.c.l.b16 %v532
    %v4365 = vunpack.c.h.b16 %v532
    %v4366 = vunpack.c.l.b16 %v533
    %v4367 = vunpack.c.h.b16 %v533
    %v4368 = vunpack.c.l.b16 %v534
    %v4369 = vunpack.c.h.b16 %v534
    %v4370 = vunpack.c.l.b16 %v535
    %v4371 = vunpack.c.h.b16 %v535
    %v4372 = vunpack.c.l.b16 %v536
    %v4373 = vunpack.c.h.b16 %v536
    %v4374 = vunpack.c.l.b16 %v537
    %v4375 = vunpack.c.h.b16 %v537
    %v4376 = vunpack.c.l.b16 %v538
    %v4377 = vunpack.c.h.b16 %v538
    %v4378 = vunpack.c.l.b16 %v539
    %v4379 = vunpack.c.h.b16 %v539
    %v4380 = vunpack.c.l.b16 %v540
    %v4381 = vunpack.c.h.b16 %v540
    %v4382 = vunpack.c.l.b16 %v541
    %v4383 = vunpack.c.h.b16 %v541
    %v4384 = vunpack.c.l.b16 %v542
    %v4385 = vunpack.c.h.b16 %v542
    %v4386 = vunpack.c.l.b16 %v543
    %v4387 = vunpack.c.h.b16 %v543
    %v4388 = vunpack.c.l.b16 %v544
    %v4389 = vunpack.c.h.b16 %v544
    %v4390 = vunpack.c.l.b16 %v545
    %v4391 = vunpack.c.h.b16 %v545
    %v4392 = vunpack.c.l.b16 %v546
    %v4393 = vunpack.c.h.b16 %v546
    %v4394 = vunpack.c.l.b16 %v547
    %v4395 = vunpack.c.h.b16 %v547
    %v4396 = vunpack.c.l.b16 %v548
    %v4397 = vunpack.c.h.b16 %v548
    %v4398 = vunpack.c.l.b16 %v549
    %v4399 = vunpack.c.h.b16 %v549
    %v4400 = vunpack.c.l.b16 %v550
    %v4401 = vunpack.c.h.b16 %v550
    %v4402 = vunpack.c.l.b16 %v551
    %v4403 = vunpack.c.h.b16 %v551
    %v4404 = vunpack.c.l.b16 %v552
    %v4405 = vunpack.c.h.b16 %v552
    %v4406 = vunpack.c.l.b16 %v553
    %v4407 = vunpack.c.h.b16 %v553
    %v4408 = vunpack.c.l.b16 %v554
    %v4409 = vunpack.c.h.b16 %v554
    %v4410 = vunpack.c.l.b16 %v555
    %v4411 = vunpack.c.h.b16 %v555
    %v4412 = vunpack.c.l.b16 %v556
    %v4413 = vunpack.c.h.b16 %v556
    %v4414 = vunpack.c.l.b16 %v557
    %v4415 = vunpack.c.h.b16 %v557
    %v4416 = vunpack.c.l.b16 %v558
    %v4417 = vunpack.c.h.b16 %v558
    %v4418 = vunpack.c.l.b16 %v559
    %v4419 = vunpack.c.h.b16 %v559
    %v4420 = vunpack.c.l.b16 %v560
    %v4421 = vunpack.c.h.b16 %v560
    %v4422 = vunpack.c.l.b16 %v561
    %v4423 = vunpack.c.h.b16 %v561
    %v4424 = vunpack.c.l.b16 %v562
    %v4425 = vunpack.c.h.b16 %v562
    %v4426 = vunpack.c.l.b16 %v563
    %v4427 = vunpack.c.h.b16 %v563
    %v4428 = vunpack.c.l.b16 %v564
    %v4429 = vunpack.c.h.b16 %v564
    %v4430 = vunpack.c.l.b16 %v565
    %v4431 = vunpack.c.h.b16 %v565
    %v4432 = vunpack.c.l.b16 %v566
    %v4433 = vunpack.c.h.b16 %v566
    %v4434 = vunpack.c.l.b16 %v567
    %v4435 = vunpack.c.h.b16 %v567
    %v4436 = vunpack.c.l.b16 %v568
    %v4437 = vunpack.c.h.b16 %v568
    %v4438 = vunpack.c.l.b16 %v569
    %v4439 = vunpack.c.h.b16 %v569
    %v4440 = vunpack.c.l.b16 %v570
    %v4441 = vunpack.c.h.b16 %v570
    %v4442 = vunpack.c.l.b16 %v571
    %v4443 = vunpack.c.h.b16 %v571
    %v4444 = vunpack.c.l.b16 %v572
    %v4445 = vunpack.c.h.b16 %v572
    %v4446 = vunpack.c.l.b16 %v573
    %v4447 = vunpack.c.h.b16 %v573
    %v4448 = vunpack.c.l.b16 %v574
    %v4449 = vunpack.c.h.b16 %v574
    %v4450 = vunpack.c.l.b16 %v575
    %v4451 = vunpack.c.h.b16 %v575
    %v4452 = vunpack.c.l.b16 %v576
    %v4453 = vunpack.c.h.b16 %v576
    %v4454 = vunpack.c.l.b16 %v577
    %v4455 = vunpack.c.h.b16 %v577
    %v4456 = vunpack.c.l.b16 %v578
    %v4457 = vunpack.c.h.b16 %v578
    %v4458 = vunpack.c.l.b16 %v579
    %v4459 = vunpack.c.h.b16 %v579
    %v4460 = vunpack.c.l.b16 %v580
    %v4461 = vunpack.c.h.b16 %v580
    %v4462 = vunpack.c.l.b16 %v581
    %v4463 = vunpack.c.h.b16 %v581
    %v4464 = vunpack.c.l.b16 %v582
    %v4465 = vunpack.c.h.b16 %v582
    %v4466 = vunpack.c.l.b16 %v583
    %v4467 = vunpack.c.h.b16 %v583
    %v4468 = vunpack.c.l.b16 %v584
    %v4469 = vunpack.c.h.b16 %v584
    %v4470 = vunpack.c.l.b16 %v585
    %v4471 = vunpack.c.h.b16 %v585
    %v4472 = vunpack.c.l.b16 %v586
    %v4473 = vunpack.c.h.b16 %v586
    %v4474 = vunpack.c.l.b16 %v587
    %v4475 = vunpack.c.h.b16 %v587
    %v4476 = vunpack.c.l.b16 %v588
    %v4477 = vunpack.c.h.b16 %v588
    %v4478 = vunpack.c.l.b16 %v589
    %v4479 = vunpack.c.h.b16 %v589
    %v4480 = vunpack.c.l.b16 %v590
    %v4481 = vunpack.c.h.b16 %v590
    %v4482 = vunpack.c.l.b16 %v591
    %v4483 = vunpack.c.h.b16 %v591
    %v4484 = vunpack.c.l.b16 %v592
    %v4485 = vunpack.c.h.b16 %v592
    %v4486 = vunpack.c.l.b16 %v593
    %v4487 = vunpack.c.h.b16 %v593
    %v4488 = vunpack.c.l.b16 %v594
    %v4489 = vunpack.c.h.b16 %v594
    %v4490 = vunpack.c.l.b16 %v595
    %v4491 = vunpack.c.h.b16 %v595
    %v4492 = vunpack.c.l.b16 %v596
    %v4493 = vunpack.c.h.b16 %v596
    %v4494 = vunpack.c.l.b16 %v597
    %v4495 = vunpack.c.h.b16 %v597
    %v4496 = vunpack.c.l.b16 %v598
    %v4497 = vunpack.c.h.b16 %v598
    %v4498 = vunpack.c.l.b16 %v599
    %v4499 = vunpack.c.h.b16 %v599
    %v4500 = vunpack.c.l.b16 %v600
    %v4501 = vunpack.c.h.b16 %v600
    %v4502 = vunpack.c.l.b16 %v601
    %v4503 = vunpack.c.h.b16 %v601
    %v4504 = vunpack.c.l.b16 %v602
    %v4505 = vunpack.c.h.b16 %v602
    %v4506 = vunpack.c.l.b16 %v603
    %v4507 = vunpack.c.h.b16 %v603
    %v4508 = vunpack.c.l.b16 %v604
    %v4509 = vunpack.c.h.b16 %v604
    %v4510 = vunpack.c.l.b16 %v605
    %v4511 = vunpack.c.h.b16 %v605
    %v4512 = vunpack.c.l.b16 %v606
    %v4513 = vunpack.c.h.b16 %v606
    %v4514 = vunpack.c.l.b16 %v607
    %v4515 = vunpack.c.h.b16 %v607
    %v4516 = vunpack.c.l.b16 %v608
    %v4517 = vunpack.c.h.b16 %v608
    %v4518 = vunpack.c.l.b16 %v609
    %v4519 = vunpack.c.h.b16 %v609
    %v4520 = vunpack.c.l.b16 %v610
    %v4521 = vunpack.c.h.b16 %v610
    %v4522 = vunpack.c.l.b16 %v611
    %v4523 = vunpack.c.h.b16 %v611
    %v4524 = vunpack.c.l.b16 %v612
    %v4525 = vunpack.c.h.b16 %v612
    %v4526 = vunpack.c.l.b16 %v613
    %v4527 = vunpack.c.h.b16 %v613
    %v4528 = vunpack.c.l.b16 %v614
    %v4529 = vunpack.c.h.b16 %v614
    %v4530 = vunpack.c.l.b16 %v615
    %v4531 = vunpack.c.h.b16 %v615
    %v4532 = vunpack.c.l.b16 %v616
    %v4533 = vunpack.c.h.b16 %v616
    %v4534 = vunpack.c.l.b16 %v617
    %v4535 = vunpack.c.h.b16 %v617
    %v4536 = vunpack.c.l.b16 %v618
    %v4537 = vunpack.c.h.b16 %v618
    %v4538 = vunpack.c.l.b16 %v619
    %v4539 = vunpack.c.h.b16 %v619
    %v4540 = vunpack.c.l.b16 %v620
    %v4541 = vunpack.c.h.b16 %v620
    %v4542 = vunpack.c.l.b16 %v621
    %v4543 = vunpack.c.h.b16 %v621
    %v4544 = vunpack.c.l.b16 %v622
    %v4545 = vunpack.c.h.b16 %v622
    %v4546 = vunpack.c.l.b16 %v623
    %v4547 = vunpack.c.h.b16 %v623
    %v4548 = vunpack.c.l.b16 %v624
    %v4549 = vunpack.c.h.b16 %v624
    %v4550 = vunpack.c.l.b16 %v625
    %v4551 = vunpack.c.h.b16 %v625
    %v4552 = vunpack.c.l.b16 %v626
    %v4553 = vunpack.c.h.b16 %v626
    %v4554 = vunpack.c.l.b16 %v627
    %v4555 = vunpack.c.h.b16 %v627
    %v4556 = vunpack.c.l.b16 %v628
    %v4557 = vunpack.c.h.b16 %v628
    %v4558 = vunpack.c.l.b16 %v629
    %v4559 = vunpack.c.h.b16 %v629
    %v4560 = vunpack.c.l.b16 %v630
    %v4561 = vunpack.c.h.b16 %v630
    %v4562 = vunpack.c.l.b16 %v631
    %v4563 = vunpack.c.h.b16 %v631
    %v4564 = vunpack.c.l.b16 %v632
    %v4565 = vunpack.c.h.b16 %v632
    %v4566 = vunpack.c.l.b16 %v633
    %v4567 = vunpack.c.h.b16 %v633
    %v4568 = vunpack.c.l.b16 %v634
    %v4569 = vunpack.c.h.b16 %v634
    %v4570 = vunpack.c.l.b16 %v635
    %v4571 = vunpack.c.h.b16 %v635
    %v4572 = vunpack.c.l.b16 %v636
    %v4573 = vunpack.c.h.b16 %v636
    %v4574 = vunpack.c.l.b16 %v637
    %v4575 = vunpack.c.h.b16 %v637
    %v4576 = vunpack.c.l.b16 %v638
    %v4577 = vunpack.c.h.b16 %v638
    %v4578 = vunpack.c.l.b16 %v639
    %v4579 = vunpack.c.h.b16 %v639
    %v4580 = vunpack.c.l.b16 %v640
    %v4581 = vunpack.c.h.b16 %v640
    %v4582 = vunpack.c.l.b16 %v641
    %v4583 = vunpack.c.h.b16 %v641
    %v4584 = vunpack.c.l.b16 %v642
    %v4585 = vunpack.c.h.b16 %v642
    %v4586 = vunpack.c.l.b16 %v643
    %v4587 = vunpack.c.h.b16 %v643
    %v4588 = vunpack.c.l.b16 %v644
    %v4589 = vunpack.c.h.b16 %v644
    %v4590 = vunpack.c.l.b16 %v645
    %v4591 = vunpack.c.h.b16 %v645
    %v4592 = vunpack.c.l.b16 %v646
    %v4593 = vunpack.c.h.b16 %v646
    %v4594 = vunpack.c.l.b16 %v647
    %v4595 = vunpack.c.h.b16 %v647
    %v4596 = vunpack.c.l.b16 %v648
    %v4597 = vunpack.c.h.b16 %v648
    %v4598 = vunpack.c.l.b16 %v649
    %v4599 = vunpack.c.h.b16 %v649
    %v4600 = vunpack.c.l.b16 %v650
    %v4601 = vunpack.c.h.b16 %v650
    %v4602 = vunpack.c.l.b16 %v651
    %v4603 = vunpack.c.h.b16 %v651
    %v4604 = vunpack.c.l.b16 %v652
    %v4605 = vunpack.c.h.b16 %v652
    %v4606 = vunpack.c.l.b16 %v653
    %v4607 = vunpack.c.h.b16 %v653
    %v4608 = vunpack.c.l.b16 %v654
    %v4609 = vunpack.c.h.b16 %v654
    %v4610 = vunpack.c.l.b16 %v655
    %v4611 = vunpack.c.h.b16 %v655
    %v4612 = vunpack.c.l.b16 %v656
    %v4613 = vunpack.c.h.b16 %v656
    %v4614 = vunpack.c.l.b16 %v657
    %v4615 = vunpack.c.h.b16 %v657
    %v4616 = vunpack.c.l.b16 %v658
    %v4617 = vunpack.c.h.b16 %v658
    %v4618 = vunpack.c.l.b16 %v659
    %v4619 = vunpack.c.h.b16 %v659
    %v4620 = vunpack.c.l.b16 %v660
    %v4621 = vunpack.c.h.b16 %v660
    %v4622 = vunpack.c.l.b16 %v661
    %v4623 = vunpack.c.h.b16 %v661
    %v4624 = vunpack.c.l.b16 %v662
    %v4625 = vunpack.c.h.b16 %v662
    %v4626 = vunpack.c.l.b16 %v663
    %v4627 = vunpack.c.h.b16 %v663
    %v4628 = vunpack.c.l.b16 %v664
    %v4629 = vunpack.c.h.b16 %v664
    %v4630 = vunpack.c.l.b16 %v665
    %v4631 = vunpack.c.h.b16 %v665
    %v4632 = vunpack.c.l.b16 %v666
    %v4633 = vunpack.c.h.b16 %v666
    %v4634 = vunpack.c.l.b16 %v667
    %v4635 = vunpack.c.h.b16 %v667
    %v4636 = vunpack.c.l.b16 %v668
    %v4637 = vunpack.c.h.b16 %v668
    %v4638 = vunpack.c.l.b16 %v669
    %v4639 = vunpack.c.h.b16 %v669
    %v4640 = vunpack.c.l.b16 %v670
    %v4641 = vunpack.c.h.b16 %v670
    %v4642 = vunpack.c.l.b16 %v671
    %v4643 = vunpack.c.h.b16 %v671
    %v4644 = vunpack.c.l.b16 %v672
    %v4645 = vunpack.c.h.b16 %v672
    %v4646 = vunpack.c.l.b16 %v673
    %v4647 = vunpack.c.h.b16 %v673
    %v4648 = vunpack.c.l.b16 %v674
    %v4649 = vunpack.c.h.b16 %v674
    %v4650 = vunpack.c.l.b16 %v675
    %v4651 = vunpack.c.h.b16 %v675
    %v4652 = vunpack.c.l.b16 %v676
    %v4653 = vunpack.c.h.b16 %v676
    %v4654 = vunpack.c.l.b16 %v677
    %v4655 = vunpack.c.h.b16 %v677
    %v4656 = vunpack.c.l.b16 %v678
    %v4657 = vunpack.c.h.b16 %v678
    %v4658 = vunpack.c.l.b16 %v679
    %v4659 = vunpack.c.h.b16 %v679
    %v4660 = vunpack.c.l.b16 %v680
    %v4661 = vunpack.c.h.b16 %v680
    %v4662 = vunpack.c.l.b16 %v681
    %v4663 = vunpack.c.h.b16 %v681
    %v4664 = vunpack.c.l.b16 %v682
    %v4665 = vunpack.c.h.b16 %v682
    %v4666 = vunpack.c.l.b16 %v683
    %v4667 = vunpack.c.h.b16 %v683
    %v4668 = vunpack.c.l.b16 %v684
    %v4669 = vunpack.c.h.b16 %v684
    %v4670 = vunpack.c.l.b16 %v685
    %v4671 = vunpack.c.h.b16 %v685
    %v4672 = vunpack.c.l.b16 %v686
    %v4673 = vunpack.c.h.b16 %v686
    %v4674 = vunpack.c.l.b16 %v687
    %v4675 = vunpack.c.h.b16 %v687
    %v4676 = vunpack.c.l.b16 %v688
    %v4677 = vunpack.c.h.b16 %v688
    %v4678 = vunpack.c.l.b16 %v689
    %v4679 = vunpack.c.h.b16 %v689
    %v4680 = vunpack.c.l.b16 %v690
    %v4681 = vunpack.c.h.b16 %v690
    %v4682 = vunpack.c.l.b16 %v691
    %v4683 = vunpack.c.h.b16 %v691
    %v4684 = vunpack.c.l.b16 %v692
    %v4685 = vunpack.c.h.b16 %v692
    %v4686 = vunpack.c.l.b16 %v693
    %v4687 = vunpack.c.h.b16 %v693
    %v4688 = vunpack.c.l.b16 %v694
    %v4689 = vunpack.c.h.b16 %v694
    %v4690 = vunpack.c.l.b16 %v695
    %v4691 = vunpack.c.h.b16 %v695
    %v4692 = vunpack.c.l.b16 %v696
    %v4693 = vunpack.c.h.b16 %v696
    %v4694 = vunpack.c.l.b16 %v697
    %v4695 = vunpack.c.h.b16 %v697
    %v4696 = vunpack.c.l.b16 %v698
    %v4697 = vunpack.c.h.b16 %v698
    %v4698 = vunpack.c.l.b16 %v699
    %v4699 = vunpack.c.h.b16 %v699
    %v4700 = vunpack.c.l.b16 %v700
    %v4701 = vunpack.c.h.b16 %v700
    %v4702 = vunpack.c.l.b16 %v701
    %v4703 = vunpack.c.h.b16 %v701
    %v4704 = vunpack.c.l.b16 %v702
    %v4705 = vunpack.c.h.b16 %v702
    %v4706 = vunpack.c.l.b16 %v703
    %v4707 = vunpack.c.h.b16 %v703
    %v4708 = vunpack.c.l.b16 %v704
    %v4709 = vunpack.c.h.b16 %v704
    %v4710 = vunpack.c.l.b16 %v705
    %v4711 = vunpack.c.h.b16 %v705
    %v4712 = vunpack.c.l.b16 %v706
    %v4713 = vunpack.c.h.b16 %v706
    %v4714 = vunpack.c.l.b16 %v707
    %v4715 = vunpack.c.h.b16 %v707
    %v4716 = vunpack.c.l.b16 %v708
    %v4717 = vunpack.c.h.b16 %v708
    %v4718 = vunpack.c.l.b16 %v709
    %v4719 = vunpack.c.h.b16 %v709
    %v4720 = vunpack.c.l.b16 %v710
    %v4721 = vunpack.c.h.b16 %v710
    %v4722 = vunpack.c.l.b16 %v711
    %v4723 = vunpack.c.h.b16 %v711
    %v4724 = vunpack.c.l.b16 %v712
    %v4725 = vunpack.c.h.b16 %v712
    %v4726 = vunpack.c.l.b16 %v713
    %v4727 = vunpack.c.h.b16 %v713
    %v4728 = vunpack.c.l.b16 %v714
    %v4729 = vunpack.c.h.b16 %v714
    %v4730 = vunpack.c.l.b16 %v715
    %v4731 = vunpack.c.h.b16 %v715
    %v4732 = vunpack.c.l.b16 %v716
    %v4733 = vunpack.c.h.b16 %v716
    %v4734 = vunpack.c.l.b16 %v717
    %v4735 = vunpack.c.h.b16 %v717
    %v4736 = vunpack.c.l.b16 %v718
    %v4737 = vunpack.c.h.b16 %v718
    %v4738 = vunpack.c.l.b16 %v719
    %v4739 = vunpack.c.h.b16 %v719
    %v4740 = vunpack.c.l.b16 %v720
    %v4741 = vunpack.c.h.b16 %v720
    %v4742 = vunpack.c.l.b16 %v721
    %v4743 = vunpack.c.h.b16 %v721
    %v4744 = vunpack.c.l.b16 %v722
    %v4745 = vunpack.c.h.b16 %v722
    %v4746 = vunpack.c.l.b16 %v723
    %v4747 = vunpack.c.h.b16 %v723
    %v4748 = vunpack.c.l.b16 %v724
    %v4749 = vunpack.c.h.b16 %v724
    %v4750 = vunpack.c.l.b16 %v725
    %v4751 = vunpack.c.h.b16 %v725
    %v4752 = vunpack.c.l.b16 %v726
    %v4753 = vunpack.c.h.b16 %v726
    %v4754 = vunpack.c.l.b16 %v727
    %v4755 = vunpack.c.h.b16 %v727
    %v4756 = vunpack.c.l.b16 %v728
    %v4757 = vunpack.c.h.b16 %v728
    %v4758 = vunpack.c.l.b16 %v729
    %v4759 = vunpack.c.h.b16 %v729
    %v4760 = vunpack.c.l.b16 %v730
    %v4761 = vunpack.c.h.b16 %v730
    %v4762 = vunpack.c.l.b16 %v731
    %v4763 = vunpack.c.h.b16 %v731
    %v4764 = vunpack.c.l.b16 %v732
    %v4765 = vunpack.c.h.b16 %v732
    %v4766 = vunpack.c.l.b16 %v733
    %v4767 = vunpack.c.h.b16 %v733
    %v4768 = vunpack.c.l.b16 %v734
    %v4769 = vunpack.c.h.b16 %v734
    %v4770 = vunpack.c.l.b16 %v735
    %v4771 = vunpack.c.h.b16 %v735
    %v4772 = vunpack.c.l.b16 %v736
    %v4773 = vunpack.c.h.b16 %v736
    %v4774 = vunpack.c.l.b16 %v737
    %v4775 = vunpack.c.h.b16 %v737
    %v4776 = vunpack.c.l.b16 %v738
    %v4777 = vunpack.c.h.b16 %v738
    %v4778 = vunpack.c.l.b16 %v739
    %v4779 = vunpack.c.h.b16 %v739
    %v4780 = vunpack.c.l.b16 %v740
    %v4781 = vunpack.c.h.b16 %v740
    %v4782 = vunpack.c.l.b16 %v741
    %v4783 = vunpack.c.h.b16 %v741
    %v4784 = vunpack.c.l.b16 %v742
    %v4785 = vunpack.c.h.b16 %v742
    %v4786 = vunpack.c.l.b16 %v743
    %v4787 = vunpack.c.h.b16 %v743
    %v4788 = vunpack.c.l.b16 %v744
    %v4789 = vunpack.c.h.b16 %v744
    %v4790 = vunpack.c.l.b16 %v745
    %v4791 = vunpack.c.h.b16 %v745
    %v4792 = vunpack.c.l.b16 %v746
    %v4793 = vunpack.c.h.b16 %v746
    %v4794 = vunpack.c.l.b16 %v747
    %v4795 = vunpack.c.h.b16 %v747
    %v4796 = vunpack.c.l.b16 %v748
    %v4797 = vunpack.c.h.b16 %v748
    %v4798 = vunpack.c.l.b16 %v749
    %v4799 = vunpack.c.h.b16 %v749
    %v4800 = vunpack.c.l.b16 %v750
    %v4801 = vunpack.c.h.b16 %v750
    %v4802 = vunpack.c.l.b16 %v751
    %v4803 = vunpack.c.h.b16 %v751
    %v4804 = vunpack.c.l.b16 %v752
    %v4805 = vunpack.c.h.b16 %v752
    %v4806 = vunpack.c.l.b16 %v753
    %v4807 = vunpack.c.h.b16 %v753
    %v4808 = vunpack.c.l.b16 %v754
    %v4809 = vunpack.c.h.b16 %v754
    %v4810 = vunpack.c.l.b16 %v755
    %v4811 = vunpack.c.h.b16 %v755
    %v4812 = vunpack.c.l.b16 %v756
    %v4813 = vunpack.c.h.b16 %v756
    %v4814 = vunpack.c.l.b16 %v757
    %v4815 = vunpack.c.h.b16 %v757
    %v4816 = vunpack.c.l.b16 %v758
    %v4817 = vunpack.c.h.b16 %v758
    %v4818 = vunpack.c.l.b16 %v759
    %v4819 = vunpack.c.h.b16 %v759
    %v4820 = vunpack.c.l.b16 %v760
    %v4821 = vunpack.c.h.b16 %v760
    %v4822 = vunpack.c.l.b16 %v761
    %v4823 = vunpack.c.h.b16 %v761
    %v4824 = vunpack.c.l.b16 %v762
    %v4825 = vunpack.c.h.b16 %v762
    %v4826 = vunpack.c.l.b16 %v763
    %v4827 = vunpack.c.h.b16 %v763
    %v4828 = vunpack.c.l.b16 %v764
    %v4829 = vunpack.c.h.b16 %v764
    %v4830 = vunpack.c.l.b16 %v765
    %v4831 = vunpack.c.h.b16 %v765
    %v4832 = vunpack.c.l.b16 %v766
    %v4833 = vunpack.c.h.b16 %v766
    %v4834 = vunpack.c.l.b16 %v767
    %v4835 = vunpack.c.h.b16 %v767
    %v4836 = vunpack.c.l.b16 %v768
    %v4837 = vunpack.c.h.b16 %v768
    %v4838 = vunpack.c.l.b16 %v769
    %v4839 = vunpack.c.h.b16 %v769
    %v4840 = vunpack.c.l.b16 %v770
    %v4841 = vunpack.c.h.b16 %v770
    %v4842 = vunpack.c.l.b16 %v771
    %v4843 = vunpack.c.h.b16 %v771
    %v4844 = vunpack.c.l.b16 %v772
    %v4845 = vunpack.c.h.b16 %v772
    %v4846 = vunpack.c.l.b16 %v773
    %v4847 = vunpack.c.h.b16 %v773
    %v4848 = vunpack.c.l.b16 %v774
    %v4849 = vunpack.c.h.b16 %v774
    %v4850 = vunpack.c.l.b16 %v775
    %v4851 = vunpack.c.h.b16 %v775
    %v4852 = vunpack.c.l.b16 %v776
    %v4853 = vunpack.c.h.b16 %v776
    %v4854 = vunpack.c.l.b16 %v777
    %v4855 = vunpack.c.h.b16 %v777
    %v4856 = vunpack.c.l.b16 %v778
    %v4857 = vunpack.c.h.b16 %v778
    %v4858 = vunpack.c.l.b16 %v779
    %v4859 = vunpack.c.h.b16 %v779
    %v4860 = vunpack.c.l.b16 %v780
    %v4861 = vunpack.c.h.b16 %v780
    %v4862 = vunpack.c.l.b16 %v781
    %v4863 = vunpack.c.h.b16 %v781
    %v4864 = vunpack.c.l.b16 %v782
    %v4865 = vunpack.c.h.b16 %v782
    %v4866 = vunpack.c.l.b16 %v783
    %v4867 = vunpack.c.h.b16 %v783
    %v4868 = vunpack.c.l.b16 %v784
    %v4869 = vunpack.c.h.b16 %v784
    %v4870 = vunpack.c.l.b16 %v785
    %v4871 = vunpack.c.h.b16 %v785
    %v4872 = vunpack.c.l.b16 %v786
    %v4873 = vunpack.c.h.b16 %v786
    %v4874 = vunpack.c.l.b16 %v787
    %v4875 = vunpack.c.h.b16 %v787
    %v4876 = vunpack.c.l.b16 %v788
    %v4877 = vunpack.c.h.b16 %v788
    %v4878 = vunpack.c.l.b16 %v789
    %v4879 = vunpack.c.h.b16 %v789
    %v4880 = vunpack.c.l.b16 %v790
    %v4881 = vunpack.c.h.b16 %v790
    %v4882 = vunpack.c.l.b16 %v791
    %v4883 = vunpack.c.h.b16 %v791
    %v4884 = vunpack.c.l.b16 %v792
    %v4885 = vunpack.c.h.b16 %v792
    %v4886 = vunpack.c.l.b16 %v793
    %v4887 = vunpack.c.h.b16 %v793
    %v4888 = vunpack.c.l.b16 %v794
    %v4889 = vunpack.c.h.b16 %v794
    %v4890 = vunpack.c.l.b16 %v795
    %v4891 = vunpack.c.h.b16 %v795
    %v4892 = vunpack.c.l.b16 %v796
    %v4893 = vunpack.c.h.b16 %v796
    %v4894 = vunpack.c.l.b16 %v797
    %v4895 = vunpack.c.h.b16 %v797
    %v4896 = vunpack.c.l.b16 %v798
    %v4897 = vunpack.c.h.b16 %v798
    %v4898 = vunpack.c.l.b16 %v799
    %v4899 = vunpack.c.h.b16 %v799
    %v4900 = vunpack.c.l.b16 %v800
    %v4901 = vunpack.c.h.b16 %v800
    %v4902 = vunpack.c.l.b16 %v801
    %v4903 = vunpack.c.h.b16 %v801
    %v4904 = vunpack.c.l.b16 %v802
    %v4905 = vunpack.c.h.b16 %v802
    %v4906 = vunpack.c.l.b16 %v803
    %v4907 = vunpack.c.h.b16 %v803
    %v4908 = vunpack.c.l.b16 %v804
    %v4909 = vunpack.c.h.b16 %v804
    %v4910 = vunpack.c.l.b16 %v805
    %v4911 = vunpack.c.h.b16 %v805
    %v4912 = vunpack.c.l.b16 %v806
    %v4913 = vunpack.c.h.b16 %v806
    %v4914 = vunpack.c.l.b16 %v807
    %v4915 = vunpack.c.h.b16 %v807
    %v4916 = vunpack.c.l.b16 %v808
    %v4917 = vunpack.c.h.b16 %v808
    %v4918 = vunpack.c.l.b16 %v809
    %v4919 = vunpack.c.h.b16 %v809
    %v4920 = vunpack.c.l.b16 %v810
    %v4921 = vunpack.c.h.b16 %v810
    %v4922 = vunpack.c.l.b16 %v811
    %v4923 = vunpack.c.h.b16 %v811
    %v4924 = vunpack.c.l.b16 %v812
    %v4925 = vunpack.c.h.b16 %v812
    %v4926 = vunpack.c.l.b16 %v813
    %v4927 = vunpack.c.h.b16 %v813
    %v4928 = vunpack.c.l.b16 %v814
    %v4929 = vunpack.c.h.b16 %v814
    %v4930 = vunpack.c.l.b16 %v815
    %v4931 = vunpack.c.h.b16 %v815
    %v4932 = vunpack.c.l.b16 %v816
    %v4933 = vunpack.c.h.b16 %v816
    %v4934 = vunpack.c.l.b16 %v817
    %v4935 = vunpack.c.h.b16 %v817
    %v4936 = vunpack.c.l.b16 %v818
    %v4937 = vunpack.c.h.b16 %v818
    %v4938 = vunpack.c.l.b16 %v819
    %v4939 = vunpack.c.h.b16 %v819
    %v4940 = vunpack.c.l.b16 %v820
    %v4941 = vunpack.c.h.b16 %v820
    %v4942 = vunpack.c.l.b16 %v821
    %v4943 = vunpack.c.h.b16 %v821
    %v4944 = vunpack.c.l.b16 %v822
    %v4945 = vunpack.c.h.b16 %v822
    %v4946 = vunpack.c.l.b16 %v823
    %v4947 = vunpack.c.h.b16 %v823
    %v4948 = vunpack.c.l.b16 %v824
    %v4949 = vunpack.c.h.b16 %v824
    %v4950 = vunpack.c.l.b16 %v825
    %v4951 = vunpack.c.h.b16 %v825
    %v4952 = vunpack.c.l.b16 %v826
    %v4953 = vunpack.c.h.b16 %v826
    %v4954 = vunpack.c.l.b16 %v827
    %v4955 = vunpack.c.h.b16 %v827
    %v4956 = vunpack.c.l.b16 %v828
    %v4957 = vunpack.c.h.b16 %v828
    %v4958 = vunpack.c.l.b16 %v829
    %v4959 = vunpack.c.h.b16 %v829
    %v4960 = vunpack.c.l.b16 %v830
    %v4961 = vunpack.c.h.b16 %v830
    %v4962 = vunpack.c.l.b16 %v831
    %v4963 = vunpack.c.h.b16 %v831
    %v4964 = vunpack.c.l.b16 %v832
    %v4965 = vunpack.c.h.b16 %v832
    %v4966 = vunpack.c.l.b16 %v833
    %v4967 = vunpack.c.h.b16 %v833
    %v4968 = vunpack.c.l.b16 %v834
    %v4969 = vunpack.c.h.b16 %v834
    %v4970 = vunpack.c.l.b16 %v835
    %v4971 = vunpack.c.h.b16 %v835
    %v4972 = vunpack.c.l.b16 %v836
    %v4973 = vunpack.c.h.b16 %v836
    %v4974 = vunpack.c.l.b16 %v837
    %v4975 = vunpack.c.h.b16 %v837
    %v4976 = vunpack.c.l.b16 %v838
    %v4977 = vunpack.c.h.b16 %v838
    %v4978 = vunpack.c.l.b16 %v839
    %v4979 = vunpack.c.h.b16 %v839
    %v4980 = vunpack.c.l.b16 %v840
    %v4981 = vunpack.c.h.b16 %v840
    %v4982 = vunpack.c.l.b16 %v841
    %v4983 = vunpack.c.h.b16 %v841
    %v4984 = vunpack.c.l.b16 %v842
    %v4985 = vunpack.c.h.b16 %v842
    %v4986 = vunpack.c.l.b16 %v843
    %v4987 = vunpack.c.h.b16 %v843
    %v4988 = vunpack.c.l.b16 %v844
    %v4989 = vunpack.c.h.b16 %v844
    %v4990 = vunpack.c.l.b16 %v845
    %v4991 = vunpack.c.h.b16 %v845
    %v4992 = vunpack.c.l.b16 %v846
    %v4993 = vunpack.c.h.b16 %v846
    %v4994 = vunpack.c.l.b16 %v847
    %v4995 = vunpack.c.h.b16 %v847
    %v4996 = vunpack.c.l.b16 %v848
    %v4997 = vunpack.c.h.b16 %v848
    %v4998 = vunpack.c.l.b16 %v849
    %v4999 = vunpack.c.h.b16 %v849
    %v5000 = vunpack.c.l.b16 %v850
    %v5001 = vunpack.c.h.b16 %v850
    %v5002 = vunpack.c.l.b16 %v851
    %v5003 = vunpack.c.h.b16 %v851
    %v5004 = vunpack.c.l.b16 %v852
    %v5005 = vunpack.c.h.b16 %v852
    %v5006 = vunpack.c.l.b16 %v853
    %v5007 = vunpack.c.h.b16 %v853
    %v5008 = vunpack.c.l.b16 %v854
    %v5009 = vunpack.c.h.b16 %v854
    %v5010 = vunpack.c.l.b16 %v855
    %v5011 = vunpack.c.h.b16 %v855
    %v5012 = vunpack.c.l.b16 %v856
    %v5013 = vunpack.c.h.b16 %v856
    %v5014 = vunpack.c.l.b16 %v857
    %v5015 = vunpack.c.h.b16 %v857
    %v5016 = vunpack.c.l.b16 %v858
    %v5017 = vunpack.c.h.b16 %v858
    %v5018 = vunpack.c.l.b16 %v859
    %v5019 = vunpack.c.h.b16 %v859
    %v5020 = vunpack.c.l.b16 %v860
    %v5021 = vunpack.c.h.b16 %v860
    %v5022 = vunpack.c.l.b16 %v861
    %v5023 = vunpack.c.h.b16 %v861
    %v5024 = vunpack.c.l.b16 %v862
    %v5025 = vunpack.c.h.b16 %v862
    %v5026 = vunpack.c.l.b16 %v863
    %v5027 = vunpack.c.h.b16 %v863
    %v5028 = vunpack.c.l.b16 %v864
    %v5029 = vunpack.c.h.b16 %v864
    %v5030 = vunpack.c.l.b16 %v865
    %v5031 = vunpack.c.h.b16 %v865
    %v5032 = vunpack.c.l.b16 %v866
    %v5033 = vunpack.c.h.b16 %v866
    %v5034 = vunpack.c.l.b16 %v867
    %v5035 = vunpack.c.h.b16 %v867
    %v5036 = vunpack.c.l.b16 %v868
    %v5037 = vunpack.c.h.b16 %v868
    %v5038 = vunpack.c.l.b16 %v869
    %v5039 = vunpack.c.h.b16 %v869
    %v5040 = vunpack.c.l.b16 %v870
    %v5041 = vunpack.c.h.b16 %v870
    %v5042 = vunpack.c.l.b16 %v871
    %v5043 = vunpack.c.h.b16 %v871
    %v5044 = vunpack.c.l.b16 %v872
    %v5045 = vunpack.c.h.b16 %v872
    %v5046 = vunpack.c.l.b16 %v873
    %v5047 = vunpack.c.h.b16 %v873
    %v5048 = vunpack.c.l.b16 %v874
    %v5049 = vunpack.c.h.b16 %v874
    %v5050 = vunpack.c.l.b16 %v875
    %v5051 = vunpack.c.h.b16 %v875
    %v5052 = vunpack.c.l.b16 %v876
    %v5053 = vunpack.c.h.b16 %v876
    %v5054 = vunpack.c.l.b16 %v877
    %v5055 = vunpack.c.h.b16 %v877
    %v5056 = vunpack.c.l.b16 %v878
    %v5057 = vunpack.c.h.b16 %v878
    %v5058 = vunpack.c.l.b16 %v879
    %v5059 = vunpack.c.h.b16 %v879
    %v5060 = vunpack.c.l.b16 %v880
    %v5061 = vunpack.c.h.b16 %v880
    %v5062 = vunpack.c.l.b16 %v881
    %v5063 = vunpack.c.h.b16 %v881
    %v5064 = vunpack.c.l.b16 %v882
    %v5065 = vunpack.c.h.b16 %v882
    %v5066 = vunpack.c.l.b16 %v883
    %v5067 = vunpack.c.h.b16 %v883
    %v5068 = vunpack.c.l.b16 %v884
    %v5069 = vunpack.c.h.b16 %v884
    %v5070 = vunpack.c.l.b16 %v885
    %v5071 = vunpack.c.h.b16 %v885
    %v5072 = vunpack.c.l.b16 %v886
    %v5073 = vunpack.c.h.b16 %v886
    %v5074 = vunpack.c.l.b16 %v887
    %v5075 = vunpack.c.h.b16 %v887
    %v5076 = vunpack.c.l.b16 %v888
    %v5077 = vunpack.c.h.b16 %v888
    %v5078 = vunpack.c.l.b16 %v889
    %v5079 = vunpack.c.h.b16 %v889
    %v5080 = vunpack.c.l.b16 %v890
    %v5081 = vunpack.c.h.b16 %v890
    %v5082 = vunpack.c.l.b16 %v891
    %v5083 = vunpack.c.h.b16 %v891
    %v5084 = vunpack.c.l.b16 %v892
    %v5085 = vunpack.c.h.b16 %v892
    %v5086 = vunpack.c.l.b16 %v893
    %v5087 = vunpack.c.h.b16 %v893
    %v5088 = vunpack.c.l.b16 %v894
    %v5089 = vunpack.c.h.b16 %v894
    %v5090 = vunpack.c.l.b16 %v895
    %v5091 = vunpack.c.h.b16 %v895
    %v5092 = vunpack.c.l.b16 %v896
    %v5093 = vunpack.c.h.b16 %v896
    %v5094 = vunpack.c.l.b16 %v897
    %v5095 = vunpack.c.h.b16 %v897
    %v5096 = vunpack.c.l.b16 %v898
    %v5097 = vunpack.c.h.b16 %v898
    %v5098 = vunpack.c.l.b16 %v899
    %v5099 = vunpack.c.h.b16 %v899
    %v5100 = vunpack.c.l.b16 %v900
    %v5101 = vunpack.c.h.b16 %v900
    %v5102 = vunpack.c.l.b16 %v901
    %v5103 = vunpack.c.h.b16 %v901
    %v5104 = vunpack.c.l.b16 %v902
    %v5105 = vunpack.c.h.b16 %v902
    %v5106 = vunpack.c.l.b16 %v903
    %v5107 = vunpack.c.h.b16 %v903
    %v5108 = vunpack.c.l.b16 %v904
    %v5109 = vunpack.c.h.b16 %v904
    %v5110 = vunpack.c.l.b16 %v905
    %v5111 = vunpack.c.h.b16 %v905
    %v5112 = vunpack.c.l.b16 %v906
    %v5113 = vunpack.c.h.b16 %v906
    %v5114 = vunpack.c.l.b16 %v907
    %v5115 = vunpack.c.h.b16 %v907
    %v5116 = vunpack.c.l.b16 %v908
    %v5117 = vunpack.c.h.b16 %v908
    %v5118 = vunpack.c.l.b16 %v909
    %v5119 = vunpack.c.h.b16 %v909
    %v5120 = vunpack.c.l.b16 %v910
    %v5121 = vunpack.c.h.b16 %v910
    %v5122 = vunpack.c.l.b16 %v911
    %v5123 = vunpack.c.h.b16 %v911
    %v5124 = vunpack.c.l.b16 %v912
    %v5125 = vunpack.c.h.b16 %v912
    %v5126 = vunpack.c.l.b16 %v913
    %v5127 = vunpack.c.h.b16 %v913
    %v5128 = vunpack.c.l.b16 %v914
    %v5129 = vunpack.c.h.b16 %v914
    %v5130 = vunpack.c.l.b16 %v915
    %v5131 = vunpack.c.h.b16 %v915
    %v5132 = vunpack.c.l.b16 %v916
    %v5133 = vunpack.c.h.b16 %v916
    %v5134 = vunpack.c.l.b16 %v917
    %v5135 = vunpack.c.h.b16 %v917
    %v5136 = vunpack.c.l.b16 %v918
    %v5137 = vunpack.c.h.b16 %v918
    %v5138 = vunpack.c.l.b16 %v919
    %v5139 = vunpack.c.h.b16 %v919
    %v5140 = vunpack.c.l.b16 %v920
    %v5141 = vunpack.c.h.b16 %v920
    %v5142 = vunpack.c.l.b16 %v921
    %v5143 = vunpack.c.h.b16 %v921
    %v5144 = vunpack.c.l.b16 %v922
    %v5145 = vunpack.c.h.b16 %v922
    %v5146 = vunpack.c.l.b16 %v923
    %v5147 = vunpack.c.h.b16 %v923
    %v5148 = vunpack.c.l.b16 %v924
    %v5149 = vunpack.c.h.b16 %v924
    %v5150 = vunpack.c.l.b16 %v925
    %v5151 = vunpack.c.h.b16 %v925
    %v5152 = vunpack.c.l.b16 %v926
    %v5153 = vunpack.c.h.b16 %v926
    %v5154 = vunpack.c.l.b16 %v927
    %v5155 = vunpack.c.h.b16 %v927
    %v5156 = vunpack.c.l.b16 %v928
    %v5157 = vunpack.c.h.b16 %v928
    %v5158 = vunpack.c.l.b16 %v929
    %v5159 = vunpack.c.h.b16 %v929
    %v5160 = vunpack.c.l.b16 %v930
    %v5161 = vunpack.c.h.b16 %v930
    %v5162 = vunpack.c.l.b16 %v931
    %v5163 = vunpack.c.h.b16 %v931
    %v5164 = vunpack.c.l.b16 %v932
    %v5165 = vunpack.c.h.b16 %v932
    %v5166 = vunpack.c.l.b16 %v933
    %v5167 = vunpack.c.h.b16 %v933
    %v5168 = vunpack.c.l.b16 %v934
    %v5169 = vunpack.c.h.b16 %v934
    %v5170 = vunpack.c.l.b16 %v935
    %v5171 = vunpack.c.h.b16 %v935
    %v5172 = vunpack.c.l.b16 %v936
    %v5173 = vunpack.c.h.b16 %v936
    %v5174 = vunpack.c.l.b16 %v937
    %v5175 = vunpack.c.h.b16 %v937
    %v5176 = vunpack.c.l.b16 %v938
    %v5177 = vunpack.c.h.b16 %v938
    %v5178 = vunpack.c.l.b16 %v939
    %v5179 = vunpack.c.h.b16 %v939
    %v5180 = vunpack.c.l.b16 %v940
    %v5181 = vunpack.c.h.b16 %v940
    %v5182 = vunpack.c.l.b16 %v941
    %v5183 = vunpack.c.h.b16 %v941
    %v5184 = vunpack.c.l.b16 %v942
    %v5185 = vunpack.c.h.b16 %v942
    %v5186 = vunpack.c.l.b16 %v943
    %v5187 = vunpack.c.h.b16 %v943
    %v5188 = vunpack.c.l.b16 %v944
    %v5189 = vunpack.c.h.b16 %v944
    %v5190 = vunpack.c.l.b16 %v945
    %v5191 = vunpack.c.h.b16 %v945
    %v5192 = vunpack.c.l.b16 %v946
    %v5193 = vunpack.c.h.b16 %v946
    %v5194 = vunpack.c.l.b16 %v947
    %v5195 = vunpack.c.h.b16 %v947
    %v5196 = vunpack.c.l.b16 %v948
    %v5197 = vunpack.c.h.b16 %v948
    %v5198 = vunpack.c.l.b16 %v949
    %v5199 = vunpack.c.h.b16 %v949
    %v5200 = vunpack.c.l.b16 %v950
    %v5201 = vunpack.c.h.b16 %v950
    %v5202 = vunpack.c.l.b16 %v951
    %v5203 = vunpack.c.h.b16 %v951
    %v5204 = vunpack.c.l.b16 %v952
    %v5205 = vunpack.c.h.b16 %v952
    %v5206 = vunpack.c.l.b16 %v953
    %v5207 = vunpack.c.h.b16 %v953
    %v5208 = vunpack.c.l.b16 %v954
    %v5209 = vunpack.c.h.b16 %v954
    %v5210 = vunpack.c.l.b16 %v955
    %v5211 = vunpack.c.h.b16 %v955
    %v5212 = vunpack.c.l.b16 %v956
    %v5213 = vunpack.c.h.b16 %v956
    %v5214 = vunpack.c.l.b16 %v957
    %v5215 = vunpack.c.h.b16 %v957
    %v5216 = vunpack.c.l.b16 %v958
    %v5217 = vunpack.c.h.b16 %v958
    %v5218 = vunpack.c.l.b16 %v959
    %v5219 = vunpack.c.h.b16 %v959
    %v5220 = vunpack.c.l.b16 %v960
    %v5221 = vunpack.c.h.b16 %v960
    %v5222 = vunpack.c.l.b16 %v961
    %v5223 = vunpack.c.h.b16 %v961
    %v5224 = vunpack.c.l.b16 %v962
    %v5225 = vunpack.c.h.b16 %v962
    %v5226 = vunpack.c.l.b16 %v963
    %v5227 = vunpack.c.h.b16 %v963
    %v5228 = vunpack.c.l.b16 %v964
    %v5229 = vunpack.c.h.b16 %v964
    %v5230 = vunpack.c.l.b16 %v965
    %v5231 = vunpack.c.h.b16 %v965
    %v5232 = vunpack.c.l.b16 %v966
    %v5233 = vunpack.c.h.b16 %v966
    %v5234 = vunpack.c.l.b16 %v967
    %v5235 = vunpack.c.h.b16 %v967
    %v5236 = vunpack.c.l.b16 %v968
    %v5237 = vunpack.c.h.b16 %v968
    %v5238 = vunpack.c.l.b16 %v969
    %v5239 = vunpack.c.h.b16 %v969
    %v5240 = vunpack.c.l.b16 %v970
    %v5241 = vunpack.c.h.b16 %v970
    %v5242 = vunpack.c.l.b16 %v971
    %v5243 = vunpack.c.h.b16 %v971
    %v5244 = vunpack.c.l.b16 %v972
    %v5245 = vunpack.c.h.b16 %v972
    %v5246 = vunpack.c.l.b16 %v973
    %v5247 = vunpack.c.h.b16 %v973
    %v5248 = vunpack.c.l.b16 %v974
    %v5249 = vunpack.c.h.b16 %v974
    %v5250 = vunpack.c.l.b16 %v975
    %v5251 = vunpack.c.h.b16 %v975
    %v5252 = vunpack.c.l.b16 %v976
    %v5253 = vunpack.c.h.b16 %v976
    %v5254 = vunpack.c.l.b16 %v977
    %v5255 = vunpack.c.h.b16 %v977
    %v5256 = vunpack.c.l.b16 %v978
    %v5257 = vunpack.c.h.b16 %v978
    %v5258 = vunpack.c.l.b16 %v979
    %v5259 = vunpack.c.h.b16 %v979
    %v5260 = vunpack.c.l.b16 %v980
    %v5261 = vunpack.c.h.b16 %v980
    %v5262 = vunpack.c.l.b16 %v981
    %v5263 = vunpack.c.h.b16 %v981
    %v5264 = vunpack.c.l.b16 %v982
    %v5265 = vunpack.c.h.b16 %v982
    %v5266 = vunpack.c.l.b16 %v983
    %v5267 = vunpack.c.h.b16 %v983
    %v5268 = vunpack.c.l.b16 %v984
    %v5269 = vunpack.c.h.b16 %v984
    %v5270 = vunpack.c.l.b16 %v985
    %v5271 = vunpack.c.h.b16 %v985
    %v5272 = vunpack.c.l.b16 %v986
    %v5273 = vunpack.c.h.b16 %v986
    %v5274 = vunpack.c.l.b16 %v987
    %v5275 = vunpack.c.h.b16 %v987
    %v5276 = vunpack.c.l.b16 %v988
    %v5277 = vunpack.c.h.b16 %v988
    %v5278 = vunpack.c.l.b16 %v989
    %v5279 = vunpack.c.h.b16 %v989
    %v5280 = vunpack.c.l.b16 %v990
    %v5281 = vunpack.c.h.b16 %v990
    %v5282 = vunpack.c.l.b16 %v991
    %v5283 = vunpack.c.h.b16 %v991
    %v5284 = vunpack.c.l.b16 %v992
    %v5285 = vunpack.c.h.b16 %v992
    %v5286 = vunpack.c.l.b16 %v993
    %v5287 = vunpack.c.h.b16 %v993
    %v5288 = vunpack.c.l.b16 %v994
    %v5289 = vunpack.c.h.b16 %v994
    %v5290 = vunpack.c.l.b16 %v995
    %v5291 = vunpack.c.h.b16 %v995
    %v5292 = vunpack.c.l.b16 %v996
    %v5293 = vunpack.c.h.b16 %v996
    %v5294 = vunpack.c.l.b16 %v997
    %v5295 = vunpack.c.h.b16 %v997
    %v5296 = vunpack.c.l.b16 %v998
    %v5297 = vunpack.c.h.b16 %v998
    %v5298 = vunpack.c.l.b16 %v999
    %v5299 = vunpack.c.h.b16 %v999
    %v5300 = vunpack.c.l.b16 %v1000
    %v5301 = vunpack.c.h.b16 %v1000
    %v5302 = vunpack.c.l.b16 %v1001
    %v5303 = vunpack.c.h.b16 %v1001
    %v5304 = vunpack.c.l.b16 %v1002
    %v5305 = vunpack.c.h.b16 %v1002
    %v5306 = vunpack.c.l.b16 %v1003
    %v5307 = vunpack.c.h.b16 %v1003
    %v5308 = vunpack.c.l.b16 %v1004
    %v5309 = vunpack.c.h.b16 %v1004
    %v5310 = vunpack.c.l.b16 %v1005
    %v5311 = vunpack.c.h.b16 %v1005
    %v5312 = vunpack.c.l.b16 %v1006
    %v5313 = vunpack.c.h.b16 %v1006
    %v5314 = vunpack.c.l.b16 %v1007
    %v5315 = vunpack.c.h.b16 %v1007
    %v5316 = vunpack.c.l.b16 %v1008
    %v5317 = vunpack.c.h.b16 %v1008
    %v5318 = vunpack.c.l.b16 %v1009
    %v5319 = vunpack.c.h.b16 %v1009
    %v5320 = vunpack.c.l.b16 %v1010
    %v5321 = vunpack.c.h.b16 %v1010
    %v5322 = vunpack.c.l.b16 %v1011
    %v5323 = vunpack.c.h.b16 %v1011
    %v5324 = vunpack.c.l.b16 %v1012
    %v5325 = vunpack.c.h.b16 %v1012
    %v5326 = vunpack.c.l.b16 %v1013
    %v5327 = vunpack.c.h.b16 %v1013
    %v5328 = vunpack.c.l.b16 %v1014
    %v5329 = vunpack.c.h.b16 %v1014
    %v5330 = vunpack.c.l.b16 %v1015
    %v5331 = vunpack.c.h.b16 %v1015
    %v5332 = vunpack.c.l.b16 %v1016
    %v5333 = vunpack.c.h.b16 %v1016
    %v5334 = vunpack.c.l.b16 %v1017
    %v5335 = vunpack.c.h.b16 %v1017
    %v5336 = vunpack.c.l.b16 %v1018
    %v5337 = vunpack.c.h.b16 %v1018
    %v5338 = vunpack.c.l.b16 %v1019
    %v5339 = vunpack.c.h.b16 %v1019
    %v5340 = vunpack.c.l.b16 %v1020
    %v5341 = vunpack.c.h.b16 %v1020
    %v5342 = vunpack.c.l.b16 %v1021
    %v5343 = vunpack.c.h.b16 %v1021
    %v5344 = vunpack.c.l.b16 %v1022
    %v5345 = vunpack.c.h.b16 %v1022
    %v5346 = vunpack.c.l.b16 %v1023
    %v5347 = vunpack.c.h.b16 %v1023
    %v5348 = vunpack.c.l.b16 %v1024
    %v5349 = vunpack.c.h.b16 %v1024
    %v5350 = vunpack.c.l.b16 %v1025
    %v5351 = vunpack.c.h.b16 %v1025
    %v5352 = vunpack.c.l.b16 %v1026
    %v5353 = vunpack.c.h.b16 %v1026
    %v5354 = vunpack.c.l.b16 %v1027
    %v5355 = vunpack.c.h.b16 %v1027
    %v5356 = vunpack.c.l.b16 %v1028
    %v5357 = vunpack.c.h.b16 %v1028
    %v5358 = vunpack.c.l.b16 %v1029
    %v5359 = vunpack.c.h.b16 %v1029
    %v5360 = vunpack.c.l.b16 %v1030
    %v5361 = vunpack.c.h.b16 %v1030
    %v5362 = vunpack.c.l.b16 %v1031
    %v5363 = vunpack.c.h.b16 %v1031
    %v5364 = vunpack.c.l.b16 %v1032
    %v5365 = vunpack.c.h.b16 %v1032
    %v5366 = vunpack.c.l.b16 %v1033
    %v5367 = vunpack.c.h.b16 %v1033
    %v5368 = vunpack.c.l.b16 %v1034
    %v5369 = vunpack.c.h.b16 %v1034
    %v5370 = vunpack.c.l.b16 %v1035
    %v5371 = vunpack.c.h.b16 %v1035
    %v5372 = vunpack.c.l.b16 %v1036
    %v5373 = vunpack.c.h.b16 %v1036
    %v5374 = vunpack.c.l.b16 %v1037
    %v5375 = vunpack.c.h.b16 %v1037
    %v5376 = vunpack.c.l.b16 %v1038
    %v5377 = vunpack.c.h.b16 %v1038
    %v5378 = vunpack.c.l.b16 %v1039
    %v5379 = vunpack.c.h.b16 %v1039
    %v5380 = vunpack.c.l.b16 %v1040
    %v5381 = vunpack.c.h.b16 %v1040
    %v5382 = vunpack.c.l.b16 %v1041
    %v5383 = vunpack.c.h.b16 %v1041
    %v5384 = vunpack.c.l.b16 %v1042
    %v5385 = vunpack.c.h.b16 %v1042
    %v5386 = vunpack.c.l.b16 %v1043
    %v5387 = vunpack.c.h.b16 %v1043
    %v5388 = vunpack.c.l.b16 %v1044
    %v5389 = vunpack.c.h.b16 %v1044
    %v5390 = vunpack.c.l.b16 %v1045
    %v5391 = vunpack.c.h.b16 %v1045
    %v5392 = vunpack.c.l.b16 %v1046
    %v5393 = vunpack.c.h.b16 %v1046
    %v5394 = vunpack.c.l.b16 %v1047
    %v5395 = vunpack.c.h.b16 %v1047
    %v5396 = vunpack.c.l.b16 %v1048
    %v5397 = vunpack.c.h.b16 %v1048
    %v5398 = vunpack.c.l.b16 %v1049
    %v5399 = vunpack.c.h.b16 %v1049
    %v5400 = vunpack.c.l.b16 %v1050
    %v5401 = vunpack.c.h.b16 %v1050
    %v5402 = vunpack.c.l.b16 %v1051
    %v5403 = vunpack.c.h.b16 %v1051
    %v5404 = vunpack.c.l.b16 %v1052
    %v5405 = vunpack.c.h.b16 %v1052
    %v5406 = vunpack.c.l.b16 %v1053
    %v5407 = vunpack.c.h.b16 %v1053
    %v5408 = vunpack.c.l.b16 %v1054
    %v5409 = vunpack.c.h.b16 %v1054
    %v5410 = vunpack.c.l.b16 %v1055
    %v5411 = vunpack.c.h.b16 %v1055
    %v5412 = vunpack.c.l.b16 %v1056
    %v5413 = vunpack.c.h.b16 %v1056
    %v5414 = vunpack.c.l.b16 %v1057
    %v5415 = vunpack.c.h.b16 %v1057
    %v5416 = vunpack.c.l.b16 %v1058
    %v5417 = vunpack.c.h.b16 %v1058
    %v5418 = vunpack.c.l.b16 %v1059
    %v5419 = vunpack.c.h.b16 %v1059
    %v5420 = vunpack.c.l.b16 %v1060
    %v5421 = vunpack.c.h.b16 %v1060
    %v5422 = vunpack.c.l.b16 %v1061
    %v5423 = vunpack.c.h.b16 %v1061
    %v5424 = vunpack.c.l.b16 %v1062
    %v5425 = vunpack.c.h.b16 %v1062
    %v5426 = vunpack.c.l.b16 %v1063
    %v5427 = vunpack.c.h.b16 %v1063
    %v5428 = vunpack.c.l.b16 %v1064
    %v5429 = vunpack.c.h.b16 %v1064
    %v5430 = vunpack.c.l.b16 %v1065
    %v5431 = vunpack.c.h.b16 %v1065
    %v5432 = vunpack.c.l.b16 %v1066
    %v5433 = vunpack.c.h.b16 %v1066
    %v5434 = vunpack.c.l.b16 %v1067
    %v5435 = vunpack.c.h.b16 %v1067
    %v5436 = vunpack.c.l.b16 %v1068
    %v5437 = vunpack.c.h.b16 %v1068
    %v5438 = vunpack.c.l.b16 %v1069
    %v5439 = vunpack.c.h.b16 %v1069
    %v5440 = vunpack.c.l.b16 %v1070
    %v5441 = vunpack.c.h.b16 %v1070
    %v5442 = vunpack.c.l.b16 %v1071
    %v5443 = vunpack.c.h.b16 %v1071
    %v5444 = vunpack.c.l.b16 %v1072
    %v5445 = vunpack.c.h.b16 %v1072
    %v5446 = vunpack.c.l.b16 %v1073
    %v5447 = vunpack.c.h.b16 %v1073
    %v5448 = vunpack.c.l.b16 %v1074
    %v5449 = vunpack.c.h.b16 %v1074
    %v5450 = vunpack.c.l.b16 %v1075
    %v5451 = vunpack.c.h.b16 %v1075
    %v5452 = vunpack.c.l.b16 %v1076
    %v5453 = vunpack.c.h.b16 %v1076
    %v5454 = vunpack.c.l.b16 %v1077
    %v5455 = vunpack.c.h.b16 %v1077
    %v5456 = vunpack.c.l.b16 %v1078
    %v5457 = vunpack.c.h.b16 %v1078
    %v5458 = vunpack.c.l.b16 %v1079
    %v5459 = vunpack.c.h.b16 %v1079
    %v5460 = vunpack.c.l.b16 %v1080
    %v5461 = vunpack.c.h.b16 %v1080
    %v5462 = vunpack.c.l.b16 %v1081
    %v5463 = vunpack.c.h.b16 %v1081
    %v5464 = vunpack.c.l.b16 %v1082
    %v5465 = vunpack.c.h.b16 %v1082
    %v5466 = vunpack.c.l.b16 %v1083
    %v5467 = vunpack.c.h.b16 %v1083
    %v5468 = vunpack.c.l.b16 %v1084
    %v5469 = vunpack.c.h.b16 %v1084
    %v5470 = vunpack.c.l.b16 %v1085
    %v5471 = vunpack.c.h.b16 %v1085
    %v5472 = vunpack.c.l.b16 %v1086
    %v5473 = vunpack.c.h.b16 %v1086
    %v5474 = vunpack.c.l.b16 %v1087
    %v5475 = vunpack.c.h.b16 %v1087
    %v5476 = vunpack.c.l.b16 %v1088
    %v5477 = vunpack.c.h.b16 %v1088
    %v5478 = vunpack.c.l.b16 %v1089
    %v5479 = vunpack.c.h.b16 %v1089
    %v5480 = vunpack.c.l.b16 %v1090
    %v5481 = vunpack.c.h.b16 %v1090
    %v5482 = vunpack.c.l.b16 %v1091
    %v5483 = vunpack.c.h.b16 %v1091
    %v5484 = vunpack.c.l.b16 %v1092
    %v5485 = vunpack.c.h.b16 %v1092
    %v5486 = vunpack.c.l.b16 %v1093
    %v5487 = vunpack.c.h.b16 %v1093
    %v5488 = vunpack.c.l.b16 %v1094
    %v5489 = vunpack.c.h.b16 %v1094
    %v5490 = vunpack.c.l.b16 %v1095
    %v5491 = vunpack.c.h.b16 %v1095
    %v5492 = vunpack.c.l.b16 %v1096
    %v5493 = vunpack.c.h.b16 %v1096
    %v5494 = vunpack.c.l.b16 %v1097
    %v5495 = vunpack.c.h.b16 %v1097
    %v5496 = vunpack.c.l.b16 %v1098
    %v5497 = vunpack.c.h.b16 %v1098
    %v5498 = vunpack.c.l.b16 %v1099
    %v5499 = vunpack.c.h.b16 %v1099
    %v5500 = vunpack.c.l.b16 %v1100
    %v5501 = vunpack.c.h.b16 %v1100
    %v5502 = vunpack.c.l.b16 %v1101
    %v5503 = vunpack.c.h.b16 %v1101
    %v5504 = vunpack.c.l.b16 %v1102
    %v5505 = vunpack.c.h.b16 %v1102
    %v5506 = vunpack.c.l.b16 %v1103
    %v5507 = vunpack.c.h.b16 %v1103
    %v5508 = vunpack.c.l.b16 %v1104
    %v5509 = vunpack.c.h.b16 %v1104
    %v5510 = vunpack.c.l.b16 %v1105
    %v5511 = vunpack.c.h.b16 %v1105
    %v5512 = vunpack.c.l.b16 %v1106
    %v5513 = vunpack.c.h.b16 %v1106
    %v5514 = vunpack.c.l.b16 %v1107
    %v5515 = vunpack.c.h.b16 %v1107
    %v5516 = vunpack.c.l.b16 %v1108
    %v5517 = vunpack.c.h.b16 %v1108
    %v5518 = vunpack.c.l.b16 %v1109
    %v5519 = vunpack.c.h.b16 %v1109
    %v5520 = vunpack.c.l.b16 %v1110
    %v5521 = vunpack.c.h.b16 %v1110
    %v5522 = vunpack.c.l.b16 %v1111
    %v5523 = vunpack.c.h.b16 %v1111
    %v5524 = vunpack.c.l.b16 %v1112
    %v5525 = vunpack.c.h.b16 %v1112
    %v5526 = vunpack.c.l.b16 %v1113
    %v5527 = vunpack.c.h.b16 %v1113
    %v5528 = vunpack.c.l.b16 %v1114
    %v5529 = vunpack.c.h.b16 %v1114
    %v5530 = vunpack.c.l.b16 %v1115
    %v5531 = vunpack.c.h.b16 %v1115
    %v5532 = vunpack.c.l.b16 %v1116
    %v5533 = vunpack.c.h.b16 %v1116
    %v5534 = vunpack.c.l.b16 %v1117
    %v5535 = vunpack.c.h.b16 %v1117
    %v5536 = vunpack.c.l.b16 %v1118
    %v5537 = vunpack.c.h.b16 %v1118
    %v5538 = vunpack.c.l.b16 %v1119
    %v5539 = vunpack.c.h.b16 %v1119
    %v5540 = vunpack.c.l.b16 %v1120
    %v5541 = vunpack.c.h.b16 %v1120
    %v5542 = vunpack.c.l.b16 %v1121
    %v5543 = vunpack.c.h.b16 %v1121
    %v5544 = vunpack.c.l.b16 %v1122
    %v5545 = vunpack.c.h.b16 %v1122
    %v5546 = vunpack.c.l.b16 %v1123
    %v5547 = vunpack.c.h.b16 %v1123
    %v5548 = vunpack.c.l.b16 %v1124
    %v5549 = vunpack.c.h.b16 %v1124
    %v5550 = vunpack.c.l.b16 %v1125
    %v5551 = vunpack.c.h.b16 %v1125
    %v5552 = vunpack.c.l.b16 %v1126
    %v5553 = vunpack.c.h.b16 %v1126
    %v5554 = vunpack.c.l.b16 %v1127
    %v5555 = vunpack.c.h.b16 %v1127
    %v5556 = vunpack.c.l.b16 %v1128
    %v5557 = vunpack.c.h.b16 %v1128
    %v5558 = vunpack.c.l.b16 %v1129
    %v5559 = vunpack.c.h.b16 %v1129
    %v5560 = vunpack.c.l.b16 %v1130
    %v5561 = vunpack.c.h.b16 %v1130
    %v5562 = vunpack.c.l.b16 %v1131
    %v5563 = vunpack.c.h.b16 %v1131
    %v5564 = vunpack.c.l.b16 %v1132
    %v5565 = vunpack.c.h.b16 %v1132
    %v5566 = vunpack.c.l.b16 %v1133
    %v5567 = vunpack.c.h.b16 %v1133
    %v5568 = vunpack.c.l.b16 %v1134
    %v5569 = vunpack.c.h.b16 %v1134
    %v5570 = vunpack.c.l.b16 %v1135
    %v5571 = vunpack.c.h.b16 %v1135
    %v5572 = vunpack.c.l.b16 %v1136
    %v5573 = vunpack.c.h.b16 %v1136
    %v5574 = vunpack.c.l.b16 %v1137
    %v5575 = vunpack.c.h.b16 %v1137
    %v5576 = vunpack.c.l.b16 %v1138
    %v5577 = vunpack.c.h.b16 %v1138
    %v5578 = vunpack.c.l.b16 %v1139
    %v5579 = vunpack.c.h.b16 %v1139
    %v5580 = vunpack.c.l.b16 %v1140
    %v5581 = vunpack.c.h.b16 %v1140
    %v5582 = vunpack.c.l.b16 %v1141
    %v5583 = vunpack.c.h.b16 %v1141
    %v5584 = vunpack.c.l.b16 %v1142
    %v5585 = vunpack.c.h.b16 %v1142
    %v5586 = vunpack.c.l.b16 %v1143
    %v5587 = vunpack.c.h.b16 %v1143
    %v5588 = vunpack.c.l.b16 %v1144
    %v5589 = vunpack.c.h.b16 %v1144
    %v5590 = vunpack.c.l.b16 %v1145
    %v5591 = vunpack.c.h.b16 %v1145
    %v5592 = vunpack.c.l.b16 %v1146
    %v5593 = vunpack.c.h.b16 %v1146
    %v5594 = vunpack.c.l.b16 %v1147
    %v5595 = vunpack.c.h.b16 %v1147
    %v5596 = vunpack.c.l.b16 %v1148
    %v5597 = vunpack.c.h.b16 %v1148
    %v5598 = vunpack.c.l.b16 %v1149
    %v5599 = vunpack.c.h.b16 %v1149
    %v5600 = vunpack.c.l.b16 %v1150
    %v5601 = vunpack.c.h.b16 %v1150
    %v5602 = vunpack.c.l.b16 %v1151
    %v5603 = vunpack.c.h.b16 %v1151
    %v5604 = vunpack.c.l.b16 %v1152
    %v5605 = vunpack.c.h.b16 %v1152
    %v5606 = vunpack.c.l.b16 %v1153
    %v5607 = vunpack.c.h.b16 %v1153
    %v5608 = vunpack.c.l.b16 %v1154
    %v5609 = vunpack.c.h.b16 %v1154
    %v5610 = vunpack.c.l.b16 %v1155
    %v5611 = vunpack.c.h.b16 %v1155
    %v5612 = vunpack.c.l.b16 %v1156
    %v5613 = vunpack.c.h.b16 %v1156
    %v5614 = vunpack.c.l.b16 %v1157
    %v5615 = vunpack.c.h.b16 %v1157
    %v5616 = vunpack.c.l.b16 %v1158
    %v5617 = vunpack.c.h.b16 %v1158
    %v5618 = vunpack.c.l.b16 %v1159
    %v5619 = vunpack.c.h.b16 %v1159
    %v5620 = vunpack.c.l.b16 %v1160
    %v5621 = vunpack.c.h.b16 %v1160
    %v5622 = vunpack.c.l.b16 %v1161
    %v5623 = vunpack.c.h.b16 %v1161
    %v5624 = vunpack.c.l.b16 %v1162
    %v5625 = vunpack.c.h.b16 %v1162
    %v5626 = vunpack.c.l.b16 %v1163
    %v5627 = vunpack.c.h.b16 %v1163
    %v5628 = vunpack.c.l.b16 %v1164
    %v5629 = vunpack.c.h.b16 %v1164
    %v5630 = vunpack.c.l.b16 %v1165
    %v5631 = vunpack.c.h.b16 %v1165
    %v5632 = vunpack.c.l.b16 %v1166
    %v5633 = vunpack.c.h.b16 %v1166
    %v5634 = vunpack.c.l.b16 %v1167
    %v5635 = vunpack.c.h.b16 %v1167
    %v5636 = vunpack.c.l.b16 %v1168
    %v5637 = vunpack.c.h.b16 %v1168
    %v5638 = vunpack.c.l.b16 %v1169
    %v5639 = vunpack.c.h.b16 %v1169
    %v5640 = vunpack.c.l.b16 %v1170
    %v5641 = vunpack.c.h.b16 %v1170
    %v5642 = vunpack.c.l.b16 %v1171
    %v5643 = vunpack.c.h.b16 %v1171
    %v5644 = vunpack.c.l.b16 %v1172
    %v5645 = vunpack.c.h.b16 %v1172
    %v5646 = vunpack.c.l.b16 %v1173
    %v5647 = vunpack.c.h.b16 %v1173
    %v5648 = vunpack.c.l.b16 %v1174
    %v5649 = vunpack.c.h.b16 %v1174
    %v5650 = vunpack.c.l.b16 %v1175
    %v5651 = vunpack.c.h.b16 %v1175
    %v5652 = vunpack.c.l.b16 %v1176
    %v5653 = vunpack.c.h.b16 %v1176
    %v5654 = vunpack.c.l.b16 %v1177
    %v5655 = vunpack.c.h.b16 %v1177
    %v5656 = vunpack.c.l.b16 %v1178
    %v5657 = vunpack.c.h.b16 %v1178
    %v5658 = vunpack.c.l.b16 %v1179
    %v5659 = vunpack.c.h.b16 %v1179
    %v5660 = vunpack.c.l.b16 %v1180
    %v5661 = vunpack.c.h.b16 %v1180
    %v5662 = vunpack.c.l.b16 %v1181
    %v5663 = vunpack.c.h.b16 %v1181
    %v5664 = vunpack.c.l.b16 %v1182
    %v5665 = vunpack.c.h.b16 %v1182
    %v5666 = vunpack.c.l.b16 %v1183
    %v5667 = vunpack.c.h.b16 %v1183
    %v5668 = vunpack.c.l.b16 %v1184
    %v5669 = vunpack.c.h.b16 %v1184
    %v5670 = vunpack.c.l.b16 %v1185
    %v5671 = vunpack.c.h.b16 %v1185
    %v5672 = vunpack.c.l.b16 %v1186
    %v5673 = vunpack.c.h.b16 %v1186
    %v5674 = vunpack.c.l.b16 %v1187
    %v5675 = vunpack.c.h.b16 %v1187
    %v5676 = vunpack.c.l.b16 %v1188
    %v5677 = vunpack.c.h.b16 %v1188
    %v5678 = vunpack.c.l.b16 %v1189
    %v5679 = vunpack.c.h.b16 %v1189
    %v5680 = vunpack.c.l.b16 %v1190
    %v5681 = vunpack.c.h.b16 %v1190
    %v5682 = vunpack.c.l.b16 %v1191
    %v5683 = vunpack.c.h.b16 %v1191
    %v5684 = vunpack.c.l.b16 %v1192
    %v5685 = vunpack.c.h.b16 %v1192
    %v5686 = vunpack.c.l.b16 %v1193
    %v5687 = vunpack.c.h.b16 %v1193
    %v5688 = vunpack.c.l.b16 %v1194
    %v5689 = vunpack.c.h.b16 %v1194
    %v5690 = vunpack.c.l.b16 %v1195
    %v5691 = vunpack.c.h.b16 %v1195
    %v5692 = vunpack.c.l.b16 %v1196
    %v5693 = vunpack.c.h.b16 %v1196
    %v5694 = vunpack.c.l.b16 %v1197
    %v5695 = vunpack.c.h.b16 %v1197
    %v5696 = vunpack.c.l.b16 %v1198
    %v5697 = vunpack.c.h.b16 %v1198
    %v5698 = vunpack.c.l.b16 %v1199
    %v5699 = vunpack.c.h.b16 %v1199
    %v5700 = vunpack.c.l.b16 %v1200
    %v5701 = vunpack.c.h.b16 %v1200
    %v5702 = vunpack.c.l.b16 %v1201
    %v5703 = vunpack.c.h.b16 %v1201
    %v5704 = vunpack.c.l.b16 %v1202
    %v5705 = vunpack.c.h.b16 %v1202
    %v5706 = vunpack.c.l.b16 %v1203
    %v5707 = vunpack.c.h.b16 %v1203
    %v5708 = vunpack.c.l.b16 %v1204
    %v5709 = vunpack.c.h.b16 %v1204
    %v5710 = vunpack.c.l.b16 %v1205
    %v5711 = vunpack.c.h.b16 %v1205
    %v5712 = vunpack.c.l.b16 %v1206
    %v5713 = vunpack.c.h.b16 %v1206
    %v5714 = vunpack.c.l.b16 %v1207
    %v5715 = vunpack.c.h.b16 %v1207
    %v5716 = vunpack.c.l.b16 %v1208
    %v5717 = vunpack.c.h.b16 %v1208
    %v5718 = vunpack.c.l.b16 %v1209
    %v5719 = vunpack.c.h.b16 %v1209
    %v5720 = vunpack.c.l.b16 %v1210
    %v5721 = vunpack.c.h.b16 %v1210
    %v5722 = vunpack.c.l.b16 %v1211
    %v5723 = vunpack.c.h.b16 %v1211
    %v5724 = vunpack.c.l.b16 %v1212
    %v5725 = vunpack.c.h.b16 %v1212
    %v5726 = vunpack.c.l.b16 %v1213
    %v5727 = vunpack.c.h.b16 %v1213
    %v5728 = vunpack.c.l.b16 %v1214
    %v5729 = vunpack.c.h.b16 %v1214
    %v5730 = vunpack.c.l.b16 %v1215
    %v5731 = vunpack.c.h.b16 %v1215
    %v5732 = vunpack.c.l.b16 %v1216
    %v5733 = vunpack.c.h.b16 %v1216
    %v5734 = vunpack.c.l.b16 %v1217
    %v5735 = vunpack.c.h.b16 %v1217
    %v5736 = vunpack.c.l.b16 %v1218
    %v5737 = vunpack.c.h.b16 %v1218
    %v5738 = vunpack.c.l.b16 %v1219
    %v5739 = vunpack.c.h.b16 %v1219
    %v5740 = vunpack.c.l.b16 %v1220
    %v5741 = vunpack.c.h.b16 %v1220
    %v5742 = vunpack.c.l.b16 %v1221
    %v5743 = vunpack.c.h.b16 %v1221
    %v5744 = vunpack.c.l.b16 %v1222
    %v5745 = vunpack.c.h.b16 %v1222
    %v5746 = vunpack.c.l.b16 %v1223
    %v5747 = vunpack.c.h.b16 %v1223
    %v5748 = vunpack.c.l.b16 %v1224
    %v5749 = vunpack.c.h.b16 %v1224
    %v5750 = vunpack.c.l.b16 %v1225
    %v5751 = vunpack.c.h.b16 %v1225
    %v5752 = vunpack.c.l.b16 %v1226
    %v5753 = vunpack.c.h.b16 %v1226
    %v5754 = vunpack.c.l.b16 %v1227
    %v5755 = vunpack.c.h.b16 %v1227
    %v5756 = vunpack.c.l.b16 %v1228
    %v5757 = vunpack.c.h.b16 %v1228
    %v5758 = vunpack.c.l.b16 %v1229
    %v5759 = vunpack.c.h.b16 %v1229
    %v5760 = vunpack.c.l.b16 %v1230
    %v5761 = vunpack.c.h.b16 %v1230
    %v5762 = vunpack.c.l.b16 %v1231
    %v5763 = vunpack.c.h.b16 %v1231
    %v5764 = vunpack.c.l.b16 %v1232
    %v5765 = vunpack.c.h.b16 %v1232
    %v5766 = vunpack.c.l.b16 %v1233
    %v5767 = vunpack.c.h.b16 %v1233
    %v5768 = vunpack.c.l.b16 %v1234
    %v5769 = vunpack.c.h.b16 %v1234
    %v5770 = vunpack.c.l.b16 %v1235
    %v5771 = vunpack.c.h.b16 %v1235
    %v5772 = vunpack.c.l.b16 %v1236
    %v5773 = vunpack.c.h.b16 %v1236
    %v5774 = vunpack.c.l.b16 %v1237
    %v5775 = vunpack.c.h.b16 %v1237
    %v5776 = vunpack.c.l.b16 %v1238
    %v5777 = vunpack.c.h.b16 %v1238
    %v5778 = vunpack.c.l.b16 %v1239
    %v5779 = vunpack.c.h.b16 %v1239
    %v5780 = vunpack.c.l.b16 %v1240
    %v5781 = vunpack.c.h.b16 %v1240
    %v5782 = vunpack.c.l.b16 %v1241
    %v5783 = vunpack.c.h.b16 %v1241
    %v5784 = vunpack.c.l.b16 %v1242
    %v5785 = vunpack.c.h.b16 %v1242
    %v5786 = vunpack.c.l.b16 %v1243
    %v5787 = vunpack.c.h.b16 %v1243
    %v5788 = vunpack.c.l.b16 %v1244
    %v5789 = vunpack.c.h.b16 %v1244
    %v5790 = vunpack.c.l.b16 %v1245
    %v5791 = vunpack.c.h.b16 %v1245
    %v5792 = vunpack.c.l.b16 %v1246
    %v5793 = vunpack.c.h.b16 %v1246
    %v5794 = vunpack.c.l.b16 %v1247
    %v5795 = vunpack.c.h.b16 %v1247
    %v5796 = vunpack.c.l.b16 %v1248
    %v5797 = vunpack.c.h.b16 %v1248
    %v5798 = vunpack.c.l.b16 %v1249
    %v5799 = vunpack.c.h.b16 %v1249
    %v5800 = vunpack.c.l.b16 %v1250
    %v5801 = vunpack.c.h.b16 %v1250
    %v5802 = vunpack.c.l.b16 %v1251
    %v5803 = vunpack.c.h.b16 %v1251
    %v5804 = vunpack.c.l.b16 %v1252
    %v5805 = vunpack.c.h.b16 %v1252
    %v5806 = vunpack.c.l.b16 %v1253
    %v5807 = vunpack.c.h.b16 %v1253
    %v5808 = vunpack.c.l.b16 %v1254
    %v5809 = vunpack.c.h.b16 %v1254
    %v5810 = vunpack.c.l.b16 %v1255
    %v5811 = vunpack.c.h.b16 %v1255
    %v5812 = vunpack.c.l.b16 %v1256
    %v5813 = vunpack.c.h.b16 %v1256
    %v5814 = vunpack.c.l.b16 %v1257
    %v5815 = vunpack.c.h.b16 %v1257
    %v5816 = vunpack.c.l.b16 %v1258
    %v5817 = vunpack.c.h.b16 %v1258
    %v5818 = vunpack.c.l.b16 %v1259
    %v5819 = vunpack.c.h.b16 %v1259
    %v5820 = vunpack.c.l.b16 %v1260
    %v5821 = vunpack.c.h.b16 %v1260
    %v5822 = vunpack.c.l.b16 %v1261
    %v5823 = vunpack.c.h.b16 %v1261
    %v5824 = vunpack.c.l.b16 %v1262
    %v5825 = vunpack.c.h.b16 %v1262
    %v5826 = vunpack.c.l.b16 %v1263
    %v5827 = vunpack.c.h.b16 %v1263
    %v5828 = vunpack.c.l.b16 %v1264
    %v5829 = vunpack.c.h.b16 %v1264
    %v5830 = vunpack.c.l.b16 %v1265
    %v5831 = vunpack.c.h.b16 %v1265
    %v5832 = vunpack.c.l.b16 %v1266
    %v5833 = vunpack.c.h.b16 %v1266
    %v5834 = vunpack.c.l.b16 %v1267
    %v5835 = vunpack.c.h.b16 %v1267
    %v5836 = vunpack.c.l.b16 %v1268
    %v5837 = vunpack.c.h.b16 %v1268
    %v5838 = vunpack.c.l.b16 %v1269
    %v5839 = vunpack.c.h.b16 %v1269
    %v5840 = vunpack.c.l.b16 %v1270
    %v5841 = vunpack.c.h.b16 %v1270
    %v5842 = vunpack.c.l.b16 %v1271
    %v5843 = vunpack.c.h.b16 %v1271
    %v5844 = vunpack.c.l.b16 %v1272
    %v5845 = vunpack.c.h.b16 %v1272
    %v5846 = vunpack.c.l.b16 %v1273
    %v5847 = vunpack.c.h.b16 %v1273
    %v5848 = vunpack.c.l.b16 %v1274
    %v5849 = vunpack.c.h.b16 %v1274
    %v5850 = vunpack.c.l.b16 %v1275
    %v5851 = vunpack.c.h.b16 %v1275
    %v5852 = vunpack.c.l.b16 %v1276
    %v5853 = vunpack.c.h.b16 %v1276
    %v5854 = vunpack.c.l.b16 %v1277
    %v5855 = vunpack.c.h.b16 %v1277
    %v5856 = vunpack.c.l.b16 %v1278
    %v5857 = vunpack.c.h.b16 %v1278
    %v5858 = vunpack.c.l.b16 %v1279
    %v5859 = vunpack.c.h.b16 %v1279
    %v5860 = vunpack.c.l.b16 %v1280
    %v5861 = vunpack.c.h.b16 %v1280
    %v5862 = vunpack.c.l.b16 %v1281
    %v5863 = vunpack.c.h.b16 %v1281
    %v5864 = vunpack.c.l.b16 %v1282
    %v5865 = vunpack.c.h.b16 %v1282
    %v5866 = vunpack.c.l.b16 %v1283
    %v5867 = vunpack.c.h.b16 %v1283
    %v5868 = vunpack.c.l.b16 %v1284
    %v5869 = vunpack.c.h.b16 %v1284
    %v5870 = vunpack.c.l.b16 %v1285
    %v5871 = vunpack.c.h.b16 %v1285
    %v5872 = vunpack.c.l.b16 %v1286
    %v5873 = vunpack.c.h.b16 %v1286
    %v5874 = vunpack.c.l.b16 %v1287
    %v5875 = vunpack.c.h.b16 %v1287
    %v5876 = vunpack.c.l.b16 %v1288
    %v5877 = vunpack.c.h.b16 %v1288
    %v5878 = vunpack.c.l.b16 %v1289
    %v5879 = vunpack.c.h.b16 %v1289
    %v5880 = vunpack.c.l.b16 %v1290
    %v5881 = vunpack.c.h.b16 %v1290
    %v5882 = vunpack.c.l.b16 %v1291
    %v5883 = vunpack.c.h.b16 %v1291
    %v5884 = vunpack.c.l.b16 %v1292
    %v5885 = vunpack.c.h.b16 %v1292
    %v5886 = vunpack.c.l.b16 %v1293
    %v5887 = vunpack.c.h.b16 %v1293
    %v5888 = vunpack.c.l.b16 %v1294
    %v5889 = vunpack.c.h.b16 %v1294
    %v5890 = vunpack.c.l.b16 %v1295
    %v5891 = vunpack.c.h.b16 %v1295
    %v5892 = vunpack.c.l.b16 %v1296
    %v5893 = vunpack.c.h.b16 %v1296
    %v5894 = vunpack.c.l.b16 %v1297
    %v5895 = vunpack.c.h.b16 %v1297
    %v5896 = vunpack.c.l.b16 %v1298
    %v5897 = vunpack.c.h.b16 %v1298
    %v5898 = vunpack.c.l.b16 %v1299
    %v5899 = vunpack.c.h.b16 %v1299
    %v5900 = vunpack.c.l.b16 %v1300
    %v5901 = vunpack.c.h.b16 %v1300
    %v5902 = vunpack.c.l.b16 %v1301
    %v5903 = vunpack.c.h.b16 %v1301
    %v5904 = vunpack.c.l.b16 %v1302
    %v5905 = vunpack.c.h.b16 %v1302
    %v5906 = vunpack.c.l.b16 %v1303
    %v5907 = vunpack.c.h.b16 %v1303
    %v5908 = vunpack.c.l.b16 %v1304
    %v5909 = vunpack.c.h.b16 %v1304
    %v5910 = vunpack.c.l.b16 %v1305
    %v5911 = vunpack.c.h.b16 %v1305
    %v5912 = vunpack.c.l.b16 %v1306
    %v5913 = vunpack.c.h.b16 %v1306
    %v5914 = vunpack.c.l.b16 %v1307
    %v5915 = vunpack.c.h.b16 %v1307
    %v5916 = vunpack.c.l.b16 %v1308
    %v5917 = vunpack.c.h.b16 %v1308
    %v5918 = vunpack.c.l.b16 %v1309
    %v5919 = vunpack.c.h.b16 %v1309
    %v5920 = vunpack.c.l.b16 %v1310
    %v5921 = vunpack.c.h.b16 %v1310
    %v5922 = vunpack.c.l.b16 %v1311
    %v5923 = vunpack.c.h.b16 %v1311
    %v5924 = vunpack.c.l.b16 %v1312
    %v5925 = vunpack.c.h.b16 %v1312
    %v5926 = vunpack.c.l.b16 %v1313
    %v5927 = vunpack.c.h.b16 %v1313
    %v5928 = vunpack.c.l.b16 %v1314
    %v5929 = vunpack.c.h.b16 %v1314
    %v5930 = vunpack.c.l.b16 %v1315
    %v5931 = vunpack.c.h.b16 %v1315
    %v5932 = vunpack.c.l.b16 %v1316
    %v5933 = vunpack.c.h.b16 %v1316
    %v5934 = vunpack.c.l.b16 %v1317
    %v5935 = vunpack.c.h.b16 %v1317
    %v5936 = vunpack.c.l.b16 %v1318
    %v5937 = vunpack.c.h.b16 %v1318
    %v5938 = vunpack.c.l.b16 %v1319
    %v5939 = vunpack.c.h.b16 %v1319
    %v5940 = vunpack.c.l.b16 %v1320
    %v5941 = vunpack.c.h.b16 %v1320
    %v5942 = vunpack.c.l.b16 %v1321
    %v5943 = vunpack.c.h.b16 %v1321
    %v5944 = vunpack.c.l.b16 %v1322
    %v5945 = vunpack.c.h.b16 %v1322
    %v5946 = vunpack.c.l.b16 %v1323
    %v5947 = vunpack.c.h.b16 %v1323
    %v5948 = vunpack.c.l.b16 %v1324
    %v5949 = vunpack.c.h.b16 %v1324
    %v5950 = vunpack.c.l.b16 %v1325
    %v5951 = vunpack.c.h.b16 %v1325
    %v5952 = vunpack.c.l.b16 %v1326
    %v5953 = vunpack.c.h.b16 %v1326
    %v5954 = vunpack.c.l.b16 %v1327
    %v5955 = vunpack.c.h.b16 %v1327
    %v5956 = vunpack.c.l.b16 %v1328
    %v5957 = vunpack.c.h.b16 %v1328
    %v5958 = vunpack.c.l.b16 %v1329
    %v5959 = vunpack.c.h.b16 %v1329
    %v5960 = vunpack.c.l.b16 %v1330
    %v5961 = vunpack.c.h.b16 %v1330
    %v5962 = vunpack.c.l.b16 %v1331
    %v5963 = vunpack.c.h.b16 %v1331
    %v5964 = vunpack.c.l.b16 %v1332
    %v5965 = vunpack.c.h.b16 %v1332
    %v5966 = vunpack.c.l.b16 %v1333
    %v5967 = vunpack.c.h.b16 %v1333
    %v5968 = vunpack.c.l.b16 %v1334
    %v5969 = vunpack.c.h.b16 %v1334
    %v5970 = vunpack.c.l.b16 %v1335
    %v5971 = vunpack.c.h.b16 %v1335
    %v5972 = vunpack.c.l.b16 %v1336
    %v5973 = vunpack.c.h.b16 %v1336
    %v5974 = vunpack.c.l.b16 %v1337
    %v5975 = vunpack.c.h.b16 %v1337
    %v5976 = vunpack.c.l.b16 %v1338
    %v5977 = vunpack.c.h.b16 %v1338
    %v5978 = vunpack.c.l.b16 %v1339
    %v5979 = vunpack.c.h.b16 %v1339
    %v5980 = vunpack.c.l.b16 %v1340
    %v5981 = vunpack.c.h.b16 %v1340
    %v5982 = vunpack.c.l.b16 %v1341
    %v5983 = vunpack.c.h.b16 %v1341
    %v5984 = vunpack.c.l.b16 %v1342
    %v5985 = vunpack.c.h.b16 %v1342
    %v5986 = vunpack.c.l.b16 %v1343
    %v5987 = vunpack.c.h.b16 %v1343
    %v5988 = vunpack.c.l.b16 %v1344
    %v5989 = vunpack.c.h.b16 %v1344
    %v5990 = vunpack.c.l.b16 %v1345
    %v5991 = vunpack.c.h.b16 %v1345
    %v5992 = vunpack.c.l.b16 %v1346
    %v5993 = vunpack.c.h.b16 %v1346
    %v5994 = vunpack.c.l.b16 %v1347
    %v5995 = vunpack.c.h.b16 %v1347
    %v5996 = vunpack.c.l.b16 %v1348
    %v5997 = vunpack.c.h.b16 %v1348
    %v5998 = vunpack.c.l.b16 %v1349
    %v5999 = vunpack.c.h.b16 %v1349
    %v6000 = vunpack.c.l.b16 %v1350
    %v6001 = vunpack.c.h.b16 %v1350
    %v6002 = vunpack.c.l.b16 %v1351
    %v6003 = vunpack.c.h.b16 %v1351
    %v6004 = vunpack.c.l.b16 %v1352
    %v6005 = vunpack.c.h.b16 %v1352
    %v6006 = vunpack.c.l.b16 %v1353
    %v6007 = vunpack.c.h.b16 %v1353
    %v6008 = vunpack.c.l.b16 %v1354
    %v6009 = vunpack.c.h.b16 %v1354
    %v6010 = vunpack.c.l.b16 %v1355
    %v6011 = vunpack.c.h.b16 %v1355
    %v6012 = vunpack.c.l.b16 %v1356
    %v6013 = vunpack.c.h.b16 %v1356
    %v6014 = vunpack.c.l.b16 %v1357
    %v6015 = vunpack.c.h.b16 %v1357
    %v6016 = vunpack.c.l.b16 %v1358
    %v6017 = vunpack.c.h.b16 %v1358
    %v6018 = vunpack.c.l.b16 %v1359
    %v6019 = vunpack.c.h.b16 %v1359
    %v6020 = vunpack.c.l.b16 %v1360
    %v6021 = vunpack.c.h.b16 %v1360
    %v6022 = vunpack.c.l.b16 %v1361
    %v6023 = vunpack.c.h.b16 %v1361
    %v6024 = vunpack.c.l.b16 %v1362
    %v6025 = vunpack.c.h.b16 %v1362
    %v6026 = vunpack.c.l.b16 %v1363
    %v6027 = vunpack.c.h.b16 %v1363
    %v6028 = vunpack.c.l.b16 %v1364
    %v6029 = vunpack.c.h.b16 %v1364
    %v6030 = vunpack.c.l.b16 %v1365
    %v6031 = vunpack.c.h.b16 %v1365
    %v6032 = vunpack.c.l.b16 %v1366
    %v6033 = vunpack.c.h.b16 %v1366
    %v6034 = vunpack.c.l.b16 %v1367
    %v6035 = vunpack.c.h.b16 %v1367
    %v6036 = vunpack.c.l.b16 %v1368
    %v6037 = vunpack.c.h.b16 %v1368
    %v6038 = vunpack.c.l.b16 %v1369
    %v6039 = vunpack.c.h.b16 %v1369
    %v6040 = vunpack.c.l.b16 %v1370
    %v6041 = vunpack.c.h.b16 %v1370
    %v6042 = vunpack.c.l.b16 %v1371
    %v6043 = vunpack.c.h.b16 %v1371
    %v6044 = vunpack.c.l.b16 %v1372
    %v6045 = vunpack.c.h.b16 %v1372
    %v6046 = vunpack.c.l.b16 %v1373
    %v6047 = vunpack.c.h.b16 %v1373
    %v6048 = vunpack.c.l.b16 %v1374
    %v6049 = vunpack.c.h.b16 %v1374
    %v6050 = vunpack.c.l.b16 %v1375
    %v6051 = vunpack.c.h.b16 %v1375
    %v6052 = vunpack.c.l.b16 %v1376
    %v6053 = vunpack.c.h.b16 %v1376
    %v6054 = vunpack.c.l.b16 %v1377
    %v6055 = vunpack.c.h.b16 %v1377
    %v6056 = vunpack.c.l.b16 %v1378
    %v6057 = vunpack.c.h.b16 %v1378
    %v6058 = vunpack.c.l.b16 %v1379
    %v6059 = vunpack.c.h.b16 %v1379
    %v6060 = vunpack.c.l.b16 %v1380
    %v6061 = vunpack.c.h.b16 %v1380
    %v6062 = vunpack.c.l.b16 %v1381
    %v6063 = vunpack.c.h.b16 %v1381
    %v6064 = vunpack.c.l.b16 %v1382
    %v6065 = vunpack.c.h.b16 %v1382
    %v6066 = vunpack.c.l.b16 %v1383
    %v6067 = vunpack.c.h.b16 %v1383
    %v6068 = vunpack.c.l.b16 %v1384
    %v6069 = vunpack.c.h.b16 %v1384
    %v6070 = vunpack.c.l.b16 %v1385
    %v6071 = vunpack.c.h.b16 %v1385
    %v6072 = vunpack.c.l.b16 %v1386
    %v6073 = vunpack.c.h.b16 %v1386
    %v6074 = vunpack.c.l.b16 %v1387
    %v6075 = vunpack.c.h.b16 %v1387
    %v6076 = vunpack.c.l.b16 %v1388
    %v6077 = vunpack.c.h.b16 %v1388
    %v6078 = vunpack.c.l.b16 %v1389
    %v6079 = vunpack.c.h.b16 %v1389
    %v6080 = vunpack.c.l.b16 %v1390
    %v6081 = vunpack.c.h.b16 %v1390
    %v6082 = vunpack.c.l.b16 %v1391
    %v6083 = vunpack.c.h.b16 %v1391
    %v6084 = vunpack.c.l.b16 %v1392
    %v6085 = vunpack.c.h.b16 %v1392
    %v6086 = vunpack.c.l.b16 %v1393
    %v6087 = vunpack.c.h.b16 %v1393
    %v6088 = vunpack.c.l.b16 %v1394
    %v6089 = vunpack.c.h.b16 %v1394
    %v6090 = vunpack.c.l.b16 %v1395
    %v6091 = vunpack.c.h.b16 %v1395
    %v6092 = vunpack.c.l.b16 %v1396
    %v6093 = vunpack.c.h.b16 %v1396
    %v6094 = vunpack.c.l.b16 %v1397
    %v6095 = vunpack.c.h.b16 %v1397
    %v6096 = vunpack.c.l.b16 %v1398
    %v6097 = vunpack.c.h.b16 %v1398
    %v6098 = vunpack.c.l.b16 %v1399
    %v6099 = vunpack.c.h.b16 %v1399
    %v6100 = vunpack.c.l.b16 %v1400
    %v6101 = vunpack.c.h.b16 %v1400
    %v6102 = vunpack.c.l.b16 %v1401
    %v6103 = vunpack.c.h.b16 %v1401
    %v6104 = vunpack.c.l.b16 %v1402
    %v6105 = vunpack.c.h.b16 %v1402
    %v6106 = vunpack.c.l.b16 %v1403
    %v6107 = vunpack.c.h.b16 %v1403
    %v6108 = vunpack.c.l.b16 %v1404
    %v6109 = vunpack.c.h.b16 %v1404
    %v6110 = vunpack.c.l.b16 %v1405
    %v6111 = vunpack.c.h.b16 %v1405
    %v6112 = vunpack.c.l.b16 %v1406
    %v6113 = vunpack.c.h.b16 %v1406
    %v6114 = vunpack.c.l.b16 %v1407
    %v6115 = vunpack.c.h.b16 %v1407
    %v6116 = vunpack.c.l.b16 %v1408
    %v6117 = vunpack.c.h.b16 %v1408
    %v6118 = vunpack.c.l.b16 %v1409
    %v6119 = vunpack.c.h.b16 %v1409
    %v6120 = vunpack.c.l.b16 %v1410
    %v6121 = vunpack.c.h.b16 %v1410
    %v6122 = vunpack.c.l.b16 %v1411
    %v6123 = vunpack.c.h.b16 %v1411
    %v6124 = vunpack.c.l.b16 %v1412
    %v6125 = vunpack.c.h.b16 %v1412
    %v6126 = vunpack.c.l.b16 %v1413
    %v6127 = vunpack.c.h.b16 %v1413
    %v6128 = vunpack.c.l.b16 %v1414
    %v6129 = vunpack.c.h.b16 %v1414
    %v6130 = vunpack.c.l.b16 %v1415
    %v6131 = vunpack.c.h.b16 %v1415
    %v6132 = vunpack.c.l.b16 %v1416
    %v6133 = vunpack.c.h.b16 %v1416
    %v6134 = vunpack.c.l.b16 %v1417
    %v6135 = vunpack.c.h.b16 %v1417
    %v6136 = vunpack.c.l.b16 %v1418
    %v6137 = vunpack.c.h.b16 %v1418
    %v6138 = vunpack.c.l.b16 %v1419
    %v6139 = vunpack.c.h.b16 %v1419
    %v6140 = vunpack.c.l.b16 %v1420
    %v6141 = vunpack.c.h.b16 %v1420
    %v6142 = vunpack.c.l.b16 %v1421
    %v6143 = vunpack.c.h.b16 %v1421
    %v6144 = vunpack.c.l.b16 %v1422
    %v6145 = vunpack.c.h.b16 %v1422
    %v6146 = vunpack.c.l.b16 %v1423
    %v6147 = vunpack.c.h.b16 %v1423
    %v6148 = vunpack.c.l.b16 %v1424
    %v6149 = vunpack.c.h.b16 %v1424
    %v6150 = vunpack.c.l.b16 %v1425
    %v6151 = vunpack.c.h.b16 %v1425
    %v6152 = vunpack.c.l.b16 %v1426
    %v6153 = vunpack.c.h.b16 %v1426
    %v6154 = vunpack.c.l.b16 %v1427
    %v6155 = vunpack.c.h.b16 %v1427
    %v6156 = vunpack.c.l.b16 %v1428
    %v6157 = vunpack.c.h.b16 %v1428
    %v6158 = vunpack.c.l.b16 %v1429
    %v6159 = vunpack.c.h.b16 %v1429
    %v6160 = vunpack.c.l.b16 %v1430
    %v6161 = vunpack.c.h.b16 %v1430
    %v6162 = vunpack.c.l.b16 %v1431
    %v6163 = vunpack.c.h.b16 %v1431
    %v6164 = vunpack.c.l.b16 %v1432
    %v6165 = vunpack.c.h.b16 %v1432
    %v6166 = vunpack.c.l.b16 %v1433
    %v6167 = vunpack.c.h.b16 %v1433
    %v6168 = vunpack.c.l.b16 %v1434
    %v6169 = vunpack.c.h.b16 %v1434
    %v6170 = vunpack.c.l.b16 %v1435
    %v6171 = vunpack.c.h.b16 %v1435
    %v6172 = vunpack.c.l.b16 %v1436
    %v6173 = vunpack.c.h.b16 %v1436
    %v6174 = vunpack.c.l.b16 %v1437
    %v6175 = vunpack.c.h.b16 %v1437
    %v6176 = vunpack.c.l.b16 %v1438
    %v6177 = vunpack.c.h.b16 %v1438
    %v6178 = vunpack.c.l.b16 %v1439
    %v6179 = vunpack.c.h.b16 %v1439
    %v6180 = vunpack.c.l.b16 %v1440
    %v6181 = vunpack.c.h.b16 %v1440
    %v6182 = vunpack.c.l.b16 %v1441
    %v6183 = vunpack.c.h.b16 %v1441
    %v6184 = vunpack.c.l.b16 %v1442
    %v6185 = vunpack.c.h.b16 %v1442
    %v6186 = vunpack.c.l.b16 %v1443
    %v6187 = vunpack.c.h.b16 %v1443
    %v6188 = vunpack.c.l.b16 %v1444
    %v6189 = vunpack.c.h.b16 %v1444
    %v6190 = vunpack.c.l.b16 %v1445
    %v6191 = vunpack.c.h.b16 %v1445
    %v6192 = vunpack.c.l.b16 %v1446
    %v6193 = vunpack.c.h.b16 %v1446
    %v6194 = vunpack.c.l.b16 %v1447
    %v6195 = vunpack.c.h.b16 %v1447
    %v6196 = vunpack.c.l.b16 %v1448
    %v6197 = vunpack.c.h.b16 %v1448
    %v6198 = vunpack.c.l.b16 %v1449
    %v6199 = vunpack.c.h.b16 %v1449
    %v6200 = vunpack.c.l.b16 %v1450
    %v6201 = vunpack.c.h.b16 %v1450
    %v6202 = vunpack.c.l.b16 %v1451
    %v6203 = vunpack.c.h.b16 %v1451
    %v6204 = vunpack.c.l.b16 %v1452
    %v6205 = vunpack.c.h.b16 %v1452
    %v6206 = vunpack.c.l.b16 %v1453
    %v6207 = vunpack.c.h.b16 %v1453
    %v6208 = vunpack.c.l.b16 %v1454
    %v6209 = vunpack.c.h.b16 %v1454
    %v6210 = vunpack.c.l.b16 %v1455
    %v6211 = vunpack.c.h.b16 %v1455
    %v6212 = vunpack.c.l.b16 %v1456
    %v6213 = vunpack.c.h.b16 %v1456
    %v6214 = vunpack.c.l.b16 %v1457
    %v6215 = vunpack.c.h.b16 %v1457
    %v6216 = vunpack.c.l.b16 %v1458
    %v6217 = vunpack.c.h.b16 %v1458
    %v6218 = vunpack.c.l.b16 %v1459
    %v6219 = vunpack.c.h.b16 %v1459
    %v6220 = vunpack.c.l.b16 %v1460
    %v6221 = vunpack.c.h.b16 %v1460
    %v6222 = vunpack.c.l.b16 %v1461
    %v6223 = vunpack.c.h.b16 %v1461
    %v6224 = vunpack.c.l.b16 %v1462
    %v6225 = vunpack.c.h.b16 %v1462
    %v6226 = vunpack.c.l.b16 %v1463
    %v6227 = vunpack.c.h.b16 %v1463
    %v6228 = vunpack.c.l.b16 %v1464
    %v6229 = vunpack.c.h.b16 %v1464
    %v6230 = vunpack.c.l.b16 %v1465
    %v6231 = vunpack.c.h.b16 %v1465
    %v6232 = vunpack.c.l.b16 %v1466
    %v6233 = vunpack.c.h.b16 %v1466
    %v6234 = vunpack.c.l.b16 %v1467
    %v6235 = vunpack.c.h.b16 %v1467
    %v6236 = vunpack.c.l.b16 %v1468
    %v6237 = vunpack.c.h.b16 %v1468
    %v6238 = vunpack.c.l.b16 %v1469
    %v6239 = vunpack.c.h.b16 %v1469
    %v6240 = vunpack.c.l.b16 %v1470
    %v6241 = vunpack.c.h.b16 %v1470
    %v6242 = vunpack.c.l.b16 %v1471
    %v6243 = vunpack.c.h.b16 %v1471
    %v6244 = vunpack.c.l.b16 %v1472
    %v6245 = vunpack.c.h.b16 %v1472
    %v6246 = vunpack.c.l.b16 %v1473
    %v6247 = vunpack.c.h.b16 %v1473
    %v6248 = vunpack.c.l.b16 %v1474
    %v6249 = vunpack.c.h.b16 %v1474
    %v6250 = vunpack.c.l.b16 %v1475
    %v6251 = vunpack.c.h.b16 %v1475
    %v6252 = vunpack.c.l.b16 %v1476
    %v6253 = vunpack.c.h.b16 %v1476
    %v6254 = vunpack.c.l.b16 %v1477
    %v6255 = vunpack.c.h.b16 %v1477
    %v6256 = vunpack.c.l.b16 %v1478
    %v6257 = vunpack.c.h.b16 %v1478
    %v6258 = vunpack.c.l.b16 %v1479
    %v6259 = vunpack.c.h.b16 %v1479
    %v6260 = vunpack.c.l.b16 %v1480
    %v6261 = vunpack.c.h.b16 %v1480
    %v6262 = vunpack.c.l.b16 %v1481
    %v6263 = vunpack.c.h.b16 %v1481
    %v6264 = vunpack.c.l.b16 %v1482
    %v6265 = vunpack.c.h.b16 %v1482
    %v6266 = vunpack.c.l.b16 %v1483
    %v6267 = vunpack.c.h.b16 %v1483
    %v6268 = vunpack.c.l.b16 %v1484
    %v6269 = vunpack.c.h.b16 %v1484
    %v6270 = vunpack.c.l.b16 %v1485
    %v6271 = vunpack.c.h.b16 %v1485
    %v6272 = vunpack.c.l.b16 %v1486
    %v6273 = vunpack.c.h.b16 %v1486
    %v6274 = vunpack.c.l.b16 %v1487
    %v6275 = vunpack.c.h.b16 %v1487
    %v6276 = vunpack.c.l.b16 %v1488
    %v6277 = vunpack.c.h.b16 %v1488
    %v6278 = vunpack.c.l.b16 %v1489
    %v6279 = vunpack.c.h.b16 %v1489
    %v6280 = vunpack.c.l.b16 %v1490
    %v6281 = vunpack.c.h.b16 %v1490
    %v6282 = vunpack.c.l.b16 %v1491
    %v6283 = vunpack.c.h.b16 %v1491
    %v6284 = vunpack.c.l.b16 %v1492
    %v6285 = vunpack.c.h.b16 %v1492
    %v6286 = vunpack.c.l.b16 %v1493
    %v6287 = vunpack.c.h.b16 %v1493
    %v6288 = vunpack.c.l.b16 %v1494
    %v6289 = vunpack.c.h.b16 %v1494
    %v6290 = vunpack.c.l.b16 %v1495
    %v6291 = vunpack.c.h.b16 %v1495
    %v6292 = vunpack.c.l.b16 %v1496
    %v6293 = vunpack.c.h.b16 %v1496
    %v6294 = vunpack.c.l.b16 %v1497
    %v6295 = vunpack.c.h.b16 %v1497
    %v6296 = vunpack.c.l.b16 %v1498
    %v6297 = vunpack.c.h.b16 %v1498
    %v6298 = vunpack.c.l.b16 %v1499
    %v6299 = vunpack.c.h.b16 %v1499
    %v6300 = vunpack.c.l.b16 %v1500
    %v6301 = vunpack.c.h.b16 %v1500
    %v6302 = vunpack.c.l.b16 %v1501
    %v6303 = vunpack.c.h.b16 %v1501
    %v6304 = vunpack.c.l.b16 %v1502
    %v6305 = vunpack.c.h.b16 %v1502
    %v6306 = vunpack.c.l.b16 %v1503
    %v6307 = vunpack.c.h.b16 %v1503
    %v6308 = vunpack.c.l.b16 %v1504
    %v6309 = vunpack.c.h.b16 %v1504
    %v6310 = vunpack.c.l.b16 %v1505
    %v6311 = vunpack.c.h.b16 %v1505
    %v6312 = vunpack.c.l.b16 %v1506
    %v6313 = vunpack.c.h.b16 %v1506
    %v6314 = vunpack.c.l.b16 %v1507
    %v6315 = vunpack.c.h.b16 %v1507
    %v6316 = vunpack.c.l.b16 %v1508
    %v6317 = vunpack.c.h.b16 %v1508
    %v6318 = vunpack.c.l.b16 %v1509
    %v6319 = vunpack.c.h.b16 %v1509
    %v6320 = vunpack.c.l.b16 %v1510
    %v6321 = vunpack.c.h.b16 %v1510
    %v6322 = vunpack.c.l.b16 %v1511
    %v6323 = vunpack.c.h.b16 %v1511
    %v6324 = vunpack.c.l.b16 %v1512
    %v6325 = vunpack.c.h.b16 %v1512
    %v6326 = vunpack.c.l.b16 %v1513
    %v6327 = vunpack.c.h.b16 %v1513
    %v6328 = vunpack.c.l.b16 %v1514
    %v6329 = vunpack.c.h.b16 %v1514
    %v6330 = vunpack.c.l.b16 %v1515
    %v6331 = vunpack.c.h.b16 %v1515
    %v6332 = vunpack.c.l.b16 %v1516
    %v6333 = vunpack.c.h.b16 %v1516
    %v6334 = vunpack.c.l.b16 %v1517
    %v6335 = vunpack.c.h.b16 %v1517
    %v6336 = vunpack.c.l.b16 %v1518
    %v6337 = vunpack.c.h.b16 %v1518
    %v6338 = vunpack.c.l.b16 %v1519
    %v6339 = vunpack.c.h.b16 %v1519
    %v6340 = vunpack.c.l.b16 %v1520
    %v6341 = vunpack.c.h.b16 %v1520
    %v6342 = vunpack.c.l.b16 %v1521
    %v6343 = vunpack.c.h.b16 %v1521
    %v6344 = vunpack.c.l.b16 %v1522
    %v6345 = vunpack.c.h.b16 %v1522
    %v6346 = vunpack.c.l.b16 %v1523
    %v6347 = vunpack.c.h.b16 %v1523
    %v6348 = vunpack.c.l.b16 %v1524
    %v6349 = vunpack.c.h.b16 %v1524
    %v6350 = vunpack.c.l.b16 %v1525
    %v6351 = vunpack.c.h.b16 %v1525
    %v6352 = vunpack.c.l.b16 %v1526
    %v6353 = vunpack.c.h.b16 %v1526
    %v6354 = vunpack.c.l.b16 %v1527
    %v6355 = vunpack.c.h.b16 %v1527
    %v6356 = vunpack.c.l.b16 %v1528
    %v6357 = vunpack.c.h.b16 %v1528
    %v6358 = vunpack.c.l.b16 %v1529
    %v6359 = vunpack.c.h.b16 %v1529
    %v6360 = vunpack.c.l.b16 %v1530
    %v6361 = vunpack.c.h.b16 %v1530
    %v6362 = vunpack.c.l.b16 %v1531
    %v6363 = vunpack.c.h.b16 %v1531
    %v6364 = vunpack.c.l.b16 %v1532
    %v6365 = vunpack.c.h.b16 %v1532
    %v6366 = vunpack.c.l.b16 %v1533
    %v6367 = vunpack.c.h.b16 %v1533
    %v6368 = vunpack.c.l.b16 %v1534
    %v6369 = vunpack.c.h.b16 %v1534
    %v6370 = vunpack.c.l.b16 %v1535
    %v6371 = vunpack.c.h.b16 %v1535
    %v6372 = vunpack.c.l.b16 %v1536
    %v6373 = vunpack.c.h.b16 %v1536
    %v6374 = vunpack.c.l.b16 %v1537
    %v6375 = vunpack.c.h.b16 %v1537
    %v6376 = vunpack.c.l.b16 %v1538
    %v6377 = vunpack.c.h.b16 %v1538
    %v6378 = vunpack.c.l.b16 %v1539
    %v6379 = vunpack.c.h.b16 %v1539
    %v6380 = vunpack.c.l.b16 %v1540
    %v6381 = vunpack.c.h.b16 %v1540
    %v6382 = vunpack.c.l.b16 %v1541
    %v6383 = vunpack.c.h.b16 %v1541
    %v6384 = vunpack.c.l.b16 %v1542
    %v6385 = vunpack.c.h.b16 %v1542
    %v6386 = vunpack.c.l.b16 %v1543
    %v6387 = vunpack.c.h.b16 %v1543
    %v6388 = vunpack.c.l.b16 %v1544
    %v6389 = vunpack.c.h.b16 %v1544
    %v6390 = vunpack.c.l.b16 %v1545
    %v6391 = vunpack.c.h.b16 %v1545
    %v6392 = vunpack.c.l.b16 %v1546
    %v6393 = vunpack.c.h.b16 %v1546
    %v6394 = vunpack.c.l.b16 %v1547
    %v6395 = vunpack.c.h.b16 %v1547
    %v6396 = vunpack.c.l.b16 %v1548
    %v6397 = vunpack.c.h.b16 %v1548
    %v6398 = vunpack.c.l.b16 %v1549
    %v6399 = vunpack.c.h.b16 %v1549
    %v6400 = vunpack.c.l.b16 %v1550
    %v6401 = vunpack.c.h.b16 %v1550
    %v6402 = vunpack.c.l.b16 %v1551
    %v6403 = vunpack.c.h.b16 %v1551
    %v6404 = vunpack.c.l.b16 %v1552
    %v6405 = vunpack.c.h.b16 %v1552
    %v6406 = vunpack.c.l.b16 %v1553
    %v6407 = vunpack.c.h.b16 %v1553
    %v6408 = vunpack.c.l.b16 %v1554
    %v6409 = vunpack.c.h.b16 %v1554
    %v6410 = vunpack.c.l.b16 %v1555
    %v6411 = vunpack.c.h.b16 %v1555
    %v6412 = vunpack.c.l.b16 %v1556
    %v6413 = vunpack.c.h.b16 %v1556
    %v6414 = vunpack.c.l.b16 %v1557
    %v6415 = vunpack.c.h.b16 %v1557
    %v6416 = vunpack.c.l.b16 %v1558
    %v6417 = vunpack.c.h.b16 %v1558
    %v6418 = vunpack.c.l.b16 %v1559
    %v6419 = vunpack.c.h.b16 %v1559
    %v6420 = vunpack.c.l.b16 %v1560
    %v6421 = vunpack.c.h.b16 %v1560
    %v6422 = vunpack.c.l.b16 %v1561
    %v6423 = vunpack.c.h.b16 %v1561
    %v6424 = vunpack.c.l.b16 %v1562
    %v6425 = vunpack.c.h.b16 %v1562
    %v6426 = vunpack.c.l.b16 %v1563
    %v6427 = vunpack.c.h.b16 %v1563
    %v6428 = vunpack.c.l.b16 %v1564
    %v6429 = vunpack.c.h.b16 %v1564
    %v6430 = vunpack.c.l.b16 %v1565
    %v6431 = vunpack.c.h.b16 %v1565
    %v6432 = vunpack.c.l.b16 %v1566
    %v6433 = vunpack.c.h.b16 %v1566
    %v6434 = vunpack.c.l.b16 %v1567
    %v6435 = vunpack.c.h.b16 %v1567
    %v6436 = vunpack.c.l.b16 %v1568
    %v6437 = vunpack.c.h.b16 %v1568
    %v6438 = vunpack.c.l.b16 %v1569
    %v6439 = vunpack.c.h.b16 %v1569
    %v6440 = vunpack.c.l.b16 %v1570
    %v6441 = vunpack.c.h.b16 %v1570
    %v6442 = vunpack.c.l.b16 %v1571
    %v6443 = vunpack.c.h.b16 %v1571
    %v6444 = vunpack.c.l.b16 %v1572
    %v6445 = vunpack.c.h.b16 %v1572
    %v6446 = vunpack.c.l.b16 %v1573
    %v6447 = vunpack.c.h.b16 %v1573
    %v6448 = vunpack.c.l.b16 %v1574
    %v6449 = vunpack.c.h.b16 %v1574
    %v6450 = vunpack.c.l.b16 %v1575
    %v6451 = vunpack.c.h.b16 %v1575
    %v6452 = vunpack.c.l.b16 %v1576
    %v6453 = vunpack.c.h.b16 %v1576
    %v6454 = vunpack.c.l.b16 %v1577
    %v6455 = vunpack.c.h.b16 %v1577
    %v6456 = vunpack.c.l.b16 %v1578
    %v6457 = vunpack.c.h.b16 %v1578
    %v6458 = vunpack.c.l.b16 %v1579
    %v6459 = vunpack.c.h.b16 %v1579
    %v6460 = vunpack.c.l.b16 %v1580
    %v6461 = vunpack.c.h.b16 %v1580
    %v6462 = vunpack.c.l.b16 %v1581
    %v6463 = vunpack.c.h.b16 %v1581
    %v6464 = vunpack.c.l.b16 %v1582
    %v6465 = vunpack.c.h.b16 %v1582
    %v6466 = vunpack.c.l.b16 %v1583
    %v6467 = vunpack.c.h.b16 %v1583
    %v6468 = vunpack.c.l.b16 %v1584
    %v6469 = vunpack.c.h.b16 %v1584
    %v6470 = vunpack.c.l.b16 %v1585
    %v6471 = vunpack.c.h.b16 %v1585
    %v6472 = vunpack.c.l.b16 %v1586
    %v6473 = vunpack.c.h.b16 %v1586
    %v6474 = vunpack.c.l.b16 %v1587
    %v6475 = vunpack.c.h.b16 %v1587
    %v6476 = vunpack.c.l.b16 %v1588
    %v6477 = vunpack.c.h.b16 %v1588
    %v6478 = vunpack.c.l.b16 %v1589
    %v6479 = vunpack.c.h.b16 %v1589
    %v6480 = vunpack.c.l.b16 %v1590
    %v6481 = vunpack.c.h.b16 %v1590
    %v6482 = vunpack.c.l.b16 %v1591
    %v6483 = vunpack.c.h.b16 %v1591
    %v6484 = vunpack.c.l.b16 %v1592
    %v6485 = vunpack.c.h.b16 %v1592
    %v6486 = vunpack.c.l.b16 %v1593
    %v6487 = vunpack.c.h.b16 %v1593
    %v6488 = vpack.c.b16 %v3360, %v3352
    %v6489 = vpack.c.b16 %v3361, %v3353
    %v6490 = vpack.c.b16 %v3362, %v3354
    %v6491 = vpack.c.b16 %v3363, %v3355
    %v6492 = vpack.c.b16 %v3364, %v3356
    %v6493 = vpack.c.b16 %v3365, %v3357
    %v6494 = vpack.c.b16 %v3366, %v3358
    %v6495 = vpack.c.b16 %v3367, %v3359
    %v6496 = vpack.c.b16 %v3376, %v3368
    %v6497 = vpack.c.b16 %v3377, %v3369
    %v6498 = vpack.c.b16 %v3378, %v3370
    %v6499 = vpack.c.b16 %v3379, %v3371
    %v6500 = vpack.c.b16 %v3380, %v3372
    %v6501 = vpack.c.b16 %v3381, %v3373
    %v6502 = vpack.c.b16 %v3382, %v3374
    %v6503 = vpack.c.b16 %v3383, %v3375
    %v6504 = vpack.c.b16 %v3392, %v3384
    %v6505 = vpack.c.b16 %v3393, %v3385
    %v6506 = vpack.c.b16 %v3394, %v3386
    %v6507 = vpack.c.b16 %v3395, %v3387
    %v6508 = vpack.c.b16 %v3396, %v3388
    %v6509 = vpack.c.b16 %v3397, %v3389
    %v6510 = vpack.c.b16 %v3398, %v3390
    %v6511 = vpack.c.b16 %v3399, %v3391
    %v6512 = vpack.c.b16 %v3408, %v3400
    %v6513 = vpack.c.b16 %v3409, %v3401
    %v6514 = vpack.c.b16 %v3410, %v3402
    %v6515 = vpack.c.b16 %v3411, %v3403
    %v6516 = vpack.c.b16 %v3412, %v3404
    %v6517 = vpack.c.b16 %v3413, %v3405
    %v6518 = vpack.c.b16 %v3414, %v3406
    %v6519 = vpack.c.b16 %v3415, %v3407
    %v6520 = vpack.c.b16 %v3424, %v3416
    %v6521 = vpack.c.b16 %v3425, %v3417
    %v6522 = vpack.c.b16 %v3426, %v3418
    %v6523 = vpack.c.b16 %v3427, %v3419
    %v6524 = vpack.c.b16 %v3428, %v3420
    %v6525 = vpack.c.b16 %v3429, %v3421
    %v6526 = vpack.c.b16 %v3430, %v3422
    %v6527 = vpack.c.b16 %v3431, %v3423
    %v6528 = vpack.c.b16 %v3440, %v3432
    %v6529 = vpack.c.b16 %v3441, %v3433
    %v6530 = vpack.c.b16 %v3442, %v3434
    %v6531 = vpack.c.b16 %v3443, %v3435
    %v6532 = vpack.c.b16 %v3444, %v3436
    %v6533 = vpack.c.b16 %v3445, %v3437
    %v6534 = vpack.c.b16 %v3446, %v3438
    %v6535 = vpack.c.b16 %v3447, %v3439
    %v6536 = vpack.c.b16 %v3456, %v3448
    %v6537 = vpack.c.b16 %v3457, %v3449
    %v6538 = vpack.c.b16 %v3458, %v3450
    %v6539 = vpack.c.b16 %v3459, %v3451
    %v6540 = vpack.c.b16 %v3460, %v3452
    %v6541 = vpack.c.b16 %v3461, %v3453
    %v6542 = vpack.c.b16 %v3462, %v3454
    %v6543 = vpack.c.b16 %v3463, %v3455
    %v6544 = vpack.c.b16 %v3472, %v3464
    %v6545 = vpack.c.b16 %v3473, %v3465
    %v6546 = vpack.c.b16 %v3474, %v3466
    %v6547 = vpack.c.b16 %v3475, %v3467
    %v6548 = vpack.c.b16 %v3476, %v3468
    %v6549 = vpack.c.b16 %v3477, %v3469
    %v6550 = vpack.c.b16 %v3478, %v3470
    %v6551 = vpack.c.b16 %v3479, %v3471
    %v6552 = vpack.c.b16 %v3488, %v3480
    %v6553 = vpack.c.b16 %v3489, %v3481
    %v6554 = vpack.c.b16 %v3490, %v3482
    %v6555 = vpack.c.b16 %v3491, %v3483
    %v6556 = vpack.c.b16 %v3492, %v3484
    %v6557 = vpack.c.b16 %v3493, %v3485
    %v6558 = vpack.c.b16 %v3494, %v3486
    %v6559 = vpack.c.b16 %v3495, %v3487
    %v6560 = vpack.c.b16 %v3504, %v3496
    %v6561 = vpack.c.b16 %v3505, %v3497
    %v6562 = vpack.c.b16 %v3506, %v3498
    %v6563 = vpack.c.b16 %v3507, %v3499
    %v6564 = vpack.c.b16 %v3508, %v3500
    %v6565 = vpack.c.b16 %v3509, %v3501
    %v6566 = vpack.c.b16 %v3510, %v3502
    %v6567 = vpack.c.b16 %v3511, %v3503
    %v6568 = vpack.c.b16 %v3520, %v3512
    %v6569 = vpack.c.b16 %v3521, %v3513
    %v6570 = vpack.c.b16 %v3522, %v3514
    %v6571 = vpack.c.b16 %v3523, %v3515
    %v6572 = vpack.c.b16 %v3524, %v3516
    %v6573 = vpack.c.b16 %v3525, %v3517
    %v6574 = vpack.c.b16 %v3526, %v3518
    %v6575 = vpack.c.b16 %v3527, %v3519
    %v6576 = vpack.c.b16 %v3536, %v3528
    %v6577 = vpack.c.b16 %v3537, %v3529
    %v6578 = vpack.c.b16 %v3538, %v3530
    %v6579 = vpack.c.b16 %v3539, %v3531
    %v6580 = vpack.c.b16 %v3540, %v3532
    %v6581 = vpack.c.b16 %v3541, %v3533
    %v6582 = vpack.c.b16 %v3542, %v3534
    %v6583 = vpack.c.b16 %v3543, %v3535
    %v6584 = vpack.c.b16 %v3552, %v3544
    %v6585 = vpack.c.b16 %v3553, %v3545
    %v6586 = vpack.c.b16 %v3554, %v3546
    %v6587 = vpack.c.b16 %v3555, %v3547
    %v6588 = vpack.c.b16 %v3556, %v3548
    %v6589 = vpack.c.b16 %v3557, %v3549
    %v6590 = vpack.c.b16 %v3558, %v3550
    %v6591 = vpack.c.b16 %v3559, %v3551
    %v6592 = vpack.c.b16 %v3568, %v3560
    %v6593 = vpack.c.b16 %v3569, %v3561
    %v6594 = vpack.c.b16 %v3570, %v3562
    %v6595 = vpack.c.b16 %v3571, %v3563
    %v6596 = vpack.c.b16 %v3572, %v3564
    %v6597 = vpack.c.b16 %v3573, %v3565
    %v6598 = vpack.c.b16 %v3574, %v3566
    %v6599 = vpack.c.b16 %v3575, %v3567
    %v6600 = vpack.c.b16 %v3584, %v3576
    %v6601 = vpack.c.b16 %v3585, %v3577
    %v6602 = vpack.c.b16 %v3586, %v3578
    %v6603 = vpack.c.b16 %v3587, %v3579
    %v6604 = vpack.c.b16 %v3588, %v3580
    %v6605 = vpack.c.b16 %v3589, %v3581
    %v6606 = vpack.c.b16 %v3590, %v3582
    %v6607 = vpack.c.b16 %v3591, %v3583
    %v6608 = vpack.c.b16 %v3600, %v3592
    %v6609 = vpack.c.b16 %v3601, %v3593
    %v6610 = vpack.c.b16 %v3602, %v3594
    %v6611 = vpack.c.b16 %v3603, %v3595
    %v6612 = vpack.c.b16 %v3604, %v3596
    %v6613 = vpack.c.b16 %v3605, %v3597
    %v6614 = vpack.c.b16 %v3606, %v3598
    %v6615 = vpack.c.b16 %v3607, %v3599
    %v6616 = vpack.c.b16 %v3616, %v3608
    %v6617 = vpack.c.b16 %v3617, %v3609
    %v6618 = vpack.c.b16 %v3618, %v3610
    %v6619 = vpack.c.b16 %v3619, %v3611
    %v6620 = vpack.c.b16 %v3620, %v3612
    %v6621 = vpack.c.b16 %v3621, %v3613
    %v6622 = vpack.c.b16 %v3622, %v3614
    %v6623 = vpack.c.b16 %v3623, %v3615
    %v6624 = vpack.c.b16 %v3632, %v3624
    %v6625 = vpack.c.b16 %v3633, %v3625
    %v6626 = vpack.c.b16 %v3634, %v3626
    %v6627 = vpack.c.b16 %v3635, %v3627
    %v6628 = vpack.c.b16 %v3636, %v3628
    %v6629 = vpack.c.b16 %v3637, %v3629
    %v6630 = vpack.c.b16 %v3638, %v3630
    %v6631 = vpack.c.b16 %v3639, %v3631
    %v6632 = vpack.c.b16 %v3648, %v3640
    %v6633 = vpack.c.b16 %v3649, %v3641
    %v6634 = vpack.c.b16 %v3650, %v3642
    %v6635 = vpack.c.b16 %v3651, %v3643
    %v6636 = vpack.c.b16 %v3652, %v3644
    %v6637 = vpack.c.b16 %v3653, %v3645
    %v6638 = vpack.c.b16 %v3654, %v3646
    %v6639 = vpack.c.b16 %v3655, %v3647
    %v6640 = vpack.c.b16 %v3664, %v3656
    %v6641 = vpack.c.b16 %v3665, %v3657
    %v6642 = vpack.c.b16 %v3666, %v3658
    %v6643 = vpack.c.b16 %v3667, %v3659
    %v6644 = vpack.c.b16 %v3668, %v3660
    %v6645 = vpack.c.b16 %v3669, %v3661
    %v6646 = vpack.c.b16 %v3670, %v3662
    %v6647 = vpack.c.b16 %v3671, %v3663
    %v6648 = vpack.c.b16 %v3680, %v3672
    %v6649 = vpack.c.b16 %v3681, %v3673
    %v6650 = vpack.c.b16 %v3682, %v3674
    %v6651 = vpack.c.b16 %v3683, %v3675
    %v6652 = vpack.c.b16 %v3684, %v3676
    %v6653 = vpack.c.b16 %v3685, %v3677
    %v6654 = vpack.c.b16 %v3686, %v3678
    %v6655 = vpack.c.b16 %v3687, %v3679
    %v6656 = vpack.c.b16 %v3696, %v3688
    %v6657 = vpack.c.b16 %v3697, %v3689
    %v6658 = vpack.c.b16 %v3698, %v3690
    %v6659 = vpack.c.b16 %v3699, %v3691
    %v6660 = vpack.c.b16 %v3700, %v3692
    %v6661 = vpack.c.b16 %v3701, %v3693
    %v6662 = vpack.c.b16 %v3702, %v3694
    %v6663 = vpack.c.b16 %v3703, %v3695
    %v6664 = vpack.c.b16 %v3712, %v3704
    %v6665 = vpack.c.b16 %v3713, %v3705
    %v6666 = vpack.c.b16 %v3714, %v3706
    %v6667 = vpack.c.b16 %v3715, %v3707
    %v6668 = vpack.c.b16 %v3716, %v3708
    %v6669 = vpack.c.b16 %v3717, %v3709
    %v6670 = vpack.c.b16 %v3718, %v3710
    %v6671 = vpack.c.b16 %v3719, %v3711
    %v6672 = vpack.c.b16 %v3728, %v3720
    %v6673 = vpack.c.b16 %v3729, %v3721
    %v6674 = vpack.c.b16 %v3730, %v3722
    %v6675 = vpack.c.b16 %v3731, %v3723
    %v6676 = vpack.c.b16 %v3732, %v3724
    %v6677 = vpack.c.b16 %v3733, %v3725
    %v6678 = vpack.c.b16 %v3734, %v3726
    %v6679 = vpack.c.b16 %v3735, %v3727
    %v6680 = vpack.c.b16 %v3744, %v3736
    %v6681 = vpack.c.b16 %v3745, %v3737
    %v6682 = vpack.c.b16 %v3746, %v3738
    %v6683 = vpack.c.b16 %v3747, %v3739
    %v6684 = vpack.c.b16 %v3748, %v3740
    %v6685 = vpack.c.b16 %v3749, %v3741
    %v6686 = vpack.c.b16 %v3750, %v3742
    %v6687 = vpack.c.b16 %v3751, %v3743
    %v6688 = vpack.c.b16 %v3760, %v3752
    %v6689 = vpack.c.b16 %v3761, %v3753
    %v6690 = vpack.c.b16 %v3762, %v3754
    %v6691 = vpack.c.b16 %v3763, %v3755
    %v6692 = vpack.c.b16 %v3764, %v3756
    %v6693 = vpack.c.b16 %v3765, %v3757
    %v6694 = vpack.c.b16 %v3766, %v3758
    %v6695 = vpack.c.b16 %v3767, %v3759
    %v6696 = vpack.c.b16 %v3776, %v3768
    %v6697 = vpack.c.b16 %v3777, %v3769
    %v6698 = vpack.c.b16 %v3778, %v3770
    %v6699 = vpack.c.b16 %v3779, %v3771
    %v6700 = vpack.c.b16 %v3780, %v3772
    %v6701 = vpack.c.b16 %v3781, %v3773
    %v6702 = vpack.c.b16 %v3782, %v3774
    %v6703 = vpack.c.b16 %v3783, %v3775
    %v6704 = vpack.c.b16 %v3792, %v3784
    %v6705 = vpack.c.b16 %v3793, %v3785
    %v6706 = vpack.c.b16 %v3794, %v3786
    %v6707 = vpack.c.b16 %v3795, %v3787
    %v6708 = vpack.c.b16 %v3796, %v3788
    %v6709 = vpack.c.b16 %v3797, %v3789
    %v6710 = vpack.c.b16 %v3798, %v3790
    %v6711 = vpack.c.b16 %v3799, %v3791
    %v6712 = vpack.c.b16 %v3808, %v3800
    %v6713 = vpack.c.b16 %v3809, %v3801
    %v6714 = vpack.c.b16 %v3810, %v3802
    %v6715 = vpack.c.b16 %v3811, %v3803
    %v6716 = vpack.c.b16 %v3812, %v3804
    %v6717 = vpack.c.b16 %v3813, %v3805
    %v6718 = vpack.c.b16 %v3814, %v3806
    %v6719 = vpack.c.b16 %v3815, %v3807
    %v6720 = vpack.c.b16 %v3824, %v3816
    %v6721 = vpack.c.b16 %v3825, %v3817
    %v6722 = vpack.c.b16 %v3826, %v3818
    %v6723 = vpack.c.b16 %v3827, %v3819
    %v6724 = vpack.c.b16 %v3828, %v3820
    %v6725 = vpack.c.b16 %v3829, %v3821
    %v6726 = vpack.c.b16 %v3830, %v3822
    %v6727 = vpack.c.b16 %v3831, %v3823
    %v6728 = vpack.c.b16 %v3840, %v3832
    %v6729 = vpack.c.b16 %v3841, %v3833
    %v6730 = vpack.c.b16 %v3842, %v3834
    %v6731 = vpack.c.b16 %v3843, %v3835
    %v6732 = vpack.c.b16 %v3844, %v3836
    %v6733 = vpack.c.b16 %v3845, %v3837
    %v6734 = vpack.c.b16 %v3846, %v3838
    %v6735 = vpack.c.b16 %v3847, %v3839
    %v6736 = vpack.c.b16 %v3856, %v3848
    %v6737 = vpack.c.b16 %v3857, %v3849
    %v6738 = vpack.c.b16 %v3858, %v3850
    %v6739 = vpack.c.b16 %v3859, %v3851
    %v6740 = vpack.c.b16 %v3860, %v3852
    %v6741 = vpack.c.b16 %v3861, %v3853
    %v6742 = vpack.c.b16 %v3862, %v3854
    %v6743 = vpack.c.b16 %v3863, %v3855
    %v6744 = vpack.c.b16 %v3872, %v3864
    %v6745 = vpack.c.b16 %v3873, %v3865
    %v6746 = vpack.c.b16 %v3874, %v3866
    %v6747 = vpack.c.b16 %v3875, %v3867
    %v6748 = vpack.c.b16 %v3876, %v3868
    %v6749 = vpack.c.b16 %v3877, %v3869
    %v6750 = vpack.c.b16 %v3878, %v3870
    %v6751 = vpack.c.b16 %v3879, %v3871
    %v6752 = vpack.c.b16 %v3888, %v3880
    %v6753 = vpack.c.b16 %v3889, %v3881
    %v6754 = vpack.c.b16 %v3890, %v3882
    %v6755 = vpack.c.b16 %v3891, %v3883
    %v6756 = vpack.c.b16 %v3892, %v3884
    %v6757 = vpack.c.b16 %v3893, %v3885
    %v6758 = vpack.c.b16 %v3894, %v3886
    %v6759 = vpack.c.b16 %v3895, %v3887
    %v6760 = vpack.c.b16 %v3904, %v3896
    %v6761 = vpack.c.b16 %v3905, %v3897
    %v6762 = vpack.c.b16 %v3906, %v3898
    %v6763 = vpack.c.b16 %v3907, %v3899
    %v6764 = vpack.c.b16 %v3908, %v3900
    %v6765 = vpack.c.b16 %v3909, %v3901
    %v6766 = vpack.c.b16 %v3910, %v3902
    %v6767 = vpack.c.b16 %v3911, %v3903
    %v6768 = vpack.c.b16 %v3920, %v3912
    %v6769 = vpack.c.b16 %v3921, %v3913
    %v6770 = vpack.c.b16 %v3922, %v3914
    %v6771 = vpack.c.b16 %v3923, %v3915
    %v6772 = vpack.c.b16 %v3924, %v3916
    %v6773 = vpack.c.b16 %v3925, %v3917
    %v6774 = vpack.c.b16 %v3926, %v3918
    %v6775 = vpack.c.b16 %v3927, %v3919
    %v6776 = vpack.c.b16 %v3936, %v3928
    %v6777 = vpack.c.b16 %v3937, %v3929
    %v6778 = vpack.c.b16 %v3938, %v3930
    %v6779 = vpack.c.b16 %v3939, %v3931
    %v6780 = vpack.c.b16 %v3940, %v3932
    %v6781 = vpack.c.b16 %v3941, %v3933
    %v6782 = vpack.c.b16 %v3942, %v3934
    %v6783 = vpack.c.b16 %v3943, %v3935
    %v6784 = vpack.c.b16 %v3952, %v3944
    %v6785 = vpack.c.b16 %v3953, %v3945
    %v6786 = vpack.c.b16 %v3954, %v3946
    %v6787 = vpack.c.b16 %v3955, %v3947
    %v6788 = vpack.c.b16 %v3956, %v3948
    %v6789 = vpack.c.b16 %v3957, %v3949
    %v6790 = vpack.c.b16 %v3958, %v3950
    %v6791 = vpack.c.b16 %v3959, %v3951
    %v6792 = vpack.c.b16 %v3968, %v3960
    %v6793 = vpack.c.b16 %v3969, %v3961
    %v6794 = vpack.c.b16 %v3970, %v3962
    %v6795 = vpack.c.b16 %v3971, %v3963
    %v6796 = vpack.c.b16 %v3972, %v3964
    %v6797 = vpack.c.b16 %v3973, %v3965
    %v6798 = vpack.c.b16 %v3974, %v3966
    %v6799 = vpack.c.b16 %v3975, %v3967
    %v6800 = vpack.c.b16 %v3984, %v3976
    %v6801 = vpack.c.b16 %v3985, %v3977
    %v6802 = vpack.c.b16 %v3986, %v3978
    %v6803 = vpack.c.b16 %v3987, %v3979
    %v6804 = vpack.c.b16 %v3988, %v3980
    %v6805 = vpack.c.b16 %v3989, %v3981
    %v6806 = vpack.c.b16 %v3990, %v3982
    %v6807 = vpack.c.b16 %v3991, %v3983
    %v6808 = vpack.c.b16 %v4000, %v3992
    %v6809 = vpack.c.b16 %v4001, %v3993
    %v6810 = vpack.c.b16 %v4002, %v3994
    %v6811 = vpack.c.b16 %v4003, %v3995
    %v6812 = vpack.c.b16 %v4004, %v3996
    %v6813 = vpack.c.b16 %v4005, %v3997
    %v6814 = vpack.c.b16 %v4006, %v3998
    %v6815 = vpack.c.b16 %v4007, %v3999
    %v6816 = vpack.c.b16 %v4016, %v4008
    %v6817 = vpack.c.b16 %v4017, %v4009
    %v6818 = vpack.c.b16 %v4018, %v4010
    %v6819 = vpack.c.b16 %v4019, %v4011
    %v6820 = vpack.c.b16 %v4020, %v4012
    %v6821 = vpack.c.b16 %v4021, %v4013
    %v6822 = vpack.c.b16 %v4022, %v4014
    %v6823 = vpack.c.b16 %v4023, %v4015
    %v6824 = vpack.c.b16 %v4032, %v4024
    %v6825 = vpack.c.b16 %v4033, %v4025
    %v6826 = vpack.c.b16 %v4034, %v4026
    %v6827 = vpack.c.b16 %v4035, %v4027
    %v6828 = vpack.c.b16 %v4036, %v4028
    %v6829 = vpack.c.b16 %v4037, %v4029
    %v6830 = vpack.c.b16 %v4038, %v4030
    %v6831 = vpack.c.b16 %v4039, %v4031
    %v6832 = vpack.c.b16 %v4048, %v4040
    %v6833 = vpack.c.b16 %v4049, %v4041
    %v6834 = vpack.c.b16 %v4050, %v4042
    %v6835 = vpack.c.b16 %v4051, %v4043
    %v6836 = vpack.c.b16 %v4052, %v4044
    %v6837 = vpack.c.b16 %v4053, %v4045
    %v6838 = vpack.c.b16 %v4054, %v4046
    %v6839 = vpack.c.b16 %v4055, %v4047
    %v6840 = vpack.c.b16 %v4064, %v4056
    %v6841 = vpack.c.b16 %v4065, %v4057
    %v6842 = vpack.c.b16 %v4066, %v4058
    %v6843 = vpack.c.b16 %v4067, %v4059
    %v6844 = vpack.c.b16 %v4068, %v4060
    %v6845 = vpack.c.b16 %v4069, %v4061
    %v6846 = vpack.c.b16 %v4070, %v4062
    %v6847 = vpack.c.b16 %v4071, %v4063
    %v6848 = vpack.c.b16 %v4080, %v4072
    %v6849 = vpack.c.b16 %v4081, %v4073
    %v6850 = vpack.c.b16 %v4082, %v4074
    %v6851 = vpack.c.b16 %v4083, %v4075
    %v6852 = vpack.c.b16 %v4084, %v4076
    %v6853 = vpack.c.b16 %v4085, %v4077
    %v6854 = vpack.c.b16 %v4086, %v4078
    %v6855 = vpack.c.b16 %v4087, %v4079
    %v6856 = vpack.c.b16 %v4096, %v4088
    %v6857 = vpack.c.b16 %v4097, %v4089
    %v6858 = vpack.c.b16 %v4098, %v4090
    %v6859 = vpack.c.b16 %v4099, %v4091
    %v6860 = vpack.c.b16 %v4100, %v4092
    %v6861 = vpack.c.b16 %v4101, %v4093
    %v6862 = vpack.c.b16 %v4102, %v4094
    %v6863 = vpack.c.b16 %v4103, %v4095
    %v6864 = vpack.c.b16 %v4112, %v4104
    %v6865 = vpack.c.b16 %v4113, %v4105
    %v6866 = vpack.c.b16 %v4114, %v4106
    %v6867 = vpack.c.b16 %v4115, %v4107
    %v6868 = vpack.c.b16 %v4116, %v4108
    %v6869 = vpack.c.b16 %v4117, %v4109
    %v6870 = vpack.c.b16 %v4118, %v4110
    %v6871 = vpack.c.b16 %v4119, %v4111
    %v6872 = vpack.c.b16 %v4128, %v4120
    %v6873 = vpack.c.b16 %v4129, %v4121
    %v6874 = vpack.c.b16 %v4130, %v4122
    %v6875 = vpack.c.b16 %v4131, %v4123
    %v6876 = vpack.c.b16 %v4132, %v4124
    %v6877 = vpack.c.b16 %v4133, %v4125
    %v6878 = vpack.c.b16 %v4134, %v4126
    %v6879 = vpack.c.b16 %v4135, %v4127
    %v6880 = vpack.c.b16 %v4144, %v4136
    %v6881 = vpack.c.b16 %v4145, %v4137
    %v6882 = vpack.c.b16 %v4146, %v4138
    %v6883 = vpack.c.b16 %v4147, %v4139
    %v6884 = vpack.c.b16 %v4148, %v4140
    %v6885 = vpack.c.b16 %v4149, %v4141
    %v6886 = vpack.c.b16 %v4150, %v4142
    %v6887 = vpack.c.b16 %v4151, %v4143
    %v6888 = vpack.c.b16 %v4160, %v4152
    %v6889 = vpack.c.b16 %v4161, %v4153
    %v6890 = vpack.c.b16 %v4162, %v4154
    %v6891 = vpack.c.b16 %v4163, %v4155
    %v6892 = vpack.c.b16 %v4164, %v4156
    %v6893 = vpack.c.b16 %v4165, %v4157
    %v6894 = vpack.c.b16 %v4166, %v4158
    %v6895 = vpack.c.b16 %v4167, %v4159
    %v6896 = vpack.c.b16 %v4176, %v4168
    %v6897 = vpack.c.b16 %v4177, %v4169
    %v6898 = vpack.c.b16 %v4178, %v4170
    %v6899 = vpack.c.b16 %v4179, %v4171
    %v6900 = vpack.c.b16 %v4180, %v4172
    %v6901 = vpack.c.b16 %v4181, %v4173
    %v6902 = vpack.c.b16 %v4182, %v4174
    %v6903 = vpack.c.b16 %v4183, %v4175
    %v6904 = vpack.c.b16 %v4192, %v4184
    %v6905 = vpack.c.b16 %v4193, %v4185
    %v6906 = vpack.c.b16 %v4194, %v4186
    %v6907 = vpack.c.b16 %v4195, %v4187
    %v6908 = vpack.c.b16 %v4196, %v4188
    %v6909 = vpack.c.b16 %v4197, %v4189
    %v6910 = vpack.c.b16 %v4198, %v4190
    %v6911 = vpack.c.b16 %v4199, %v4191
    %v6912 = vpack.c.b16 %v4208, %v4200
    %v6913 = vpack.c.b16 %v4209, %v4201
    %v6914 = vpack.c.b16 %v4210, %v4202
    %v6915 = vpack.c.b16 %v4211, %v4203
    %v6916 = vpack.c.b16 %v4212, %v4204
    %v6917 = vpack.c.b16 %v4213, %v4205
    %v6918 = vpack.c.b16 %v4214, %v4206
    %v6919 = vpack.c.b16 %v4215, %v4207
    %v6920 = vpack.c.b16 %v4224, %v4216
    %v6921 = vpack.c.b16 %v4225, %v4217
    %v6922 = vpack.c.b16 %v4226, %v4218
    %v6923 = vpack.c.b16 %v4227, %v4219
    %v6924 = vpack.c.b16 %v4228, %v4220
    %v6925 = vpack.c.b16 %v4229, %v4221
    %v6926 = vpack.c.b16 %v4230, %v4222
    %v6927 = vpack.c.b16 %v4231, %v4223
    %v6928 = vpack.c.b16 %v4240, %v4232
    %v6929 = vpack.c.b16 %v4241, %v4233
    %v6930 = vpack.c.b16 %v4242, %v4234
    %v6931 = vpack.c.b16 %v4243, %v4235
    %v6932 = vpack.c.b16 %v4244, %v4236
    %v6933 = vpack.c.b16 %v4245, %v4237
    %v6934 = vpack.c.b16 %v4246, %v4238
    %v6935 = vpack.c.b16 %v4247, %v4239
    %v6936 = vpack.c.b16 %v4256, %v4248
    %v6937 = vpack.c.b16 %v4257, %v4249
    %v6938 = vpack.c.b16 %v4258, %v4250
    %v6939 = vpack.c.b16 %v4259, %v4251
    %v6940 = vpack.c.b16 %v4260, %v4252
    %v6941 = vpack.c.b16 %v4261, %v4253
    %v6942 = vpack.c.b16 %v4262, %v4254
    %v6943 = vpack.c.b16 %v4263, %v4255
    %v6944 = vpack.c.b16 %v4272, %v4264
    %v6945 = vpack.c.b16 %v4273, %v4265
    %v6946 = vpack.c.b16 %v4274, %v4266
    %v6947 = vpack.c.b16 %v4275, %v4267
    %v6948 = vpack.c.b16 %v4276, %v4268
    %v6949 = vpack.c.b16 %v4277, %v4269
    %v6950 = vpack.c.b16 %v4278, %v4270
    %v6951 = vpack.c.b16 %v4279, %v4271
    %v6952 = vpack.c.b16 %v4288, %v4280
    %v6953 = vpack.c.b16 %v4289, %v4281
    %v6954 = vpack.c.b16 %v4290, %v4282
    %v6955 = vpack.c.b16 %v4291, %v4283
    %v6956 = vpack.c.b16 %v4292, %v4284
    %v6957 = vpack.c.b16 %v4293, %v4285
    %v6958 = vpack.c.b16 %v4294, %v4286
    %v6959 = vpack.c.b16 %v4295, %v4287
    %v6960 = vpack.c.b16 %v4304, %v4296
    %v6961 = vpack.c.b16 %v4305, %v4297
    %v6962 = vpack.c.b16 %v4306, %v4298
    %v6963 = vpack.c.b16 %v4307, %v4299
    %v6964 = vpack.c.b16 %v4308, %v4300
    %v6965 = vpack.c.b16 %v4309, %v4301
    %v6966 = vpack.c.b16 %v4310, %v4302
    %v6967 = vpack.c.b16 %v4311, %v4303
    %v6968 = vpack.c.b16 %v4320, %v4312
    %v6969 = vpack.c.b16 %v4321, %v4313
    %v6970 = vpack.c.b16 %v4322, %v4314
    %v6971 = vpack.c.b16 %v4323, %v4315
    %v6972 = vpack.c.b16 %v4324, %v4316
    %v6973 = vpack.c.b16 %v4325, %v4317
    %v6974 = vpack.c.b16 %v4326, %v4318
    %v6975 = vpack.c.b16 %v4327, %v4319
    %v6976 = vpack.c.b16 %v4336, %v4328
    %v6977 = vpack.c.b16 %v4337, %v4329
    %v6978 = vpack.c.b16 %v4338, %v4330
    %v6979 = vpack.c.b16 %v4339, %v4331
    %v6980 = vpack.c.b16 %v4340, %v4332
    %v6981 = vpack.c.b16 %v4341, %v4333
    %v6982 = vpack.c.b16 %v4342, %v4334
    %v6983 = vpack.c.b16 %v4343, %v4335
    %v6984 = vpack.c.b16 %v4352, %v4344
    %v6985 = vpack.c.b16 %v4353, %v4345
    %v6986 = vpack.c.b16 %v4354, %v4346
    %v6987 = vpack.c.b16 %v4355, %v4347
    %v6988 = vpack.c.b16 %v4356, %v4348
    %v6989 = vpack.c.b16 %v4357, %v4349
    %v6990 = vpack.c.b16 %v4358, %v4350
    %v6991 = vpack.c.b16 %v4359, %v4351
    %v6992 = vpack.c.b16 %v4368, %v4360
    %v6993 = vpack.c.b16 %v4369, %v4361
    %v6994 = vpack.c.b16 %v4370, %v4362
    %v6995 = vpack.c.b16 %v4371, %v4363
    %v6996 = vpack.c.b16 %v4372, %v4364
    %v6997 = vpack.c.b16 %v4373, %v4365
    %v6998 = vpack.c.b16 %v4374, %v4366
    %v6999 = vpack.c.b16 %v4375, %v4367
    %v7000 = vpack.c.b16 %v4384, %v4376
    %v7001 = vpack.c.b16 %v4385, %v4377
    %v7002 = vpack.c.b16 %v4386, %v4378
    %v7003 = vpack.c.b16 %v4387, %v4379
    %v7004 = vpack.c.b16 %v4388, %v4380
    %v7005 = vpack.c.b16 %v4389, %v4381
    %v7006 = vpack.c.b16 %v4390, %v4382
    %v7007 = vpack.c.b16 %v4391, %v4383
    %v7008 = vpack.c.b16 %v4400, %v4392
    %v7009 = vpack.c.b16 %v4401, %v4393
    %v7010 = vpack.c.b16 %v4402, %v4394
    %v7011 = vpack.c.b16 %v4403, %v4395
    %v7012 = vpack.c.b16 %v4404, %v4396
    %v7013 = vpack.c.b16 %v4405, %v4397
    %v7014 = vpack.c.b16 %v4406, %v4398
    %v7015 = vpack.c.b16 %v4407, %v4399
    %v7016 = vpack.c.b16 %v4416, %v4408
    %v7017 = vpack.c.b16 %v4417, %v4409
    %v7018 = vpack.c.b16 %v4418, %v4410
    %v7019 = vpack.c.b16 %v4419, %v4411
    %v7020 = vpack.c.b16 %v4420, %v4412
    %v7021 = vpack.c.b16 %v4421, %v4413
    %v7022 = vpack.c.b16 %v4422, %v4414
    %v7023 = vpack.c.b16 %v4423, %v4415
    %v7024 = vpack.c.b16 %v4432, %v4424
    %v7025 = vpack.c.b16 %v4433, %v4425
    %v7026 = vpack.c.b16 %v4434, %v4426
    %v7027 = vpack.c.b16 %v4435, %v4427
    %v7028 = vpack.c.b16 %v4436, %v4428
    %v7029 = vpack.c.b16 %v4437, %v4429
    %v7030 = vpack.c.b16 %v4438, %v4430
    %v7031 = vpack.c.b16 %v4439, %v4431
    %v7032 = vpack.c.b16 %v4448, %v4440
    %v7033 = vpack.c.b16 %v4449, %v4441
    %v7034 = vpack.c.b16 %v4450, %v4442
    %v7035 = vpack.c.b16 %v4451, %v4443
    %v7036 = vpack.c.b16 %v4452, %v4444
    %v7037 = vpack.c.b16 %v4453, %v4445
    %v7038 = vpack.c.b16 %v4454, %v4446
    %v7039 = vpack.c.b16 %v4455, %v4447
    %v7040 = vpack.c.b16 %v4464, %v4456
    %v7041 = vpack.c.b16 %v4465, %v4457
    %v7042 = vpack.c.b16 %v4466, %v4458
    %v7043 = vpack.c.b16 %v4467, %v4459
    %v7044 = vpack.c.b16 %v4468, %v4460
    %v7045 = vpack.c.b16 %v4469, %v4461
    %v7046 = vpack.c.b16 %v4470, %v4462
    %v7047 = vpack.c.b16 %v4471, %v4463
    %v7048 = vpack.c.b16 %v4480, %v4472
    %v7049 = vpack.c.b16 %v4481, %v4473
    %v7050 = vpack.c.b16 %v4482, %v4474
    %v7051 = vpack.c.b16 %v4483, %v4475
    %v7052 = vpack.c.b16 %v4484, %v4476
    %v7053 = vpack.c.b16 %v4485, %v4477
    %v7054 = vpack.c.b16 %v4486, %v4478
    %v7055 = vpack.c.b16 %v4487, %v4479
    %v7056 = vpack.c.b16 %v4496, %v4488
    %v7057 = vpack.c.b16 %v4497, %v4489
    %v7058 = vpack.c.b16 %v4498, %v4490
    %v7059 = vpack.c.b16 %v4499, %v4491
    %v7060 = vpack.c.b16 %v4500, %v4492
    %v7061 = vpack.c.b16 %v4501, %v4493
    %v7062 = vpack.c.b16 %v4502, %v4494
    %v7063 = vpack.c.b16 %v4503, %v4495
    %v7064 = vpack.c.b16 %v4512, %v4504
    %v7065 = vpack.c.b16 %v4513, %v4505
    %v7066 = vpack.c.b16 %v4514, %v4506
    %v7067 = vpack.c.b16 %v4515, %v4507
    %v7068 = vpack.c.b16 %v4516, %v4508
    %v7069 = vpack.c.b16 %v4517, %v4509
    %v7070 = vpack.c.b16 %v4518, %v4510
    %v7071 = vpack.c.b16 %v4519, %v4511
    %v7072 = vpack.c.b16 %v4528, %v4520
    %v7073 = vpack.c.b16 %v4529, %v4521
    %v7074 = vpack.c.b16 %v4530, %v4522
    %v7075 = vpack.c.b16 %v4531, %v4523
    %v7076 = vpack.c.b16 %v4532, %v4524
    %v7077 = vpack.c.b16 %v4533, %v4525
    %v7078 = vpack.c.b16 %v4534, %v4526
    %v7079 = vpack.c.b16 %v4535, %v4527
    %v7080 = vpack.c.b16 %v4544, %v4536
    %v7081 = vpack.c.b16 %v4545, %v4537
    %v7082 = vpack.c.b16 %v4546, %v4538
    %v7083 = vpack.c.b16 %v4547, %v4539
    %v7084 = vpack.c.b16 %v4548, %v4540
    %v7085 = vpack.c.b16 %v4549, %v4541
    %v7086 = vpack.c.b16 %v4550, %v4542
    %v7087 = vpack.c.b16 %v4551, %v4543
    %v7088 = vpack.c.b16 %v4560, %v4552
    %v7089 = vpack.c.b16 %v4561, %v4553
    %v7090 = vpack.c.b16 %v4562, %v4554
    %v7091 = vpack.c.b16 %v4563, %v4555
    %v7092 = vpack.c.b16 %v4564, %v4556
    %v7093 = vpack.c.b16 %v4565, %v4557
    %v7094 = vpack.c.b16 %v4566, %v4558
    %v7095 = vpack.c.b16 %v4567, %v4559
    %v7096 = vpack.c.b16 %v4576, %v4568
    %v7097 = vpack.c.b16 %v4577, %v4569
    %v7098 = vpack.c.b16 %v4578, %v4570
    %v7099 = vpack.c.b16 %v4579, %v4571
    %v7100 = vpack.c.b16 %v4580, %v4572
    %v7101 = vpack.c.b16 %v4581, %v4573
    %v7102 = vpack.c.b16 %v4582, %v4574
    %v7103 = vpack.c.b16 %v4583, %v4575
    %v7104 = vpack.c.b16 %v4592, %v4584
    %v7105 = vpack.c.b16 %v4593, %v4585
    %v7106 = vpack.c.b16 %v4594, %v4586
    %v7107 = vpack.c.b16 %v4595, %v4587
    %v7108 = vpack.c.b16 %v4596, %v4588
    %v7109 = vpack.c.b16 %v4597, %v4589
    %v7110 = vpack.c.b16 %v4598, %v4590
    %v7111 = vpack.c.b16 %v4599, %v4591
    %v7112 = vpack.c.b16 %v4608, %v4600
    %v7113 = vpack.c.b16 %v4609, %v4601
    %v7114 = vpack.c.b16 %v4610, %v4602
    %v7115 = vpack.c.b16 %v4611, %v4603
    %v7116 = vpack.c.b16 %v4612, %v4604
    %v7117 = vpack.c.b16 %v4613, %v4605
    %v7118 = vpack.c.b16 %v4614, %v4606
    %v7119 = vpack.c.b16 %v4615, %v4607
    %v7120 = vpack.c.b16 %v4624, %v4616
    %v7121 = vpack.c.b16 %v4625, %v4617
    %v7122 = vpack.c.b16 %v4626, %v4618
    %v7123 = vpack.c.b16 %v4627, %v4619
    %v7124 = vpack.c.b16 %v4628, %v4620
    %v7125 = vpack.c.b16 %v4629, %v4621
    %v7126 = vpack.c.b16 %v4630, %v4622
    %v7127 = vpack.c.b16 %v4631, %v4623
    %v7128 = vpack.c.b16 %v4640, %v4632
    %v7129 = vpack.c.b16 %v4641, %v4633
    %v7130 = vpack.c.b16 %v4642, %v4634
    %v7131 = vpack.c.b16 %v4643, %v4635
    %v7132 = vpack.c.b16 %v4644, %v4636
    %v7133 = vpack.c.b16 %v4645, %v4637
    %v7134 = vpack.c.b16 %v4646, %v4638
    %v7135 = vpack.c.b16 %v4647, %v4639
    %v7136 = vpack.c.b16 %v4656, %v4648
    %v7137 = vpack.c.b16 %v4657, %v4649
    %v7138 = vpack.c.b16 %v4658, %v4650
    %v7139 = vpack.c.b16 %v4659, %v4651
    %v7140 = vpack.c.b16 %v4660, %v4652
    %v7141 = vpack.c.b16 %v4661, %v4653
    %v7142 = vpack.c.b16 %v4662, %v4654
    %v7143 = vpack.c.b16 %v4663, %v4655
    %v7144 = vpack.c.b16 %v4672, %v4664
    %v7145 = vpack.c.b16 %v4673, %v4665
    %v7146 = vpack.c.b16 %v4674, %v4666
    %v7147 = vpack.c.b16 %v4675, %v4667
    %v7148 = vpack.c.b16 %v4676, %v4668
    %v7149 = vpack.c.b16 %v4677, %v4669
    %v7150 = vpack.c.b16 %v4678, %v4670
    %v7151 = vpack.c.b16 %v4679, %v4671
    %v7152 = vpack.c.b16 %v4688, %v4680
    %v7153 = vpack.c.b16 %v4689, %v4681
    %v7154 = vpack.c.b16 %v4690, %v4682
    %v7155 = vpack.c.b16 %v4691, %v4683
    %v7156 = vpack.c.b16 %v4692, %v4684
    %v7157 = vpack.c.b16 %v4693, %v4685
    %v7158 = vpack.c.b16 %v4694, %v4686
    %v7159 = vpack.c.b16 %v4695, %v4687
    %v7160 = vpack.c.b16 %v4704, %v4696
    %v7161 = vpack.c.b16 %v4705, %v4697
    %v7162 = vpack.c.b16 %v4706, %v4698
    %v7163 = vpack.c.b16 %v4707, %v4699
    %v7164 = vpack.c.b16 %v4708, %v4700
    %v7165 = vpack.c.b16 %v4709, %v4701
    %v7166 = vpack.c.b16 %v4710, %v4702
    %v7167 = vpack.c.b16 %v4711, %v4703
    %v7168 = vpack.c.b16 %v4720, %v4712
    %v7169 = vpack.c.b16 %v4721, %v4713
    %v7170 = vpack.c.b16 %v4722, %v4714
    %v7171 = vpack.c.b16 %v4723, %v4715
    %v7172 = vpack.c.b16 %v4724, %v4716
    %v7173 = vpack.c.b16 %v4725, %v4717
    %v7174 = vpack.c.b16 %v4726, %v4718
    %v7175 = vpack.c.b16 %v4727, %v4719
    %v7176 = vpack.c.b16 %v4736, %v4728
    %v7177 = vpack.c.b16 %v4737, %v4729
    %v7178 = vpack.c.b16 %v4738, %v4730
    %v7179 = vpack.c.b16 %v4739, %v4731
    %v7180 = vpack.c.b16 %v4740, %v4732
    %v7181 = vpack.c.b16 %v4741, %v4733
    %v7182 = vpack.c.b16 %v4742, %v4734
    %v7183 = vpack.c.b16 %v4743, %v4735
    %v7184 = vpack.c.b16 %v4752, %v4744
    %v7185 = vpack.c.b16 %v4753, %v4745
    %v7186 = vpack.c.b16 %v4754, %v4746
    %v7187 = vpack.c.b16 %v4755, %v4747
    %v7188 = vpack.c.b16 %v4756, %v4748
    %v7189 = vpack.c.b16 %v4757, %v4749
    %v7190 = vpack.c.b16 %v4758, %v4750
    %v7191 = vpack.c.b16 %v4759, %v4751
    %v7192 = vpack.c.b16 %v4768, %v4760
    %v7193 = vpack.c.b16 %v4769, %v4761
    %v7194 = vpack.c.b16 %v4770, %v4762
    %v7195 = vpack.c.b16 %v4771, %v4763
    %v7196 = vpack.c.b16 %v4772, %v4764
    %v7197 = vpack.c.b16 %v4773, %v4765
    %v7198 = vpack.c.b16 %v4774, %v4766
    %v7199 = vpack.c.b16 %v4775, %v4767
    %v7200 = vpack.c.b16 %v4784, %v4776
    %v7201 = vpack.c.b16 %v4785, %v4777
    %v7202 = vpack.c.b16 %v4786, %v4778
    %v7203 = vpack.c.b16 %v4787, %v4779
    %v7204 = vpack.c.b16 %v4788, %v4780
    %v7205 = vpack.c.b16 %v4789, %v4781
    %v7206 = vpack.c.b16 %v4790, %v4782
    %v7207 = vpack.c.b16 %v4791, %v4783
    %v7208 = vpack.c.b16 %v4800, %v4792
    %v7209 = vpack.c.b16 %v4801, %v4793
    %v7210 = vpack.c.b16 %v4802, %v4794
    %v7211 = vpack.c.b16 %v4803, %v4795
    %v7212 = vpack.c.b16 %v4804, %v4796
    %v7213 = vpack.c.b16 %v4805, %v4797
    %v7214 = vpack.c.b16 %v4806, %v4798
    %v7215 = vpack.c.b16 %v4807, %v4799
    %v7216 = vpack.c.b16 %v4816, %v4808
    %v7217 = vpack.c.b16 %v4817, %v4809
    %v7218 = vpack.c.b16 %v4818, %v4810
    %v7219 = vpack.c.b16 %v4819, %v4811
    %v7220 = vpack.c.b16 %v4820, %v4812
    %v7221 = vpack.c.b16 %v4821, %v4813
    %v7222 = vpack.c.b16 %v4822, %v4814
    %v7223 = vpack.c.b16 %v4823, %v4815
    %v7224 = vpack.c.b16 %v4832, %v4824
    %v7225 = vpack.c.b16 %v4833, %v4825
    %v7226 = vpack.c.b16 %v4834, %v4826
    %v7227 = vpack.c.b16 %v4835, %v4827
    %v7228 = vpack.c.b16 %v4836, %v4828
    %v7229 = vpack.c.b16 %v4837, %v4829
    %v7230 = vpack.c.b16 %v4838, %v4830
    %v7231 = vpack.c.b16 %v4839, %v4831
    %v7232 = vpack.c.b16 %v4848, %v4840
    %v7233 = vpack.c.b16 %v4849, %v4841
    %v7234 = vpack.c.b16 %v4850, %v4842
    %v7235 = vpack.c.b16 %v4851, %v4843
    %v7236 = vpack.c.b16 %v4852, %v4844
    %v7237 = vpack.c.b16 %v4853, %v4845
    %v7238 = vpack.c.b16 %v4854, %v4846
    %v7239 = vpack.c.b16 %v4855, %v4847
    %v7240 = vpack.c.b16 %v4864, %v4856
    %v7241 = vpack.c.b16 %v4865, %v4857
    %v7242 = vpack.c.b16 %v4866, %v4858
    %v7243 = vpack.c.b16 %v4867, %v4859
    %v7244 = vpack.c.b16 %v4868, %v4860
    %v7245 = vpack.c.b16 %v4869, %v4861
    %v7246 = vpack.c.b16 %v4870, %v4862
    %v7247 = vpack.c.b16 %v4871, %v4863
    %v7248 = vpack.c.b16 %v4880, %v4872
    %v7249 = vpack.c.b16 %v4881, %v4873
    %v7250 = vpack.c.b16 %v4882, %v4874
    %v7251 = vpack.c.b16 %v4883, %v4875
    %v7252 = vpack.c.b16 %v4884, %v4876
    %v7253 = vpack.c.b16 %v4885, %v4877
    %v7254 = vpack.c.b16 %v4886, %v4878
    %v7255 = vpack.c.b16 %v4887, %v4879
    %v7256 = vpack.c.b16 %v4896, %v4888
    %v7257 = vpack.c.b16 %v4897, %v4889
    %v7258 = vpack.c.b16 %v4898, %v4890
    %v7259 = vpack.c.b16 %v4899, %v4891
    %v7260 = vpack.c.b16 %v4900, %v4892
    %v7261 = vpack.c.b16 %v4901, %v4893
    %v7262 = vpack.c.b16 %v4902, %v4894
    %v7263 = vpack.c.b16 %v4903, %v4895
    %v7264 = vpack.c.b16 %v4912, %v4904
    %v7265 = vpack.c.b16 %v4913, %v4905
    %v7266 = vpack.c.b16 %v4914, %v4906
    %v7267 = vpack.c.b16 %v4915, %v4907
    %v7268 = vpack.c.b16 %v4916, %v4908
    %v7269 = vpack.c.b16 %v4917, %v4909
    %v7270 = vpack.c.b16 %v4918, %v4910
    %v7271 = vpack.c.b16 %v4919, %v4911
    %v7272 = vpack.c.b16 %v4928, %v4920
    %v7273 = vpack.c.b16 %v4929, %v4921
    %v7274 = vpack.c.b16 %v4930, %v4922
    %v7275 = vpack.c.b16 %v4931, %v4923
    %v7276 = vpack.c.b16 %v4932, %v4924
    %v7277 = vpack.c.b16 %v4933, %v4925
    %v7278 = vpack.c.b16 %v4934, %v4926
    %v7279 = vpack.c.b16 %v4935, %v4927
    %v7280 = vpack.c.b16 %v4944, %v4936
    %v7281 = vpack.c.b16 %v4945, %v4937
    %v7282 = vpack.c.b16 %v4946, %v4938
    %v7283 = vpack.c.b16 %v4947, %v4939
    %v7284 = vpack.c.b16 %v4948, %v4940
    %v7285 = vpack.c.b16 %v4949, %v4941
    %v7286 = vpack.c.b16 %v4950, %v4942
    %v7287 = vpack.c.b16 %v4951, %v4943
    %v7288 = vpack.c.b16 %v4960, %v4952
    %v7289 = vpack.c.b16 %v4961, %v4953
    %v7290 = vpack.c.b16 %v4962, %v4954
    %v7291 = vpack.c.b16 %v4963, %v4955
    %v7292 = vpack.c.b16 %v4964, %v4956
    %v7293 = vpack.c.b16 %v4965, %v4957
    %v7294 = vpack.c.b16 %v4966, %v4958
    %v7295 = vpack.c.b16 %v4967, %v4959
    %v7296 = vpack.c.b16 %v4976, %v4968
    %v7297 = vpack.c.b16 %v4977, %v4969
    %v7298 = vpack.c.b16 %v4978, %v4970
    %v7299 = vpack.c.b16 %v4979, %v4971
    %v7300 = vpack.c.b16 %v4980, %v4972
    %v7301 = vpack.c.b16 %v4981, %v4973
    %v7302 = vpack.c.b16 %v4982, %v4974
    %v7303 = vpack.c.b16 %v4983, %v4975
    %v7304 = vpack.c.b16 %v4992, %v4984
    %v7305 = vpack.c.b16 %v4993, %v4985
    %v7306 = vpack.c.b16 %v4994, %v4986
    %v7307 = vpack.c.b16 %v4995, %v4987
    %v7308 = vpack.c.b16 %v4996, %v4988
    %v7309 = vpack.c.b16 %v4997, %v4989
    %v7310 = vpack.c.b16 %v4998, %v4990
    %v7311 = vpack.c.b16 %v4999, %v4991
    %v7312 = vpack.c.b16 %v5008, %v5000
    %v7313 = vpack.c.b16 %v5009, %v5001
    %v7314 = vpack.c.b16 %v5010, %v5002
    %v7315 = vpack.c.b16 %v5011, %v5003
    %v7316 = vpack.c.b16 %v5012, %v5004
    %v7317 = vpack.c.b16 %v5013, %v5005
    %v7318 = vpack.c.b16 %v5014, %v5006
    %v7319 = vpack.c.b16 %v5015, %v5007
    %v7320 = vpack.c.b16 %v5024, %v5016
    %v7321 = vpack.c.b16 %v5025, %v5017
    %v7322 = vpack.c.b16 %v5026, %v5018
    %v7323 = vpack.c.b16 %v5027, %v5019
    %v7324 = vpack.c.b16 %v5028, %v5020
    %v7325 = vpack.c.b16 %v5029, %v5021
    %v7326 = vpack.c.b16 %v5030, %v5022
    %v7327 = vpack.c.b16 %v5031, %v5023
    %v7328 = vpack.c.b16 %v5040, %v5032
    %v7329 = vpack.c.b16 %v5041, %v5033
    %v7330 = vpack.c.b16 %v5042, %v5034
    %v7331 = vpack.c.b16 %v5043, %v5035
    %v7332 = vpack.c.b16 %v5044, %v5036
    %v7333 = vpack.c.b16 %v5045, %v5037
    %v7334 = vpack.c.b16 %v5046, %v5038
    %v7335 = vpack.c.b16 %v5047, %v5039
    %v7336 = vpack.c.b16 %v5056, %v5048
    %v7337 = vpack.c.b16 %v5057, %v5049
    %v7338 = vpack.c.b16 %v5058, %v5050
    %v7339 = vpack.c.b16 %v5059, %v5051
    %v7340 = vpack.c.b16 %v5060, %v5052
    %v7341 = vpack.c.b16 %v5061, %v5053
    %v7342 = vpack.c.b16 %v5062, %v5054
    %v7343 = vpack.c.b16 %v5063, %v5055
    %v7344 = vpack.c.b16 %v5072, %v5064
    %v7345 = vpack.c.b16 %v5073, %v5065
    %v7346 = vpack.c.b16 %v5074, %v5066
    %v7347 = vpack.c.b16 %v5075, %v5067
    %v7348 = vpack.c.b16 %v5076, %v5068
    %v7349 = vpack.c.b16 %v5077, %v5069
    %v7350 = vpack.c.b16 %v5078, %v5070
    %v7351 = vpack.c.b16 %v5079, %v5071
    %v7352 = vpack.c.b16 %v5088, %v5080
    %v7353 = vpack.c.b16 %v5089, %v5081
    %v7354 = vpack.c.b16 %v5090, %v5082
    %v7355 = vpack.c.b16 %v5091, %v5083
    %v7356 = vpack.c.b16 %v5092, %v5084
    %v7357 = vpack.c.b16 %v5093, %v5085
    %v7358 = vpack.c.b16 %v5094, %v5086
    %v7359 = vpack.c.b16 %v5095, %v5087
    %v7360 = vpack.c.b16 %v5104, %v5096
    %v7361 = vpack.c.b16 %v5105, %v5097
    %v7362 = vpack.c.b16 %v5106, %v5098
    %v7363 = vpack.c.b16 %v5107, %v5099
    %v7364 = vpack.c.b16 %v5108, %v5100
    %v7365 = vpack.c.b16 %v5109, %v5101
    %v7366 = vpack.c.b16 %v5110, %v5102
    %v7367 = vpack.c.b16 %v5111, %v5103
    %v7368 = vpack.c.b16 %v5120, %v5112
    %v7369 = vpack.c.b16 %v5121, %v5113
    %v7370 = vpack.c.b16 %v5122, %v5114
    %v7371 = vpack.c.b16 %v5123, %v5115
    %v7372 = vpack.c.b16 %v5124, %v5116
    %v7373 = vpack.c.b16 %v5125, %v5117
    %v7374 = vpack.c.b16 %v5126, %v5118
    %v7375 = vpack.c.b16 %v5127, %v5119
    %v7376 = vpack.c.b16 %v5136, %v5128
    %v7377 = vpack.c.b16 %v5137, %v5129
    %v7378 = vpack.c.b16 %v5138, %v5130
    %v7379 = vpack.c.b16 %v5139, %v5131
    %v7380 = vpack.c.b16 %v5140, %v5132
    %v7381 = vpack.c.b16 %v5141, %v5133
    %v7382 = vpack.c.b16 %v5142, %v5134
    %v7383 = vpack.c.b16 %v5143, %v5135
    %v7384 = vpack.c.b16 %v5152, %v5144
    %v7385 = vpack.c.b16 %v5153, %v5145
    %v7386 = vpack.c.b16 %v5154, %v5146
    %v7387 = vpack.c.b16 %v5155, %v5147
    %v7388 = vpack.c.b16 %v5156, %v5148
    %v7389 = vpack.c.b16 %v5157, %v5149
    %v7390 = vpack.c.b16 %v5158, %v5150
    %v7391 = vpack.c.b16 %v5159, %v5151
    %v7392 = vpack.c.b16 %v5168, %v5160
    %v7393 = vpack.c.b16 %v5169, %v5161
    %v7394 = vpack.c.b16 %v5170, %v5162
    %v7395 = vpack.c.b16 %v5171, %v5163
    %v7396 = vpack.c.b16 %v5172, %v5164
    %v7397 = vpack.c.b16 %v5173, %v5165
    %v7398 = vpack.c.b16 %v5174, %v5166
    %v7399 = vpack.c.b16 %v5175, %v5167
    %v7400 = vpack.c.b16 %v5184, %v5176
    %v7401 = vpack.c.b16 %v5185, %v5177
    %v7402 = vpack.c.b16 %v5186, %v5178
    %v7403 = vpack.c.b16 %v5187, %v5179
    %v7404 = vpack.c.b16 %v5188, %v5180
    %v7405 = vpack.c.b16 %v5189, %v5181
    %v7406 = vpack.c.b16 %v5190, %v5182
    %v7407 = vpack.c.b16 %v5191, %v5183
    %v7408 = vpack.c.b16 %v5200, %v5192
    %v7409 = vpack.c.b16 %v5201, %v5193
    %v7410 = vpack.c.b16 %v5202, %v5194
    %v7411 = vpack.c.b16 %v5203, %v5195
    %v7412 = vpack.c.b16 %v5204, %v5196
    %v7413 = vpack.c.b16 %v5205, %v5197
    %v7414 = vpack.c.b16 %v5206, %v5198
    %v7415 = vpack.c.b16 %v5207, %v5199
    %v7416 = vpack.c.b16 %v5216, %v5208
    %v7417 = vpack.c.b16 %v5217, %v5209
    %v7418 = vpack.c.b16 %v5218, %v5210
    %v7419 = vpack.c.b16 %v5219, %v5211
    %v7420 = vpack.c.b16 %v5220, %v5212
    %v7421 = vpack.c.b16 %v5221, %v5213
    %v7422 = vpack.c.b16 %v5222, %v5214
    %v7423 = vpack.c.b16 %v5223, %v5215
    %v7424 = vpack.c.b16 %v5232, %v5224
    %v7425 = vpack.c.b16 %v5233, %v5225
    %v7426 = vpack.c.b16 %v5234, %v5226
    %v7427 = vpack.c.b16 %v5235, %v5227
    %v7428 = vpack.c.b16 %v5236, %v5228
    %v7429 = vpack.c.b16 %v5237, %v5229
    %v7430 = vpack.c.b16 %v5238, %v5230
    %v7431 = vpack.c.b16 %v5239, %v5231
    %v7432 = vpack.c.b16 %v5248, %v5240
    %v7433 = vpack.c.b16 %v5249, %v5241
    %v7434 = vpack.c.b16 %v5250, %v5242
    %v7435 = vpack.c.b16 %v5251, %v5243
    %v7436 = vpack.c.b16 %v5252, %v5244
    %v7437 = vpack.c.b16 %v5253, %v5245
    %v7438 = vpack.c.b16 %v5254, %v5246
    %v7439 = vpack.c.b16 %v5255, %v5247
    %v7440 = vpack.c.b16 %v5264, %v5256
    %v7441 = vpack.c.b16 %v5265, %v5257
    %v7442 = vpack.c.b16 %v5266, %v5258
    %v7443 = vpack.c.b16 %v5267, %v5259
    %v7444 = vpack.c.b16 %v5268, %v5260
    %v7445 = vpack.c.b16 %v5269, %v5261
    %v7446 = vpack.c.b16 %v5270, %v5262
    %v7447 = vpack.c.b16 %v5271, %v5263
    %v7448 = vpack.c.b16 %v5280, %v5272
    %v7449 = vpack.c.b16 %v5281, %v5273
    %v7450 = vpack.c.b16 %v5282, %v5274
    %v7451 = vpack.c.b16 %v5283, %v5275
    %v7452 = vpack.c.b16 %v5284, %v5276
    %v7453 = vpack.c.b16 %v5285, %v5277
    %v7454 = vpack.c.b16 %v5286, %v5278
    %v7455 = vpack.c.b16 %v5287, %v5279
    %v7456 = vpack.c.b16 %v5296, %v5288
    %v7457 = vpack.c.b16 %v5297, %v5289
    %v7458 = vpack.c.b16 %v5298, %v5290
    %v7459 = vpack.c.b16 %v5299, %v5291
    %v7460 = vpack.c.b16 %v5300, %v5292
    %v7461 = vpack.c.b16 %v5301, %v5293
    %v7462 = vpack.c.b16 %v5302, %v5294
    %v7463 = vpack.c.b16 %v5303, %v5295
    %v7464 = vpack.c.b16 %v5312, %v5304
    %v7465 = vpack.c.b16 %v5313, %v5305
    %v7466 = vpack.c.b16 %v5314, %v5306
    %v7467 = vpack.c.b16 %v5315, %v5307
    %v7468 = vpack.c.b16 %v5316, %v5308
    %v7469 = vpack.c.b16 %v5317, %v5309
    %v7470 = vpack.c.b16 %v5318, %v5310
    %v7471 = vpack.c.b16 %v5319, %v5311
    %v7472 = vpack.c.b16 %v5328, %v5320
    %v7473 = vpack.c.b16 %v5329, %v5321
    %v7474 = vpack.c.b16 %v5330, %v5322
    %v7475 = vpack.c.b16 %v5331, %v5323
    %v7476 = vpack.c.b16 %v5332, %v5324
    %v7477 = vpack.c.b16 %v5333, %v5325
    %v7478 = vpack.c.b16 %v5334, %v5326
    %v7479 = vpack.c.b16 %v5335, %v5327
    %v7480 = vpack.c.b16 %v5344, %v5336
    %v7481 = vpack.c.b16 %v5345, %v5337
    %v7482 = vpack.c.b16 %v5346, %v5338
    %v7483 = vpack.c.b16 %v5347, %v5339
    %v7484 = vpack.c.b16 %v5348, %v5340
    %v7485 = vpack.c.b16 %v5349, %v5341
    %v7486 = vpack.c.b16 %v5350, %v5342
    %v7487 = vpack.c.b16 %v5351, %v5343
    %v7488 = vpack.c.b16 %v5360, %v5352
    %v7489 = vpack.c.b16 %v5361, %v5353
    %v7490 = vpack.c.b16 %v5362, %v5354
    %v7491 = vpack.c.b16 %v5363, %v5355
    %v7492 = vpack.c.b16 %v5364, %v5356
    %v7493 = vpack.c.b16 %v5365, %v5357
    %v7494 = vpack.c.b16 %v5366, %v5358
    %v7495 = vpack.c.b16 %v5367, %v5359
    %v7496 = vpack.c.b16 %v5376, %v5368
    %v7497 = vpack.c.b16 %v5377, %v5369
    %v7498 = vpack.c.b16 %v5378, %v5370
    %v7499 = vpack.c.b16 %v5379, %v5371
    %v7500 = vpack.c.b16 %v5380, %v5372
    %v7501 = vpack.c.b16 %v5381, %v5373
    %v7502 = vpack.c.b16 %v5382, %v5374
    %v7503 = vpack.c.b16 %v5383, %v5375
    %v7504 = vpack.c.b16 %v5392, %v5384
    %v7505 = vpack.c.b16 %v5393, %v5385
    %v7506 = vpack.c.b16 %v5394, %v5386
    %v7507 = vpack.c.b16 %v5395, %v5387
    %v7508 = vpack.c.b16 %v5396, %v5388
    %v7509 = vpack.c.b16 %v5397, %v5389
    %v7510 = vpack.c.b16 %v5398, %v5390
    %v7511 = vpack.c.b16 %v5399, %v5391
    %v7512 = vpack.c.b16 %v5408, %v5400
    %v7513 = vpack.c.b16 %v5409, %v5401
    %v7514 = vpack.c.b16 %v5410, %v5402
    %v7515 = vpack.c.b16 %v5411, %v5403
    %v7516 = vpack.c.b16 %v5412, %v5404
    %v7517 = vpack.c.b16 %v5413, %v5405
    %v7518 = vpack.c.b16 %v5414, %v5406
    %v7519 = vpack.c.b16 %v5415, %v5407
    %v7520 = vpack.c.b16 %v5424, %v5416
    %v7521 = vpack.c.b16 %v5425, %v5417
    %v7522 = vpack.c.b16 %v5426, %v5418
    %v7523 = vpack.c.b16 %v5427, %v5419
    %v7524 = vpack.c.b16 %v5428, %v5420
    %v7525 = vpack.c.b16 %v5429, %v5421
    %v7526 = vpack.c.b16 %v5430, %v5422
    %v7527 = vpack.c.b16 %v5431, %v5423
    %v7528 = vpack.c.b16 %v5440, %v5432
    %v7529 = vpack.c.b16 %v5441, %v5433
    %v7530 = vpack.c.b16 %v5442, %v5434
    %v7531 = vpack.c.b16 %v5443, %v5435
    %v7532 = vpack.c.b16 %v5444, %v5436
    %v7533 = vpack.c.b16 %v5445, %v5437
    %v7534 = vpack.c.b16 %v5446, %v5438
    %v7535 = vpack.c.b16 %v5447, %v5439
    %v7536 = vpack.c.b16 %v5456, %v5448
    %v7537 = vpack.c.b16 %v5457, %v5449
    %v7538 = vpack.c.b16 %v5458, %v5450
    %v7539 = vpack.c.b16 %v5459, %v5451
    %v7540 = vpack.c.b16 %v5460, %v5452
    %v7541 = vpack.c.b16 %v5461, %v5453
    %v7542 = vpack.c.b16 %v5462, %v5454
    %v7543 = vpack.c.b16 %v5463, %v5455
    %v7544 = vpack.c.b16 %v5472, %v5464
    %v7545 = vpack.c.b16 %v5473, %v5465
    %v7546 = vpack.c.b16 %v5474, %v5466
    %v7547 = vpack.c.b16 %v5475, %v5467
    %v7548 = vpack.c.b16 %v5476, %v5468
    %v7549 = vpack.c.b16 %v5477, %v5469
    %v7550 = vpack.c.b16 %v5478, %v5470
    %v7551 = vpack.c.b16 %v5479, %v5471
    %v7552 = vpack.c.b16 %v5488, %v5480
    %v7553 = vpack.c.b16 %v5489, %v5481
    %v7554 = vpack.c.b16 %v5490, %v5482
    %v7555 = vpack.c.b16 %v5491, %v5483
    %v7556 = vpack.c.b16 %v5492, %v5484
    %v7557 = vpack.c.b16 %v5493, %v5485
    %v7558 = vpack.c.b16 %v5494, %v5486
    %v7559 = vpack.c.b16 %v5495, %v5487
    %v7560 = vpack.c.b16 %v5504, %v5496
    %v7561 = vpack.c.b16 %v5505, %v5497
    %v7562 = vpack.c.b16 %v5506, %v5498
    %v7563 = vpack.c.b16 %v5507, %v5499
    %v7564 = vpack.c.b16 %v5508, %v5500
    %v7565 = vpack.c.b16 %v5509, %v5501
    %v7566 = vpack.c.b16 %v5510, %v5502
    %v7567 = vpack.c.b16 %v5511, %v5503
    %v7568 = vpack.c.b16 %v5520, %v5512
    %v7569 = vpack.c.b16 %v5521, %v5513
    %v7570 = vpack.c.b16 %v5522, %v5514
    %v7571 = vpack.c.b16 %v5523, %v5515
    %v7572 = vpack.c.b16 %v5524, %v5516
    %v7573 = vpack.c.b16 %v5525, %v5517
    %v7574 = vpack.c.b16 %v5526, %v5518
    %v7575 = vpack.c.b16 %v5527, %v5519
    %v7576 = vpack.c.b16 %v5536, %v5528
    %v7577 = vpack.c.b16 %v5537, %v5529
    %v7578 = vpack.c.b16 %v5538, %v5530
    %v7579 = vpack.c.b16 %v5539, %v5531
    %v7580 = vpack.c.b16 %v5540, %v5532
    %v7581 = vpack.c.b16 %v5541, %v5533
    %v7582 = vpack.c.b16 %v5542, %v5534
    %v7583 = vpack.c.b16 %v5543, %v5535
    %v7584 = vpack.c.b16 %v5552, %v5544
    %v7585 = vpack.c.b16 %v5553, %v5545
    %v7586 = vpack.c.b16 %v5554, %v5546
    %v7587 = vpack.c.b16 %v5555, %v5547
    %v7588 = vpack.c.b16 %v5556, %v5548
    %v7589 = vpack.c.b16 %v5557, %v5549
    %v7590 = vpack.c.b16 %v5558, %v5550
    %v7591 = vpack.c.b16 %v5559, %v5551
    %v7592 = vpack.c.b16 %v5568, %v5560
    %v7593 = vpack.c.b16 %v5569, %v5561
    %v7594 = vpack.c.b16 %v5570, %v5562
    %v7595 = vpack.c.b16 %v5571, %v5563
    %v7596 = vpack.c.b16 %v5572, %v5564
    %v7597 = vpack.c.b16 %v5573, %v5565
    %v7598 = vpack.c.b16 %v5574, %v5566
    %v7599 = vpack.c.b16 %v5575, %v5567
    %v7600 = vpack.c.b16 %v5584, %v5576
    %v7601 = vpack.c.b16 %v5585, %v5577
    %v7602 = vpack.c.b16 %v5586, %v5578
    %v7603 = vpack.c.b16 %v5587, %v5579
    %v7604 = vpack.c.b16 %v5588, %v5580
    %v7605 = vpack.c.b16 %v5589, %v5581
    %v7606 = vpack.c.b16 %v5590, %v5582
    %v7607 = vpack.c.b16 %v5591, %v5583
    %v7608 = vpack.c.b16 %v5600, %v5592
    %v7609 = vpack.c.b16 %v5601, %v5593
    %v7610 = vpack.c.b16 %v5602, %v5594
    %v7611 = vpack.c.b16 %v5603, %v5595
    %v7612 = vpack.c.b16 %v5604, %v5596
    %v7613 = vpack.c.b16 %v5605, %v5597
    %v7614 = vpack.c.b16 %v5606, %v5598
    %v7615 = vpack.c.b16 %v5607, %v5599
    %v7616 = vpack.c.b16 %v5616, %v5608
    %v7617 = vpack.c.b16 %v5617, %v5609
    %v7618 = vpack.c.b16 %v5618, %v5610
    %v7619 = vpack.c.b16 %v5619, %v5611
    %v7620 = vpack.c.b16 %v5620, %v5612
    %v7621 = vpack.c.b16 %v5621, %v5613
    %v7622 = vpack.c.b16 %v5622, %v5614
    %v7623 = vpack.c.b16 %v5623, %v5615
    %v7624 = vpack.c.b16 %v5632, %v5624
    %v7625 = vpack.c.b16 %v5633, %v5625
    %v7626 = vpack.c.b16 %v5634, %v5626
    %v7627 = vpack.c.b16 %v5635, %v5627
    %v7628 = vpack.c.b16 %v5636, %v5628
    %v7629 = vpack.c.b16 %v5637, %v5629
    %v7630 = vpack.c.b16 %v5638, %v5630
    %v7631 = vpack.c.b16 %v5639, %v5631
    %v7632 = vpack.c.b16 %v5648, %v5640
    %v7633 = vpack.c.b16 %v5649, %v5641
    %v7634 = vpack.c.b16 %v5650, %v5642
    %v7635 = vpack.c.b16 %v5651, %v5643
    %v7636 = vpack.c.b16 %v5652, %v5644
    %v7637 = vpack.c.b16 %v5653, %v5645
    %v7638 = vpack.c.b16 %v5654, %v5646
    %v7639 = vpack.c.b16 %v5655, %v5647
    %v7640 = vpack.c.b16 %v5664, %v5656
    %v7641 = vpack.c.b16 %v5665, %v5657
    %v7642 = vpack.c.b16 %v5666, %v5658
    %v7643 = vpack.c.b16 %v5667, %v5659
    %v7644 = vpack.c.b16 %v5668, %v5660
    %v7645 = vpack.c.b16 %v5669, %v5661
    %v7646 = vpack.c.b16 %v5670, %v5662
    %v7647 = vpack.c.b16 %v5671, %v5663
    %v7648 = vpack.c.b16 %v5680, %v5672
    %v7649 = vpack.c.b16 %v5681, %v5673
    %v7650 = vpack.c.b16 %v5682, %v5674
    %v7651 = vpack.c.b16 %v5683, %v5675
    %v7652 = vpack.c.b16 %v5684, %v5676
    %v7653 = vpack.c.b16 %v5685, %v5677
    %v7654 = vpack.c.b16 %v5686, %v5678
    %v7655 = vpack.c.b16 %v5687, %v5679
    %v7656 = vpack.c.b16 %v5696, %v5688
    %v7657 = vpack.c.b16 %v5697, %v5689
    %v7658 = vpack.c.b16 %v5698, %v5690
    %v7659 = vpack.c.b16 %v5699, %v5691
    %v7660 = vpack.c.b16 %v5700, %v5692
    %v7661 = vpack.c.b16 %v5701, %v5693
    %v7662 = vpack.c.b16 %v5702, %v5694
    %v7663 = vpack.c.b16 %v5703, %v5695
    %v7664 = vpack.c.b16 %v5712, %v5704
    %v7665 = vpack.c.b16 %v5713, %v5705
    %v7666 = vpack.c.b16 %v5714, %v5706
    %v7667 = vpack.c.b16 %v5715, %v5707
    %v7668 = vpack.c.b16 %v5716, %v5708
    %v7669 = vpack.c.b16 %v5717, %v5709
    %v7670 = vpack.c.b16 %v5718, %v5710
    %v7671 = vpack.c.b16 %v5719, %v5711
    %v7672 = vpack.c.b16 %v5728, %v5720
    %v7673 = vpack.c.b16 %v5729, %v5721
    %v7674 = vpack.c.b16 %v5730, %v5722
    %v7675 = vpack.c.b16 %v5731, %v5723
    %v7676 = vpack.c.b16 %v5732, %v5724
    %v7677 = vpack.c.b16 %v5733, %v5725
    %v7678 = vpack.c.b16 %v5734, %v5726
    %v7679 = vpack.c.b16 %v5735, %v5727
    %v7680 = vpack.c.b16 %v5744, %v5736
    %v7681 = vpack.c.b16 %v5745, %v5737
    %v7682 = vpack.c.b16 %v5746, %v5738
    %v7683 = vpack.c.b16 %v5747, %v5739
    %v7684 = vpack.c.b16 %v5748, %v5740
    %v7685 = vpack.c.b16 %v5749, %v5741
    %v7686 = vpack.c.b16 %v5750, %v5742
    %v7687 = vpack.c.b16 %v5751, %v5743
    %v7688 = vpack.c.b16 %v5760, %v5752
    %v7689 = vpack.c.b16 %v5761, %v5753
    %v7690 = vpack.c.b16 %v5762, %v5754
    %v7691 = vpack.c.b16 %v5763, %v5755
    %v7692 = vpack.c.b16 %v5764, %v5756
    %v7693 = vpack.c.b16 %v5765, %v5757
    %v7694 = vpack.c.b16 %v5766, %v5758
    %v7695 = vpack.c.b16 %v5767, %v5759
    %v7696 = vpack.c.b16 %v5776, %v5768
    %v7697 = vpack.c.b16 %v5777, %v5769
    %v7698 = vpack.c.b16 %v5778, %v5770
    %v7699 = vpack.c.b16 %v5779, %v5771
    %v7700 = vpack.c.b16 %v5780, %v5772
    %v7701 = vpack.c.b16 %v5781, %v5773
    %v7702 = vpack.c.b16 %v5782, %v5774
    %v7703 = vpack.c.b16 %v5783, %v5775
    %v7704 = vpack.c.b16 %v5792, %v5784
    %v7705 = vpack.c.b16 %v5793, %v5785
    %v7706 = vpack.c.b16 %v5794, %v5786
    %v7707 = vpack.c.b16 %v5795, %v5787
    %v7708 = vpack.c.b16 %v5796, %v5788
    %v7709 = vpack.c.b16 %v5797, %v5789
    %v7710 = vpack.c.b16 %v5798, %v5790
    %v7711 = vpack.c.b16 %v5799, %v5791
    %v7712 = vpack.c.b16 %v5808, %v5800
    %v7713 = vpack.c.b16 %v5809, %v5801
    %v7714 = vpack.c.b16 %v5810, %v5802
    %v7715 = vpack.c.b16 %v5811, %v5803
    %v7716 = vpack.c.b16 %v5812, %v5804
    %v7717 = vpack.c.b16 %v5813, %v5805
    %v7718 = vpack.c.b16 %v5814, %v5806
    %v7719 = vpack.c.b16 %v5815, %v5807
    %v7720 = vpack.c.b16 %v5824, %v5816
    %v7721 = vpack.c.b16 %v5825, %v5817
    %v7722 = vpack.c.b16 %v5826, %v5818
    %v7723 = vpack.c.b16 %v5827, %v5819
    %v7724 = vpack.c.b16 %v5828, %v5820
    %v7725 = vpack.c.b16 %v5829, %v5821
    %v7726 = vpack.c.b16 %v5830, %v5822
    %v7727 = vpack.c.b16 %v5831, %v5823
    %v7728 = vpack.c.b16 %v5840, %v5832
    %v7729 = vpack.c.b16 %v5841, %v5833
    %v7730 = vpack.c.b16 %v5842, %v5834
    %v7731 = vpack.c.b16 %v5843, %v5835
    %v7732 = vpack.c.b16 %v5844, %v5836
    %v7733 = vpack.c.b16 %v5845, %v5837
    %v7734 = vpack.c.b16 %v5846, %v5838
    %v7735 = vpack.c.b16 %v5847, %v5839
    %v7736 = vpack.c.b16 %v5856, %v5848
    %v7737 = vpack.c.b16 %v5857, %v5849
    %v7738 = vpack.c.b16 %v5858, %v5850
    %v7739 = vpack.c.b16 %v5859, %v5851
    %v7740 = vpack.c.b16 %v5860, %v5852
    %v7741 = vpack.c.b16 %v5861, %v5853
    %v7742 = vpack.c.b16 %v5862, %v5854
    %v7743 = vpack.c.b16 %v5863, %v5855
    %v7744 = vpack.c.b16 %v5872, %v5864
    %v7745 = vpack.c.b16 %v5873, %v5865
    %v7746 = vpack.c.b16 %v5874, %v5866
    %v7747 = vpack.c.b16 %v5875, %v5867
    %v7748 = vpack.c.b16 %v5876, %v5868
    %v7749 = vpack.c.b16 %v5877, %v5869
    %v7750 = vpack.c.b16 %v5878, %v5870
    %v7751 = vpack.c.b16 %v5879, %v5871
    %v7752 = vpack.c.b16 %v5888, %v5880
    %v7753 = vpack.c.b16 %v5889, %v5881
    %v7754 = vpack.c.b16 %v5890, %v5882
    %v7755 = vpack.c.b16 %v5891, %v5883
    %v7756 = vpack.c.b16 %v5892, %v5884
    %v7757 = vpack.c.b16 %v5893, %v5885
    %v7758 = vpack.c.b16 %v5894, %v5886
    %v7759 = vpack.c.b16 %v5895, %v5887
    %v7760 = vpack.c.b16 %v5904, %v5896
    %v7761 = vpack.c.b16 %v5905, %v5897
    %v7762 = vpack.c.b16 %v5906, %v5898
    %v7763 = vpack.c.b16 %v5907, %v5899
    %v7764 = vpack.c.b16 %v5908, %v5900
    %v7765 = vpack.c.b16 %v5909, %v5901
    %v7766 = vpack.c.b16 %v5910, %v5902
    %v7767 = vpack.c.b16 %v5911, %v5903
    %v7768 = vpack.c.b16 %v5920, %v5912
    %v7769 = vpack.c.b16 %v5921, %v5913
    %v7770 = vpack.c.b16 %v5922, %v5914
    %v7771 = vpack.c.b16 %v5923, %v5915
    %v7772 = vpack.c.b16 %v5924, %v5916
    %v7773 = vpack.c.b16 %v5925, %v5917
    %v7774 = vpack.c.b16 %v5926, %v5918
    %v7775 = vpack.c.b16 %v5927, %v5919
    %v7776 = vpack.c.b16 %v5936, %v5928
    %v7777 = vpack.c.b16 %v5937, %v5929
    %v7778 = vpack.c.b16 %v5938, %v5930
    %v7779 = vpack.c.b16 %v5939, %v5931
    %v7780 = vpack.c.b16 %v5940, %v5932
    %v7781 = vpack.c.b16 %v5941, %v5933
    %v7782 = vpack.c.b16 %v5942, %v5934
    %v7783 = vpack.c.b16 %v5943, %v5935
    %v7784 = vpack.c.b16 %v5952, %v5944
    %v7785 = vpack.c.b16 %v5953, %v5945
    %v7786 = vpack.c.b16 %v5954, %v5946
    %v7787 = vpack.c.b16 %v5955, %v5947
    %v7788 = vpack.c.b16 %v5956, %v5948
    %v7789 = vpack.c.b16 %v5957, %v5949
    %v7790 = vpack.c.b16 %v5958, %v5950
    %v7791 = vpack.c.b16 %v5959, %v5951
    %v7792 = vpack.c.b16 %v5968, %v5960
    %v7793 = vpack.c.b16 %v5969, %v5961
    %v7794 = vpack.c.b16 %v5970, %v5962
    %v7795 = vpack.c.b16 %v5971, %v5963
    %v7796 = vpack.c.b16 %v5972, %v5964
    %v7797 = vpack.c.b16 %v5973, %v5965
    %v7798 = vpack.c.b16 %v5974, %v5966
    %v7799 = vpack.c.b16 %v5975, %v5967
    %v7800 = vpack.c.b16 %v5984, %v5976
    %v7801 = vpack.c.b16 %v5985, %v5977
    %v7802 = vpack.c.b16 %v5986, %v5978
    %v7803 = vpack.c.b16 %v5987, %v5979
    %v7804 = vpack.c.b16 %v5988, %v5980
    %v7805 = vpack.c.b16 %v5989, %v5981
    %v7806 = vpack.c.b16 %v5990, %v5982
    %v7807 = vpack.c.b16 %v5991, %v5983
    %v7808 = vpack.c.b16 %v6000, %v5992
    %v7809 = vpack.c.b16 %v6001, %v5993
    %v7810 = vpack.c.b16 %v6002, %v5994
    %v7811 = vpack.c.b16 %v6003, %v5995
    %v7812 = vpack.c.b16 %v6004, %v5996
    %v7813 = vpack.c.b16 %v6005, %v5997
    %v7814 = vpack.c.b16 %v6006, %v5998
    %v7815 = vpack.c.b16 %v6007, %v5999
    %v7816 = vpack.c.b16 %v6016, %v6008
    %v7817 = vpack.c.b16 %v6017, %v6009
    %v7818 = vpack.c.b16 %v6018, %v6010
    %v7819 = vpack.c.b16 %v6019, %v6011
    %v7820 = vpack.c.b16 %v6020, %v6012
    %v7821 = vpack.c.b16 %v6021, %v6013
    %v7822 = vpack.c.b16 %v6022, %v6014
    %v7823 = vpack.c.b16 %v6023, %v6015
    %v7824 = vpack.c.b16 %v6032, %v6024
    %v7825 = vpack.c.b16 %v6033, %v6025
    %v7826 = vpack.c.b16 %v6034, %v6026
    %v7827 = vpack.c.b16 %v6035, %v6027
    %v7828 = vpack.c.b16 %v6036, %v6028
    %v7829 = vpack.c.b16 %v6037, %v6029
    %v7830 = vpack.c.b16 %v6038, %v6030
    %v7831 = vpack.c.b16 %v6039, %v6031
    %v7832 = vpack.c.b16 %v6048, %v6040
    %v7833 = vpack.c.b16 %v6049, %v6041
    %v7834 = vpack.c.b16 %v6050, %v6042
    %v7835 = vpack.c.b16 %v6051, %v6043
    %v7836 = vpack.c.b16 %v6052, %v6044
    %v7837 = vpack.c.b16 %v6053, %v6045
    %v7838 = vpack.c.b16 %v6054, %v6046
    %v7839 = vpack.c.b16 %v6055, %v6047
    %v7840 = vpack.c.b16 %v6064, %v6056
    %v7841 = vpack.c.b16 %v6065, %v6057
    %v7842 = vpack.c.b16 %v6066, %v6058
    %v7843 = vpack.c.b16 %v6067, %v6059
    %v7844 = vpack.c.b16 %v6068, %v6060
    %v7845 = vpack.c.b16 %v6069, %v6061
    %v7846 = vpack.c.b16 %v6070, %v6062
    %v7847 = vpack.c.b16 %v6071, %v6063
    %v7848 = vpack.c.b16 %v6080, %v6072
    %v7849 = vpack.c.b16 %v6081, %v6073
    %v7850 = vpack.c.b16 %v6082, %v6074
    %v7851 = vpack.c.b16 %v6083, %v6075
    %v7852 = vpack.c.b16 %v6084, %v6076
    %v7853 = vpack.c.b16 %v6085, %v6077
    %v7854 = vpack.c.b16 %v6086, %v6078
    %v7855 = vpack.c.b16 %v6087, %v6079
    %v7856 = vpack.c.b16 %v6096, %v6088
    %v7857 = vpack.c.b16 %v6097, %v6089
    %v7858 = vpack.c.b16 %v6098, %v6090
    %v7859 = vpack.c.b16 %v6099, %v6091
    %v7860 = vpack.c.b16 %v6100, %v6092
    %v7861 = vpack.c.b16 %v6101, %v6093
    %v7862 = vpack.c.b16 %v6102, %v6094
    %v7863 = vpack.c.b16 %v6103, %v6095
    %v7864 = vpack.c.b16 %v6112, %v6104
    %v7865 = vpack.c.b16 %v6113, %v6105
    %v7866 = vpack.c.b16 %v6114, %v6106
    %v7867 = vpack.c.b16 %v6115, %v6107
    %v7868 = vpack.c.b16 %v6116, %v6108
    %v7869 = vpack.c.b16 %v6117, %v6109
    %v7870 = vpack.c.b16 %v6118, %v6110
    %v7871 = vpack.c.b16 %v6119, %v6111
    %v7872 = vpack.c.b16 %v6128, %v6120
    %v7873 = vpack.c.b16 %v6129, %v6121
    %v7874 = vpack.c.b16 %v6130, %v6122
    %v7875 = vpack.c.b16 %v6131, %v6123
    %v7876 = vpack.c.b16 %v6132, %v6124
    %v7877 = vpack.c.b16 %v6133, %v6125
    %v7878 = vpack.c.b16 %v6134, %v6126
    %v7879 = vpack.c.b16 %v6135, %v6127
    %v7880 = vpack.c.b16 %v6144, %v6136
    %v7881 = vpack.c.b16 %v6145, %v6137
    %v7882 = vpack.c.b16 %v6146, %v6138
    %v7883 = vpack.c.b16 %v6147, %v6139
    %v7884 = vpack.c.b16 %v6148, %v6140
    %v7885 = vpack.c.b16 %v6149, %v6141
    %v7886 = vpack.c.b16 %v6150, %v6142
    %v7887 = vpack.c.b16 %v6151, %v6143
    %v7888 = vpack.c.b16 %v6160, %v6152
    %v7889 = vpack.c.b16 %v6161, %v6153
    %v7890 = vpack.c.b16 %v6162, %v6154
    %v7891 = vpack.c.b16 %v6163, %v6155
    %v7892 = vpack.c.b16 %v6164, %v6156
    %v7893 = vpack.c.b16 %v6165, %v6157
    %v7894 = vpack.c.b16 %v6166, %v6158
    %v7895 = vpack.c.b16 %v6167, %v6159
    %v7896 = vpack.c.b16 %v6176, %v6168
    %v7897 = vpack.c.b16 %v6177, %v6169
    %v7898 = vpack.c.b16 %v6178, %v6170
    %v7899 = vpack.c.b16 %v6179, %v6171
    %v7900 = vpack.c.b16 %v6180, %v6172
    %v7901 = vpack.c.b16 %v6181, %v6173
    %v7902 = vpack.c.b16 %v6182, %v6174
    %v7903 = vpack.c.b16 %v6183, %v6175
    %v7904 = vpack.c.b16 %v6192, %v6184
    %v7905 = vpack.c.b16 %v6193, %v6185
    %v7906 = vpack.c.b16 %v6194, %v6186
    %v7907 = vpack.c.b16 %v6195, %v6187
    %v7908 = vpack.c.b16 %v6196, %v6188
    %v7909 = vpack.c.b16 %v6197, %v6189
    %v7910 = vpack.c.b16 %v6198, %v6190
    %v7911 = vpack.c.b16 %v6199, %v6191
    %v7912 = vpack.c.b16 %v6208, %v6200
    %v7913 = vpack.c.b16 %v6209, %v6201
    %v7914 = vpack.c.b16 %v6210, %v6202
    %v7915 = vpack.c.b16 %v6211, %v6203
    %v7916 = vpack.c.b16 %v6212, %v6204
    %v7917 = vpack.c.b16 %v6213, %v6205
    %v7918 = vpack.c.b16 %v6214, %v6206
    %v7919 = vpack.c.b16 %v6215, %v6207
    %v7920 = vpack.c.b16 %v6224, %v6216
    %v7921 = vpack.c.b16 %v6225, %v6217
    %v7922 = vpack.c.b16 %v6226, %v6218
    %v7923 = vpack.c.b16 %v6227, %v6219
    %v7924 = vpack.c.b16 %v6228, %v6220
    %v7925 = vpack.c.b16 %v6229, %v6221
    %v7926 = vpack.c.b16 %v6230, %v6222
    %v7927 = vpack.c.b16 %v6231, %v6223
    %v7928 = vpack.c.b16 %v6240, %v6232
    %v7929 = vpack.c.b16 %v6241, %v6233
    %v7930 = vpack.c.b16 %v6242, %v6234
    %v7931 = vpack.c.b16 %v6243, %v6235
    %v7932 = vpack.c.b16 %v6244, %v6236
    %v7933 = vpack.c.b16 %v6245, %v6237
    %v7934 = vpack.c.b16 %v6246, %v6238
    %v7935 = vpack.c.b16 %v6247, %v6239
    %v7936 = vpack.c.b16 %v6256, %v6248
    %v7937 = vpack.c.b16 %v6257, %v6249
    %v7938 = vpack.c.b16 %v6258, %v6250
    %v7939 = vpack.c.b16 %v6259, %v6251
    %v7940 = vpack.c.b16 %v6260, %v6252
    %v7941 = vpack.c.b16 %v6261, %v6253
    %v7942 = vpack.c.b16 %v6262, %v6254
    %v7943 = vpack.c.b16 %v6263, %v6255
    %v7944 = vpack.c.b16 %v6272, %v6264
    %v7945 = vpack.c.b16 %v6273, %v6265
    %v7946 = vpack.c.b16 %v6274, %v6266
    %v7947 = vpack.c.b16 %v6275, %v6267
    %v7948 = vpack.c.b16 %v6276, %v6268
    %v7949 = vpack.c.b16 %v6277, %v6269
    %v7950 = vpack.c.b16 %v6278, %v6270
    %v7951 = vpack.c.b16 %v6279, %v6271
    %v7952 = vpack.c.b16 %v6288, %v6280
    %v7953 = vpack.c.b16 %v6289, %v6281
    %v7954 = vpack.c.b16 %v6290, %v6282
    %v7955 = vpack.c.b16 %v6291, %v6283
    %v7956 = vpack.c.b16 %v6292, %v6284
    %v7957 = vpack.c.b16 %v6293, %v6285
    %v7958 = vpack.c.b16 %v6294, %v6286
    %v7959 = vpack.c.b16 %v6295, %v6287
    %v7960 = vpack.c.b16 %v6304, %v6296
    %v7961 = vpack.c.b16 %v6305, %v6297
    %v7962 = vpack.c.b16 %v6306, %v6298
    %v7963 = vpack.c.b16 %v6307, %v6299
    %v7964 = vpack.c.b16 %v6308, %v6300
    %v7965 = vpack.c.b16 %v6309, %v6301
    %v7966 = vpack.c.b16 %v6310, %v6302
    %v7967 = vpack.c.b16 %v6311, %v6303
    %v7968 = vpack.c.b16 %v6320, %v6312
    %v7969 = vpack.c.b16 %v6321, %v6313
    %v7970 = vpack.c.b16 %v6322, %v6314
    %v7971 = vpack.c.b16 %v6323, %v6315
    %v7972 = vpack.c.b16 %v6324, %v6316
    %v7973 = vpack.c.b16 %v6325, %v6317
    %v7974 = vpack.c.b16 %v6326, %v6318
    %v7975 = vpack.c.b16 %v6327, %v6319
    %v7976 = vpack.c.b16 %v6336, %v6328
    %v7977 = vpack.c.b16 %v6337, %v6329
    %v7978 = vpack.c.b16 %v6338, %v6330
    %v7979 = vpack.c.b16 %v6339, %v6331
    %v7980 = vpack.c.b16 %v6340, %v6332
    %v7981 = vpack.c.b16 %v6341, %v6333
    %v7982 = vpack.c.b16 %v6342, %v6334
    %v7983 = vpack.c.b16 %v6343, %v6335
    %v7984 = vpack.c.b16 %v6352, %v6344
    %v7985 = vpack.c.b16 %v6353, %v6345
    %v7986 = vpack.c.b16 %v6354, %v6346
    %v7987 = vpack.c.b16 %v6355, %v6347
    %v7988 = vpack.c.b16 %v6356, %v6348
    %v7989 = vpack.c.b16 %v6357, %v6349
    %v7990 = vpack.c.b16 %v6358, %v6350
    %v7991 = vpack.c.b16 %v6359, %v6351
    %v7992 = vpack.c.b16 %v6368, %v6360
    %v7993 = vpack.c.b16 %v6369, %v6361
    %v7994 = vpack.c.b16 %v6370, %v6362
    %v7995 = vpack.c.b16 %v6371, %v6363
    %v7996 = vpack.c.b16 %v6372, %v6364
    %v7997 = vpack.c.b16 %v6373, %v6365
    %v7998 = vpack.c.b16 %v6374, %v6366
    %v7999 = vpack.c.b16 %v6375, %v6367
    %v8000 = vpack.c.b16 %v6384, %v6376
    %v8001 = vpack.c.b16 %v6385, %v6377
    %v8002 = vpack.c.b16 %v6386, %v6378
    %v8003 = vpack.c.b16 %v6387, %v6379
    %v8004 = vpack.c.b16 %v6388, %v6380
    %v8005 = vpack.c.b16 %v6389, %v6381
    %v8006 = vpack.c.b16 %v6390, %v6382
    %v8007 = vpack.c.b16 %v6391, %v6383
    %v8008 = vpack.c.b16 %v6400, %v6392
    %v8009 = vpack.c.b16 %v6401, %v6393
    %v8010 = vpack.c.b16 %v6402, %v6394
    %v8011 = vpack.c.b16 %v6403, %v6395
    %v8012 = vpack.c.b16 %v6404, %v6396
    %v8013 = vpack.c.b16 %v6405, %v6397
    %v8014 = vpack.c.b16 %v6406, %v6398
    %v8015 = vpack.c.b16 %v6407, %v6399
    %v8016 = vpack.c.b16 %v6416, %v6408
    %v8017 = vpack.c.b16 %v6417, %v6409
    %v8018 = vpack.c.b16 %v6418, %v6410
    %v8019 = vpack.c.b16 %v6419, %v6411
    %v8020 = vpack.c.b16 %v6420, %v6412
    %v8021 = vpack.c.b16 %v6421, %v6413
    %v8022 = vpack.c.b16 %v6422, %v6414
    %v8023 = vpack.c.b16 %v6423, %v6415
    %v8024 = vpack.c.b16 %v6432, %v6424
    %v8025 = vpack.c.b16 %v6433, %v6425
    %v8026 = vpack.c.b16 %v6434, %v6426
    %v8027 = vpack.c.b16 %v6435, %v6427
    %v8028 = vpack.c.b16 %v6436, %v6428
    %v8029 = vpack.c.b16 %v6437, %v6429
    %v8030 = vpack.c.b16 %v6438, %v6430
    %v8031 = vpack.c.b16 %v6439, %v6431
    %v8032 = vpack.c.b16 %v6448, %v6440
    %v8033 = vpack.c.b16 %v6449, %v6441
    %v8034 = vpack.c.b16 %v6450, %v6442
    %v8035 = vpack.c.b16 %v6451, %v6443
    %v8036 = vpack.c.b16 %v6452, %v6444
    %v8037 = vpack.c.b16 %v6453, %v6445
    %v8038 = vpack.c.b16 %v6454, %v6446
    %v8039 = vpack.c.b16 %v6455, %v6447
    %v8040 = vpack.c.b16 %v6464, %v6456
    %v8041 = vpack.c.b16 %v6465, %v6457
    %v8042 = vpack.c.b16 %v6466, %v6458
    %v8043 = vpack.c.b16 %v6467, %v6459
    %v8044 = vpack.c.b16 %v6468, %v6460
    %v8045 = vpack.c.b16 %v6469, %v6461
    %v8046 = vpack.c.b16 %v6470, %v6462
    %v8047 = vpack.c.b16 %v6471, %v6463
    %v8048 = vpack.c.b16 %v6480, %v6472
    %v8049 = vpack.c.b16 %v6481, %v6473
    %v8050 = vpack.c.b16 %v6482, %v6474
    %v8051 = vpack.c.b16 %v6483, %v6475
    %v8052 = vpack.c.b16 %v6484, %v6476
    %v8053 = vpack.c.b16 %v6485, %v6477
    %v8054 = vpack.c.b16 %v6486, %v6478
    %v8055 = vpack.c.b16 %v6487, %v6479
    %v9625 = vlaneseq
    %v9626 = vshrl.u32 %v9625, 7
    %v9627 = vsub.s32 0, %v9626
    %v9628 = vrot.slane %v1594, %v9627
    %v9629 = vlaneseq
    %v9630 = vshrl.u32 %v9629, 7
    %v9631 = vsub.s32 1, %v9630
    %v9632 = vrot.slane %v1594, %v9631
    %v9633 = vlaneseq
    %v9634 = vshrl.u32 %v9633, 7
    %v9635 = vsub.s32 2, %v9634
    %v9636 = vrot.slane %v1594, %v9635
    %v9637 = vlaneseq
    %v9638 = vshrl.u32 %v9637, 7
    %v9639 = vsub.s32 3, %v9638
    %v9640 = vrot.slane %v1594, %v9639
    %v9641 = vlaneseq
    %v9642 = vshrl.u32 %v9641, 7
    %v9643 = vsub.s32 4, %v9642
    %v9644 = vrot.slane %v1594, %v9643
    %v9645 = vlaneseq
    %v9646 = vshrl.u32 %v9645, 7
    %v9647 = vsub.s32 5, %v9646
    %v9648 = vrot.slane %v1594, %v9647
    %v9649 = vlaneseq
    %v9650 = vshrl.u32 %v9649, 7
    %v9651 = vsub.s32 6, %v9650
    %v9652 = vrot.slane %v1594, %v9651
    %v9653 = vlaneseq
    %v9654 = vshrl.u32 %v9653, 7
    %v9655 = vsub.s32 7, %v9654
    %v9656 = vrot.slane %v1594, %v9655
    %vm9665 = vcmask 523264
    %v9667 = vsel %vm9665, %v1759, 0
    %9669 = vmatprep.subr.bf16.mxu0 %v6489
    %9670 = vmatpush1.bf16.msra.mxu0 %v6488
    %9671 = vmatprep.subr.bf16.mxu0 %v6497
    %9672 = vmatpush1.bf16.msra.mxu0 %v6496
    %9673 = vmatprep.subr.bf16.mxu0 %v6505
    %9674 = vmatpush1.bf16.msra.mxu0 %v6504
    %9675 = vmatprep.subr.bf16.mxu0 %v6513
    %9676 = vmatpush1.bf16.msra.mxu0 %v6512
    %9677 = vmatprep.subr.bf16.mxu0 %v6521
    %9678 = vmatpush1.bf16.msra.mxu0 %v6520
    %9679 = vmatprep.subr.bf16.mxu0 %v6529
    %9680 = vmatpush1.bf16.msra.mxu0 %v6528
    %9681 = vmatprep.subr.bf16.mxu0 %v6537
    %9682 = vmatpush1.bf16.msra.mxu0 %v6536
    %9683 = vmatprep.subr.bf16.mxu0 %v6545
    %9684 = vmatpush1.bf16.msra.mxu0 %v6544
    %9685 = vmatprep.subr.bf16.mxu0 %v6553
    %9686 = vmatpush1.bf16.msra.mxu0 %v6552
    %9687 = vmatprep.subr.bf16.mxu0 %v6561
    %9688 = vmatpush1.bf16.msra.mxu0 %v6560
    %9689 = vmatprep.subr.bf16.mxu0 %v6569
    %9690 = vmatpush1.bf16.msra.mxu0 %v6568
    %9691 = vmatprep.subr.bf16.mxu0 %v6577
    %9692 = vmatpush1.bf16.msra.mxu0 %v6576
    %9693 = vmatprep.subr.bf16.mxu0 %v6585
    %9694 = vmatpush1.bf16.msra.mxu0 %v6584
    %9695 = vmatprep.subr.bf16.mxu0 %v6593
    %9696 = vmatpush1.bf16.msra.mxu0 %v6592
    %9697 = vmatprep.subr.bf16.mxu0 %v6601
    %9698 = vmatpush1.bf16.msra.mxu0 %v6600
    %9699 = vmatprep.subr.bf16.mxu0 %v6609
    %9700 = vmatpush1.bf16.msra.mxu0 %v6608
    %9701 = vmatprep.mubr.bf16.mxu0 %v1636
    %9702 = vmatmul.mubr.bf16.gmra.mrb[0].mxu0 %v1622
    %v9703 = vpop.f32.mrb[0].mxu0
    %v9704 = vadd.f32 %v9628, %v9703
    %v9705 = vpop.f32.mrb[0].mxu0
    %v9706 = vadd.f32 %v9632, %v9705
    %v9707 = vpop.f32.mrb[0].mxu0
    %v9708 = vpop.f32.mrb[0].mxu0
    %9709 = vdwg.mxu0
    %9710 = vmatprep.subr.bf16.mxu0 %v6617
    %9711 = vmatpush1.bf16.msra.mxu0 %v6616
    %9712 = vmatprep.subr.bf16.mxu0 %v6625
    %9713 = vmatpush1.bf16.msra.mxu0 %v6624
    %9714 = vmatprep.subr.bf16.mxu0 %v6633
    %9715 = vmatpush1.bf16.msra.mxu0 %v6632
    %9716 = vmatprep.subr.bf16.mxu0 %v6641
    %9717 = vmatpush1.bf16.msra.mxu0 %v6640
    %9718 = vmatprep.subr.bf16.mxu0 %v6649
    %9719 = vmatpush1.bf16.msra.mxu0 %v6648
    %9720 = vmatprep.subr.bf16.mxu0 %v6657
    %9721 = vmatpush1.bf16.msra.mxu0 %v6656
    %9722 = vmatprep.subr.bf16.mxu0 %v6665
    %9723 = vmatpush1.bf16.msra.mxu0 %v6664
    %9724 = vmatprep.subr.bf16.mxu0 %v6673
    %9725 = vmatpush1.bf16.msra.mxu0 %v6672
    %9726 = vmatprep.subr.bf16.mxu0 %v6681
    %9727 = vmatpush1.bf16.msra.mxu0 %v6680
    %9728 = vmatprep.subr.bf16.mxu0 %v6689
    %9729 = vmatpush1.bf16.msra.mxu0 %v6688
    %9730 = vmatprep.subr.bf16.mxu0 %v6697
    %9731 = vmatpush1.bf16.msra.mxu0 %v6696
    %9732 = vmatprep.subr.bf16.mxu0 %v6705
    %9733 = vmatpush1.bf16.msra.mxu0 %v6704
    %9734 = vmatprep.subr.bf16.mxu0 %v6713
    %9735 = vmatpush1.bf16.msra.mxu0 %v6712
    %9736 = vmatprep.subr.bf16.mxu0 %v6721
    %9737 = vmatpush1.bf16.msra.mxu0 %v6720
    %9738 = vmatprep.subr.bf16.mxu0 %v6729
    %9739 = vmatpush1.bf16.msra.mxu0 %v6728
    %9740 = vmatprep.subr.bf16.mxu0 %v6737
    %9741 = vmatpush1.bf16.msra.mxu0 %v6736
    %9742 = vmatprep.mubr.bf16.mxu0 %v1646
    %9743 = vmatmul.mubr.bf16.gmra.mrb[0].mxu0 %v1644
    %v9744 = vpop.f32.mrb[0].mxu0
    %v9745 = vadd.f32 %v9704, %v9744
    %v9746 = vpop.f32.mrb[0].mxu0
    %v9747 = vadd.f32 %v9706, %v9746
    %v9748 = vpop.f32.mrb[0].mxu0
    %v9749 = vpop.f32.mrb[0].mxu0
    %9750 = vdwg.mxu0
    %9751 = vmatprep.subr.bf16.mxu0 %v6745
    %9752 = vmatpush1.bf16.msra.mxu0 %v6744
    %9753 = vmatprep.subr.bf16.mxu0 %v6753
    %9754 = vmatpush1.bf16.msra.mxu0 %v6752
    %9755 = vmatprep.subr.bf16.mxu0 %v6761
    %9756 = vmatpush1.bf16.msra.mxu0 %v6760
    %9757 = vmatprep.subr.bf16.mxu0 %v6769
    %9758 = vmatpush1.bf16.msra.mxu0 %v6768
    %9759 = vmatprep.subr.bf16.mxu0 %v6777
    %9760 = vmatpush1.bf16.msra.mxu0 %v6776
    %9761 = vmatprep.subr.bf16.mxu0 %v6785
    %9762 = vmatpush1.bf16.msra.mxu0 %v6784
    %9763 = vmatprep.subr.bf16.mxu0 %v6793
    %9764 = vmatpush1.bf16.msra.mxu0 %v6792
    %9765 = vmatprep.subr.bf16.mxu0 %v6801
    %9766 = vmatpush1.bf16.msra.mxu0 %v6800
    %9767 = vmatprep.subr.bf16.mxu0 %v6809
    %9768 = vmatpush1.bf16.msra.mxu0 %v6808
    %9769 = vmatprep.subr.bf16.mxu0 %v6817
    %9770 = vmatpush1.bf16.msra.mxu0 %v6816
    %9771 = vmatprep.subr.bf16.mxu0 %v6825
    %9772 = vmatpush1.bf16.msra.mxu0 %v6824
    %9773 = vmatprep.subr.bf16.mxu0 %v6833
    %9774 = vmatpush1.bf16.msra.mxu0 %v6832
    %9775 = vmatprep.subr.bf16.mxu0 %v6841
    %9776 = vmatpush1.bf16.msra.mxu0 %v6840
    %9777 = vmatprep.subr.bf16.mxu0 %v6849
    %9778 = vmatpush1.bf16.msra.mxu0 %v6848
    %9779 = vmatprep.subr.bf16.mxu0 %v6857
    %9780 = vmatpush1.bf16.msra.mxu0 %v6856
    %9781 = vmatprep.subr.bf16.mxu0 %v6865
    %9782 = vmatpush1.bf16.msra.mxu0 %v6864
    %9783 = vmatprep.mubr.bf16.mxu0 %v1643
    %9784 = vmatmul.mubr.bf16.gmra.mrb[0].mxu0 %v1629
    %v9785 = vpop.f32.mrb[0].mxu0
    %v9786 = vadd.f32 %v9745, %v9785
    %v9787 = vpop.f32.mrb[0].mxu0
    %v9788 = vadd.f32 %v9747, %v9787
    %v9789 = vpop.f32.mrb[0].mxu0
    %v9790 = vpop.f32.mrb[0].mxu0
    %9791 = vdwg.mxu0
    %9792 = vmatprep.subr.bf16.mxu0 %v6873
    %9793 = vmatpush1.bf16.msra.mxu0 %v6872
    %9794 = vmatprep.subr.bf16.mxu0 %v6881
    %9795 = vmatpush1.bf16.msra.mxu0 %v6880
    %9796 = vmatprep.subr.bf16.mxu0 %v6889
    %9797 = vmatpush1.bf16.msra.mxu0 %v6888
    %9798 = vmatprep.subr.bf16.mxu0 %v6897
    %9799 = vmatpush1.bf16.msra.mxu0 %v6896
    %9800 = vmatprep.subr.bf16.mxu0 %v6905
    %9801 = vmatpush1.bf16.msra.mxu0 %v6904
    %9802 = vmatprep.subr.bf16.mxu0 %v6913
    %9803 = vmatpush1.bf16.msra.mxu0 %v6912
    %9804 = vmatprep.subr.bf16.mxu0 %v6921
    %9805 = vmatpush1.bf16.msra.mxu0 %v6920
    %9806 = vmatprep.subr.bf16.mxu0 %v6929
    %9807 = vmatpush1.bf16.msra.mxu0 %v6928
    %9808 = vmatprep.subr.bf16.mxu0 %v6937
    %9809 = vmatpush1.bf16.msra.mxu0 %v6936
    %9810 = vmatprep.subr.bf16.mxu0 %v6945
    %9811 = vmatpush1.bf16.msra.mxu0 %v6944
    %9812 = vmatprep.subr.bf16.mxu0 %v6953
    %9813 = vmatpush1.bf16.msra.mxu0 %v6952
    %9814 = vmatprep.subr.bf16.mxu0 %v6961
    %9815 = vmatpush1.bf16.msra.mxu0 %v6960
    %9816 = vmatprep.subr.bf16.mxu0 %v6969
    %9817 = vmatpush1.bf16.msra.mxu0 %v6968
    %9818 = vmatprep.subr.bf16.mxu0 %v6977
    %9819 = vmatpush1.bf16.msra.mxu0 %v6976
    %9820 = vmatprep.subr.bf16.mxu0 %v6985
    %9821 = vmatpush1.bf16.msra.mxu0 %v6984
    %9822 = vmatprep.subr.bf16.mxu0 %v6993
    %9823 = vmatpush1.bf16.msra.mxu0 %v6992
    %9824 = vmatprep.mubr.bf16.mxu0 %v1647
    %9825 = vmatmul.mubr.bf16.gmra.mrb[0].mxu0 %v1645
    %v9826 = vpop.f32.mrb[0].mxu0
    %v9827 = vadd.f32 %v9786, %v9826
    %v9828 = vpop.f32.mrb[0].mxu0
    %v9829 = vadd.f32 %v9788, %v9828
    %v9830 = vpop.f32.mrb[0].mxu0
    %v9831 = vpop.f32.mrb[0].mxu0
    %9832 = vdwg.mxu0
    %9833 = vmatprep.subr.bf16.mxu0 %v7001
    %9834 = vmatpush1.bf16.msra.mxu0 %v7000
    %9835 = vmatprep.subr.bf16.mxu0 %v7009
    %9836 = vmatpush1.bf16.msra.mxu0 %v7008
    %9837 = vmatprep.subr.bf16.mxu0 %v7017
    %9838 = vmatpush1.bf16.msra.mxu0 %v7016
    %9839 = vmatprep.subr.bf16.mxu0 %v7025
    %9840 = vmatpush1.bf16.msra.mxu0 %v7024
    %9841 = vmatprep.subr.bf16.mxu0 %v7033
    %9842 = vmatpush1.bf16.msra.mxu0 %v7032
    %9843 = vmatprep.subr.bf16.mxu0 %v7041
    %9844 = vmatpush1.bf16.msra.mxu0 %v7040
    %9845 = vmatprep.subr.bf16.mxu0 %v7049
    %9846 = vmatpush1.bf16.msra.mxu0 %v7048
    %9847 = vmatprep.subr.bf16.mxu0 %v7057
    %9848 = vmatpush1.bf16.msra.mxu0 %v7056
    %9849 = vmatprep.subr.bf16.mxu0 %v7065
    %9850 = vmatpush1.bf16.msra.mxu0 %v7064
    %9851 = vmatprep.subr.bf16.mxu0 %v7073
    %9852 = vmatpush1.bf16.msra.mxu0 %v7072
    %9853 = vmatprep.subr.bf16.mxu0 %v7081
    %9854 = vmatpush1.bf16.msra.mxu0 %v7080
    %9855 = vmatprep.subr.bf16.mxu0 %v7089
    %9856 = vmatpush1.bf16.msra.mxu0 %v7088
    %9857 = vmatprep.subr.bf16.mxu0 %v7097
    %9858 = vmatpush1.bf16.msra.mxu0 %v7096
    %9859 = vmatprep.subr.bf16.mxu0 %v7105
    %9860 = vmatpush1.bf16.msra.mxu0 %v7104
    %9861 = vmatprep.subr.bf16.mxu0 %v7113
    %9862 = vmatpush1.bf16.msra.mxu0 %v7112
    %9863 = vmatprep.subr.bf16.mxu0 %v7121
    %9864 = vmatpush1.bf16.msra.mxu0 %v7120
    %9865 = vmatprep.mubr.bf16.mxu0 %v1685
    %9866 = vmatmul.mubr.bf16.gmra.mrb[0].mxu0 %v1671
    %v9867 = vpop.f32.mrb[0].mxu0
    %v9868 = vadd.f32 %v9827, %v9867
    %v9869 = vpop.f32.mrb[0].mxu0
    %v9870 = vadd.f32 %v9829, %v9869
    %v9871 = vpop.f32.mrb[0].mxu0
    %v9872 = vpop.f32.mrb[0].mxu0
    %9873 = vdwg.mxu0
    %9874 = vmatprep.subr.bf16.mxu0 %v7129
    %9875 = vmatpush1.bf16.msra.mxu0 %v7128
    %9876 = vmatprep.subr.bf16.mxu0 %v7137
    %9877 = vmatpush1.bf16.msra.mxu0 %v7136
    %9878 = vmatprep.subr.bf16.mxu0 %v7145
    %9879 = vmatpush1.bf16.msra.mxu0 %v7144
    %9880 = vmatprep.subr.bf16.mxu0 %v7153
    %9881 = vmatpush1.bf16.msra.mxu0 %v7152
    %9882 = vmatprep.subr.bf16.mxu0 %v7161
    %9883 = vmatpush1.bf16.msra.mxu0 %v7160
    %9884 = vmatprep.subr.bf16.mxu0 %v7169
    %9885 = vmatpush1.bf16.msra.mxu0 %v7168
    %9886 = vmatprep.subr.bf16.mxu0 %v7177
    %9887 = vmatpush1.bf16.msra.mxu0 %v7176
    %9888 = vmatprep.subr.bf16.mxu0 %v7185
    %9889 = vmatpush1.bf16.msra.mxu0 %v7184
    %9890 = vmatprep.subr.bf16.mxu0 %v7193
    %9891 = vmatpush1.bf16.msra.mxu0 %v7192
    %9892 = vmatprep.subr.bf16.mxu0 %v7201
    %9893 = vmatpush1.bf16.msra.mxu0 %v7200
    %9894 = vmatprep.subr.bf16.mxu0 %v7209
    %9895 = vmatpush1.bf16.msra.mxu0 %v7208
    %9896 = vmatprep.subr.bf16.mxu0 %v7217
    %9897 = vmatpush1.bf16.msra.mxu0 %v7216
    %9898 = vmatprep.subr.bf16.mxu0 %v7225
    %9899 = vmatpush1.bf16.msra.mxu0 %v7224
    %9900 = vmatprep.subr.bf16.mxu0 %v7233
    %9901 = vmatpush1.bf16.msra.mxu0 %v7232
    %9902 = vmatprep.subr.bf16.mxu0 %v7241
    %9903 = vmatpush1.bf16.msra.mxu0 %v7240
    %9904 = vmatprep.subr.bf16.mxu0 %v7249
    %9905 = vmatpush1.bf16.msra.mxu0 %v7248
    %9906 = vmatprep.mubr.bf16.mxu0 %v1695
    %9907 = vmatmul.mubr.bf16.gmra.mrb[0].mxu0 %v1693
    %v9908 = vpop.f32.mrb[0].mxu0
    %v9909 = vadd.f32 %v9868, %v9908
    %v9910 = vpop.f32.mrb[0].mxu0
    %v9911 = vadd.f32 %v9870, %v9910
    %v9912 = vpop.f32.mrb[0].mxu0
    %v9913 = vpop.f32.mrb[0].mxu0
    %9914 = vdwg.mxu0
    %9915 = vmatprep.subr.bf16.mxu0 %v7257
    %9916 = vmatpush1.bf16.msra.mxu0 %v7256
    %9917 = vmatprep.subr.bf16.mxu0 %v7265
    %9918 = vmatpush1.bf16.msra.mxu0 %v7264
    %9919 = vmatprep.subr.bf16.mxu0 %v7273
    %9920 = vmatpush1.bf16.msra.mxu0 %v7272
    %9921 = vmatprep.subr.bf16.mxu0 %v7281
    %9922 = vmatpush1.bf16.msra.mxu0 %v7280
    %9923 = vmatprep.subr.bf16.mxu0 %v7289
    %9924 = vmatpush1.bf16.msra.mxu0 %v7288
    %9925 = vmatprep.subr.bf16.mxu0 %v7297
    %9926 = vmatpush1.bf16.msra.mxu0 %v7296
    %9927 = vmatprep.subr.bf16.mxu0 %v7305
    %9928 = vmatpush1.bf16.msra.mxu0 %v7304
    %9929 = vmatprep.subr.bf16.mxu0 %v7313
    %9930 = vmatpush1.bf16.msra.mxu0 %v7312
    %9931 = vmatprep.subr.bf16.mxu0 %v7321
    %9932 = vmatpush1.bf16.msra.mxu0 %v7320
    %9933 = vmatprep.subr.bf16.mxu0 %v7329
    %9934 = vmatpush1.bf16.msra.mxu0 %v7328
    %9935 = vmatprep.subr.bf16.mxu0 %v7337
    %9936 = vmatpush1.bf16.msra.mxu0 %v7336
    %9937 = vmatprep.subr.bf16.mxu0 %v7345
    %9938 = vmatpush1.bf16.msra.mxu0 %v7344
    %9939 = vmatprep.subr.bf16.mxu0 %v7353
    %9940 = vmatpush1.bf16.msra.mxu0 %v7352
    %9941 = vmatprep.subr.bf16.mxu0 %v7361
    %9942 = vmatpush1.bf16.msra.mxu0 %v7360
    %9943 = vmatprep.subr.bf16.mxu0 %v7369
    %9944 = vmatpush1.bf16.msra.mxu0 %v7368
    %9945 = vmatprep.subr.bf16.mxu0 %v7377
    %9946 = vmatpush1.bf16.msra.mxu0 %v7376
    %9947 = vmatprep.mubr.bf16.mxu0 %v1692
    %9948 = vmatmul.mubr.bf16.gmra.mrb[0].mxu0 %v1678
    %v9949 = vpop.f32.mrb[0].mxu0
    %v9950 = vadd.f32 %v9909, %v9949
    %v9951 = vpop.f32.mrb[0].mxu0
    %v9952 = vadd.f32 %v9911, %v9951
    %v9953 = vpop.f32.mrb[0].mxu0
    %v9954 = vpop.f32.mrb[0].mxu0
    %9955 = vdwg.mxu0
    %9956 = vmatprep.subr.bf16.mxu0 %v7385
    %9957 = vmatpush1.bf16.msra.mxu0 %v7384
    %9958 = vmatprep.subr.bf16.mxu0 %v7393
    %9959 = vmatpush1.bf16.msra.mxu0 %v7392
    %9960 = vmatprep.subr.bf16.mxu0 %v7401
    %9961 = vmatpush1.bf16.msra.mxu0 %v7400
    %9962 = vmatprep.subr.bf16.mxu0 %v7409
    %9963 = vmatpush1.bf16.msra.mxu0 %v7408
    %9964 = vmatprep.subr.bf16.mxu0 %v7417
    %9965 = vmatpush1.bf16.msra.mxu0 %v7416
    %9966 = vmatprep.subr.bf16.mxu0 %v7425
    %9967 = vmatpush1.bf16.msra.mxu0 %v7424
    %9968 = vmatprep.subr.bf16.mxu0 %v7433
    %9969 = vmatpush1.bf16.msra.mxu0 %v7432
    %9970 = vmatprep.subr.bf16.mxu0 %v7441
    %9971 = vmatpush1.bf16.msra.mxu0 %v7440
    %9972 = vmatprep.subr.bf16.mxu0 %v7449
    %9973 = vmatpush1.bf16.msra.mxu0 %v7448
    %9974 = vmatprep.subr.bf16.mxu0 %v7457
    %9975 = vmatpush1.bf16.msra.mxu0 %v7456
    %9976 = vmatprep.subr.bf16.mxu0 %v7465
    %9977 = vmatpush1.bf16.msra.mxu0 %v7464
    %9978 = vmatprep.subr.bf16.mxu0 %v7473
    %9979 = vmatpush1.bf16.msra.mxu0 %v7472
    %9980 = vmatprep.subr.bf16.mxu0 %v7481
    %9981 = vmatpush1.bf16.msra.mxu0 %v7480
    %9982 = vmatprep.subr.bf16.mxu0 %v7489
    %9983 = vmatpush1.bf16.msra.mxu0 %v7488
    %9984 = vmatprep.subr.bf16.mxu0 %v7497
    %9985 = vmatpush1.bf16.msra.mxu0 %v7496
    %9986 = vmatprep.subr.bf16.mxu0 %v7505
    %9987 = vmatpush1.bf16.msra.mxu0 %v7504
    %9988 = vmatprep.mubr.bf16.mxu0 %v1696
    %9989 = vmatmul.mubr.bf16.gmra.mrb[0].mxu0 %v1694
    %v9990 = vpop.f32.mrb[0].mxu0
    %v9991 = vadd.f32 %v9950, %v9990
    %v9992 = vpop.f32.mrb[0].mxu0
    %v9993 = vadd.f32 %v9952, %v9992
    %v9994 = vpop.f32.mrb[0].mxu0
    %v9995 = vpop.f32.mrb[0].mxu0
    %9996 = vdwg.mxu0
    %9997 = vmatprep.subr.bf16.mxu0 %v7513
    %9998 = vmatpush1.bf16.msra.mxu0 %v7512
    %9999 = vmatprep.subr.bf16.mxu0 %v7521
    %10000 = vmatpush1.bf16.msra.mxu0 %v7520
    %10001 = vmatprep.subr.bf16.mxu0 %v7529
    %10002 = vmatpush1.bf16.msra.mxu0 %v7528
    %10003 = vmatprep.subr.bf16.mxu0 %v7537
    %10004 = vmatpush1.bf16.msra.mxu0 %v7536
    %10005 = vmatprep.subr.bf16.mxu0 %v7545
    %10006 = vmatpush1.bf16.msra.mxu0 %v7544
    %10007 = vmatprep.subr.bf16.mxu0 %v7553
    %10008 = vmatpush1.bf16.msra.mxu0 %v7552
    %10009 = vmatprep.subr.bf16.mxu0 %v7561
    %10010 = vmatpush1.bf16.msra.mxu0 %v7560
    %10011 = vmatprep.subr.bf16.mxu0 %v7569
    %10012 = vmatpush1.bf16.msra.mxu0 %v7568
    %10013 = vmatprep.subr.bf16.mxu0 %v7577
    %10014 = vmatpush1.bf16.msra.mxu0 %v7576
    %10015 = vmatprep.subr.bf16.mxu0 %v7585
    %10016 = vmatpush1.bf16.msra.mxu0 %v7584
    %10017 = vmatprep.subr.bf16.mxu0 %v7593
    %10018 = vmatpush1.bf16.msra.mxu0 %v7592
    %10019 = vmatprep.subr.bf16.mxu0 %v7601
    %10020 = vmatpush1.bf16.msra.mxu0 %v7600
    %10021 = vmatprep.subr.bf16.mxu0 %v7609
    %10022 = vmatpush1.bf16.msra.mxu0 %v7608
    %10023 = vmatprep.subr.bf16.mxu0 %v7617
    %10024 = vmatpush1.bf16.msra.mxu0 %v7616
    %10025 = vmatprep.subr.bf16.mxu0 %v7625
    %10026 = vmatpush1.bf16.msra.mxu0 %v7624
    %10027 = vmatprep.subr.bf16.mxu0 %v7633
    %10028 = vmatpush1.bf16.msra.mxu0 %v7632
    %10029 = vmatprep.mubr.bf16.mxu0 %v1734
    %10030 = vmatmul.mubr.bf16.gmra.mrb[0].mxu0 %v1720
    %v10031 = vpop.f32.mrb[0].mxu0
    %v10032 = vadd.f32 %v9991, %v10031
    %v10033 = vpop.f32.mrb[0].mxu0
    %v10034 = vadd.f32 %v9993, %v10033
    %v10035 = vpop.f32.mrb[0].mxu0
    %v10036 = vpop.f32.mrb[0].mxu0
    %10037 = vdwg.mxu0
    %10038 = vmatprep.subr.bf16.mxu0 %v7641
    %10039 = vmatpush1.bf16.msra.mxu0 %v7640
    %10040 = vmatprep.subr.bf16.mxu0 %v7649
    %10041 = vmatpush1.bf16.msra.mxu0 %v7648
    %10042 = vmatprep.subr.bf16.mxu0 %v7657
    %10043 = vmatpush1.bf16.msra.mxu0 %v7656
    %10044 = vmatprep.subr.bf16.mxu0 %v7665
    %10045 = vmatpush1.bf16.msra.mxu0 %v7664
    %10046 = vmatprep.subr.bf16.mxu0 %v7673
    %10047 = vmatpush1.bf16.msra.mxu0 %v7672
    %10048 = vmatprep.subr.bf16.mxu0 %v7681
    %10049 = vmatpush1.bf16.msra.mxu0 %v7680
    %10050 = vmatprep.subr.bf16.mxu0 %v7689
    %10051 = vmatpush1.bf16.msra.mxu0 %v7688
    %10052 = vmatprep.subr.bf16.mxu0 %v7697
    %10053 = vmatpush1.bf16.msra.mxu0 %v7696
    %10054 = vmatprep.subr.bf16.mxu0 %v7705
    %10055 = vmatpush1.bf16.msra.mxu0 %v7704
    %10056 = vmatprep.subr.bf16.mxu0 %v7713
    %10057 = vmatpush1.bf16.msra.mxu0 %v7712
    %10058 = vmatprep.subr.bf16.mxu0 %v7721
    %10059 = vmatpush1.bf16.msra.mxu0 %v7720
    %10060 = vmatprep.subr.bf16.mxu0 %v7729
    %10061 = vmatpush1.bf16.msra.mxu0 %v7728
    %10062 = vmatprep.subr.bf16.mxu0 %v7737
    %10063 = vmatpush1.bf16.msra.mxu0 %v7736
    %10064 = vmatprep.subr.bf16.mxu0 %v7745
    %10065 = vmatpush1.bf16.msra.mxu0 %v7744
    %10066 = vmatprep.subr.bf16.mxu0 %v7753
    %10067 = vmatpush1.bf16.msra.mxu0 %v7752
    %10068 = vmatprep.subr.bf16.mxu0 %v7761
    %10069 = vmatpush1.bf16.msra.mxu0 %v7760
    %10070 = vmatprep.mubr.bf16.mxu0 %v1744
    %10071 = vmatmul.mubr.bf16.gmra.mrb[0].mxu0 %v1742
    %v10072 = vpop.f32.mrb[0].mxu0
    %v10073 = vadd.f32 %v10032, %v10072
    %v10074 = vpop.f32.mrb[0].mxu0
    %v10075 = vadd.f32 %v10034, %v10074
    %v10076 = vpop.f32.mrb[0].mxu0
    %v10077 = vpop.f32.mrb[0].mxu0
    %10078 = vdwg.mxu0
    %10079 = vmatprep.subr.bf16.mxu0 %v7769
    %10080 = vmatpush1.bf16.msra.mxu0 %v7768
    %10081 = vmatprep.subr.bf16.mxu0 %v7777
    %10082 = vmatpush1.bf16.msra.mxu0 %v7776
    %10083 = vmatprep.subr.bf16.mxu0 %v7785
    %10084 = vmatpush1.bf16.msra.mxu0 %v7784
    %10085 = vmatprep.subr.bf16.mxu0 %v7793
    %10086 = vmatpush1.bf16.msra.mxu0 %v7792
    %10087 = vmatprep.subr.bf16.mxu0 %v7801
    %10088 = vmatpush1.bf16.msra.mxu0 %v7800
    %10089 = vmatprep.subr.bf16.mxu0 %v7809
    %10090 = vmatpush1.bf16.msra.mxu0 %v7808
    %10091 = vmatprep.subr.bf16.mxu0 %v7817
    %10092 = vmatpush1.bf16.msra.mxu0 %v7816
    %10093 = vmatprep.subr.bf16.mxu0 %v7825
    %10094 = vmatpush1.bf16.msra.mxu0 %v7824
    %10095 = vmatprep.subr.bf16.mxu0 %v7833
    %10096 = vmatpush1.bf16.msra.mxu0 %v7832
    %10097 = vmatprep.subr.bf16.mxu0 %v7841
    %10098 = vmatpush1.bf16.msra.mxu0 %v7840
    %10099 = vmatprep.subr.bf16.mxu0 %v7849
    %10100 = vmatpush1.bf16.msra.mxu0 %v7848
    %10101 = vmatprep.subr.bf16.mxu0 %v7857
    %10102 = vmatpush1.bf16.msra.mxu0 %v7856
    %10103 = vmatprep.subr.bf16.mxu0 %v7865
    %10104 = vmatpush1.bf16.msra.mxu0 %v7864
    %10105 = vmatprep.subr.bf16.mxu0 %v7873
    %10106 = vmatpush1.bf16.msra.mxu0 %v7872
    %10107 = vmatprep.subr.bf16.mxu0 %v7881
    %10108 = vmatpush1.bf16.msra.mxu0 %v7880
    %10109 = vmatprep.subr.bf16.mxu0 %v7889
    %10110 = vmatpush1.bf16.msra.mxu0 %v7888
    %10111 = vmatprep.mubr.bf16.mxu0 %v1741
    %10112 = vmatmul.mubr.bf16.gmra.mrb[0].mxu0 %v1727
    %v10113 = vpop.f32.mrb[0].mxu0
    %v10114 = vadd.f32 %v10073, %v10113
    %v10115 = vpop.f32.mrb[0].mxu0
    %v10116 = vadd.f32 %v10075, %v10115
    %v10117 = vpop.f32.mrb[0].mxu0
    %v10118 = vpop.f32.mrb[0].mxu0
    %10119 = vdwg.mxu0
    %10120 = vmatprep.subr.bf16.mxu0 %v7897
    %10121 = vmatpush1.bf16.msra.mxu0 %v7896
    %10122 = vmatprep.subr.bf16.mxu0 %v7905
    %10123 = vmatpush1.bf16.msra.mxu0 %v7904
    %10124 = vmatprep.subr.bf16.mxu0 %v7913
    %10125 = vmatpush1.bf16.msra.mxu0 %v7912
    %10126 = vmatprep.subr.bf16.mxu0 %v7921
    %10127 = vmatpush1.bf16.msra.mxu0 %v7920
    %10128 = vmatprep.subr.bf16.mxu0 %v7929
    %10129 = vmatpush1.bf16.msra.mxu0 %v7928
    %10130 = vmatprep.subr.bf16.mxu0 %v7937
    %10131 = vmatpush1.bf16.msra.mxu0 %v7936
    %10132 = vmatprep.subr.bf16.mxu0 %v7945
    %10133 = vmatpush1.bf16.msra.mxu0 %v7944
    %10134 = vmatprep.subr.bf16.mxu0 %v7953
    %10135 = vmatpush1.bf16.msra.mxu0 %v7952
    %10136 = vmatprep.subr.bf16.mxu0 %v7961
    %10137 = vmatpush1.bf16.msra.mxu0 %v7960
    %10138 = vmatprep.subr.bf16.mxu0 %v7969
    %10139 = vmatpush1.bf16.msra.mxu0 %v7968
    %10140 = vmatprep.subr.bf16.mxu0 %v7977
    %10141 = vmatpush1.bf16.msra.mxu0 %v7976
    %10142 = vmatprep.subr.bf16.mxu0 %v7985
    %10143 = vmatpush1.bf16.msra.mxu0 %v7984
    %10144 = vmatprep.subr.bf16.mxu0 %v7993
    %10145 = vmatpush1.bf16.msra.mxu0 %v7992
    %10146 = vmatprep.subr.bf16.mxu0 %v8001
    %10147 = vmatpush1.bf16.msra.mxu0 %v8000
    %10148 = vmatprep.subr.bf16.mxu0 %v8009
    %10149 = vmatpush1.bf16.msra.mxu0 %v8008
    %10150 = vmatprep.subr.bf16.mxu0 %v8017
    %10151 = vmatpush1.bf16.msra.mxu0 %v8016
    %10152 = vmatprep.mubr.bf16.mxu0 %v1745
    %10153 = vmatmul.mubr.bf16.gmra.mrb[0].mxu0 %v1743
    %v10154 = vpop.f32.mrb[0].mxu0
    %v10155 = vadd.f32 %v10114, %v10154
    %v10156 = vpop.f32.mrb[0].mxu0
    %v10157 = vadd.f32 %v10116, %v10156
    %v10158 = vpop.f32.mrb[0].mxu0
    %v10159 = vpop.f32.mrb[0].mxu0
    %10160 = vdwg.mxu0
    %10161 = vmatprep.subr.bf16.mxu0 %v8025
    %10162 = vmatpush1.bf16.msra.mxu0 %v8024
    %10163 = vmatprep.subr.bf16.mxu0 %v8033
    %10164 = vmatpush1.bf16.msra.mxu0 %v8032
    %10165 = vmatprep.subr.bf16.mxu0 %v8041
    %10166 = vmatpush1.bf16.msra.mxu0 %v8040
    %10167 = vmatprep.subr.bf16.mxu0 %v8049
    %10168 = vmatpush1.bf16.msra.mxu0 %v8048
    %10169 = vmatprep.subr.bf16.mxu0 0
    %10170 = vmatpush1.bf16.msra.mxu0 0
    %10171 = vmatprep.subr.bf16.mxu0 0
    %10172 = vmatpush1.bf16.msra.mxu0 0
    %10173 = vmatprep.subr.bf16.mxu0 0
    %10174 = vmatpush1.bf16.msra.mxu0 0
    %10175 = vmatprep.subr.bf16.mxu0 0
    %10176 = vmatpush1.bf16.msra.mxu0 0
    %10177 = vmatprep.subr.bf16.mxu0 0
    %10178 = vmatpush1.bf16.msra.mxu0 0
    %10179 = vmatprep.subr.bf16.mxu0 0
    %10180 = vmatpush1.bf16.msra.mxu0 0
    %10181 = vmatprep.subr.bf16.mxu0 0
    %10182 = vmatpush1.bf16.msra.mxu0 0
    %10183 = vmatprep.subr.bf16.mxu0 0
    %10184 = vmatpush1.bf16.msra.mxu0 0
    %10185 = vmatprep.subr.bf16.mxu0 0
    %10186 = vmatpush1.bf16.msra.mxu0 0
    %10187 = vmatprep.subr.bf16.mxu0 0
    %10188 = vmatpush1.bf16.msra.mxu0 0
    %10189 = vmatprep.subr.bf16.mxu0 0
    %10190 = vmatpush1.bf16.msra.mxu0 0
    %10191 = vmatprep.subr.bf16.mxu0 0
    %10192 = vmatpush1.bf16.msra.mxu0 0
    %10193 = vmatprep.mubr.bf16.mxu0 0
    %10194 = vmatmul.mubr.bf16.gmra.mrb[0].mxu0 %v9667
    %v10195 = vpop.f32.mrb[0].mxu0
    %v10196 = vadd.f32 %v10155, %v10195
    %v10197 = vpop.f32.mrb[0].mxu0
    %v10198 = vadd.f32 %v10157, %v10197
    %v10199 = vpop.f32.mrb[0].mxu0
    %v10200 = vpop.f32.mrb[0].mxu0
    %10201 = vdwg.mxu0
    %10202 = vmatprep.subr.bf16.mxu0 %v6491
    %10203 = vmatpush1.bf16.msra.mxu0 %v6490
    %10204 = vmatprep.subr.bf16.mxu0 %v6499
    %10205 = vmatpush1.bf16.msra.mxu0 %v6498
    %10206 = vmatprep.subr.bf16.mxu0 %v6507
    %10207 = vmatpush1.bf16.msra.mxu0 %v6506
    %10208 = vmatprep.subr.bf16.mxu0 %v6515
    %10209 = vmatpush1.bf16.msra.mxu0 %v6514
    %10210 = vmatprep.subr.bf16.mxu0 %v6523
    %10211 = vmatpush1.bf16.msra.mxu0 %v6522
    %10212 = vmatprep.subr.bf16.mxu0 %v6531
    %10213 = vmatpush1.bf16.msra.mxu0 %v6530
    %10214 = vmatprep.subr.bf16.mxu0 %v6539
    %10215 = vmatpush1.bf16.msra.mxu0 %v6538
    %10216 = vmatprep.subr.bf16.mxu0 %v6547
    %10217 = vmatpush1.bf16.msra.mxu0 %v6546
    %10218 = vmatprep.subr.bf16.mxu0 %v6555
    %10219 = vmatpush1.bf16.msra.mxu0 %v6554
    %10220 = vmatprep.subr.bf16.mxu0 %v6563
    %10221 = vmatpush1.bf16.msra.mxu0 %v6562
    %10222 = vmatprep.subr.bf16.mxu0 %v6571
    %10223 = vmatpush1.bf16.msra.mxu0 %v6570
    %10224 = vmatprep.subr.bf16.mxu0 %v6579
    %10225 = vmatpush1.bf16.msra.mxu0 %v6578
    %10226 = vmatprep.subr.bf16.mxu0 %v6587
    %10227 = vmatpush1.bf16.msra.mxu0 %v6586
    %10228 = vmatprep.subr.bf16.mxu0 %v6595
    %10229 = vmatpush1.bf16.msra.mxu0 %v6594
    %10230 = vmatprep.subr.bf16.mxu0 %v6603
    %10231 = vmatpush1.bf16.msra.mxu0 %v6602
    %10232 = vmatprep.subr.bf16.mxu0 %v6611
    %10233 = vmatpush1.bf16.msra.mxu0 %v6610
    %10234 = vmatprep.mubr.bf16.mxu0 %v1636
    %10235 = vmatmul.mubr.bf16.gmra.mrb[0].mxu0 %v1622
    %v10236 = vpop.f32.mrb[0].mxu0
    %v10237 = vadd.f32 %v9636, %v10236
    %v10238 = vpop.f32.mrb[0].mxu0
    %v10239 = vadd.f32 %v9640, %v10238
    %v10240 = vpop.f32.mrb[0].mxu0
    %v10241 = vpop.f32.mrb[0].mxu0
    %10242 = vdwg.mxu0
    %10243 = vmatprep.subr.bf16.mxu0 %v6619
    %10244 = vmatpush1.bf16.msra.mxu0 %v6618
    %10245 = vmatprep.subr.bf16.mxu0 %v6627
    %10246 = vmatpush1.bf16.msra.mxu0 %v6626
    %10247 = vmatprep.subr.bf16.mxu0 %v6635
    %10248 = vmatpush1.bf16.msra.mxu0 %v6634
    %10249 = vmatprep.subr.bf16.mxu0 %v6643
    %10250 = vmatpush1.bf16.msra.mxu0 %v6642
    %10251 = vmatprep.subr.bf16.mxu0 %v6651
    %10252 = vmatpush1.bf16.msra.mxu0 %v6650
    %10253 = vmatprep.subr.bf16.mxu0 %v6659
    %10254 = vmatpush1.bf16.msra.mxu0 %v6658
    %10255 = vmatprep.subr.bf16.mxu0 %v6667
    %10256 = vmatpush1.bf16.msra.mxu0 %v6666
    %10257 = vmatprep.subr.bf16.mxu0 %v6675
    %10258 = vmatpush1.bf16.msra.mxu0 %v6674
    %10259 = vmatprep.subr.bf16.mxu0 %v6683
    %10260 = vmatpush1.bf16.msra.mxu0 %v6682
    %10261 = vmatprep.subr.bf16.mxu0 %v6691
    %10262 = vmatpush1.bf16.msra.mxu0 %v6690
    %10263 = vmatprep.subr.bf16.mxu0 %v6699
    %10264 = vmatpush1.bf16.msra.mxu0 %v6698
    %10265 = vmatprep.subr.bf16.mxu0 %v6707
    %10266 = vmatpush1.bf16.msra.mxu0 %v6706
    %10267 = vmatprep.subr.bf16.mxu0 %v6715
    %10268 = vmatpush1.bf16.msra.mxu0 %v6714
    %10269 = vmatprep.subr.bf16.mxu0 %v6723
    %10270 = vmatpush1.bf16.msra.mxu0 %v6722
    %10271 = vmatprep.subr.bf16.mxu0 %v6731
    %10272 = vmatpush1.bf16.msra.mxu0 %v6730
    %10273 = vmatprep.subr.bf16.mxu0 %v6739
    %10274 = vmatpush1.bf16.msra.mxu0 %v6738
    %10275 = vmatprep.mubr.bf16.mxu0 %v1646
    %10276 = vmatmul.mubr.bf16.gmra.mrb[0].mxu0 %v1644
    %v10277 = vpop.f32.mrb[0].mxu0
    %v10278 = vadd.f32 %v10237, %v10277
    %v10279 = vpop.f32.mrb[0].mxu0
    %v10280 = vadd.f32 %v10239, %v10279
    %v10281 = vpop.f32.mrb[0].mxu0
    %v10282 = vpop.f32.mrb[0].mxu0
    %10283 = vdwg.mxu0
    %10284 = vmatprep.subr.bf16.mxu0 %v6747
    %10285 = vmatpush1.bf16.msra.mxu0 %v6746
    %10286 = vmatprep.subr.bf16.mxu0 %v6755
    %10287 = vmatpush1.bf16.msra.mxu0 %v6754
    %10288 = vmatprep.subr.bf16.mxu0 %v6763
    %10289 = vmatpush1.bf16.msra.mxu0 %v6762
    %10290 = vmatprep.subr.bf16.mxu0 %v6771
    %10291 = vmatpush1.bf16.msra.mxu0 %v6770
    %10292 = vmatprep.subr.bf16.mxu0 %v6779
    %10293 = vmatpush1.bf16.msra.mxu0 %v6778
    %10294 = vmatprep.subr.bf16.mxu0 %v6787
    %10295 = vmatpush1.bf16.msra.mxu0 %v6786
    %10296 = vmatprep.subr.bf16.mxu0 %v6795
    %10297 = vmatpush1.bf16.msra.mxu0 %v6794
    %10298 = vmatprep.subr.bf16.mxu0 %v6803
    %10299 = vmatpush1.bf16.msra.mxu0 %v6802
    %10300 = vmatprep.subr.bf16.mxu0 %v6811
    %10301 = vmatpush1.bf16.msra.mxu0 %v6810
    %10302 = vmatprep.subr.bf16.mxu0 %v6819
    %10303 = vmatpush1.bf16.msra.mxu0 %v6818
    %10304 = vmatprep.subr.bf16.mxu0 %v6827
    %10305 = vmatpush1.bf16.msra.mxu0 %v6826
    %10306 = vmatprep.subr.bf16.mxu0 %v6835
    %10307 = vmatpush1.bf16.msra.mxu0 %v6834
    %10308 = vmatprep.subr.bf16.mxu0 %v6843
    %10309 = vmatpush1.bf16.msra.mxu0 %v6842
    %10310 = vmatprep.subr.bf16.mxu0 %v6851
    %10311 = vmatpush1.bf16.msra.mxu0 %v6850
    %10312 = vmatprep.subr.bf16.mxu0 %v6859
    %10313 = vmatpush1.bf16.msra.mxu0 %v6858
    %10314 = vmatprep.subr.bf16.mxu0 %v6867
    %10315 = vmatpush1.bf16.msra.mxu0 %v6866
    %10316 = vmatprep.mubr.bf16.mxu0 %v1643
    %10317 = vmatmul.mubr.bf16.gmra.mrb[0].mxu0 %v1629
    %v10318 = vpop.f32.mrb[0].mxu0
    %v10319 = vadd.f32 %v10278, %v10318
    %v10320 = vpop.f32.mrb[0].mxu0
    %v10321 = vadd.f32 %v10280, %v10320
    %v10322 = vpop.f32.mrb[0].mxu0
    %v10323 = vpop.f32.mrb[0].mxu0
    %10324 = vdwg.mxu0
    %10325 = vmatprep.subr.bf16.mxu0 %v6875
    %10326 = vmatpush1.bf16.msra.mxu0 %v6874
    %10327 = vmatprep.subr.bf16.mxu0 %v6883
    %10328 = vmatpush1.bf16.msra.mxu0 %v6882
    %10329 = vmatprep.subr.bf16.mxu0 %v6891
    %10330 = vmatpush1.bf16.msra.mxu0 %v6890
    %10331 = vmatprep.subr.bf16.mxu0 %v6899
    %10332 = vmatpush1.bf16.msra.mxu0 %v6898
    %10333 = vmatprep.subr.bf16.mxu0 %v6907
    %10334 = vmatpush1.bf16.msra.mxu0 %v6906
    %10335 = vmatprep.subr.bf16.mxu0 %v6915
    %10336 = vmatpush1.bf16.msra.mxu0 %v6914
    %10337 = vmatprep.subr.bf16.mxu0 %v6923
    %10338 = vmatpush1.bf16.msra.mxu0 %v6922
    %10339 = vmatprep.subr.bf16.mxu0 %v6931
    %10340 = vmatpush1.bf16.msra.mxu0 %v6930
    %10341 = vmatprep.subr.bf16.mxu0 %v6939
    %10342 = vmatpush1.bf16.msra.mxu0 %v6938
    %10343 = vmatprep.subr.bf16.mxu0 %v6947
    %10344 = vmatpush1.bf16.msra.mxu0 %v6946
    %10345 = vmatprep.subr.bf16.mxu0 %v6955
    %10346 = vmatpush1.bf16.msra.mxu0 %v6954
    %10347 = vmatprep.subr.bf16.mxu0 %v6963
    %10348 = vmatpush1.bf16.msra.mxu0 %v6962
    %10349 = vmatprep.subr.bf16.mxu0 %v6971
    %10350 = vmatpush1.bf16.msra.mxu0 %v6970
    %10351 = vmatprep.subr.bf16.mxu0 %v6979
    %10352 = vmatpush1.bf16.msra.mxu0 %v6978
    %10353 = vmatprep.subr.bf16.mxu0 %v6987
    %10354 = vmatpush1.bf16.msra.mxu0 %v6986
    %10355 = vmatprep.subr.bf16.mxu0 %v6995
    %10356 = vmatpush1.bf16.msra.mxu0 %v6994
    %10357 = vmatprep.mubr.bf16.mxu0 %v1647
    %10358 = vmatmul.mubr.bf16.gmra.mrb[0].mxu0 %v1645
    %v10359 = vpop.f32.mrb[0].mxu0
    %v10360 = vadd.f32 %v10319, %v10359
    %v10361 = vpop.f32.mrb[0].mxu0
    %v10362 = vadd.f32 %v10321, %v10361
    %v10363 = vpop.f32.mrb[0].mxu0
    %v10364 = vpop.f32.mrb[0].mxu0
    %10365 = vdwg.mxu0
    %10366 = vmatprep.subr.bf16.mxu0 %v7003
    %10367 = vmatpush1.bf16.msra.mxu0 %v7002
    %10368 = vmatprep.subr.bf16.mxu0 %v7011
    %10369 = vmatpush1.bf16.msra.mxu0 %v7010
    %10370 = vmatprep.subr.bf16.mxu0 %v7019
    %10371 = vmatpush1.bf16.msra.mxu0 %v7018
    %10372 = vmatprep.subr.bf16.mxu0 %v7027
    %10373 = vmatpush1.bf16.msra.mxu0 %v7026
    %10374 = vmatprep.subr.bf16.mxu0 %v7035
    %10375 = vmatpush1.bf16.msra.mxu0 %v7034
    %10376 = vmatprep.subr.bf16.mxu0 %v7043
    %10377 = vmatpush1.bf16.msra.mxu0 %v7042
    %10378 = vmatprep.subr.bf16.mxu0 %v7051
    %10379 = vmatpush1.bf16.msra.mxu0 %v7050
    %10380 = vmatprep.subr.bf16.mxu0 %v7059
    %10381 = vmatpush1.bf16.msra.mxu0 %v7058
    %10382 = vmatprep.subr.bf16.mxu0 %v7067
    %10383 = vmatpush1.bf16.msra.mxu0 %v7066
    %10384 = vmatprep.subr.bf16.mxu0 %v7075
    %10385 = vmatpush1.bf16.msra.mxu0 %v7074
    %10386 = vmatprep.subr.bf16.mxu0 %v7083
    %10387 = vmatpush1.bf16.msra.mxu0 %v7082
    %10388 = vmatprep.subr.bf16.mxu0 %v7091
    %10389 = vmatpush1.bf16.msra.mxu0 %v7090
    %10390 = vmatprep.subr.bf16.mxu0 %v7099
    %10391 = vmatpush1.bf16.msra.mxu0 %v7098
    %10392 = vmatprep.subr.bf16.mxu0 %v7107
    %10393 = vmatpush1.bf16.msra.mxu0 %v7106
    %10394 = vmatprep.subr.bf16.mxu0 %v7115
    %10395 = vmatpush1.bf16.msra.mxu0 %v7114
    %10396 = vmatprep.subr.bf16.mxu0 %v7123
    %10397 = vmatpush1.bf16.msra.mxu0 %v7122
    %10398 = vmatprep.mubr.bf16.mxu0 %v1685
    %10399 = vmatmul.mubr.bf16.gmra.mrb[0].mxu0 %v1671
    %v10400 = vpop.f32.mrb[0].mxu0
    %v10401 = vadd.f32 %v10360, %v10400
    %v10402 = vpop.f32.mrb[0].mxu0
    %v10403 = vadd.f32 %v10362, %v10402
    %v10404 = vpop.f32.mrb[0].mxu0
    %v10405 = vpop.f32.mrb[0].mxu0
    %10406 = vdwg.mxu0
    %10407 = vmatprep.subr.bf16.mxu0 %v7131
    %10408 = vmatpush1.bf16.msra.mxu0 %v7130
    %10409 = vmatprep.subr.bf16.mxu0 %v7139
    %10410 = vmatpush1.bf16.msra.mxu0 %v7138
    %10411 = vmatprep.subr.bf16.mxu0 %v7147
    %10412 = vmatpush1.bf16.msra.mxu0 %v7146
    %10413 = vmatprep.subr.bf16.mxu0 %v7155
    %10414 = vmatpush1.bf16.msra.mxu0 %v7154
    %10415 = vmatprep.subr.bf16.mxu0 %v7163
    %10416 = vmatpush1.bf16.msra.mxu0 %v7162
    %10417 = vmatprep.subr.bf16.mxu0 %v7171
    %10418 = vmatpush1.bf16.msra.mxu0 %v7170
    %10419 = vmatprep.subr.bf16.mxu0 %v7179
    %10420 = vmatpush1.bf16.msra.mxu0 %v7178
    %10421 = vmatprep.subr.bf16.mxu0 %v7187
    %10422 = vmatpush1.bf16.msra.mxu0 %v7186
    %10423 = vmatprep.subr.bf16.mxu0 %v7195
    %10424 = vmatpush1.bf16.msra.mxu0 %v7194
    %10425 = vmatprep.subr.bf16.mxu0 %v7203
    %10426 = vmatpush1.bf16.msra.mxu0 %v7202
    %10427 = vmatprep.subr.bf16.mxu0 %v7211
    %10428 = vmatpush1.bf16.msra.mxu0 %v7210
    %10429 = vmatprep.subr.bf16.mxu0 %v7219
    %10430 = vmatpush1.bf16.msra.mxu0 %v7218
    %10431 = vmatprep.subr.bf16.mxu0 %v7227
    %10432 = vmatpush1.bf16.msra.mxu0 %v7226
    %10433 = vmatprep.subr.bf16.mxu0 %v7235
    %10434 = vmatpush1.bf16.msra.mxu0 %v7234
    %10435 = vmatprep.subr.bf16.mxu0 %v7243
    %10436 = vmatpush1.bf16.msra.mxu0 %v7242
    %10437 = vmatprep.subr.bf16.mxu0 %v7251
    %10438 = vmatpush1.bf16.msra.mxu0 %v7250
    %10439 = vmatprep.mubr.bf16.mxu0 %v1695
    %10440 = vmatmul.mubr.bf16.gmra.mrb[0].mxu0 %v1693
    %v10441 = vpop.f32.mrb[0].mxu0
    %v10442 = vadd.f32 %v10401, %v10441
    %v10443 = vpop.f32.mrb[0].mxu0
    %v10444 = vadd.f32 %v10403, %v10443
    %v10445 = vpop.f32.mrb[0].mxu0
    %v10446 = vpop.f32.mrb[0].mxu0
    %10447 = vdwg.mxu0
    %10448 = vmatprep.subr.bf16.mxu0 %v7259
    %10449 = vmatpush1.bf16.msra.mxu0 %v7258
    %10450 = vmatprep.subr.bf16.mxu0 %v7267
    %10451 = vmatpush1.bf16.msra.mxu0 %v7266
    %10452 = vmatprep.subr.bf16.mxu0 %v7275
    %10453 = vmatpush1.bf16.msra.mxu0 %v7274
    %10454 = vmatprep.subr.bf16.mxu0 %v7283
    %10455 = vmatpush1.bf16.msra.mxu0 %v7282
    %10456 = vmatprep.subr.bf16.mxu0 %v7291
    %10457 = vmatpush1.bf16.msra.mxu0 %v7290
    %10458 = vmatprep.subr.bf16.mxu0 %v7299
    %10459 = vmatpush1.bf16.msra.mxu0 %v7298
    %10460 = vmatprep.subr.bf16.mxu0 %v7307
    %10461 = vmatpush1.bf16.msra.mxu0 %v7306
    %10462 = vmatprep.subr.bf16.mxu0 %v7315
    %10463 = vmatpush1.bf16.msra.mxu0 %v7314
    %10464 = vmatprep.subr.bf16.mxu0 %v7323
    %10465 = vmatpush1.bf16.msra.mxu0 %v7322
    %10466 = vmatprep.subr.bf16.mxu0 %v7331
    %10467 = vmatpush1.bf16.msra.mxu0 %v7330
    %10468 = vmatprep.subr.bf16.mxu0 %v7339
    %10469 = vmatpush1.bf16.msra.mxu0 %v7338
    %10470 = vmatprep.subr.bf16.mxu0 %v7347
    %10471 = vmatpush1.bf16.msra.mxu0 %v7346
    %10472 = vmatprep.subr.bf16.mxu0 %v7355
    %10473 = vmatpush1.bf16.msra.mxu0 %v7354
    %10474 = vmatprep.subr.bf16.mxu0 %v7363
    %10475 = vmatpush1.bf16.msra.mxu0 %v7362
    %10476 = vmatprep.subr.bf16.mxu0 %v7371
    %10477 = vmatpush1.bf16.msra.mxu0 %v7370
    %10478 = vmatprep.subr.bf16.mxu0 %v7379
    %10479 = vmatpush1.bf16.msra.mxu0 %v7378
    %10480 = vmatprep.mubr.bf16.mxu0 %v1692
    %10481 = vmatmul.mubr.bf16.gmra.mrb[0].mxu0 %v1678
    %v10482 = vpop.f32.mrb[0].mxu0
    %v10483 = vadd.f32 %v10442, %v10482
    %v10484 = vpop.f32.mrb[0].mxu0
    %v10485 = vadd.f32 %v10444, %v10484
    %v10486 = vpop.f32.mrb[0].mxu0
    %v10487 = vpop.f32.mrb[0].mxu0
    %10488 = vdwg.mxu0
    %10489 = vmatprep.subr.bf16.mxu0 %v7387
    %10490 = vmatpush1.bf16.msra.mxu0 %v7386
    %10491 = vmatprep.subr.bf16.mxu0 %v7395
    %10492 = vmatpush1.bf16.msra.mxu0 %v7394
    %10493 = vmatprep.subr.bf16.mxu0 %v7403
    %10494 = vmatpush1.bf16.msra.mxu0 %v7402
    %10495 = vmatprep.subr.bf16.mxu0 %v7411
    %10496 = vmatpush1.bf16.msra.mxu0 %v7410
    %10497 = vmatprep.subr.bf16.mxu0 %v7419
    %10498 = vmatpush1.bf16.msra.mxu0 %v7418
    %10499 = vmatprep.subr.bf16.mxu0 %v7427
    %10500 = vmatpush1.bf16.msra.mxu0 %v7426
    %10501 = vmatprep.subr.bf16.mxu0 %v7435
    %10502 = vmatpush1.bf16.msra.mxu0 %v7434
    %10503 = vmatprep.subr.bf16.mxu0 %v7443
    %10504 = vmatpush1.bf16.msra.mxu0 %v7442
    %10505 = vmatprep.subr.bf16.mxu0 %v7451
    %10506 = vmatpush1.bf16.msra.mxu0 %v7450
    %10507 = vmatprep.subr.bf16.mxu0 %v7459
    %10508 = vmatpush1.bf16.msra.mxu0 %v7458
    %10509 = vmatprep.subr.bf16.mxu0 %v7467
    %10510 = vmatpush1.bf16.msra.mxu0 %v7466
    %10511 = vmatprep.subr.bf16.mxu0 %v7475
    %10512 = vmatpush1.bf16.msra.mxu0 %v7474
    %10513 = vmatprep.subr.bf16.mxu0 %v7483
    %10514 = vmatpush1.bf16.msra.mxu0 %v7482
    %10515 = vmatprep.subr.bf16.mxu0 %v7491
    %10516 = vmatpush1.bf16.msra.mxu0 %v7490
    %10517 = vmatprep.subr.bf16.mxu0 %v7499
    %10518 = vmatpush1.bf16.msra.mxu0 %v7498
    %10519 = vmatprep.subr.bf16.mxu0 %v7507
    %10520 = vmatpush1.bf16.msra.mxu0 %v7506
    %10521 = vmatprep.mubr.bf16.mxu0 %v1696
    %10522 = vmatmul.mubr.bf16.gmra.mrb[0].mxu0 %v1694
    %v10523 = vpop.f32.mrb[0].mxu0
    %v10524 = vadd.f32 %v10483, %v10523
    %v10525 = vpop.f32.mrb[0].mxu0
    %v10526 = vadd.f32 %v10485, %v10525
    %v10527 = vpop.f32.mrb[0].mxu0
    %v10528 = vpop.f32.mrb[0].mxu0
    %10529 = vdwg.mxu0
    %10530 = vmatprep.subr.bf16.mxu0 %v7515
    %10531 = vmatpush1.bf16.msra.mxu0 %v7514
    %10532 = vmatprep.subr.bf16.mxu0 %v7523
    %10533 = vmatpush1.bf16.msra.mxu0 %v7522
    %10534 = vmatprep.subr.bf16.mxu0 %v7531
    %10535 = vmatpush1.bf16.msra.mxu0 %v7530
    %10536 = vmatprep.subr.bf16.mxu0 %v7539
    %10537 = vmatpush1.bf16.msra.mxu0 %v7538
    %10538 = vmatprep.subr.bf16.mxu0 %v7547
    %10539 = vmatpush1.bf16.msra.mxu0 %v7546
    %10540 = vmatprep.subr.bf16.mxu0 %v7555
    %10541 = vmatpush1.bf16.msra.mxu0 %v7554
    %10542 = vmatprep.subr.bf16.mxu0 %v7563
    %10543 = vmatpush1.bf16.msra.mxu0 %v7562
    %10544 = vmatprep.subr.bf16.mxu0 %v7571
    %10545 = vmatpush1.bf16.msra.mxu0 %v7570
    %10546 = vmatprep.subr.bf16.mxu0 %v7579
    %10547 = vmatpush1.bf16.msra.mxu0 %v7578
    %10548 = vmatprep.subr.bf16.mxu0 %v7587
    %10549 = vmatpush1.bf16.msra.mxu0 %v7586
    %10550 = vmatprep.subr.bf16.mxu0 %v7595
    %10551 = vmatpush1.bf16.msra.mxu0 %v7594
    %10552 = vmatprep.subr.bf16.mxu0 %v7603
    %10553 = vmatpush1.bf16.msra.mxu0 %v7602
    %10554 = vmatprep.subr.bf16.mxu0 %v7611
    %10555 = vmatpush1.bf16.msra.mxu0 %v7610
    %10556 = vmatprep.subr.bf16.mxu0 %v7619
    %10557 = vmatpush1.bf16.msra.mxu0 %v7618
    %10558 = vmatprep.subr.bf16.mxu0 %v7627
    %10559 = vmatpush1.bf16.msra.mxu0 %v7626
    %10560 = vmatprep.subr.bf16.mxu0 %v7635
    %10561 = vmatpush1.bf16.msra.mxu0 %v7634
    %10562 = vmatprep.mubr.bf16.mxu0 %v1734
    %10563 = vmatmul.mubr.bf16.gmra.mrb[0].mxu0 %v1720
    %v10564 = vpop.f32.mrb[0].mxu0
    %v10565 = vadd.f32 %v10524, %v10564
    %v10566 = vpop.f32.mrb[0].mxu0
    %v10567 = vadd.f32 %v10526, %v10566
    %v10568 = vpop.f32.mrb[0].mxu0
    %v10569 = vpop.f32.mrb[0].mxu0
    %10570 = vdwg.mxu0
    %10571 = vmatprep.subr.bf16.mxu0 %v7643
    %10572 = vmatpush1.bf16.msra.mxu0 %v7642
    %10573 = vmatprep.subr.bf16.mxu0 %v7651
    %10574 = vmatpush1.bf16.msra.mxu0 %v7650
    %10575 = vmatprep.subr.bf16.mxu0 %v7659
    %10576 = vmatpush1.bf16.msra.mxu0 %v7658
    %10577 = vmatprep.subr.bf16.mxu0 %v7667
    %10578 = vmatpush1.bf16.msra.mxu0 %v7666
    %10579 = vmatprep.subr.bf16.mxu0 %v7675
    %10580 = vmatpush1.bf16.msra.mxu0 %v7674
    %10581 = vmatprep.subr.bf16.mxu0 %v7683
    %10582 = vmatpush1.bf16.msra.mxu0 %v7682
    %10583 = vmatprep.subr.bf16.mxu0 %v7691
    %10584 = vmatpush1.bf16.msra.mxu0 %v7690
    %10585 = vmatprep.subr.bf16.mxu0 %v7699
    %10586 = vmatpush1.bf16.msra.mxu0 %v7698
    %10587 = vmatprep.subr.bf16.mxu0 %v7707
    %10588 = vmatpush1.bf16.msra.mxu0 %v7706
    %10589 = vmatprep.subr.bf16.mxu0 %v7715
    %10590 = vmatpush1.bf16.msra.mxu0 %v7714
    %10591 = vmatprep.subr.bf16.mxu0 %v7723
    %10592 = vmatpush1.bf16.msra.mxu0 %v7722
    %10593 = vmatprep.subr.bf16.mxu0 %v7731
    %10594 = vmatpush1.bf16.msra.mxu0 %v7730
    %10595 = vmatprep.subr.bf16.mxu0 %v7739
    %10596 = vmatpush1.bf16.msra.mxu0 %v7738
    %10597 = vmatprep.subr.bf16.mxu0 %v7747
    %10598 = vmatpush1.bf16.msra.mxu0 %v7746
    %10599 = vmatprep.subr.bf16.mxu0 %v7755
    %10600 = vmatpush1.bf16.msra.mxu0 %v7754
    %10601 = vmatprep.subr.bf16.mxu0 %v7763
    %10602 = vmatpush1.bf16.msra.mxu0 %v7762
    %10603 = vmatprep.mubr.bf16.mxu0 %v1744
    %10604 = vmatmul.mubr.bf16.gmra.mrb[0].mxu0 %v1742
    %v10605 = vpop.f32.mrb[0].mxu0
    %v10606 = vadd.f32 %v10565, %v10605
    %v10607 = vpop.f32.mrb[0].mxu0
    %v10608 = vadd.f32 %v10567, %v10607
    %v10609 = vpop.f32.mrb[0].mxu0
    %v10610 = vpop.f32.mrb[0].mxu0
    %10611 = vdwg.mxu0
    %10612 = vmatprep.subr.bf16.mxu0 %v7771
    %10613 = vmatpush1.bf16.msra.mxu0 %v7770
    %10614 = vmatprep.subr.bf16.mxu0 %v7779
    %10615 = vmatpush1.bf16.msra.mxu0 %v7778
    %10616 = vmatprep.subr.bf16.mxu0 %v7787
    %10617 = vmatpush1.bf16.msra.mxu0 %v7786
    %10618 = vmatprep.subr.bf16.mxu0 %v7795
    %10619 = vmatpush1.bf16.msra.mxu0 %v7794
    %10620 = vmatprep.subr.bf16.mxu0 %v7803
    %10621 = vmatpush1.bf16.msra.mxu0 %v7802
    %10622 = vmatprep.subr.bf16.mxu0 %v7811
    %10623 = vmatpush1.bf16.msra.mxu0 %v7810
    %10624 = vmatprep.subr.bf16.mxu0 %v7819
    %10625 = vmatpush1.bf16.msra.mxu0 %v7818
    %10626 = vmatprep.subr.bf16.mxu0 %v7827
    %10627 = vmatpush1.bf16.msra.mxu0 %v7826
    %10628 = vmatprep.subr.bf16.mxu0 %v7835
    %10629 = vmatpush1.bf16.msra.mxu0 %v7834
    %10630 = vmatprep.subr.bf16.mxu0 %v7843
    %10631 = vmatpush1.bf16.msra.mxu0 %v7842
    %10632 = vmatprep.subr.bf16.mxu0 %v7851
    %10633 = vmatpush1.bf16.msra.mxu0 %v7850
    %10634 = vmatprep.subr.bf16.mxu0 %v7859
    %10635 = vmatpush1.bf16.msra.mxu0 %v7858
    %10636 = vmatprep.subr.bf16.mxu0 %v7867
    %10637 = vmatpush1.bf16.msra.mxu0 %v7866
    %10638 = vmatprep.subr.bf16.mxu0 %v7875
    %10639 = vmatpush1.bf16.msra.mxu0 %v7874
    %10640 = vmatprep.subr.bf16.mxu0 %v7883
    %10641 = vmatpush1.bf16.msra.mxu0 %v7882
    %10642 = vmatprep.subr.bf16.mxu0 %v7891
    %10643 = vmatpush1.bf16.msra.mxu0 %v7890
    %10644 = vmatprep.mubr.bf16.mxu0 %v1741
    %10645 = vmatmul.mubr.bf16.gmra.mrb[0].mxu0 %v1727
    %v10646 = vpop.f32.mrb[0].mxu0
    %v10647 = vadd.f32 %v10606, %v10646
    %v10648 = vpop.f32.mrb[0].mxu0
    %v10649 = vadd.f32 %v10608, %v10648
    %v10650 = vpop.f32.mrb[0].mxu0
    %v10651 = vpop.f32.mrb[0].mxu0
    %10652 = vdwg.mxu0
    %10653 = vmatprep.subr.bf16.mxu0 %v7899
    %10654 = vmatpush1.bf16.msra.mxu0 %v7898
    %10655 = vmatprep.subr.bf16.mxu0 %v7907
    %10656 = vmatpush1.bf16.msra.mxu0 %v7906
    %10657 = vmatprep.subr.bf16.mxu0 %v7915
    %10658 = vmatpush1.bf16.msra.mxu0 %v7914
    %10659 = vmatprep.subr.bf16.mxu0 %v7923
    %10660 = vmatpush1.bf16.msra.mxu0 %v7922
    %10661 = vmatprep.subr.bf16.mxu0 %v7931
    %10662 = vmatpush1.bf16.msra.mxu0 %v7930
    %10663 = vmatprep.subr.bf16.mxu0 %v7939
    %10664 = vmatpush1.bf16.msra.mxu0 %v7938
    %10665 = vmatprep.subr.bf16.mxu0 %v7947
    %10666 = vmatpush1.bf16.msra.mxu0 %v7946
    %10667 = vmatprep.subr.bf16.mxu0 %v7955
    %10668 = vmatpush1.bf16.msra.mxu0 %v7954
    %10669 = vmatprep.subr.bf16.mxu0 %v7963
    %10670 = vmatpush1.bf16.msra.mxu0 %v7962
    %10671 = vmatprep.subr.bf16.mxu0 %v7971
    %10672 = vmatpush1.bf16.msra.mxu0 %v7970
    %10673 = vmatprep.subr.bf16.mxu0 %v7979
    %10674 = vmatpush1.bf16.msra.mxu0 %v7978
    %10675 = vmatprep.subr.bf16.mxu0 %v7987
    %10676 = vmatpush1.bf16.msra.mxu0 %v7986
    %10677 = vmatprep.subr.bf16.mxu0 %v7995
    %10678 = vmatpush1.bf16.msra.mxu0 %v7994
    %10679 = vmatprep.subr.bf16.mxu0 %v8003
    %10680 = vmatpush1.bf16.msra.mxu0 %v8002
    %10681 = vmatprep.subr.bf16.mxu0 %v8011
    %10682 = vmatpush1.bf16.msra.mxu0 %v8010
    %10683 = vmatprep.subr.bf16.mxu0 %v8019
    %10684 = vmatpush1.bf16.msra.mxu0 %v8018
    %10685 = vmatprep.mubr.bf16.mxu0 %v1745
    %10686 = vmatmul.mubr.bf16.gmra.mrb[0].mxu0 %v1743
    %v10687 = vpop.f32.mrb[0].mxu0
    %v10688 = vadd.f32 %v10647, %v10687
    %v10689 = vpop.f32.mrb[0].mxu0
    %v10690 = vadd.f32 %v10649, %v10689
    %v10691 = vpop.f32.mrb[0].mxu0
    %v10692 = vpop.f32.mrb[0].mxu0
    %10693 = vdwg.mxu0
    %10694 = vmatprep.subr.bf16.mxu0 %v8027
    %10695 = vmatpush1.bf16.msra.mxu0 %v8026
    %10696 = vmatprep.subr.bf16.mxu0 %v8035
    %10697 = vmatpush1.bf16.msra.mxu0 %v8034
    %10698 = vmatprep.subr.bf16.mxu0 %v8043
    %10699 = vmatpush1.bf16.msra.mxu0 %v8042
    %10700 = vmatprep.subr.bf16.mxu0 %v8051
    %10701 = vmatpush1.bf16.msra.mxu0 %v8050
    %10702 = vmatprep.subr.bf16.mxu0 0
    %10703 = vmatpush1.bf16.msra.mxu0 0
    %10704 = vmatprep.subr.bf16.mxu0 0
    %10705 = vmatpush1.bf16.msra.mxu0 0
    %10706 = vmatprep.subr.bf16.mxu0 0
    %10707 = vmatpush1.bf16.msra.mxu0 0
    %10708 = vmatprep.subr.bf16.mxu0 0
    %10709 = vmatpush1.bf16.msra.mxu0 0
    %10710 = vmatprep.subr.bf16.mxu0 0
    %10711 = vmatpush1.bf16.msra.mxu0 0
    %10712 = vmatprep.subr.bf16.mxu0 0
    %10713 = vmatpush1.bf16.msra.mxu0 0
    %10714 = vmatprep.subr.bf16.mxu0 0
    %10715 = vmatpush1.bf16.msra.mxu0 0
    %10716 = vmatprep.subr.bf16.mxu0 0
    %10717 = vmatpush1.bf16.msra.mxu0 0
    %10718 = vmatprep.subr.bf16.mxu0 0
    %10719 = vmatpush1.bf16.msra.mxu0 0
    %10720 = vmatprep.subr.bf16.mxu0 0
    %10721 = vmatpush1.bf16.msra.mxu0 0
    %10722 = vmatprep.subr.bf16.mxu0 0
    %10723 = vmatpush1.bf16.msra.mxu0 0
    %10724 = vmatprep.subr.bf16.mxu0 0
    %10725 = vmatpush1.bf16.msra.mxu0 0
    %10726 = vmatprep.mubr.bf16.mxu0 0
    %10727 = vmatmul.mubr.bf16.gmra.mrb[0].mxu0 %v9667
    %v10728 = vpop.f32.mrb[0].mxu0
    %v10729 = vadd.f32 %v10688, %v10728
    %v10730 = vpop.f32.mrb[0].mxu0
    %v10731 = vadd.f32 %v10690, %v10730
    %v10732 = vpop.f32.mrb[0].mxu0
    %v10733 = vpop.f32.mrb[0].mxu0
    %10734 = vdwg.mxu0
    %10735 = vmatprep.subr.bf16.mxu0 %v6493
    %10736 = vmatpush1.bf16.msra.mxu0 %v6492
    %10737 = vmatprep.subr.bf16.mxu0 %v6501
    %10738 = vmatpush1.bf16.msra.mxu0 %v6500
    %10739 = vmatprep.subr.bf16.mxu0 %v6509
    %10740 = vmatpush1.bf16.msra.mxu0 %v6508
    %10741 = vmatprep.subr.bf16.mxu0 %v6517
    %10742 = vmatpush1.bf16.msra.mxu0 %v6516
    %10743 = vmatprep.subr.bf16.mxu0 %v6525
    %10744 = vmatpush1.bf16.msra.mxu0 %v6524
    %10745 = vmatprep.subr.bf16.mxu0 %v6533
    %10746 = vmatpush1.bf16.msra.mxu0 %v6532
    %10747 = vmatprep.subr.bf16.mxu0 %v6541
    %10748 = vmatpush1.bf16.msra.mxu0 %v6540
    %10749 = vmatprep.subr.bf16.mxu0 %v6549
    %10750 = vmatpush1.bf16.msra.mxu0 %v6548
    %10751 = vmatprep.subr.bf16.mxu0 %v6557
    %10752 = vmatpush1.bf16.msra.mxu0 %v6556
    %10753 = vmatprep.subr.bf16.mxu0 %v6565
    %10754 = vmatpush1.bf16.msra.mxu0 %v6564
    %10755 = vmatprep.subr.bf16.mxu0 %v6573
    %10756 = vmatpush1.bf16.msra.mxu0 %v6572
    %10757 = vmatprep.subr.bf16.mxu0 %v6581
    %10758 = vmatpush1.bf16.msra.mxu0 %v6580
    %10759 = vmatprep.subr.bf16.mxu0 %v6589
    %10760 = vmatpush1.bf16.msra.mxu0 %v6588
    %10761 = vmatprep.subr.bf16.mxu0 %v6597
    %10762 = vmatpush1.bf16.msra.mxu0 %v6596
    %10763 = vmatprep.subr.bf16.mxu0 %v6605
    %10764 = vmatpush1.bf16.msra.mxu0 %v6604
    %10765 = vmatprep.subr.bf16.mxu0 %v6613
    %10766 = vmatpush1.bf16.msra.mxu0 %v6612
    %10767 = vmatprep.mubr.bf16.mxu0 %v1636
    %10768 = vmatmul.mubr.bf16.gmra.mrb[0].mxu0 %v1622
    %v10769 = vpop.f32.mrb[0].mxu0
    %v10770 = vadd.f32 %v9644, %v10769
    %v10771 = vpop.f32.mrb[0].mxu0
    %v10772 = vadd.f32 %v9648, %v10771
    %v10773 = vpop.f32.mrb[0].mxu0
    %v10774 = vpop.f32.mrb[0].mxu0
    %10775 = vdwg.mxu0
    %10776 = vmatprep.subr.bf16.mxu0 %v6621
    %10777 = vmatpush1.bf16.msra.mxu0 %v6620
    %10778 = vmatprep.subr.bf16.mxu0 %v6629
    %10779 = vmatpush1.bf16.msra.mxu0 %v6628
    %10780 = vmatprep.subr.bf16.mxu0 %v6637
    %10781 = vmatpush1.bf16.msra.mxu0 %v6636
    %10782 = vmatprep.subr.bf16.mxu0 %v6645
    %10783 = vmatpush1.bf16.msra.mxu0 %v6644
    %10784 = vmatprep.subr.bf16.mxu0 %v6653
    %10785 = vmatpush1.bf16.msra.mxu0 %v6652
    %10786 = vmatprep.subr.bf16.mxu0 %v6661
    %10787 = vmatpush1.bf16.msra.mxu0 %v6660
    %10788 = vmatprep.subr.bf16.mxu0 %v6669
    %10789 = vmatpush1.bf16.msra.mxu0 %v6668
    %10790 = vmatprep.subr.bf16.mxu0 %v6677
    %10791 = vmatpush1.bf16.msra.mxu0 %v6676
    %10792 = vmatprep.subr.bf16.mxu0 %v6685
    %10793 = vmatpush1.bf16.msra.mxu0 %v6684
    %10794 = vmatprep.subr.bf16.mxu0 %v6693
    %10795 = vmatpush1.bf16.msra.mxu0 %v6692
    %10796 = vmatprep.subr.bf16.mxu0 %v6701
    %10797 = vmatpush1.bf16.msra.mxu0 %v6700
    %10798 = vmatprep.subr.bf16.mxu0 %v6709
    %10799 = vmatpush1.bf16.msra.mxu0 %v6708
    %10800 = vmatprep.subr.bf16.mxu0 %v6717
    %10801 = vmatpush1.bf16.msra.mxu0 %v6716
    %10802 = vmatprep.subr.bf16.mxu0 %v6725
    %10803 = vmatpush1.bf16.msra.mxu0 %v6724
    %10804 = vmatprep.subr.bf16.mxu0 %v6733
    %10805 = vmatpush1.bf16.msra.mxu0 %v6732
    %10806 = vmatprep.subr.bf16.mxu0 %v6741
    %10807 = vmatpush1.bf16.msra.mxu0 %v6740
    %10808 = vmatprep.mubr.bf16.mxu0 %v1646
    %10809 = vmatmul.mubr.bf16.gmra.mrb[0].mxu0 %v1644
    %v10810 = vpop.f32.mrb[0].mxu0
    %v10811 = vadd.f32 %v10770, %v10810
    %v10812 = vpop.f32.mrb[0].mxu0
    %v10813 = vadd.f32 %v10772, %v10812
    %v10814 = vpop.f32.mrb[0].mxu0
    %v10815 = vpop.f32.mrb[0].mxu0
    %10816 = vdwg.mxu0
    %10817 = vmatprep.subr.bf16.mxu0 %v6749
    %10818 = vmatpush1.bf16.msra.mxu0 %v6748
    %10819 = vmatprep.subr.bf16.mxu0 %v6757
    %10820 = vmatpush1.bf16.msra.mxu0 %v6756
    %10821 = vmatprep.subr.bf16.mxu0 %v6765
    %10822 = vmatpush1.bf16.msra.mxu0 %v6764
    %10823 = vmatprep.subr.bf16.mxu0 %v6773
    %10824 = vmatpush1.bf16.msra.mxu0 %v6772
    %10825 = vmatprep.subr.bf16.mxu0 %v6781
    %10826 = vmatpush1.bf16.msra.mxu0 %v6780
    %10827 = vmatprep.subr.bf16.mxu0 %v6789
    %10828 = vmatpush1.bf16.msra.mxu0 %v6788
    %10829 = vmatprep.subr.bf16.mxu0 %v6797
    %10830 = vmatpush1.bf16.msra.mxu0 %v6796
    %10831 = vmatprep.subr.bf16.mxu0 %v6805
    %10832 = vmatpush1.bf16.msra.mxu0 %v6804
    %10833 = vmatprep.subr.bf16.mxu0 %v6813
    %10834 = vmatpush1.bf16.msra.mxu0 %v6812
    %10835 = vmatprep.subr.bf16.mxu0 %v6821
    %10836 = vmatpush1.bf16.msra.mxu0 %v6820
    %10837 = vmatprep.subr.bf16.mxu0 %v6829
    %10838 = vmatpush1.bf16.msra.mxu0 %v6828
    %10839 = vmatprep.subr.bf16.mxu0 %v6837
    %10840 = vmatpush1.bf16.msra.mxu0 %v6836
    %10841 = vmatprep.subr.bf16.mxu0 %v6845
    %10842 = vmatpush1.bf16.msra.mxu0 %v6844
    %10843 = vmatprep.subr.bf16.mxu0 %v6853
    %10844 = vmatpush1.bf16.msra.mxu0 %v6852
    %10845 = vmatprep.subr.bf16.mxu0 %v6861
    %10846 = vmatpush1.bf16.msra.mxu0 %v6860
    %10847 = vmatprep.subr.bf16.mxu0 %v6869
    %10848 = vmatpush1.bf16.msra.mxu0 %v6868
    %10849 = vmatprep.mubr.bf16.mxu0 %v1643
    %10850 = vmatmul.mubr.bf16.gmra.mrb[0].mxu0 %v1629
    %v10851 = vpop.f32.mrb[0].mxu0
    %v10852 = vadd.f32 %v10811, %v10851
    %v10853 = vpop.f32.mrb[0].mxu0
    %v10854 = vadd.f32 %v10813, %v10853
    %v10855 = vpop.f32.mrb[0].mxu0
    %v10856 = vpop.f32.mrb[0].mxu0
    %10857 = vdwg.mxu0
    %10858 = vmatprep.subr.bf16.mxu0 %v6877
    %10859 = vmatpush1.bf16.msra.mxu0 %v6876
    %10860 = vmatprep.subr.bf16.mxu0 %v6885
    %10861 = vmatpush1.bf16.msra.mxu0 %v6884
    %10862 = vmatprep.subr.bf16.mxu0 %v6893
    %10863 = vmatpush1.bf16.msra.mxu0 %v6892
    %10864 = vmatprep.subr.bf16.mxu0 %v6901
    %10865 = vmatpush1.bf16.msra.mxu0 %v6900
    %10866 = vmatprep.subr.bf16.mxu0 %v6909
    %10867 = vmatpush1.bf16.msra.mxu0 %v6908
    %10868 = vmatprep.subr.bf16.mxu0 %v6917
    %10869 = vmatpush1.bf16.msra.mxu0 %v6916
    %10870 = vmatprep.subr.bf16.mxu0 %v6925
    %10871 = vmatpush1.bf16.msra.mxu0 %v6924
    %10872 = vmatprep.subr.bf16.mxu0 %v6933
    %10873 = vmatpush1.bf16.msra.mxu0 %v6932
    %10874 = vmatprep.subr.bf16.mxu0 %v6941
    %10875 = vmatpush1.bf16.msra.mxu0 %v6940
    %10876 = vmatprep.subr.bf16.mxu0 %v6949
    %10877 = vmatpush1.bf16.msra.mxu0 %v6948
    %10878 = vmatprep.subr.bf16.mxu0 %v6957
    %10879 = vmatpush1.bf16.msra.mxu0 %v6956
    %10880 = vmatprep.subr.bf16.mxu0 %v6965
    %10881 = vmatpush1.bf16.msra.mxu0 %v6964
    %10882 = vmatprep.subr.bf16.mxu0 %v6973
    %10883 = vmatpush1.bf16.msra.mxu0 %v6972
    %10884 = vmatprep.subr.bf16.mxu0 %v6981
    %10885 = vmatpush1.bf16.msra.mxu0 %v6980
    %10886 = vmatprep.subr.bf16.mxu0 %v6989
    %10887 = vmatpush1.bf16.msra.mxu0 %v6988
    %10888 = vmatprep.subr.bf16.mxu0 %v6997
    %10889 = vmatpush1.bf16.msra.mxu0 %v6996
    %10890 = vmatprep.mubr.bf16.mxu0 %v1647
    %10891 = vmatmul.mubr.bf16.gmra.mrb[0].mxu0 %v1645
    %v10892 = vpop.f32.mrb[0].mxu0
    %v10893 = vadd.f32 %v10852, %v10892
    %v10894 = vpop.f32.mrb[0].mxu0
    %v10895 = vadd.f32 %v10854, %v10894
    %v10896 = vpop.f32.mrb[0].mxu0
    %v10897 = vpop.f32.mrb[0].mxu0
    %10898 = vdwg.mxu0
    %10899 = vmatprep.subr.bf16.mxu0 %v7005
    %10900 = vmatpush1.bf16.msra.mxu0 %v7004
    %10901 = vmatprep.subr.bf16.mxu0 %v7013
    %10902 = vmatpush1.bf16.msra.mxu0 %v7012
    %10903 = vmatprep.subr.bf16.mxu0 %v7021
    %10904 = vmatpush1.bf16.msra.mxu0 %v7020
    %10905 = vmatprep.subr.bf16.mxu0 %v7029
    %10906 = vmatpush1.bf16.msra.mxu0 %v7028
    %10907 = vmatprep.subr.bf16.mxu0 %v7037
    %10908 = vmatpush1.bf16.msra.mxu0 %v7036
    %10909 = vmatprep.subr.bf16.mxu0 %v7045
    %10910 = vmatpush1.bf16.msra.mxu0 %v7044
    %10911 = vmatprep.subr.bf16.mxu0 %v7053
    %10912 = vmatpush1.bf16.msra.mxu0 %v7052
    %10913 = vmatprep.subr.bf16.mxu0 %v7061
    %10914 = vmatpush1.bf16.msra.mxu0 %v7060
    %10915 = vmatprep.subr.bf16.mxu0 %v7069
    %10916 = vmatpush1.bf16.msra.mxu0 %v7068
    %10917 = vmatprep.subr.bf16.mxu0 %v7077
    %10918 = vmatpush1.bf16.msra.mxu0 %v7076
    %10919 = vmatprep.subr.bf16.mxu0 %v7085
    %10920 = vmatpush1.bf16.msra.mxu0 %v7084
    %10921 = vmatprep.subr.bf16.mxu0 %v7093
    %10922 = vmatpush1.bf16.msra.mxu0 %v7092
    %10923 = vmatprep.subr.bf16.mxu0 %v7101
    %10924 = vmatpush1.bf16.msra.mxu0 %v7100
    %10925 = vmatprep.subr.bf16.mxu0 %v7109
    %10926 = vmatpush1.bf16.msra.mxu0 %v7108
    %10927 = vmatprep.subr.bf16.mxu0 %v7117
    %10928 = vmatpush1.bf16.msra.mxu0 %v7116
    %10929 = vmatprep.subr.bf16.mxu0 %v7125
    %10930 = vmatpush1.bf16.msra.mxu0 %v7124
    %10931 = vmatprep.mubr.bf16.mxu0 %v1685
    %10932 = vmatmul.mubr.bf16.gmra.mrb[0].mxu0 %v1671
    %v10933 = vpop.f32.mrb[0].mxu0
    %v10934 = vadd.f32 %v10893, %v10933
    %v10935 = vpop.f32.mrb[0].mxu0
    %v10936 = vadd.f32 %v10895, %v10935
    %v10937 = vpop.f32.mrb[0].mxu0
    %v10938 = vpop.f32.mrb[0].mxu0
    %10939 = vdwg.mxu0
    %10940 = vmatprep.subr.bf16.mxu0 %v7133
    %10941 = vmatpush1.bf16.msra.mxu0 %v7132
    %10942 = vmatprep.subr.bf16.mxu0 %v7141
    %10943 = vmatpush1.bf16.msra.mxu0 %v7140
    %10944 = vmatprep.subr.bf16.mxu0 %v7149
    %10945 = vmatpush1.bf16.msra.mxu0 %v7148
    %10946 = vmatprep.subr.bf16.mxu0 %v7157
    %10947 = vmatpush1.bf16.msra.mxu0 %v7156
    %10948 = vmatprep.subr.bf16.mxu0 %v7165
    %10949 = vmatpush1.bf16.msra.mxu0 %v7164
    %10950 = vmatprep.subr.bf16.mxu0 %v7173
    %10951 = vmatpush1.bf16.msra.mxu0 %v7172
    %10952 = vmatprep.subr.bf16.mxu0 %v7181
    %10953 = vmatpush1.bf16.msra.mxu0 %v7180
    %10954 = vmatprep.subr.bf16.mxu0 %v7189
    %10955 = vmatpush1.bf16.msra.mxu0 %v7188
    %10956 = vmatprep.subr.bf16.mxu0 %v7197
    %10957 = vmatpush1.bf16.msra.mxu0 %v7196
    %10958 = vmatprep.subr.bf16.mxu0 %v7205
    %10959 = vmatpush1.bf16.msra.mxu0 %v7204
    %10960 = vmatprep.subr.bf16.mxu0 %v7213
    %10961 = vmatpush1.bf16.msra.mxu0 %v7212
    %10962 = vmatprep.subr.bf16.mxu0 %v7221
    %10963 = vmatpush1.bf16.msra.mxu0 %v7220
    %10964 = vmatprep.subr.bf16.mxu0 %v7229
    %10965 = vmatpush1.bf16.msra.mxu0 %v7228
    %10966 = vmatprep.subr.bf16.mxu0 %v7237
    %10967 = vmatpush1.bf16.msra.mxu0 %v7236
    %10968 = vmatprep.subr.bf16.mxu0 %v7245
    %10969 = vmatpush1.bf16.msra.mxu0 %v7244
    %10970 = vmatprep.subr.bf16.mxu0 %v7253
    %10971 = vmatpush1.bf16.msra.mxu0 %v7252
    %10972 = vmatprep.mubr.bf16.mxu0 %v1695
    %10973 = vmatmul.mubr.bf16.gmra.mrb[0].mxu0 %v1693
    %v10974 = vpop.f32.mrb[0].mxu0
    %v10975 = vadd.f32 %v10934, %v10974
    %v10976 = vpop.f32.mrb[0].mxu0
    %v10977 = vadd.f32 %v10936, %v10976
    %v10978 = vpop.f32.mrb[0].mxu0
    %v10979 = vpop.f32.mrb[0].mxu0
    %10980 = vdwg.mxu0
    %10981 = vmatprep.subr.bf16.mxu0 %v7261
    %10982 = vmatpush1.bf16.msra.mxu0 %v7260
    %10983 = vmatprep.subr.bf16.mxu0 %v7269
    %10984 = vmatpush1.bf16.msra.mxu0 %v7268
    %10985 = vmatprep.subr.bf16.mxu0 %v7277
    %10986 = vmatpush1.bf16.msra.mxu0 %v7276
    %10987 = vmatprep.subr.bf16.mxu0 %v7285
    %10988 = vmatpush1.bf16.msra.mxu0 %v7284
    %10989 = vmatprep.subr.bf16.mxu0 %v7293
    %10990 = vmatpush1.bf16.msra.mxu0 %v7292
    %10991 = vmatprep.subr.bf16.mxu0 %v7301
    %10992 = vmatpush1.bf16.msra.mxu0 %v7300
    %10993 = vmatprep.subr.bf16.mxu0 %v7309
    %10994 = vmatpush1.bf16.msra.mxu0 %v7308
    %10995 = vmatprep.subr.bf16.mxu0 %v7317
    %10996 = vmatpush1.bf16.msra.mxu0 %v7316
    %10997 = vmatprep.subr.bf16.mxu0 %v7325
    %10998 = vmatpush1.bf16.msra.mxu0 %v7324
    %10999 = vmatprep.subr.bf16.mxu0 %v7333
    %11000 = vmatpush1.bf16.msra.mxu0 %v7332
    %11001 = vmatprep.subr.bf16.mxu0 %v7341
    %11002 = vmatpush1.bf16.msra.mxu0 %v7340
    %11003 = vmatprep.subr.bf16.mxu0 %v7349
    %11004 = vmatpush1.bf16.msra.mxu0 %v7348
    %11005 = vmatprep.subr.bf16.mxu0 %v7357
    %11006 = vmatpush1.bf16.msra.mxu0 %v7356
    %11007 = vmatprep.subr.bf16.mxu0 %v7365
    %11008 = vmatpush1.bf16.msra.mxu0 %v7364
    %11009 = vmatprep.subr.bf16.mxu0 %v7373
    %11010 = vmatpush1.bf16.msra.mxu0 %v7372
    %11011 = vmatprep.subr.bf16.mxu0 %v7381
    %11012 = vmatpush1.bf16.msra.mxu0 %v7380
    %11013 = vmatprep.mubr.bf16.mxu0 %v1692
    %11014 = vmatmul.mubr.bf16.gmra.mrb[0].mxu0 %v1678
    %v11015 = vpop.f32.mrb[0].mxu0
    %v11016 = vadd.f32 %v10975, %v11015
    %v11017 = vpop.f32.mrb[0].mxu0
    %v11018 = vadd.f32 %v10977, %v11017
    %v11019 = vpop.f32.mrb[0].mxu0
    %v11020 = vpop.f32.mrb[0].mxu0
    %11021 = vdwg.mxu0
    %11022 = vmatprep.subr.bf16.mxu0 %v7389
    %11023 = vmatpush1.bf16.msra.mxu0 %v7388
    %11024 = vmatprep.subr.bf16.mxu0 %v7397
    %11025 = vmatpush1.bf16.msra.mxu0 %v7396
    %11026 = vmatprep.subr.bf16.mxu0 %v7405
    %11027 = vmatpush1.bf16.msra.mxu0 %v7404
    %11028 = vmatprep.subr.bf16.mxu0 %v7413
    %11029 = vmatpush1.bf16.msra.mxu0 %v7412
    %11030 = vmatprep.subr.bf16.mxu0 %v7421
    %11031 = vmatpush1.bf16.msra.mxu0 %v7420
    %11032 = vmatprep.subr.bf16.mxu0 %v7429
    %11033 = vmatpush1.bf16.msra.mxu0 %v7428
    %11034 = vmatprep.subr.bf16.mxu0 %v7437
    %11035 = vmatpush1.bf16.msra.mxu0 %v7436
    %11036 = vmatprep.subr.bf16.mxu0 %v7445
    %11037 = vmatpush1.bf16.msra.mxu0 %v7444
    %11038 = vmatprep.subr.bf16.mxu0 %v7453
    %11039 = vmatpush1.bf16.msra.mxu0 %v7452
    %11040 = vmatprep.subr.bf16.mxu0 %v7461
    %11041 = vmatpush1.bf16.msra.mxu0 %v7460
    %11042 = vmatprep.subr.bf16.mxu0 %v7469
    %11043 = vmatpush1.bf16.msra.mxu0 %v7468
    %11044 = vmatprep.subr.bf16.mxu0 %v7477
    %11045 = vmatpush1.bf16.msra.mxu0 %v7476
    %11046 = vmatprep.subr.bf16.mxu0 %v7485
    %11047 = vmatpush1.bf16.msra.mxu0 %v7484
    %11048 = vmatprep.subr.bf16.mxu0 %v7493
    %11049 = vmatpush1.bf16.msra.mxu0 %v7492
    %11050 = vmatprep.subr.bf16.mxu0 %v7501
    %11051 = vmatpush1.bf16.msra.mxu0 %v7500
    %11052 = vmatprep.subr.bf16.mxu0 %v7509
    %11053 = vmatpush1.bf16.msra.mxu0 %v7508
    %11054 = vmatprep.mubr.bf16.mxu0 %v1696
    %11055 = vmatmul.mubr.bf16.gmra.mrb[0].mxu0 %v1694
    %v11056 = vpop.f32.mrb[0].mxu0
    %v11057 = vadd.f32 %v11016, %v11056
    %v11058 = vpop.f32.mrb[0].mxu0
    %v11059 = vadd.f32 %v11018, %v11058
    %v11060 = vpop.f32.mrb[0].mxu0
    %v11061 = vpop.f32.mrb[0].mxu0
    %11062 = vdwg.mxu0
    %11063 = vmatprep.subr.bf16.mxu0 %v7517
    %11064 = vmatpush1.bf16.msra.mxu0 %v7516
    %11065 = vmatprep.subr.bf16.mxu0 %v7525
    %11066 = vmatpush1.bf16.msra.mxu0 %v7524
    %11067 = vmatprep.subr.bf16.mxu0 %v7533
    %11068 = vmatpush1.bf16.msra.mxu0 %v7532
    %11069 = vmatprep.subr.bf16.mxu0 %v7541
    %11070 = vmatpush1.bf16.msra.mxu0 %v7540
    %11071 = vmatprep.subr.bf16.mxu0 %v7549
    %11072 = vmatpush1.bf16.msra.mxu0 %v7548
    %11073 = vmatprep.subr.bf16.mxu0 %v7557
    %11074 = vmatpush1.bf16.msra.mxu0 %v7556
    %11075 = vmatprep.subr.bf16.mxu0 %v7565
    %11076 = vmatpush1.bf16.msra.mxu0 %v7564
    %11077 = vmatprep.subr.bf16.mxu0 %v7573
    %11078 = vmatpush1.bf16.msra.mxu0 %v7572
    %11079 = vmatprep.subr.bf16.mxu0 %v7581
    %11080 = vmatpush1.bf16.msra.mxu0 %v7580
    %11081 = vmatprep.subr.bf16.mxu0 %v7589
    %11082 = vmatpush1.bf16.msra.mxu0 %v7588
    %11083 = vmatprep.subr.bf16.mxu0 %v7597
    %11084 = vmatpush1.bf16.msra.mxu0 %v7596
    %11085 = vmatprep.subr.bf16.mxu0 %v7605
    %11086 = vmatpush1.bf16.msra.mxu0 %v7604
    %11087 = vmatprep.subr.bf16.mxu0 %v7613
    %11088 = vmatpush1.bf16.msra.mxu0 %v7612
    %11089 = vmatprep.subr.bf16.mxu0 %v7621
    %11090 = vmatpush1.bf16.msra.mxu0 %v7620
    %11091 = vmatprep.subr.bf16.mxu0 %v7629
    %11092 = vmatpush1.bf16.msra.mxu0 %v7628
    %11093 = vmatprep.subr.bf16.mxu0 %v7637
    %11094 = vmatpush1.bf16.msra.mxu0 %v7636
    %11095 = vmatprep.mubr.bf16.mxu0 %v1734
    %11096 = vmatmul.mubr.bf16.gmra.mrb[0].mxu0 %v1720
    %v11097 = vpop.f32.mrb[0].mxu0
    %v11098 = vadd.f32 %v11057, %v11097
    %v11099 = vpop.f32.mrb[0].mxu0
    %v11100 = vadd.f32 %v11059, %v11099
    %v11101 = vpop.f32.mrb[0].mxu0
    %v11102 = vpop.f32.mrb[0].mxu0
    %11103 = vdwg.mxu0
    %11104 = vmatprep.subr.bf16.mxu0 %v7645
    %11105 = vmatpush1.bf16.msra.mxu0 %v7644
    %11106 = vmatprep.subr.bf16.mxu0 %v7653
    %11107 = vmatpush1.bf16.msra.mxu0 %v7652
    %11108 = vmatprep.subr.bf16.mxu0 %v7661
    %11109 = vmatpush1.bf16.msra.mxu0 %v7660
    %11110 = vmatprep.subr.bf16.mxu0 %v7669
    %11111 = vmatpush1.bf16.msra.mxu0 %v7668
    %11112 = vmatprep.subr.bf16.mxu0 %v7677
    %11113 = vmatpush1.bf16.msra.mxu0 %v7676
    %11114 = vmatprep.subr.bf16.mxu0 %v7685
    %11115 = vmatpush1.bf16.msra.mxu0 %v7684
    %11116 = vmatprep.subr.bf16.mxu0 %v7693
    %11117 = vmatpush1.bf16.msra.mxu0 %v7692
    %11118 = vmatprep.subr.bf16.mxu0 %v7701
    %11119 = vmatpush1.bf16.msra.mxu0 %v7700
    %11120 = vmatprep.subr.bf16.mxu0 %v7709
    %11121 = vmatpush1.bf16.msra.mxu0 %v7708
    %11122 = vmatprep.subr.bf16.mxu0 %v7717
    %11123 = vmatpush1.bf16.msra.mxu0 %v7716
    %11124 = vmatprep.subr.bf16.mxu0 %v7725
    %11125 = vmatpush1.bf16.msra.mxu0 %v7724
    %11126 = vmatprep.subr.bf16.mxu0 %v7733
    %11127 = vmatpush1.bf16.msra.mxu0 %v7732
    %11128 = vmatprep.subr.bf16.mxu0 %v7741
    %11129 = vmatpush1.bf16.msra.mxu0 %v7740
    %11130 = vmatprep.subr.bf16.mxu0 %v7749
    %11131 = vmatpush1.bf16.msra.mxu0 %v7748
    %11132 = vmatprep.subr.bf16.mxu0 %v7757
    %11133 = vmatpush1.bf16.msra.mxu0 %v7756
    %11134 = vmatprep.subr.bf16.mxu0 %v7765
    %11135 = vmatpush1.bf16.msra.mxu0 %v7764
    %11136 = vmatprep.mubr.bf16.mxu0 %v1744
    %11137 = vmatmul.mubr.bf16.gmra.mrb[0].mxu0 %v1742
    %v11138 = vpop.f32.mrb[0].mxu0
    %v11139 = vadd.f32 %v11098, %v11138
    %v11140 = vpop.f32.mrb[0].mxu0
    %v11141 = vadd.f32 %v11100, %v11140
    %v11142 = vpop.f32.mrb[0].mxu0
    %v11143 = vpop.f32.mrb[0].mxu0
    %11144 = vdwg.mxu0
    %11145 = vmatprep.subr.bf16.mxu0 %v7773
    %11146 = vmatpush1.bf16.msra.mxu0 %v7772
    %11147 = vmatprep.subr.bf16.mxu0 %v7781
    %11148 = vmatpush1.bf16.msra.mxu0 %v7780
    %11149 = vmatprep.subr.bf16.mxu0 %v7789
    %11150 = vmatpush1.bf16.msra.mxu0 %v7788
    %11151 = vmatprep.subr.bf16.mxu0 %v7797
    %11152 = vmatpush1.bf16.msra.mxu0 %v7796
    %11153 = vmatprep.subr.bf16.mxu0 %v7805
    %11154 = vmatpush1.bf16.msra.mxu0 %v7804
    %11155 = vmatprep.subr.bf16.mxu0 %v7813
    %11156 = vmatpush1.bf16.msra.mxu0 %v7812
    %11157 = vmatprep.subr.bf16.mxu0 %v7821
    %11158 = vmatpush1.bf16.msra.mxu0 %v7820
    %11159 = vmatprep.subr.bf16.mxu0 %v7829
    %11160 = vmatpush1.bf16.msra.mxu0 %v7828
    %11161 = vmatprep.subr.bf16.mxu0 %v7837
    %11162 = vmatpush1.bf16.msra.mxu0 %v7836
    %11163 = vmatprep.subr.bf16.mxu0 %v7845
    %11164 = vmatpush1.bf16.msra.mxu0 %v7844
    %11165 = vmatprep.subr.bf16.mxu0 %v7853
    %11166 = vmatpush1.bf16.msra.mxu0 %v7852
    %11167 = vmatprep.subr.bf16.mxu0 %v7861
    %11168 = vmatpush1.bf16.msra.mxu0 %v7860
    %11169 = vmatprep.subr.bf16.mxu0 %v7869
    %11170 = vmatpush1.bf16.msra.mxu0 %v7868
    %11171 = vmatprep.subr.bf16.mxu0 %v7877
    %11172 = vmatpush1.bf16.msra.mxu0 %v7876
    %11173 = vmatprep.subr.bf16.mxu0 %v7885
    %11174 = vmatpush1.bf16.msra.mxu0 %v7884
    %11175 = vmatprep.subr.bf16.mxu0 %v7893
    %11176 = vmatpush1.bf16.msra.mxu0 %v7892
    %11177 = vmatprep.mubr.bf16.mxu0 %v1741
    %11178 = vmatmul.mubr.bf16.gmra.mrb[0].mxu0 %v1727
    %v11179 = vpop.f32.mrb[0].mxu0
    %v11180 = vadd.f32 %v11139, %v11179
    %v11181 = vpop.f32.mrb[0].mxu0
    %v11182 = vadd.f32 %v11141, %v11181
    %v11183 = vpop.f32.mrb[0].mxu0
    %v11184 = vpop.f32.mrb[0].mxu0
    %11185 = vdwg.mxu0
    %11186 = vmatprep.subr.bf16.mxu0 %v7901
    %11187 = vmatpush1.bf16.msra.mxu0 %v7900
    %11188 = vmatprep.subr.bf16.mxu0 %v7909
    %11189 = vmatpush1.bf16.msra.mxu0 %v7908
    %11190 = vmatprep.subr.bf16.mxu0 %v7917
    %11191 = vmatpush1.bf16.msra.mxu0 %v7916
    %11192 = vmatprep.subr.bf16.mxu0 %v7925
    %11193 = vmatpush1.bf16.msra.mxu0 %v7924
    %11194 = vmatprep.subr.bf16.mxu0 %v7933
    %11195 = vmatpush1.bf16.msra.mxu0 %v7932
    %11196 = vmatprep.subr.bf16.mxu0 %v7941
    %11197 = vmatpush1.bf16.msra.mxu0 %v7940
    %11198 = vmatprep.subr.bf16.mxu0 %v7949
    %11199 = vmatpush1.bf16.msra.mxu0 %v7948
    %11200 = vmatprep.subr.bf16.mxu0 %v7957
    %11201 = vmatpush1.bf16.msra.mxu0 %v7956
    %11202 = vmatprep.subr.bf16.mxu0 %v7965
    %11203 = vmatpush1.bf16.msra.mxu0 %v7964
    %11204 = vmatprep.subr.bf16.mxu0 %v7973
    %11205 = vmatpush1.bf16.msra.mxu0 %v7972
    %11206 = vmatprep.subr.bf16.mxu0 %v7981
    %11207 = vmatpush1.bf16.msra.mxu0 %v7980
    %11208 = vmatprep.subr.bf16.mxu0 %v7989
    %11209 = vmatpush1.bf16.msra.mxu0 %v7988
    %11210 = vmatprep.subr.bf16.mxu0 %v7997
    %11211 = vmatpush1.bf16.msra.mxu0 %v7996
    %11212 = vmatprep.subr.bf16.mxu0 %v8005
    %11213 = vmatpush1.bf16.msra.mxu0 %v8004
    %11214 = vmatprep.subr.bf16.mxu0 %v8013
    %11215 = vmatpush1.bf16.msra.mxu0 %v8012
    %11216 = vmatprep.subr.bf16.mxu0 %v8021
    %11217 = vmatpush1.bf16.msra.mxu0 %v8020
    %11218 = vmatprep.mubr.bf16.mxu0 %v1745
    %11219 = vmatmul.mubr.bf16.gmra.mrb[0].mxu0 %v1743
    %v11220 = vpop.f32.mrb[0].mxu0
    %v11221 = vadd.f32 %v11180, %v11220
    %v11222 = vpop.f32.mrb[0].mxu0
    %v11223 = vadd.f32 %v11182, %v11222
    %v11224 = vpop.f32.mrb[0].mxu0
    %v11225 = vpop.f32.mrb[0].mxu0
    %11226 = vdwg.mxu0
    %11227 = vmatprep.subr.bf16.mxu0 %v8029
    %11228 = vmatpush1.bf16.msra.mxu0 %v8028
    %11229 = vmatprep.subr.bf16.mxu0 %v8037
    %11230 = vmatpush1.bf16.msra.mxu0 %v8036
    %11231 = vmatprep.subr.bf16.mxu0 %v8045
    %11232 = vmatpush1.bf16.msra.mxu0 %v8044
    %11233 = vmatprep.subr.bf16.mxu0 %v8053
    %11234 = vmatpush1.bf16.msra.mxu0 %v8052
    %11235 = vmatprep.subr.bf16.mxu0 0
    %11236 = vmatpush1.bf16.msra.mxu0 0
    %11237 = vmatprep.subr.bf16.mxu0 0
    %11238 = vmatpush1.bf16.msra.mxu0 0
    %11239 = vmatprep.subr.bf16.mxu0 0
    %11240 = vmatpush1.bf16.msra.mxu0 0
    %11241 = vmatprep.subr.bf16.mxu0 0
    %11242 = vmatpush1.bf16.msra.mxu0 0
    %11243 = vmatprep.subr.bf16.mxu0 0
    %11244 = vmatpush1.bf16.msra.mxu0 0
    %11245 = vmatprep.subr.bf16.mxu0 0
    %11246 = vmatpush1.bf16.msra.mxu0 0
    %11247 = vmatprep.subr.bf16.mxu0 0
    %11248 = vmatpush1.bf16.msra.mxu0 0
    %11249 = vmatprep.subr.bf16.mxu0 0
    %11250 = vmatpush1.bf16.msra.mxu0 0
    %11251 = vmatprep.subr.bf16.mxu0 0
    %11252 = vmatpush1.bf16.msra.mxu0 0
    %11253 = vmatprep.subr.bf16.mxu0 0
    %11254 = vmatpush1.bf16.msra.mxu0 0
    %11255 = vmatprep.subr.bf16.mxu0 0
    %11256 = vmatpush1.bf16.msra.mxu0 0
    %11257 = vmatprep.subr.bf16.mxu0 0
    %11258 = vmatpush1.bf16.msra.mxu0 0
    %11259 = vmatprep.mubr.bf16.mxu0 0
    %11260 = vmatmul.mubr.bf16.gmra.mrb[0].mxu0 %v9667
    %v11261 = vpop.f32.mrb[0].mxu0
    %v11262 = vadd.f32 %v11221, %v11261
    %v11263 = vpop.f32.mrb[0].mxu0
    %v11264 = vadd.f32 %v11223, %v11263
    %v11265 = vpop.f32.mrb[0].mxu0
    %v11266 = vpop.f32.mrb[0].mxu0
    %11267 = vdwg.mxu0
    %11268 = vmatprep.subr.bf16.mxu0 %v6495
    %11269 = vmatpush1.bf16.msra.mxu0 %v6494
    %11270 = vmatprep.subr.bf16.mxu0 %v6503
    %11271 = vmatpush1.bf16.msra.mxu0 %v6502
    %11272 = vmatprep.subr.bf16.mxu0 %v6511
    %11273 = vmatpush1.bf16.msra.mxu0 %v6510
    %11274 = vmatprep.subr.bf16.mxu0 %v6519
    %11275 = vmatpush1.bf16.msra.mxu0 %v6518
    %11276 = vmatprep.subr.bf16.mxu0 %v6527
    %11277 = vmatpush1.bf16.msra.mxu0 %v6526
    %11278 = vmatprep.subr.bf16.mxu0 %v6535
    %11279 = vmatpush1.bf16.msra.mxu0 %v6534
    %11280 = vmatprep.subr.bf16.mxu0 %v6543
    %11281 = vmatpush1.bf16.msra.mxu0 %v6542
    %11282 = vmatprep.subr.bf16.mxu0 %v6551
    %11283 = vmatpush1.bf16.msra.mxu0 %v6550
    %11284 = vmatprep.subr.bf16.mxu0 %v6559
    %11285 = vmatpush1.bf16.msra.mxu0 %v6558
    %11286 = vmatprep.subr.bf16.mxu0 %v6567
    %11287 = vmatpush1.bf16.msra.mxu0 %v6566
    %11288 = vmatprep.subr.bf16.mxu0 %v6575
    %11289 = vmatpush1.bf16.msra.mxu0 %v6574
    %11290 = vmatprep.subr.bf16.mxu0 %v6583
    %11291 = vmatpush1.bf16.msra.mxu0 %v6582
    %11292 = vmatprep.subr.bf16.mxu0 %v6591
    %11293 = vmatpush1.bf16.msra.mxu0 %v6590
    %11294 = vmatprep.subr.bf16.mxu0 %v6599
    %11295 = vmatpush1.bf16.msra.mxu0 %v6598
    %11296 = vmatprep.subr.bf16.mxu0 %v6607
    %11297 = vmatpush1.bf16.msra.mxu0 %v6606
    %11298 = vmatprep.subr.bf16.mxu0 %v6615
    %11299 = vmatpush1.bf16.msra.mxu0 %v6614
    %11300 = vmatprep.mubr.bf16.mxu0 %v1636
    %11301 = vmatmul.mubr.bf16.gmra.mrb[0].mxu0 %v1622
    %v11302 = vpop.f32.mrb[0].mxu0
    %v11303 = vadd.f32 %v9652, %v11302
    %v11304 = vpop.f32.mrb[0].mxu0
    %v11305 = vadd.f32 %v9656, %v11304
    %v11306 = vpop.f32.mrb[0].mxu0
    %v11307 = vpop.f32.mrb[0].mxu0
    %11308 = vdwg.mxu0
    %11309 = vmatprep.subr.bf16.mxu0 %v6623
    %11310 = vmatpush1.bf16.msra.mxu0 %v6622
    %11311 = vmatprep.subr.bf16.mxu0 %v6631
    %11312 = vmatpush1.bf16.msra.mxu0 %v6630
    %11313 = vmatprep.subr.bf16.mxu0 %v6639
    %11314 = vmatpush1.bf16.msra.mxu0 %v6638
    %11315 = vmatprep.subr.bf16.mxu0 %v6647
    %11316 = vmatpush1.bf16.msra.mxu0 %v6646
    %11317 = vmatprep.subr.bf16.mxu0 %v6655
    %11318 = vmatpush1.bf16.msra.mxu0 %v6654
    %11319 = vmatprep.subr.bf16.mxu0 %v6663
    %11320 = vmatpush1.bf16.msra.mxu0 %v6662
    %11321 = vmatprep.subr.bf16.mxu0 %v6671
    %11322 = vmatpush1.bf16.msra.mxu0 %v6670
    %11323 = vmatprep.subr.bf16.mxu0 %v6679
    %11324 = vmatpush1.bf16.msra.mxu0 %v6678
    %11325 = vmatprep.subr.bf16.mxu0 %v6687
    %11326 = vmatpush1.bf16.msra.mxu0 %v6686
    %11327 = vmatprep.subr.bf16.mxu0 %v6695
    %11328 = vmatpush1.bf16.msra.mxu0 %v6694
    %11329 = vmatprep.subr.bf16.mxu0 %v6703
    %11330 = vmatpush1.bf16.msra.mxu0 %v6702
    %11331 = vmatprep.subr.bf16.mxu0 %v6711
    %11332 = vmatpush1.bf16.msra.mxu0 %v6710
    %11333 = vmatprep.subr.bf16.mxu0 %v6719
    %11334 = vmatpush1.bf16.msra.mxu0 %v6718
    %11335 = vmatprep.subr.bf16.mxu0 %v6727
    %11336 = vmatpush1.bf16.msra.mxu0 %v6726
    %11337 = vmatprep.subr.bf16.mxu0 %v6735
    %11338 = vmatpush1.bf16.msra.mxu0 %v6734
    %11339 = vmatprep.subr.bf16.mxu0 %v6743
    %11340 = vmatpush1.bf16.msra.mxu0 %v6742
    %11341 = vmatprep.mubr.bf16.mxu0 %v1646
    %11342 = vmatmul.mubr.bf16.gmra.mrb[0].mxu0 %v1644
    %v11343 = vpop.f32.mrb[0].mxu0
    %v11344 = vadd.f32 %v11303, %v11343
    %v11345 = vpop.f32.mrb[0].mxu0
    %v11346 = vadd.f32 %v11305, %v11345
    %v11347 = vpop.f32.mrb[0].mxu0
    %v11348 = vpop.f32.mrb[0].mxu0
    %11349 = vdwg.mxu0
    %11350 = vmatprep.subr.bf16.mxu0 %v6751
    %11351 = vmatpush1.bf16.msra.mxu0 %v6750
    %11352 = vmatprep.subr.bf16.mxu0 %v6759
    %11353 = vmatpush1.bf16.msra.mxu0 %v6758
    %11354 = vmatprep.subr.bf16.mxu0 %v6767
    %11355 = vmatpush1.bf16.msra.mxu0 %v6766
    %11356 = vmatprep.subr.bf16.mxu0 %v6775
    %11357 = vmatpush1.bf16.msra.mxu0 %v6774
    %11358 = vmatprep.subr.bf16.mxu0 %v6783
    %11359 = vmatpush1.bf16.msra.mxu0 %v6782
    %11360 = vmatprep.subr.bf16.mxu0 %v6791
    %11361 = vmatpush1.bf16.msra.mxu0 %v6790
    %11362 = vmatprep.subr.bf16.mxu0 %v6799
    %11363 = vmatpush1.bf16.msra.mxu0 %v6798
    %11364 = vmatprep.subr.bf16.mxu0 %v6807
    %11365 = vmatpush1.bf16.msra.mxu0 %v6806
    %11366 = vmatprep.subr.bf16.mxu0 %v6815
    %11367 = vmatpush1.bf16.msra.mxu0 %v6814
    %11368 = vmatprep.subr.bf16.mxu0 %v6823
    %11369 = vmatpush1.bf16.msra.mxu0 %v6822
    %11370 = vmatprep.subr.bf16.mxu0 %v6831
    %11371 = vmatpush1.bf16.msra.mxu0 %v6830
    %11372 = vmatprep.subr.bf16.mxu0 %v6839
    %11373 = vmatpush1.bf16.msra.mxu0 %v6838
    %11374 = vmatprep.subr.bf16.mxu0 %v6847
    %11375 = vmatpush1.bf16.msra.mxu0 %v6846
    %11376 = vmatprep.subr.bf16.mxu0 %v6855
    %11377 = vmatpush1.bf16.msra.mxu0 %v6854
    %11378 = vmatprep.subr.bf16.mxu0 %v6863
    %11379 = vmatpush1.bf16.msra.mxu0 %v6862
    %11380 = vmatprep.subr.bf16.mxu0 %v6871
    %11381 = vmatpush1.bf16.msra.mxu0 %v6870
    %11382 = vmatprep.mubr.bf16.mxu0 %v1643
    %11383 = vmatmul.mubr.bf16.gmra.mrb[0].mxu0 %v1629
    %v11384 = vpop.f32.mrb[0].mxu0
    %v11385 = vadd.f32 %v11344, %v11384
    %v11386 = vpop.f32.mrb[0].mxu0
    %v11387 = vadd.f32 %v11346, %v11386
    %v11388 = vpop.f32.mrb[0].mxu0
    %v11389 = vpop.f32.mrb[0].mxu0
    %11390 = vdwg.mxu0
    %11391 = vmatprep.subr.bf16.mxu0 %v6879
    %11392 = vmatpush1.bf16.msra.mxu0 %v6878
    %11393 = vmatprep.subr.bf16.mxu0 %v6887
    %11394 = vmatpush1.bf16.msra.mxu0 %v6886
    %11395 = vmatprep.subr.bf16.mxu0 %v6895
    %11396 = vmatpush1.bf16.msra.mxu0 %v6894
    %11397 = vmatprep.subr.bf16.mxu0 %v6903
    %11398 = vmatpush1.bf16.msra.mxu0 %v6902
    %11399 = vmatprep.subr.bf16.mxu0 %v6911
    %11400 = vmatpush1.bf16.msra.mxu0 %v6910
    %11401 = vmatprep.subr.bf16.mxu0 %v6919
    %11402 = vmatpush1.bf16.msra.mxu0 %v6918
    %11403 = vmatprep.subr.bf16.mxu0 %v6927
    %11404 = vmatpush1.bf16.msra.mxu0 %v6926
    %11405 = vmatprep.subr.bf16.mxu0 %v6935
    %11406 = vmatpush1.bf16.msra.mxu0 %v6934
    %11407 = vmatprep.subr.bf16.mxu0 %v6943
    %11408 = vmatpush1.bf16.msra.mxu0 %v6942
    %11409 = vmatprep.subr.bf16.mxu0 %v6951
    %11410 = vmatpush1.bf16.msra.mxu0 %v6950
    %11411 = vmatprep.subr.bf16.mxu0 %v6959
    %11412 = vmatpush1.bf16.msra.mxu0 %v6958
    %11413 = vmatprep.subr.bf16.mxu0 %v6967
    %11414 = vmatpush1.bf16.msra.mxu0 %v6966
    %11415 = vmatprep.subr.bf16.mxu0 %v6975
    %11416 = vmatpush1.bf16.msra.mxu0 %v6974
    %11417 = vmatprep.subr.bf16.mxu0 %v6983
    %11418 = vmatpush1.bf16.msra.mxu0 %v6982
    %11419 = vmatprep.subr.bf16.mxu0 %v6991
    %11420 = vmatpush1.bf16.msra.mxu0 %v6990
    %11421 = vmatprep.subr.bf16.mxu0 %v6999
    %11422 = vmatpush1.bf16.msra.mxu0 %v6998
    %11423 = vmatprep.mubr.bf16.mxu0 %v1647
    %11424 = vmatmul.mubr.bf16.gmra.mrb[0].mxu0 %v1645
    %v11425 = vpop.f32.mrb[0].mxu0
    %v11426 = vadd.f32 %v11385, %v11425
    %v11427 = vpop.f32.mrb[0].mxu0
    %v11428 = vadd.f32 %v11387, %v11427
    %v11429 = vpop.f32.mrb[0].mxu0
    %v11430 = vpop.f32.mrb[0].mxu0
    %11431 = vdwg.mxu0
    %11432 = vmatprep.subr.bf16.mxu0 %v7007
    %11433 = vmatpush1.bf16.msra.mxu0 %v7006
    %11434 = vmatprep.subr.bf16.mxu0 %v7015
    %11435 = vmatpush1.bf16.msra.mxu0 %v7014
    %11436 = vmatprep.subr.bf16.mxu0 %v7023
    %11437 = vmatpush1.bf16.msra.mxu0 %v7022
    %11438 = vmatprep.subr.bf16.mxu0 %v7031
    %11439 = vmatpush1.bf16.msra.mxu0 %v7030
    %11440 = vmatprep.subr.bf16.mxu0 %v7039
    %11441 = vmatpush1.bf16.msra.mxu0 %v7038
    %11442 = vmatprep.subr.bf16.mxu0 %v7047
    %11443 = vmatpush1.bf16.msra.mxu0 %v7046
    %11444 = vmatprep.subr.bf16.mxu0 %v7055
    %11445 = vmatpush1.bf16.msra.mxu0 %v7054
    %11446 = vmatprep.subr.bf16.mxu0 %v7063
    %11447 = vmatpush1.bf16.msra.mxu0 %v7062
    %11448 = vmatprep.subr.bf16.mxu0 %v7071
    %11449 = vmatpush1.bf16.msra.mxu0 %v7070
    %11450 = vmatprep.subr.bf16.mxu0 %v7079
    %11451 = vmatpush1.bf16.msra.mxu0 %v7078
    %11452 = vmatprep.subr.bf16.mxu0 %v7087
    %11453 = vmatpush1.bf16.msra.mxu0 %v7086
    %11454 = vmatprep.subr.bf16.mxu0 %v7095
    %11455 = vmatpush1.bf16.msra.mxu0 %v7094
    %11456 = vmatprep.subr.bf16.mxu0 %v7103
    %11457 = vmatpush1.bf16.msra.mxu0 %v7102
    %11458 = vmatprep.subr.bf16.mxu0 %v7111
    %11459 = vmatpush1.bf16.msra.mxu0 %v7110
    %11460 = vmatprep.subr.bf16.mxu0 %v7119
    %11461 = vmatpush1.bf16.msra.mxu0 %v7118
    %11462 = vmatprep.subr.bf16.mxu0 %v7127
    %11463 = vmatpush1.bf16.msra.mxu0 %v7126
    %11464 = vmatprep.mubr.bf16.mxu0 %v1685
    %11465 = vmatmul.mubr.bf16.gmra.mrb[0].mxu0 %v1671
    %v11466 = vpop.f32.mrb[0].mxu0
    %v11467 = vadd.f32 %v11426, %v11466
    %v11468 = vpop.f32.mrb[0].mxu0
    %v11469 = vadd.f32 %v11428, %v11468
    %v11470 = vpop.f32.mrb[0].mxu0
    %v11471 = vpop.f32.mrb[0].mxu0
    %11472 = vdwg.mxu0
    %11473 = vmatprep.subr.bf16.mxu0 %v7135
    %11474 = vmatpush1.bf16.msra.mxu0 %v7134
    %11475 = vmatprep.subr.bf16.mxu0 %v7143
    %11476 = vmatpush1.bf16.msra.mxu0 %v7142
    %11477 = vmatprep.subr.bf16.mxu0 %v7151
    %11478 = vmatpush1.bf16.msra.mxu0 %v7150
    %11479 = vmatprep.subr.bf16.mxu0 %v7159
    %11480 = vmatpush1.bf16.msra.mxu0 %v7158
    %11481 = vmatprep.subr.bf16.mxu0 %v7167
    %11482 = vmatpush1.bf16.msra.mxu0 %v7166
    %11483 = vmatprep.subr.bf16.mxu0 %v7175
    %11484 = vmatpush1.bf16.msra.mxu0 %v7174
    %11485 = vmatprep.subr.bf16.mxu0 %v7183
    %11486 = vmatpush1.bf16.msra.mxu0 %v7182
    %11487 = vmatprep.subr.bf16.mxu0 %v7191
    %11488 = vmatpush1.bf16.msra.mxu0 %v7190
    %11489 = vmatprep.subr.bf16.mxu0 %v7199
    %11490 = vmatpush1.bf16.msra.mxu0 %v7198
    %11491 = vmatprep.subr.bf16.mxu0 %v7207
    %11492 = vmatpush1.bf16.msra.mxu0 %v7206
    %11493 = vmatprep.subr.bf16.mxu0 %v7215
    %11494 = vmatpush1.bf16.msra.mxu0 %v7214
    %11495 = vmatprep.subr.bf16.mxu0 %v7223
    %11496 = vmatpush1.bf16.msra.mxu0 %v7222
    %11497 = vmatprep.subr.bf16.mxu0 %v7231
    %11498 = vmatpush1.bf16.msra.mxu0 %v7230
    %11499 = vmatprep.subr.bf16.mxu0 %v7239
    %11500 = vmatpush1.bf16.msra.mxu0 %v7238
    %11501 = vmatprep.subr.bf16.mxu0 %v7247
    %11502 = vmatpush1.bf16.msra.mxu0 %v7246
    %11503 = vmatprep.subr.bf16.mxu0 %v7255
    %11504 = vmatpush1.bf16.msra.mxu0 %v7254
    %11505 = vmatprep.mubr.bf16.mxu0 %v1695
    %11506 = vmatmul.mubr.bf16.gmra.mrb[0].mxu0 %v1693
    %v11507 = vpop.f32.mrb[0].mxu0
    %v11508 = vadd.f32 %v11467, %v11507
    %v11509 = vpop.f32.mrb[0].mxu0
    %v11510 = vadd.f32 %v11469, %v11509
    %v11511 = vpop.f32.mrb[0].mxu0
    %v11512 = vpop.f32.mrb[0].mxu0
    %11513 = vdwg.mxu0
    %11514 = vmatprep.subr.bf16.mxu0 %v7263
    %11515 = vmatpush1.bf16.msra.mxu0 %v7262
    %11516 = vmatprep.subr.bf16.mxu0 %v7271
    %11517 = vmatpush1.bf16.msra.mxu0 %v7270
    %11518 = vmatprep.subr.bf16.mxu0 %v7279
    %11519 = vmatpush1.bf16.msra.mxu0 %v7278
    %11520 = vmatprep.subr.bf16.mxu0 %v7287
    %11521 = vmatpush1.bf16.msra.mxu0 %v7286
    %11522 = vmatprep.subr.bf16.mxu0 %v7295
    %11523 = vmatpush1.bf16.msra.mxu0 %v7294
    %11524 = vmatprep.subr.bf16.mxu0 %v7303
    %11525 = vmatpush1.bf16.msra.mxu0 %v7302
    %11526 = vmatprep.subr.bf16.mxu0 %v7311
    %11527 = vmatpush1.bf16.msra.mxu0 %v7310
    %11528 = vmatprep.subr.bf16.mxu0 %v7319
    %11529 = vmatpush1.bf16.msra.mxu0 %v7318
    %11530 = vmatprep.subr.bf16.mxu0 %v7327
    %11531 = vmatpush1.bf16.msra.mxu0 %v7326
    %11532 = vmatprep.subr.bf16.mxu0 %v7335
    %11533 = vmatpush1.bf16.msra.mxu0 %v7334
    %11534 = vmatprep.subr.bf16.mxu0 %v7343
    %11535 = vmatpush1.bf16.msra.mxu0 %v7342
    %11536 = vmatprep.subr.bf16.mxu0 %v7351
    %11537 = vmatpush1.bf16.msra.mxu0 %v7350
    %11538 = vmatprep.subr.bf16.mxu0 %v7359
    %11539 = vmatpush1.bf16.msra.mxu0 %v7358
    %11540 = vmatprep.subr.bf16.mxu0 %v7367
    %11541 = vmatpush1.bf16.msra.mxu0 %v7366
    %11542 = vmatprep.subr.bf16.mxu0 %v7375
    %11543 = vmatpush1.bf16.msra.mxu0 %v7374
    %11544 = vmatprep.subr.bf16.mxu0 %v7383
    %11545 = vmatpush1.bf16.msra.mxu0 %v7382
    %11546 = vmatprep.mubr.bf16.mxu0 %v1692
    %11547 = vmatmul.mubr.bf16.gmra.mrb[0].mxu0 %v1678
    %v11548 = vpop.f32.mrb[0].mxu0
    %v11549 = vadd.f32 %v11508, %v11548
    %v11550 = vpop.f32.mrb[0].mxu0
    %v11551 = vadd.f32 %v11510, %v11550
    %v11552 = vpop.f32.mrb[0].mxu0
    %v11553 = vpop.f32.mrb[0].mxu0
    %11554 = vdwg.mxu0
    %11555 = vmatprep.subr.bf16.mxu0 %v7391
    %11556 = vmatpush1.bf16.msra.mxu0 %v7390
    %11557 = vmatprep.subr.bf16.mxu0 %v7399
    %11558 = vmatpush1.bf16.msra.mxu0 %v7398
    %11559 = vmatprep.subr.bf16.mxu0 %v7407
    %11560 = vmatpush1.bf16.msra.mxu0 %v7406
    %11561 = vmatprep.subr.bf16.mxu0 %v7415
    %11562 = vmatpush1.bf16.msra.mxu0 %v7414
    %11563 = vmatprep.subr.bf16.mxu0 %v7423
    %11564 = vmatpush1.bf16.msra.mxu0 %v7422
    %11565 = vmatprep.subr.bf16.mxu0 %v7431
    %11566 = vmatpush1.bf16.msra.mxu0 %v7430
    %11567 = vmatprep.subr.bf16.mxu0 %v7439
    %11568 = vmatpush1.bf16.msra.mxu0 %v7438
    %11569 = vmatprep.subr.bf16.mxu0 %v7447
    %11570 = vmatpush1.bf16.msra.mxu0 %v7446
    %11571 = vmatprep.subr.bf16.mxu0 %v7455
    %11572 = vmatpush1.bf16.msra.mxu0 %v7454
    %11573 = vmatprep.subr.bf16.mxu0 %v7463
    %11574 = vmatpush1.bf16.msra.mxu0 %v7462
    %11575 = vmatprep.subr.bf16.mxu0 %v7471
    %11576 = vmatpush1.bf16.msra.mxu0 %v7470
    %11577 = vmatprep.subr.bf16.mxu0 %v7479
    %11578 = vmatpush1.bf16.msra.mxu0 %v7478
    %11579 = vmatprep.subr.bf16.mxu0 %v7487
    %11580 = vmatpush1.bf16.msra.mxu0 %v7486
    %11581 = vmatprep.subr.bf16.mxu0 %v7495
    %11582 = vmatpush1.bf16.msra.mxu0 %v7494
    %11583 = vmatprep.subr.bf16.mxu0 %v7503
    %11584 = vmatpush1.bf16.msra.mxu0 %v7502
    %11585 = vmatprep.subr.bf16.mxu0 %v7511
    %11586 = vmatpush1.bf16.msra.mxu0 %v7510
    %11587 = vmatprep.mubr.bf16.mxu0 %v1696
    %11588 = vmatmul.mubr.bf16.gmra.mrb[0].mxu0 %v1694
    %v11589 = vpop.f32.mrb[0].mxu0
    %v11590 = vadd.f32 %v11549, %v11589
    %v11591 = vpop.f32.mrb[0].mxu0
    %v11592 = vadd.f32 %v11551, %v11591
    %v11593 = vpop.f32.mrb[0].mxu0
    %v11594 = vpop.f32.mrb[0].mxu0
    %11595 = vdwg.mxu0
    %11596 = vmatprep.subr.bf16.mxu0 %v7519
    %11597 = vmatpush1.bf16.msra.mxu0 %v7518
    %11598 = vmatprep.subr.bf16.mxu0 %v7527
    %11599 = vmatpush1.bf16.msra.mxu0 %v7526
    %11600 = vmatprep.subr.bf16.mxu0 %v7535
    %11601 = vmatpush1.bf16.msra.mxu0 %v7534
    %11602 = vmatprep.subr.bf16.mxu0 %v7543
    %11603 = vmatpush1.bf16.msra.mxu0 %v7542
    %11604 = vmatprep.subr.bf16.mxu0 %v7551
    %11605 = vmatpush1.bf16.msra.mxu0 %v7550
    %11606 = vmatprep.subr.bf16.mxu0 %v7559
    %11607 = vmatpush1.bf16.msra.mxu0 %v7558
    %11608 = vmatprep.subr.bf16.mxu0 %v7567
    %11609 = vmatpush1.bf16.msra.mxu0 %v7566
    %11610 = vmatprep.subr.bf16.mxu0 %v7575
    %11611 = vmatpush1.bf16.msra.mxu0 %v7574
    %11612 = vmatprep.subr.bf16.mxu0 %v7583
    %11613 = vmatpush1.bf16.msra.mxu0 %v7582
    %11614 = vmatprep.subr.bf16.mxu0 %v7591
    %11615 = vmatpush1.bf16.msra.mxu0 %v7590
    %11616 = vmatprep.subr.bf16.mxu0 %v7599
    %11617 = vmatpush1.bf16.msra.mxu0 %v7598
    %11618 = vmatprep.subr.bf16.mxu0 %v7607
    %11619 = vmatpush1.bf16.msra.mxu0 %v7606
    %11620 = vmatprep.subr.bf16.mxu0 %v7615
    %11621 = vmatpush1.bf16.msra.mxu0 %v7614
    %11622 = vmatprep.subr.bf16.mxu0 %v7623
    %11623 = vmatpush1.bf16.msra.mxu0 %v7622
    %11624 = vmatprep.subr.bf16.mxu0 %v7631
    %11625 = vmatpush1.bf16.msra.mxu0 %v7630
    %11626 = vmatprep.subr.bf16.mxu0 %v7639
    %11627 = vmatpush1.bf16.msra.mxu0 %v7638
    %11628 = vmatprep.mubr.bf16.mxu0 %v1734
    %11629 = vmatmul.mubr.bf16.gmra.mrb[0].mxu0 %v1720
    %v11630 = vpop.f32.mrb[0].mxu0
    %v11631 = vadd.f32 %v11590, %v11630
    %v11632 = vpop.f32.mrb[0].mxu0
    %v11633 = vadd.f32 %v11592, %v11632
    %v11634 = vpop.f32.mrb[0].mxu0
    %v11635 = vpop.f32.mrb[0].mxu0
    %11636 = vdwg.mxu0
    %11637 = vmatprep.subr.bf16.mxu0 %v7647
    %11638 = vmatpush1.bf16.msra.mxu0 %v7646
    %11639 = vmatprep.subr.bf16.mxu0 %v7655
    %11640 = vmatpush1.bf16.msra.mxu0 %v7654
    %11641 = vmatprep.subr.bf16.mxu0 %v7663
    %11642 = vmatpush1.bf16.msra.mxu0 %v7662
    %11643 = vmatprep.subr.bf16.mxu0 %v7671
    %11644 = vmatpush1.bf16.msra.mxu0 %v7670
    %11645 = vmatprep.subr.bf16.mxu0 %v7679
    %11646 = vmatpush1.bf16.msra.mxu0 %v7678
    %11647 = vmatprep.subr.bf16.mxu0 %v7687
    %11648 = vmatpush1.bf16.msra.mxu0 %v7686
    %11649 = vmatprep.subr.bf16.mxu0 %v7695
    %11650 = vmatpush1.bf16.msra.mxu0 %v7694
    %11651 = vmatprep.subr.bf16.mxu0 %v7703
    %11652 = vmatpush1.bf16.msra.mxu0 %v7702
    %11653 = vmatprep.subr.bf16.mxu0 %v7711
    %11654 = vmatpush1.bf16.msra.mxu0 %v7710
    %11655 = vmatprep.subr.bf16.mxu0 %v7719
    %11656 = vmatpush1.bf16.msra.mxu0 %v7718
    %11657 = vmatprep.subr.bf16.mxu0 %v7727
    %11658 = vmatpush1.bf16.msra.mxu0 %v7726
    %11659 = vmatprep.subr.bf16.mxu0 %v7735
    %11660 = vmatpush1.bf16.msra.mxu0 %v7734
    %11661 = vmatprep.subr.bf16.mxu0 %v7743
    %11662 = vmatpush1.bf16.msra.mxu0 %v7742
    %11663 = vmatprep.subr.bf16.mxu0 %v7751
    %11664 = vmatpush1.bf16.msra.mxu0 %v7750
    %11665 = vmatprep.subr.bf16.mxu0 %v7759
    %11666 = vmatpush1.bf16.msra.mxu0 %v7758
    %11667 = vmatprep.subr.bf16.mxu0 %v7767
    %11668 = vmatpush1.bf16.msra.mxu0 %v7766
    %11669 = vmatprep.mubr.bf16.mxu0 %v1744
    %11670 = vmatmul.mubr.bf16.gmra.mrb[0].mxu0 %v1742
    %v11671 = vpop.f32.mrb[0].mxu0
    %v11672 = vadd.f32 %v11631, %v11671
    %v11673 = vpop.f32.mrb[0].mxu0
    %v11674 = vadd.f32 %v11633, %v11673
    %v11675 = vpop.f32.mrb[0].mxu0
    %v11676 = vpop.f32.mrb[0].mxu0
    %11677 = vdwg.mxu0
    %11678 = vmatprep.subr.bf16.mxu0 %v7775
    %11679 = vmatpush1.bf16.msra.mxu0 %v7774
    %11680 = vmatprep.subr.bf16.mxu0 %v7783
    %11681 = vmatpush1.bf16.msra.mxu0 %v7782
    %11682 = vmatprep.subr.bf16.mxu0 %v7791
    %11683 = vmatpush1.bf16.msra.mxu0 %v7790
    %11684 = vmatprep.subr.bf16.mxu0 %v7799
    %11685 = vmatpush1.bf16.msra.mxu0 %v7798
    %11686 = vmatprep.subr.bf16.mxu0 %v7807
    %11687 = vmatpush1.bf16.msra.mxu0 %v7806
    %11688 = vmatprep.subr.bf16.mxu0 %v7815
    %11689 = vmatpush1.bf16.msra.mxu0 %v7814
    %11690 = vmatprep.subr.bf16.mxu0 %v7823
    %11691 = vmatpush1.bf16.msra.mxu0 %v7822
    %11692 = vmatprep.subr.bf16.mxu0 %v7831
    %11693 = vmatpush1.bf16.msra.mxu0 %v7830
    %11694 = vmatprep.subr.bf16.mxu0 %v7839
    %11695 = vmatpush1.bf16.msra.mxu0 %v7838
    %11696 = vmatprep.subr.bf16.mxu0 %v7847
    %11697 = vmatpush1.bf16.msra.mxu0 %v7846
    %11698 = vmatprep.subr.bf16.mxu0 %v7855
    %11699 = vmatpush1.bf16.msra.mxu0 %v7854
    %11700 = vmatprep.subr.bf16.mxu0 %v7863
    %11701 = vmatpush1.bf16.msra.mxu0 %v7862
    %11702 = vmatprep.subr.bf16.mxu0 %v7871
    %11703 = vmatpush1.bf16.msra.mxu0 %v7870
    %11704 = vmatprep.subr.bf16.mxu0 %v7879
    %11705 = vmatpush1.bf16.msra.mxu0 %v7878
    %11706 = vmatprep.subr.bf16.mxu0 %v7887
    %11707 = vmatpush1.bf16.msra.mxu0 %v7886
    %11708 = vmatprep.subr.bf16.mxu0 %v7895
    %11709 = vmatpush1.bf16.msra.mxu0 %v7894
    %11710 = vmatprep.mubr.bf16.mxu0 %v1741
    %11711 = vmatmul.mubr.bf16.gmra.mrb[0].mxu0 %v1727
    %v11712 = vpop.f32.mrb[0].mxu0
    %v11713 = vadd.f32 %v11672, %v11712
    %v11714 = vpop.f32.mrb[0].mxu0
    %v11715 = vadd.f32 %v11674, %v11714
    %v11716 = vpop.f32.mrb[0].mxu0
    %v11717 = vpop.f32.mrb[0].mxu0
    %11718 = vdwg.mxu0
    %11719 = vmatprep.subr.bf16.mxu0 %v7903
    %11720 = vmatpush1.bf16.msra.mxu0 %v7902
    %11721 = vmatprep.subr.bf16.mxu0 %v7911
    %11722 = vmatpush1.bf16.msra.mxu0 %v7910
    %11723 = vmatprep.subr.bf16.mxu0 %v7919
    %11724 = vmatpush1.bf16.msra.mxu0 %v7918
    %11725 = vmatprep.subr.bf16.mxu0 %v7927
    %11726 = vmatpush1.bf16.msra.mxu0 %v7926
    %11727 = vmatprep.subr.bf16.mxu0 %v7935
    %11728 = vmatpush1.bf16.msra.mxu0 %v7934
    %11729 = vmatprep.subr.bf16.mxu0 %v7943
    %11730 = vmatpush1.bf16.msra.mxu0 %v7942
    %11731 = vmatprep.subr.bf16.mxu0 %v7951
    %11732 = vmatpush1.bf16.msra.mxu0 %v7950
    %11733 = vmatprep.subr.bf16.mxu0 %v7959
    %11734 = vmatpush1.bf16.msra.mxu0 %v7958
    %11735 = vmatprep.subr.bf16.mxu0 %v7967
    %11736 = vmatpush1.bf16.msra.mxu0 %v7966
    %11737 = vmatprep.subr.bf16.mxu0 %v7975
    %11738 = vmatpush1.bf16.msra.mxu0 %v7974
    %11739 = vmatprep.subr.bf16.mxu0 %v7983
    %11740 = vmatpush1.bf16.msra.mxu0 %v7982
    %11741 = vmatprep.subr.bf16.mxu0 %v7991
    %11742 = vmatpush1.bf16.msra.mxu0 %v7990
    %11743 = vmatprep.subr.bf16.mxu0 %v7999
    %11744 = vmatpush1.bf16.msra.mxu0 %v7998
    %11745 = vmatprep.subr.bf16.mxu0 %v8007
    %11746 = vmatpush1.bf16.msra.mxu0 %v8006
    %11747 = vmatprep.subr.bf16.mxu0 %v8015
    %11748 = vmatpush1.bf16.msra.mxu0 %v8014
    %11749 = vmatprep.subr.bf16.mxu0 %v8023
    %11750 = vmatpush1.bf16.msra.mxu0 %v8022
    %11751 = vmatprep.mubr.bf16.mxu0 %v1745
    %11752 = vmatmul.mubr.bf16.gmra.mrb[0].mxu0 %v1743
    %v11753 = vpop.f32.mrb[0].mxu0
    %v11754 = vadd.f32 %v11713, %v11753
    %v11755 = vpop.f32.mrb[0].mxu0
    %v11756 = vadd.f32 %v11715, %v11755
    %v11757 = vpop.f32.mrb[0].mxu0
    %v11758 = vpop.f32.mrb[0].mxu0
    %11759 = vdwg.mxu0
    %11760 = vmatprep.subr.bf16.mxu0 %v8031
    %11761 = vmatpush1.bf16.msra.mxu0 %v8030
    %11762 = vmatprep.subr.bf16.mxu0 %v8039
    %11763 = vmatpush1.bf16.msra.mxu0 %v8038
    %11764 = vmatprep.subr.bf16.mxu0 %v8047
    %11765 = vmatpush1.bf16.msra.mxu0 %v8046
    %11766 = vmatprep.subr.bf16.mxu0 %v8055
    %11767 = vmatpush1.bf16.msra.mxu0 %v8054
    %11768 = vmatprep.subr.bf16.mxu0 0
    %11769 = vmatpush1.bf16.msra.mxu0 0
    %11770 = vmatprep.subr.bf16.mxu0 0
    %11771 = vmatpush1.bf16.msra.mxu0 0
    %11772 = vmatprep.subr.bf16.mxu0 0
    %11773 = vmatpush1.bf16.msra.mxu0 0
    %11774 = vmatprep.subr.bf16.mxu0 0
    %11775 = vmatpush1.bf16.msra.mxu0 0
    %11776 = vmatprep.subr.bf16.mxu0 0
    %11777 = vmatpush1.bf16.msra.mxu0 0
    %11778 = vmatprep.subr.bf16.mxu0 0
    %11779 = vmatpush1.bf16.msra.mxu0 0
    %11780 = vmatprep.subr.bf16.mxu0 0
    %11781 = vmatpush1.bf16.msra.mxu0 0
    %11782 = vmatprep.subr.bf16.mxu0 0
    %11783 = vmatpush1.bf16.msra.mxu0 0
    %11784 = vmatprep.subr.bf16.mxu0 0
    %11785 = vmatpush1.bf16.msra.mxu0 0
    %11786 = vmatprep.subr.bf16.mxu0 0
    %11787 = vmatpush1.bf16.msra.mxu0 0
    %11788 = vmatprep.subr.bf16.mxu0 0
    %11789 = vmatpush1.bf16.msra.mxu0 0
    %11790 = vmatprep.subr.bf16.mxu0 0
    %11791 = vmatpush1.bf16.msra.mxu0 0
    %11792 = vmatprep.mubr.bf16.mxu0 0
    %11793 = vmatmul.mubr.bf16.gmra.mrb[0].mxu0 %v9667
    %v11794 = vpop.f32.mrb[0].mxu0
    %v11795 = vadd.f32 %v11754, %v11794
    %v11796 = vpop.f32.mrb[0].mxu0
    %v11797 = vadd.f32 %v11756, %v11796
    %v11798 = vpop.f32.mrb[0].mxu0
    %v11799 = vpop.f32.mrb[0].mxu0
    %11800 = vdwg.mxu0
    %v11801 = vmax.f32 %v10196, 0.0
    %v11802 = vmax.f32 %v10198, 0.0
    %v11803 = vmax.f32 %v10729, 0.0
    %v11804 = vmax.f32 %v10731, 0.0
    %v11805 = vmax.f32 %v11262, 0.0
    %v11806 = vmax.f32 %v11264, 0.0
    %v11807 = vmax.f32 %v11795, 0.0
    %v11808 = vmax.f32 %v11797, 0.0
    %v11809 = vpack.c.bf16 %v11801, %v11801
    %v11810 = vpack.c.bf16 %v11802, %v11802
    %v11811 = vpack.c.bf16 %v11803, %v11803
    %v11812 = vpack.c.bf16 %v11804, %v11804
    %v11813 = vpack.c.bf16 %v11805, %v11805
    %v11814 = vpack.c.bf16 %v11806, %v11806
    %v11815 = vpack.c.bf16 %v11807, %v11807
    %v11816 = vpack.c.bf16 %v11808, %v11808
    %v11817 = vld [vmem:[%s3] sm:$0xf]
    %v11818 = vld [vmem:[%s3 + $0x4] sm:$0xf]
    %v11819 = vld [vmem:[%s3 + $0x8] sm:$0xf]
    %v11820 = vld [vmem:[%s3 + $0xc] sm:$0xf]
    %v11821 = vld [vmem:[%s3 + $0x10] sm:$0xf]
    %v11822 = vld [vmem:[%s3 + $0x14] sm:$0xf]
    %v11823 = vld [vmem:[%s3 + $0x18] sm:$0xf]
    %v11824 = vld [vmem:[%s3 + $0x1c] sm:$0xf]
    %v11825 = vld [vmem:[%s3 + $0x20] sm:$0xf]
    %v11826 = vld [vmem:[%s3 + $0x24] sm:$0xf]
    %v11827 = vld [vmem:[%s3 + $0x28] sm:$0xf]
    %v11828 = vld [vmem:[%s3 + $0x2c] sm:$0xf]
    %v11829 = vld [vmem:[%s3 + $0x30] sm:$0xf]
    %v11830 = vld [vmem:[%s3 + $0x34] sm:$0xf]
    %v11831 = vld [vmem:[%s3 + $0x38] sm:$0xf]
    %v11832 = vld [vmem:[%s3 + $0x3c] sm:$0xf]
    %v11833 = vld [vmem:[%s3 + $0x40] sm:$0xf]
    %v11834 = vld [vmem:[%s3 + $0x44] sm:$0xf]
    %v11835 = vld [vmem:[%s3 + $0x48] sm:$0xf]
    %v11836 = vld [vmem:[%s3 + $0x4c] sm:$0xf]
    %v11837 = vld [vmem:[%s3 + $0x50] sm:$0xf]
    %v11838 = vld [vmem:[%s3 + $0x54] sm:$0xf]
    %v11839 = vld [vmem:[%s3 + $0x58] sm:$0xf]
    %v11840 = vld [vmem:[%s3 + $0x5c] sm:$0xf]
    %v11841 = vld [vmem:[%s3 + $0x60] sm:$0xf]
    %v11842 = vld [vmem:[%s3 + $0x64] sm:$0xf]
    %v11843 = vld [vmem:[%s3 + $0x68] sm:$0xf]
    %v11844 = vld [vmem:[%s3 + $0x6c] sm:$0xf]
    %v11845 = vld [vmem:[%s3 + $0x70] sm:$0xf]
    %v11846 = vld [vmem:[%s3 + $0x74] sm:$0xf]
    %v11847 = vld [vmem:[%s3 + $0x78] sm:$0xf]
    %v11848 = vld [vmem:[%s3 + $0x7c] sm:$0xf]
    %v11849 = vld [vmem:[%s3 + $0x80] sm:$0xf]
    %v11850 = vld [vmem:[%s3 + $0x84] sm:$0xf]
    %v11851 = vld [vmem:[%s3 + $0x88] sm:$0xf]
    %v11852 = vld [vmem:[%s3 + $0x8c] sm:$0xf]
    %v11853 = vld [vmem:[%s3 + $0x90] sm:$0xf]
    %v11854 = vld [vmem:[%s3 + $0x94] sm:$0xf]
    %v11855 = vld [vmem:[%s3 + $0x98] sm:$0xf]
    %v11856 = vld [vmem:[%s3 + $0x9c] sm:$0xf]
    %v11857 = vld [vmem:[%s3 + $0xa0] sm:$0xf]
    %v11858 = vld [vmem:[%s3 + $0xa4] sm:$0xf]
    %v11859 = vld [vmem:[%s3 + $0xa8] sm:$0xf]
    %v11860 = vld [vmem:[%s3 + $0xac] sm:$0xf]
    %v11861 = vld [vmem:[%s3 + $0xb0] sm:$0xf]
    %v11862 = vld [vmem:[%s3 + $0xb4] sm:$0xf]
    %v11863 = vld [vmem:[%s3 + $0xb8] sm:$0xf]
    %v11864 = vld [vmem:[%s3 + $0xbc] sm:$0xf]
    %v11865 = vld [vmem:[%s3 + $0xc0] sm:$0xf]
    %v11866 = vld [vmem:[%s3 + $0xc4] sm:$0xf]
    %v11867 = vld [vmem:[%s3 + $0xc8] sm:$0xf]
    %v11868 = vld [vmem:[%s3 + $0xcc] sm:$0xf]
    %v11869 = vld [vmem:[%s3 + $0xd0] sm:$0xf]
    %v11870 = vld [vmem:[%s3 + $0xd4] sm:$0xf]
    %v11871 = vld [vmem:[%s3 + $0xd8] sm:$0xf]
    %v11872 = vld [vmem:[%s3 + $0xdc] sm:$0xf]
    %v11873 = vld [vmem:[%s3 + $0xe0] sm:$0xf]
    %v11874 = vld [vmem:[%s3 + $0xe4] sm:$0xf]
    %v11875 = vld [vmem:[%s3 + $0xe8] sm:$0xf]
    %v11876 = vld [vmem:[%s3 + $0xec] sm:$0xf]
    %v11877 = vld [vmem:[%s3 + $0xf0] sm:$0xf]
    %v11878 = vld [vmem:[%s3 + $0xf4] sm:$0xf]
    %v11879 = vld [vmem:[%s3 + $0xf8] sm:$0xf]
    %v11880 = vld [vmem:[%s3 + $0xfc] sm:$0xf]
    %v11881 = vld [vmem:[%s3 + $0x100] sm:$0xf]
    %v11882 = vld [vmem:[%s3 + $0x104] sm:$0xf]
    %v11883 = vld [vmem:[%s3 + $0x108] sm:$0xf]
    %v11884 = vld [vmem:[%s3 + $0x10c] sm:$0xf]
    %v11885 = vld [vmem:[%s3 + $0x110] sm:$0xf]
    %v11886 = vld [vmem:[%s3 + $0x114] sm:$0xf]
    %v11887 = vld [vmem:[%s3 + $0x118] sm:$0xf]
    %v11888 = vld [vmem:[%s3 + $0x11c] sm:$0xf]
    %v11889 = vld [vmem:[%s3 + $0x120] sm:$0xf]
    %v11890 = vld [vmem:[%s3 + $0x124] sm:$0xf]
    %v11891 = vld [vmem:[%s3 + $0x128] sm:$0xf]
    %v11892 = vld [vmem:[%s3 + $0x12c] sm:$0xf]
    %v11893 = vld [vmem:[%s3 + $0x130] sm:$0xf]
    %v11894 = vld [vmem:[%s3 + $0x134] sm:$0xf]
    %v11895 = vld [vmem:[%s3 + $0x138] sm:$0xf]
    %v11896 = vld [vmem:[%s3 + $0x13c] sm:$0xf]
    %v11897 = vld [vmem:[%s3 + $0x140] sm:$0xf]
    %v11898 = vld [vmem:[%s3 + $0x144] sm:$0xf]
    %v11899 = vld [vmem:[%s3 + $0x148] sm:$0xf]
    %v11900 = vld [vmem:[%s3 + $0x14c] sm:$0xf]
    %v11901 = vld [vmem:[%s3 + $0x150] sm:$0xf]
    %v11902 = vld [vmem:[%s3 + $0x154] sm:$0xf]
    %v11903 = vld [vmem:[%s3 + $0x158] sm:$0xf]
    %v11904 = vld [vmem:[%s3 + $0x15c] sm:$0xf]
    %v11905 = vld [vmem:[%s3 + $0x160] sm:$0xf]
    %v11906 = vld [vmem:[%s3 + $0x164] sm:$0xf]
    %v11907 = vld [vmem:[%s3 + $0x168] sm:$0xf]
    %v11908 = vld [vmem:[%s3 + $0x16c] sm:$0xf]
    %v11909 = vld [vmem:[%s3 + $0x170] sm:$0xf]
    %v11910 = vld [vmem:[%s3 + $0x174] sm:$0xf]
    %v11911 = vld [vmem:[%s3 + $0x178] sm:$0xf]
    %v11912 = vld [vmem:[%s3 + $0x17c] sm:$0xf]
    %v11913 = vld [vmem:[%s3 + $0x180] sm:$0xf]
    %v11914 = vld [vmem:[%s3 + $0x184] sm:$0xf]
    %v11915 = vld [vmem:[%s3 + $0x188] sm:$0xf]
    %v11916 = vld [vmem:[%s3 + $0x18c] sm:$0xf]
    %v11917 = vld [vmem:[%s3 + $0x190] sm:$0xf]
    %v11918 = vld [vmem:[%s3 + $0x194] sm:$0xf]
    %v11919 = vld [vmem:[%s3 + $0x198] sm:$0xf]
    %v11920 = vld [vmem:[%s3 + $0x19c] sm:$0xf]
    %v11921 = vld [vmem:[%s3 + $0x1a0] sm:$0xf]
    %v11922 = vld [vmem:[%s3 + $0x1a4] sm:$0xf]
    %v11923 = vld [vmem:[%s3 + $0x1a8] sm:$0xf]
    %v11924 = vld [vmem:[%s3 + $0x1ac] sm:$0xf]
    %v11925 = vld [vmem:[%s3 + $0x1b0] sm:$0xf]
    %v11926 = vld [vmem:[%s3 + $0x1b4] sm:$0xf]
    %v11927 = vld [vmem:[%s3 + $0x1b8] sm:$0xf]
    %v11928 = vld [vmem:[%s3 + $0x1bc] sm:$0xf]
    %v11929 = vld [vmem:[%s3 + $0x1c0] sm:$0xf]
    %v11930 = vld [vmem:[%s3 + $0x1c4] sm:$0xf]
    %v11931 = vld [vmem:[%s3 + $0x1c8] sm:$0xf]
    %v11932 = vld [vmem:[%s3 + $0x1cc] sm:$0xf]
    %v11933 = vld [vmem:[%s3 + $0x1d0] sm:$0xf]
    %v11934 = vld [vmem:[%s3 + $0x1d4] sm:$0xf]
    %v11935 = vld [vmem:[%s3 + $0x1d8] sm:$0xf]
    %v11936 = vld [vmem:[%s3 + $0x1dc] sm:$0xf]
    %v11937 = vld [vmem:[%s3 + $0x1e0] sm:$0xf]
    %v11938 = vld [vmem:[%s3 + $0x1e4] sm:$0xf]
    %v11939 = vld [vmem:[%s3 + $0x1e8] sm:$0xf]
    %v11940 = vld [vmem:[%s3 + $0x1ec] sm:$0xf]
    %v11941 = vld [vmem:[%s3 + $0x1f0] sm:$0xf]
    %v11942 = vld [vmem:[%s3 + $0x1f4] sm:$0xf]
    %v11943 = vld [vmem:[%s3 + $0x1f8] sm:$0xf]
    %v11944 = vld [vmem:[%s3 + $0x1fc] sm:$0xf]
    %v11945 = vld [vmem:[%s4] sm:$0x1]
    %v12074 = vunpack.c.l.b16 %v11817
    %v12075 = vunpack.c.l.b16 %v11818
    %v12076 = vunpack.c.l.b16 %v11819
    %v12077 = vunpack.c.l.b16 %v11820
    %v12078 = vunpack.c.l.b16 %v11821
    %v12079 = vunpack.c.l.b16 %v11822
    %v12080 = vunpack.c.l.b16 %v11823
    %v12081 = vunpack.c.l.b16 %v11824
    %v12082 = vunpack.c.l.b16 %v11825
    %v12083 = vunpack.c.l.b16 %v11826
    %v12084 = vunpack.c.l.b16 %v11827
    %v12085 = vunpack.c.l.b16 %v11828
    %v12086 = vunpack.c.l.b16 %v11829
    %v12087 = vunpack.c.l.b16 %v11830
    %v12088 = vunpack.c.l.b16 %v11831
    %v12089 = vunpack.c.l.b16 %v11832
    %v12090 = vunpack.c.l.b16 %v11833
    %v12091 = vunpack.c.l.b16 %v11834
    %v12092 = vunpack.c.l.b16 %v11835
    %v12093 = vunpack.c.l.b16 %v11836
    %v12094 = vunpack.c.l.b16 %v11837
    %v12095 = vunpack.c.l.b16 %v11838
    %v12096 = vunpack.c.l.b16 %v11839
    %v12097 = vunpack.c.l.b16 %v11840
    %v12098 = vunpack.c.l.b16 %v11841
    %v12099 = vunpack.c.l.b16 %v11842
    %v12100 = vunpack.c.l.b16 %v11843
    %v12101 = vunpack.c.l.b16 %v11844
    %v12102 = vunpack.c.l.b16 %v11845
    %v12103 = vunpack.c.l.b16 %v11846
    %v12104 = vunpack.c.l.b16 %v11847
    %v12105 = vunpack.c.l.b16 %v11848
    %v12106 = vunpack.c.l.b16 %v11849
    %v12107 = vunpack.c.l.b16 %v11850
    %v12108 = vunpack.c.l.b16 %v11851
    %v12109 = vunpack.c.l.b16 %v11852
    %v12110 = vunpack.c.l.b16 %v11853
    %v12111 = vunpack.c.l.b16 %v11854
    %v12112 = vunpack.c.l.b16 %v11855
    %v12113 = vunpack.c.l.b16 %v11856
    %v12114 = vunpack.c.l.b16 %v11857
    %v12115 = vunpack.c.l.b16 %v11858
    %v12116 = vunpack.c.l.b16 %v11859
    %v12117 = vunpack.c.l.b16 %v11860
    %v12118 = vunpack.c.l.b16 %v11861
    %v12119 = vunpack.c.l.b16 %v11862
    %v12120 = vunpack.c.l.b16 %v11863
    %v12121 = vunpack.c.l.b16 %v11864
    %v12122 = vunpack.c.l.b16 %v11865
    %v12123 = vunpack.c.l.b16 %v11866
    %v12124 = vunpack.c.l.b16 %v11867
    %v12125 = vunpack.c.l.b16 %v11868
    %v12126 = vunpack.c.l.b16 %v11869
    %v12127 = vunpack.c.l.b16 %v11870
    %v12128 = vunpack.c.l.b16 %v11871
    %v12129 = vunpack.c.l.b16 %v11872
    %v12130 = vunpack.c.l.b16 %v11873
    %v12131 = vunpack.c.l.b16 %v11874
    %v12132 = vunpack.c.l.b16 %v11875
    %v12133 = vunpack.c.l.b16 %v11876
    %v12134 = vunpack.c.l.b16 %v11877
    %v12135 = vunpack.c.l.b16 %v11878
    %v12136 = vunpack.c.l.b16 %v11879
    %v12137 = vunpack.c.l.b16 %v11880
    %v12138 = vunpack.c.l.b16 %v11881
    %v12139 = vunpack.c.l.b16 %v11882
    %v12140 = vunpack.c.l.b16 %v11883
    %v12141 = vunpack.c.l.b16 %v11884
    %v12142 = vunpack.c.l.b16 %v11885
    %v12143 = vunpack.c.l.b16 %v11886
    %v12144 = vunpack.c.l.b16 %v11887
    %v12145 = vunpack.c.l.b16 %v11888
    %v12146 = vunpack.c.l.b16 %v11889
    %v12147 = vunpack.c.l.b16 %v11890
    %v12148 = vunpack.c.l.b16 %v11891
    %v12149 = vunpack.c.l.b16 %v11892
    %v12150 = vunpack.c.l.b16 %v11893
    %v12151 = vunpack.c.l.b16 %v11894
    %v12152 = vunpack.c.l.b16 %v11895
    %v12153 = vunpack.c.l.b16 %v11896
    %v12154 = vunpack.c.l.b16 %v11897
    %v12155 = vunpack.c.l.b16 %v11898
    %v12156 = vunpack.c.l.b16 %v11899
    %v12157 = vunpack.c.l.b16 %v11900
    %v12158 = vunpack.c.l.b16 %v11901
    %v12159 = vunpack.c.l.b16 %v11902
    %v12160 = vunpack.c.l.b16 %v11903
    %v12161 = vunpack.c.l.b16 %v11904
    %v12162 = vunpack.c.l.b16 %v11905
    %v12163 = vunpack.c.l.b16 %v11906
    %v12164 = vunpack.c.l.b16 %v11907
    %v12165 = vunpack.c.l.b16 %v11908
    %v12166 = vunpack.c.l.b16 %v11909
    %v12167 = vunpack.c.l.b16 %v11910
    %v12168 = vunpack.c.l.b16 %v11911
    %v12169 = vunpack.c.l.b16 %v11912
    %v12170 = vunpack.c.l.b16 %v11913
    %v12171 = vunpack.c.l.b16 %v11914
    %v12172 = vunpack.c.l.b16 %v11915
    %v12173 = vunpack.c.l.b16 %v11916
    %v12174 = vunpack.c.l.b16 %v11917
    %v12175 = vunpack.c.l.b16 %v11918
    %v12176 = vunpack.c.l.b16 %v11919
    %v12177 = vunpack.c.l.b16 %v11920
    %v12178 = vunpack.c.l.b16 %v11921
    %v12179 = vunpack.c.l.b16 %v11922
    %v12180 = vunpack.c.l.b16 %v11923
    %v12181 = vunpack.c.l.b16 %v11924
    %v12182 = vunpack.c.l.b16 %v11925
    %v12183 = vunpack.c.l.b16 %v11926
    %v12184 = vunpack.c.l.b16 %v11927
    %v12185 = vunpack.c.l.b16 %v11928
    %v12186 = vunpack.c.l.b16 %v11929
    %v12187 = vunpack.c.l.b16 %v11930
    %v12188 = vunpack.c.l.b16 %v11931
    %v12189 = vunpack.c.l.b16 %v11932
    %v12190 = vunpack.c.l.b16 %v11933
    %v12191 = vunpack.c.l.b16 %v11934
    %v12192 = vunpack.c.l.b16 %v11935
    %v12193 = vunpack.c.l.b16 %v11936
    %v12194 = vunpack.c.l.b16 %v11937
    %v12195 = vunpack.c.l.b16 %v11938
    %v12196 = vunpack.c.l.b16 %v11939
    %v12197 = vunpack.c.l.b16 %v11940
    %v12198 = vunpack.c.l.b16 %v11941
    %v12199 = vunpack.c.l.b16 %v11942
    %v12200 = vunpack.c.l.b16 %v11943
    %v12201 = vunpack.c.l.b16 %v11944
    %v12202 = vpack.c.b16 %v12075, %v12074
    %v12203 = vpack.c.b16 %v12077, %v12076
    %v12204 = vpack.c.b16 %v12079, %v12078
    %v12205 = vpack.c.b16 %v12081, %v12080
    %v12206 = vpack.c.b16 %v12083, %v12082
    %v12207 = vpack.c.b16 %v12085, %v12084
    %v12208 = vpack.c.b16 %v12087, %v12086
    %v12209 = vpack.c.b16 %v12089, %v12088
    %v12210 = vpack.c.b16 %v12091, %v12090
    %v12211 = vpack.c.b16 %v12093, %v12092
    %v12212 = vpack.c.b16 %v12095, %v12094
    %v12213 = vpack.c.b16 %v12097, %v12096
    %v12214 = vpack.c.b16 %v12099, %v12098
    %v12215 = vpack.c.b16 %v12101, %v12100
    %v12216 = vpack.c.b16 %v12103, %v12102
    %v12217 = vpack.c.b16 %v12105, %v12104
    %v12218 = vpack.c.b16 %v12107, %v12106
    %v12219 = vpack.c.b16 %v12109, %v12108
    %v12220 = vpack.c.b16 %v12111, %v12110
    %v12221 = vpack.c.b16 %v12113, %v12112
    %v12222 = vpack.c.b16 %v12115, %v12114
    %v12223 = vpack.c.b16 %v12117, %v12116
    %v12224 = vpack.c.b16 %v12119, %v12118
    %v12225 = vpack.c.b16 %v12121, %v12120
    %v12226 = vpack.c.b16 %v12123, %v12122
    %v12227 = vpack.c.b16 %v12125, %v12124
    %v12228 = vpack.c.b16 %v12127, %v12126
    %v12229 = vpack.c.b16 %v12129, %v12128
    %v12230 = vpack.c.b16 %v12131, %v12130
    %v12231 = vpack.c.b16 %v12133, %v12132
    %v12232 = vpack.c.b16 %v12135, %v12134
    %v12233 = vpack.c.b16 %v12137, %v12136
    %v12234 = vpack.c.b16 %v12139, %v12138
    %v12235 = vpack.c.b16 %v12141, %v12140
    %v12236 = vpack.c.b16 %v12143, %v12142
    %v12237 = vpack.c.b16 %v12145, %v12144
    %v12238 = vpack.c.b16 %v12147, %v12146
    %v12239 = vpack.c.b16 %v12149, %v12148
    %v12240 = vpack.c.b16 %v12151, %v12150
    %v12241 = vpack.c.b16 %v12153, %v12152
    %v12242 = vpack.c.b16 %v12155, %v12154
    %v12243 = vpack.c.b16 %v12157, %v12156
    %v12244 = vpack.c.b16 %v12159, %v12158
    %v12245 = vpack.c.b16 %v12161, %v12160
    %v12246 = vpack.c.b16 %v12163, %v12162
    %v12247 = vpack.c.b16 %v12165, %v12164
    %v12248 = vpack.c.b16 %v12167, %v12166
    %v12249 = vpack.c.b16 %v12169, %v12168
    %v12250 = vpack.c.b16 %v12171, %v12170
    %v12251 = vpack.c.b16 %v12173, %v12172
    %v12252 = vpack.c.b16 %v12175, %v12174
    %v12253 = vpack.c.b16 %v12177, %v12176
    %v12254 = vpack.c.b16 %v12179, %v12178
    %v12255 = vpack.c.b16 %v12181, %v12180
    %v12256 = vpack.c.b16 %v12183, %v12182
    %v12257 = vpack.c.b16 %v12185, %v12184
    %v12258 = vpack.c.b16 %v12187, %v12186
    %v12259 = vpack.c.b16 %v12189, %v12188
    %v12260 = vpack.c.b16 %v12191, %v12190
    %v12261 = vpack.c.b16 %v12193, %v12192
    %v12262 = vpack.c.b16 %v12195, %v12194
    %v12263 = vpack.c.b16 %v12197, %v12196
    %v12264 = vpack.c.b16 %v12199, %v12198
    %v12265 = vpack.c.b16 %v12201, %v12200
    %12330 = vmatprep.subr.bf16.mxu0 0
    %12331 = vmatpush1.bf16.msra.mxu0 %v12202
    %12332 = vmatprep.subr.bf16.mxu0 0
    %12333 = vmatpush1.bf16.msra.mxu0 %v12203
    %12334 = vmatprep.subr.bf16.mxu0 0
    %12335 = vmatpush1.bf16.msra.mxu0 %v12204
    %12336 = vmatprep.subr.bf16.mxu0 0
    %12337 = vmatpush1.bf16.msra.mxu0 %v12205
    %12338 = vmatprep.subr.bf16.mxu0 0
    %12339 = vmatpush1.bf16.msra.mxu0 %v12206
    %12340 = vmatprep.subr.bf16.mxu0 0
    %12341 = vmatpush1.bf16.msra.mxu0 %v12207
    %12342 = vmatprep.subr.bf16.mxu0 0
    %12343 = vmatpush1.bf16.msra.mxu0 %v12208
    %12344 = vmatprep.subr.bf16.mxu0 0
    %12345 = vmatpush1.bf16.msra.mxu0 %v12209
    %12346 = vmatprep.subr.bf16.mxu0 0
    %12347 = vmatpush1.bf16.msra.mxu0 %v12210
    %12348 = vmatprep.subr.bf16.mxu0 0
    %12349 = vmatpush1.bf16.msra.mxu0 %v12211
    %12350 = vmatprep.subr.bf16.mxu0 0
    %12351 = vmatpush1.bf16.msra.mxu0 %v12212
    %12352 = vmatprep.subr.bf16.mxu0 0
    %12353 = vmatpush1.bf16.msra.mxu0 %v12213
    %12354 = vmatprep.subr.bf16.mxu0 0
    %12355 = vmatpush1.bf16.msra.mxu0 %v12214
    %12356 = vmatprep.subr.bf16.mxu0 0
    %12357 = vmatpush1.bf16.msra.mxu0 %v12215
    %12358 = vmatprep.subr.bf16.mxu0 0
    %12359 = vmatpush1.bf16.msra.mxu0 %v12216
    %12360 = vmatprep.subr.bf16.mxu0 0
    %12361 = vmatpush1.bf16.msra.mxu0 %v12217
    %12362 = vmatprep.mubr.bf16.mxu0 %v11810
    %12363 = vmatmul.mubr.bf16.gmra.mrb[0].mxu0 %v11809
    %v12364 = vpop.f32.mrb[0].mxu0
    %v12365 = vadd.f32 %v11945, %v12364
    %v12366 = vpop.f32.mrb[0].mxu0
    %v12367 = vpop.f32.mrb[0].mxu0
    %v12368 = vpop.f32.mrb[0].mxu0
    %12369 = vdwg.mxu0
    %12370 = vmatprep.subr.bf16.mxu0 0
    %12371 = vmatpush1.bf16.msra.mxu0 %v12218
    %12372 = vmatprep.subr.bf16.mxu0 0
    %12373 = vmatpush1.bf16.msra.mxu0 %v12219
    %12374 = vmatprep.subr.bf16.mxu0 0
    %12375 = vmatpush1.bf16.msra.mxu0 %v12220
    %12376 = vmatprep.subr.bf16.mxu0 0
    %12377 = vmatpush1.bf16.msra.mxu0 %v12221
    %12378 = vmatprep.subr.bf16.mxu0 0
    %12379 = vmatpush1.bf16.msra.mxu0 %v12222
    %12380 = vmatprep.subr.bf16.mxu0 0
    %12381 = vmatpush1.bf16.msra.mxu0 %v12223
    %12382 = vmatprep.subr.bf16.mxu0 0
    %12383 = vmatpush1.bf16.msra.mxu0 %v12224
    %12384 = vmatprep.subr.bf16.mxu0 0
    %12385 = vmatpush1.bf16.msra.mxu0 %v12225
    %12386 = vmatprep.subr.bf16.mxu0 0
    %12387 = vmatpush1.bf16.msra.mxu0 %v12226
    %12388 = vmatprep.subr.bf16.mxu0 0
    %12389 = vmatpush1.bf16.msra.mxu0 %v12227
    %12390 = vmatprep.subr.bf16.mxu0 0
    %12391 = vmatpush1.bf16.msra.mxu0 %v12228
    %12392 = vmatprep.subr.bf16.mxu0 0
    %12393 = vmatpush1.bf16.msra.mxu0 %v12229
    %12394 = vmatprep.subr.bf16.mxu0 0
    %12395 = vmatpush1.bf16.msra.mxu0 %v12230
    %12396 = vmatprep.subr.bf16.mxu0 0
    %12397 = vmatpush1.bf16.msra.mxu0 %v12231
    %12398 = vmatprep.subr.bf16.mxu0 0
    %12399 = vmatpush1.bf16.msra.mxu0 %v12232
    %12400 = vmatprep.subr.bf16.mxu0 0
    %12401 = vmatpush1.bf16.msra.mxu0 %v12233
    %12402 = vmatprep.mubr.bf16.mxu0 %v11812
    %12403 = vmatmul.mubr.bf16.gmra.mrb[0].mxu0 %v11811
    %v12404 = vpop.f32.mrb[0].mxu0
    %v12405 = vadd.f32 %v12365, %v12404
    %v12406 = vpop.f32.mrb[0].mxu0
    %v12407 = vpop.f32.mrb[0].mxu0
    %v12408 = vpop.f32.mrb[0].mxu0
    %12409 = vdwg.mxu0
    %12410 = vmatprep.subr.bf16.mxu0 0
    %12411 = vmatpush1.bf16.msra.mxu0 %v12234
    %12412 = vmatprep.subr.bf16.mxu0 0
    %12413 = vmatpush1.bf16.msra.mxu0 %v12235
    %12414 = vmatprep.subr.bf16.mxu0 0
    %12415 = vmatpush1.bf16.msra.mxu0 %v12236
    %12416 = vmatprep.subr.bf16.mxu0 0
    %12417 = vmatpush1.bf16.msra.mxu0 %v12237
    %12418 = vmatprep.subr.bf16.mxu0 0
    %12419 = vmatpush1.bf16.msra.mxu0 %v12238
    %12420 = vmatprep.subr.bf16.mxu0 0
    %12421 = vmatpush1.bf16.msra.mxu0 %v12239
    %12422 = vmatprep.subr.bf16.mxu0 0
    %12423 = vmatpush1.bf16.msra.mxu0 %v12240
    %12424 = vmatprep.subr.bf16.mxu0 0
    %12425 = vmatpush1.bf16.msra.mxu0 %v12241
    %12426 = vmatprep.subr.bf16.mxu0 0
    %12427 = vmatpush1.bf16.msra.mxu0 %v12242
    %12428 = vmatprep.subr.bf16.mxu0 0
    %12429 = vmatpush1.bf16.msra.mxu0 %v12243
    %12430 = vmatprep.subr.bf16.mxu0 0
    %12431 = vmatpush1.bf16.msra.mxu0 %v12244
    %12432 = vmatprep.subr.bf16.mxu0 0
    %12433 = vmatpush1.bf16.msra.mxu0 %v12245
    %12434 = vmatprep.subr.bf16.mxu0 0
    %12435 = vmatpush1.bf16.msra.mxu0 %v12246
    %12436 = vmatprep.subr.bf16.mxu0 0
    %12437 = vmatpush1.bf16.msra.mxu0 %v12247
    %12438 = vmatprep.subr.bf16.mxu0 0
    %12439 = vmatpush1.bf16.msra.mxu0 %v12248
    %12440 = vmatprep.subr.bf16.mxu0 0
    %12441 = vmatpush1.bf16.msra.mxu0 %v12249
    %12442 = vmatprep.mubr.bf16.mxu0 %v11814
    %12443 = vmatmul.mubr.bf16.gmra.mrb[0].mxu0 %v11813
    %v12444 = vpop.f32.mrb[0].mxu0
    %v12445 = vadd.f32 %v12405, %v12444
    %v12446 = vpop.f32.mrb[0].mxu0
    %v12447 = vpop.f32.mrb[0].mxu0
    %v12448 = vpop.f32.mrb[0].mxu0
    %12449 = vdwg.mxu0
    %12450 = vmatprep.subr.bf16.mxu0 0
    %12451 = vmatpush1.bf16.msra.mxu0 %v12250
    %12452 = vmatprep.subr.bf16.mxu0 0
    %12453 = vmatpush1.bf16.msra.mxu0 %v12251
    %12454 = vmatprep.subr.bf16.mxu0 0
    %12455 = vmatpush1.bf16.msra.mxu0 %v12252
    %12456 = vmatprep.subr.bf16.mxu0 0
    %12457 = vmatpush1.bf16.msra.mxu0 %v12253
    %12458 = vmatprep.subr.bf16.mxu0 0
    %12459 = vmatpush1.bf16.msra.mxu0 %v12254
    %12460 = vmatprep.subr.bf16.mxu0 0
    %12461 = vmatpush1.bf16.msra.mxu0 %v12255
    %12462 = vmatprep.subr.bf16.mxu0 0
    %12463 = vmatpush1.bf16.msra.mxu0 %v12256
    %12464 = vmatprep.subr.bf16.mxu0 0
    %12465 = vmatpush1.bf16.msra.mxu0 %v12257
    %12466 = vmatprep.subr.bf16.mxu0 0
    %12467 = vmatpush1.bf16.msra.mxu0 %v12258
    %12468 = vmatprep.subr.bf16.mxu0 0
    %12469 = vmatpush1.bf16.msra.mxu0 %v12259
    %12470 = vmatprep.subr.bf16.mxu0 0
    %12471 = vmatpush1.bf16.msra.mxu0 %v12260
    %12472 = vmatprep.subr.bf16.mxu0 0
    %12473 = vmatpush1.bf16.msra.mxu0 %v12261
    %12474 = vmatprep.subr.bf16.mxu0 0
    %12475 = vmatpush1.bf16.msra.mxu0 %v12262
    %12476 = vmatprep.subr.bf16.mxu0 0
    %12477 = vmatpush1.bf16.msra.mxu0 %v12263
    %12478 = vmatprep.subr.bf16.mxu0 0
    %12479 = vmatpush1.bf16.msra.mxu0 %v12264
    %12480 = vmatprep.subr.bf16.mxu0 0
    %12481 = vmatpush1.bf16.msra.mxu0 %v12265
    %12482 = vmatprep.mubr.bf16.mxu0 %v11816
    %12483 = vmatmul.mubr.bf16.gmra.mrb[0].mxu0 %v11815
    %v12484 = vpop.f32.mrb[0].mxu0
    %v12485 = vadd.f32 %v12445, %v12484
    %v12486 = vpop.f32.mrb[0].mxu0
    %v12487 = vpop.f32.mrb[0].mxu0
    %v12488 = vpop.f32.mrb[0].mxu0
    %12489 = vdwg.mxu0
    %v12490 = vlaneseq
    %v12491 = vand.u32 %v12490, 127
    %vm12492 = vcmp.lt.s32.totalorder %v12491, 6
    %v12493 = vsel %vm12492, %v12485, 0.0
    %vm12494 = vcmask 1040384
    %v12495 = vsel %vm12494, %v12493, 0.0
    %12496 = vadd.xlane.f32.xlu0 %v12495
    %v12497 = vpop.xlane.xlu0 %12496
    %v12498 = vrot.slane %v12497, 4
    %v12499 = vadd.f32 %v12497, %v12498
    %v12500 = vrot.slane %v12499, 2
    %v12501 = vadd.f32 %v12499, %v12500
    %v12502 = vrot.slane %v12501, 1
    %v12503 = vadd.f32 %v12501, %v12502
    %s12504 = vtos %v12503
    %s12505 = smul.f32 %s12504, 0.16666667
    %vm12506 = vcmp.eq.s32.totalorder %v12491, 127
    %v12507 = vsel %vm12506, %v12485, 0.0
    %v12508 = vsel %vm12494, %v12507, 0.0
    %12509 = vadd.xlane.f32.xlu0 %v12508
    %v12510 = vpop.xlane.xlu0 %12509
    %v12511 = vstv %s12505
    %v12512 = vsub.f32 %v12510, %v12511
    %v12513 = vadd.f32 %v12493, %v12512
    %12514 = vst [vmem:[#allocation2] sm:$0x1] %v12513
    // Predicated region
    $region22: #{model3layer_forward.7} parent=1 // pred_check
      _
    $region23: #{model3layer_forward.7} parent=1 // pred_check_branch
      %12516 = sbr.rel (0) target = $region25
    $region24: #{model3layer_forward.7} parent=1 // pred_region
      %s12518 = ssub.s32 16, 16
      %12519 = vsyncadd [#allocation3], %s12518
      %s12521 = sshll.u32 [#allocation2], 4
      %s12522 = int_to_ptr.vmem [resolvable:$true] %s12521
      %12524 = dma.vmem_to_hbm [thread:$0]  %s12522, 16, %s5, [#allocation3]
    $region25: #{model3layer_forward.7} parent=1 // pred_fallthru
      _
    // Predicated region
    $region26: #{model3layer_forward.7} parent=1 // pred_check
      _
    $region27: #{model3layer_forward.7} parent=1 // pred_check_branch
      %12526 = sbr.rel (0) target = $region29
    $region28: #{model3layer_forward.7} parent=1 // pred_region
      %12527 = dma.done [#allocation3], 16
    $region29: #{model3layer_forward.7} parent=1 // pred_fallthru
      _
    %12528 = vsyncpa [#allocation3], 1

</llo_original>
